<compile_context>
chip_gen: v5e
topology: v5e:2x2
jax: 0.10.0
libtpu: 0.0.40
codegen_flags: <defaults>
</compile_context>

<pallas_src>
import functools
import math

import numpy as np

import jax
import jax.numpy as jnp
from jax.experimental import pallas as pl
from jax.experimental.pallas import tpu as pltpu


def _round_up(x, m):
    return (x + m - 1) // m * m


def _softplus(y):
    # torch.nn.Softplus(beta=1, threshold=20): y for y > 20, else log1p(exp(y)).
    # (exp overflow for huge y lands on the discarded branch of the where.)
    return jnp.where(y > 20.0, y, jnp.log1p(jnp.exp(y)))


# ---------------------------------------------------------------------------
# Fused forward kernel (single pallas_call, everything VMEM resident)
# ---------------------------------------------------------------------------
def _prodos_kernel(
    # graph data + constant selector
    node_ref, eattr_ref, ei0c_ref, ei1c_ref, batch_ref, atoms_ref, sexp_ref,
    # embedding weights
    e1w_ref, e1b_ref, e2w_ref, e2b_ref,
    # conv stacks (leading dim = n_conv)
    w1i_ref, w1j_ref, w1e_ref, b1_ref, w2_ref, b2_ref, w3_ref, b3_ref,
    bnsc_ref, bnsh_ref,
    # head weights (2 or 6 refs, depending on use_fc) followed by the 3 outputs
    *head_and_outs,
    n_conv, n_orbitals, use_fc):
    f32, bf16 = jnp.float32, jnp.bfloat16
    *head, pdos_ref, adose_ref, dos_ref = head_and_outs

    n_pad = node_ref.shape[0]
    e_pad = ei0c_ref.shape[0]
    g_pad = dos_ref.shape[0]
    a_pad = adose_ref.shape[0]
    grid_pad = dos_ref.shape[1]

    def mm(a, b):
        return jnp.dot(a, b, preferred_element_type=f32)

    # ---- embeddings: Linear + Softplus, twice ----
    x = _softplus(mm(node_ref[...], e1w_ref[...]) + e1b_ref[...])
    x = _softplus(mm(x, e2w_ref[...]) + e2b_ref[...])

    # ---- edge gather one-hots, bf16 (selection is exact), built once ----
    node_ids_e = jax.lax.broadcasted_iota(jnp.int32, (e_pad, n_pad), 1)
    gat_i = (ei0c_ref[...] == node_ids_e).astype(bf16)   # (E,N): x_i rows (edge_index[0])
    gat_j = (ei1c_ref[...] == node_ids_e).astype(bf16)   # (E,N): x_j rows (edge_index[1])
    eattr = eattr_ref[...]

    # ---- CrystalGraphConv x n_conv, fully in VMEM ----
    for c in range(n_conv):
        # reassociated mlp1: node-level products first, then edge gathers on the MXU
        xw1i = mm(x, w1i_ref[c]).astype(bf16)
        xw1j = mm(x, w1j_ref[c]).astype(bf16)
        h = _softplus(mm(gat_i, xw1i) + mm(gat_j, xw1j)
                      + mm(eattr, w1e_ref[c]) + b1_ref[c])
        h = _softplus(mm(h, w2_ref[c]) + b2_ref[c])
        msg = _softplus(mm(h, w3_ref[c]) + b3_ref[c]).astype(bf16)
        # scatter-add at edge_index[0]: agg = gat_i^T @ msg (no scat buffer needed)
        agg = jax.lax.dot_general(gat_i, msg, (((0,), (0,)), ((), ())),
                                  preferred_element_type=f32)
        # BatchNorm (eval mode, folded to scale/shift) + residual + Softplus
        x = _softplus(agg * bnsc_ref[c] + bnsh_ref[c] + x)

    # ---- output head (dropout == identity at inference) ----
    if use_fc:
        f1w, f1b, f2w, f2b, f3w, f3b = head
        hh = _softplus(mm(x, f1w[...]) + f1b[...])
        hh = _softplus(mm(hh, f2w[...]) + f2b[...])
        logits = mm(hh, f3w[...]) + f3b[...]
    else:
        ctf_w, ctf_b = head
        logits = mm(x, ctf_w[...]) + ctf_b[...]

    # numerically-stable sigmoid; exact divide (approx recip drifts vs torch)
    z = jnp.exp(-jnp.abs(logits))
    inv = 1.0 / (1.0 + z)
    pdos = jnp.where(logits >= 0.0, inv, z * inv)
    pdos_ref[...] = pdos                          # (N_pad, out_pad): lane-dense store
    # NOTE: pad rows/lanes of pdos hold head(0)/sigmoid values; every pool below
    # excludes them (ids == -1, Sexp zero rows) and the wrapper slices them off.

    # ---- pools: orbital split via ONE matmul with the precomputed selector ----
    # pcat[:, o*grid_pad:(o+1)*grid_pad] == pdos[:, o*grid:(o+1)*grid] (zero-padded lanes)
    pdos_b = pdos.astype(bf16)
    pcat = mm(pdos_b, sexp_ref[...])              # (N_pad, n_orbitals * grid_pad)

    p_fold = pcat[:, 0:grid_pad]                  # sum over orbitals (for dos)
    for o in range(1, n_orbitals):
        p_fold = p_fold + pcat[:, o * grid_pad:(o + 1) * grid_pad]

    graph_ids = jax.lax.broadcasted_iota(jnp.int32, (g_pad, n_pad), 0)
    oh_graph = (batch_ref[...] == graph_ids).astype(bf16)
    dos_ref[...] = mm(oh_graph, p_fold.astype(bf16))        # gsp over batch

    atom_ids = jax.lax.broadcasted_iota(jnp.int32, (a_pad, n_pad), 0)
    atoms_all = atoms_ref[...]
    acc_atom = jnp.zeros((a_pad, grid_pad), f32)
    for o in range(n_orbitals):                   # general atoms_batch semantics
        oh_atom = (atoms_all[o:o + 1, :] == atom_ids).astype(bf16)
        p_o = pcat[:, o * grid_pad:(o + 1) * grid_pad].astype(bf16)
        acc_atom = acc_atom + mm(oh_atom, p_o)
    adose_ref[...] = acc_atom                                # gsp over atoms_batch


# ---------------------------------------------------------------------------
# Wrapper: pad once, fold BN, stack conv weights, single pallas_call
# ---------------------------------------------------------------------------
def prodosnet_forward(params, node_fea, edge_index, edge_attr, batch, atoms_batch,
                      *, num_graphs, num_atoms, n_orbitals, grid,
                      use_cdf=False, train_on_pdos=False):
    f32, bf16 = jnp.float32, jnp.bfloat16
    n_nodes, n_fea = node_fea.shape
    n_edges = edge_index.shape[1]
    nbr_fea = edge_attr.shape[1]
    convs = params["convs"]
    n_conv = len(convs)
    n_real = n_orbitals * grid

    n_pad = _round_up(n_nodes, 8)
    e_pad = _round_up(n_edges, 8)
    g_pad = _round_up(num_graphs, 8)
    a_pad = _round_up(num_atoms, 8)
    orb_pad = _round_up(n_orbitals, 8)
    out_pad = _round_up(n_real, 128)
    grid_pad = _round_up(grid, 128)

    # ---- pad activations / indices ONCE (pad ids = -1 => match nothing) ----
    node_p = jnp.zeros((n_pad, n_fea), f32).at[:n_nodes].set(node_fea.astype(f32))
    eattr_p = jnp.zeros((e_pad, nbr_fea), f32).at[:n_edges].set(edge_attr.astype(f32))
    ei0 = edge_index[0].astype(jnp.int32)
    ei1 = edge_index[1].astype(jnp.int32)
    ei0_col = jnp.full((e_pad, 1), -1, jnp.int32).at[:n_edges, 0].set(ei0)
    ei1_col = jnp.full((e_pad, 1), -1, jnp.int32).at[:n_edges, 0].set(ei1)
    batch_row = jnp.full((1, n_pad), -1, jnp.int32).at[0, :n_nodes].set(batch.astype(jnp.int32))
    atoms_mat = jnp.full((orb_pad, n_pad), -1, jnp.int32).at[:n_orbitals, :n_nodes].set(
        atoms_batch.astype(jnp.int32).reshape(n_nodes, n_orbitals).T)

    # ---- constant block-diagonal expand selector: Sexp[o*grid+c, o*grid_pad+c] = 1 ----
    sexp_np = np.zeros((out_pad, n_orbitals * grid_pad), np.float32)
    cc = np.arange(grid)
    for o in range(n_orbitals):
        sexp_np[o * grid + cc, o * grid_pad + cc] = 1.0
    sexp = jnp.asarray(sexp_np, dtype=bf16)

    # ---- weights: stack convs, split mlp1, fold BatchNorm, lane-pad wide heads ----
    def b_row(b):
        return b.reshape(1, -1).astype(f32)

    def pad_out(w, b):
        k, n = w.shape
        wp = jnp.zeros((k, out_pad), f32).at[:, :n].set(w.astype(f32))
        bp = jnp.zeros((1, out_pad), f32).at[0, :n].set(b.astype(f32))
        return wp, bp

    w1 = jnp.stack([c["mlp1"][0] for c in convs]).astype(f32)          # (C, 2F+nbr, l1)
    b1 = jnp.stack([c["mlp1"][1] for c in convs]).astype(f32)[:, None, :]
    w2 = jnp.stack([c["mlp2"][0] for c in convs]).astype(f32)
    b2 = jnp.stack([c["mlp2"][1] for c in convs]).astype(f32)[:, None, :]
    w3 = jnp.stack([c["mlp3"][0] for c in convs]).astype(f32)
    b3 = jnp.stack([c["mlp3"][1] for c in convs]).astype(f32)[:, None, :]
    eps = 1e-5
    bn_scale = jnp.stack([c["bn_gamma"] / jnp.sqrt(c["bn_var"] + eps)
                          for c in convs]).astype(f32)[:, None, :]
    bn_shift = jnp.stack([c["bn_beta"] - c["bn_mean"] * c["bn_gamma"] / jnp.sqrt(c["bn_var"] + eps)
                          for c in convs]).astype(f32)[:, None, :]
    w1i, w1j, w1e = w1[:, :n_fea, :], w1[:, n_fea:2 * n_fea, :], w1[:, 2 * n_fea:, :]
    l1, l2 = w2.shape[1], w3.shape[1]

    e1w, e1b = params["embedding_1"]
    e2w, e2b = params["embedding_2"]

    use_fc = not ((not use_cdf) and train_on_pdos)
    if use_fc:   # only pass (and DMA) the head weights this static branch uses
        f1w, f1b = params["fc_out_1"][0].astype(f32), b_row(params["fc_out_1"][1])
        f2w, f2b = params["fc_out_2"][0].astype(f32), b_row(params["fc_out_2"][1])
        f3w, f3b = pad_out(*params["fc_out_3"])
        head_inputs = (f1w, f1b, f2w, f2b, f3w, f3b)
        head_hidden = (f1w.shape[1], f2w.shape[1])
    else:
        ctf_w, ctf_b = pad_out(*params["conv_to_fc"])
        head_inputs = (ctf_w, ctf_b)
        head_hidden = ()

    inputs = (node_p, eattr_p, ei0_col, ei1_col, batch_row, atoms_mat, sexp,
              e1w.astype(f32), b_row(e1b), e2w.astype(f32), b_row(e2b),
              w1i, w1j, w1e, b1, w2, b2, w3, b3, bn_scale, bn_shift) + head_inputs

    # ---- advisory cost estimate for the XLA scheduler ----
    def mmf(m, k, n):
        return 2 * m * k * n
    flops = 2 * mmf(n_pad, n_fea, n_fea)
    trans = 2 * 2 * n_pad * n_fea
    for _ in range(n_conv):
        flops += 2 * mmf(n_pad, n_fea, l1) + 2 * mmf(e_pad, n_pad, l1)
        flops += mmf(e_pad, nbr_fea, l1) + mmf(e_pad, l1, l2) + mmf(e_pad, l2, n_fea)
        flops += mmf(n_pad, e_pad, n_fea)
        trans += 2 * (e_pad * (l1 + l2 + n_fea) + n_pad * n_fea)
    if use_fc:
        h1, h2 = head_hidden
        flops += mmf(n_pad, n_fea, h1) + mmf(n_pad, h1, h2) + mmf(n_pad, h2, out_pad)
        trans += 2 * n_pad * (h1 + h2) + n_pad * out_pad
    else:
        flops += mmf(n_pad, n_fea, out_pad)
        trans += n_pad * out_pad
    flops += mmf(n_pad, out_pad, n_orbitals * grid_pad)
    flops += mmf(g_pad, n_pad, grid_pad) + n_orbitals * mmf(a_pad, n_pad, grid_pad)
    out_bytes = 4 * (n_pad * out_pad + a_pad * grid_pad + g_pad * grid_pad)
    in_bytes = sum(int(np.prod(a.shape)) * a.dtype.itemsize for a in inputs)
    cost = pl.CostEstimate(flops=int(flops), transcendentals=int(trans),
                           bytes_accessed=int(in_bytes + out_bytes))

    # ---- scoped VMEM limit: well above the 16/32 MiB defaults, below physical ----
    try:
        cap = int(pltpu.get_tpu_info().vmem_capacity_bytes)
        vmem_limit = max(32 * 1024 * 1024, (cap * 3) // 4)   # 96 MiB v5e/v6e, 48 MiB v7x
    except Exception:
        vmem_limit = 48 * 1024 * 1024                        # safe on every generation

    vmem = pl.BlockSpec(memory_space=pltpu.MemorySpace.VMEM)
    pdos_p, adose_p, dos_p = pl.pallas_call(
        functools.partial(_prodos_kernel, n_conv=n_conv, n_orbitals=n_orbitals,
                          use_fc=use_fc),
        out_shape=(jax.ShapeDtypeStruct((n_pad, out_pad), f32),
                   jax.ShapeDtypeStruct((a_pad, grid_pad), f32),
                   jax.ShapeDtypeStruct((g_pad, grid_pad), f32)),
        in_specs=[vmem] * len(inputs),
        out_specs=(vmem, vmem, vmem),
        compiler_params=pltpu.CompilerParams(vmem_limit_bytes=int(vmem_limit)),
        cost_estimate=cost,
    )(*inputs)

    # strip row/lane padding, reshape pdos rows per orbital (matches torch .view)
    pdos = pdos_p[:n_nodes, :n_real].reshape(n_nodes * n_orbitals, grid)
    atomic_dos = adose_p[:num_atoms, :grid]
    dos = dos_p[:num_graphs, :grid]
    return pdos, atomic_dos, dos


# ---------------------------------------------------------------------------
# Parameters (deterministic init, matching the nn.Module shapes)
# ---------------------------------------------------------------------------
def init_params(key, orig_fea, nbr_fea, l1, l2, grid, n_orbitals, n_conv):
    keys = list(jax.random.split(key, 4 * (3 + 3 * n_conv + 4)))
    kit = iter(keys)

    def lin(fi, fo):
        k1, k2 = next(kit), next(kit)
        bound = 1.0 / math.sqrt(fi)
        w = jax.random.uniform(k1, (fi, fo), jnp.float32, -bound, bound)
        b = jax.random.uniform(k2, (fo,), jnp.float32, -bound, bound)
        return w, b

    params = {
        "embedding_1": lin(orig_fea, orig_fea),
        "embedding_2": lin(orig_fea, orig_fea),
        "conv_to_fc": lin(orig_fea, n_orbitals * grid),
        "fc_out_1": lin(orig_fea, 256),
        "fc_out_2": lin(256, 512),
        "fc_out_3": lin(512, n_orbitals * grid),
    }
    convs = []
    for _ in range(n_conv):
        convs.append({
            "mlp1": lin(2 * orig_fea + nbr_fea, l1),
            "mlp2": lin(l1, l2),
            "mlp3": lin(l2, orig_fea),
            "bn_gamma": jnp.ones((orig_fea,), jnp.float32),
            "bn_beta": jnp.zeros((orig_fea,), jnp.float32),
            "bn_mean": jnp.zeros((orig_fea,), jnp.float32),
            "bn_var": jnp.ones((orig_fea,), jnp.float32),
        })
    params["convs"] = convs
    return params


# ---------------------------------------------------------------------------
# Pure-JAX reference (same eval semantics) for a correctness smoke test
# ---------------------------------------------------------------------------
def reference_forward(params, node_fea, edge_index, edge_attr, batch, atoms_batch,
                      *, num_graphs, num_atoms, n_orbitals, grid,
                      use_cdf=False, train_on_pdos=False):
    def lin(x, wb):
        return x @ wb[0] + wb[1]

    x = _softplus(lin(node_fea, params["embedding_1"]))
    x = _softplus(lin(x, params["embedding_2"]))
    for cp in params["convs"]:
        x_i = x[edge_index[0]]
        x_j = x[edge_index[1]]
        z = jnp.concatenate([x_i, x_j, edge_attr], axis=-1)
        msg = _softplus(lin(_softplus(lin(_softplus(lin(z, cp["mlp1"])), cp["mlp2"])), cp["mlp3"]))
        agg = jax.ops.segment_sum(msg, edge_index[0], num_segments=x.shape[0])
        scale = cp["bn_gamma"] / jnp.sqrt(cp["bn_var"] + 1e-5)
        shift = cp["bn_beta"] - cp["bn_mean"] * scale
        x = _softplus(agg * scale + shift + x)
    if (not use_cdf) and train_on_pdos:
        pdos = jax.nn.sigmoid(lin(x, params["conv_to_fc"]))
    else:
        x = _softplus(lin(x, params["fc_out_1"]))
        x = _softplus(lin(x, params["fc_out_2"]))
        pdos = jax.nn.sigmoid(lin(x, params["fc_out_3"]))
    dos = jax.ops.segment_sum(pdos, batch, num_segments=num_graphs)
    dos = dos.reshape(num_graphs, n_orbitals, grid).sum(axis=1)
    pdos_rows = pdos.reshape(-1, grid)
    atomic_dos = jax.ops.segment_sum(pdos_rows, atoms_batch, num_segments=num_atoms)
    return pdos_rows, atomic_dos, dos


# ---------------------------------------------------------------------------
if __name__ == "__main__":
    ORIG_FEA, NBR_FEA = 32, 16
    L1 = L2 = 64
    GRID, N_ORBITALS = 64, 9
    N_CONV = 3
    N_NODES, N_EDGES, N_GRAPHS = 12, 24, 2

    key = jax.random.PRNGKey(0)
    kp, kx, ke, ki = jax.random.split(key, 4)
    params = init_params(kp, ORIG_FEA, NBR_FEA, L1, L2, GRID, N_ORBITALS, N_CONV)

    node_fea = jax.random.normal(kx, (N_NODES, ORIG_FEA), jnp.float32)
    edge_attr = jax.random.normal(ke, (N_EDGES, NBR_FEA), jnp.float32)
    edge_index = jax.random.randint(ki, (2, N_EDGES), 0, N_NODES)
    batch = jnp.repeat(jnp.arange(N_GRAPHS), N_NODES // N_GRAPHS)   # graph id per node
    atoms_batch = jnp.repeat(jnp.arange(N_NODES), N_ORBITALS)       # atom id per orbital row

    fwd = jax.jit(functools.partial(
        prodosnet_forward,
        num_graphs=N_GRAPHS, num_atoms=N_NODES,
        n_orbitals=N_ORBITALS, grid=GRID))

    pdos, atomic_dos, dos = fwd(params, node_fea, edge_index, edge_attr,
                                batch, atoms_batch)
    jax.block_until_ready((pdos, atomic_dos, dos))

    assert pdos.shape == (N_NODES * N_ORBITALS, GRID)
    assert atomic_dos.shape == (N_NODES, GRID)
    assert dos.shape == (N_GRAPHS, GRID)
    assert bool(jnp.all(jnp.isfinite(pdos)))
    assert bool(jnp.all(jnp.isfinite(atomic_dos)))
    assert bool(jnp.all(jnp.isfinite(dos)))

    # correctness smoke-test vs. pure-JAX reference (tolerance covers the bf16
    # one-hot / selector matmul inputs + MXU default-precision dense matmuls)
    rp, ra, rd = reference_forward(params, node_fea, edge_index, edge_attr, batch, atoms_batch,
                                   num_graphs=N_GRAPHS, num_atoms=N_NODES,
                                   n_orbitals=N_ORBITALS, grid=GRID)
    assert bool(jnp.allclose(pdos, rp, rtol=5e-2, atol=5e-2))
    assert bool(jnp.allclose(atomic_dos, ra, rtol=5e-2, atol=5e-2))
    assert bool(jnp.allclose(dos, rd, rtol=5e-2, atol=5e-2))

    print("KERNEL_OK")
</pallas_src>

<mosaic_0001>
module attributes {stable_mosaic.version = 11 : i64} {
  func.func @_prodos_kernel(%arg0: memref<16x32xf32, #tpu.memory_space<vmem>>, %arg1: memref<24x16xf32, #tpu.memory_space<vmem>>, %arg2: memref<24x1xi32, #tpu.memory_space<vmem>>, %arg3: memref<24x1xi32, #tpu.memory_space<vmem>>, %arg4: memref<1x16xi32, #tpu.memory_space<vmem>>, %arg5: memref<16x16xi32, #tpu.memory_space<vmem>>, %arg6: memref<640x1152xbf16, #tpu.memory_space<vmem>>, %arg7: memref<32x32xf32, #tpu.memory_space<vmem>>, %arg8: memref<1x32xf32, #tpu.memory_space<vmem>>, %arg9: memref<32x32xf32, #tpu.memory_space<vmem>>, %arg10: memref<1x32xf32, #tpu.memory_space<vmem>>, %arg11: memref<3x32x64xf32, #tpu.memory_space<vmem>>, %arg12: memref<3x32x64xf32, #tpu.memory_space<vmem>>, %arg13: memref<3x16x64xf32, #tpu.memory_space<vmem>>, %arg14: memref<3x1x64xf32, #tpu.memory_space<vmem>>, %arg15: memref<3x64x64xf32, #tpu.memory_space<vmem>>, %arg16: memref<3x1x64xf32, #tpu.memory_space<vmem>>, %arg17: memref<3x64x32xf32, #tpu.memory_space<vmem>>, %arg18: memref<3x1x32xf32, #tpu.memory_space<vmem>>, %arg19: memref<3x1x32xf32, #tpu.memory_space<vmem>>, %arg20: memref<3x1x32xf32, #tpu.memory_space<vmem>>, %arg21: memref<32x256xf32, #tpu.memory_space<vmem>>, %arg22: memref<1x256xf32, #tpu.memory_space<vmem>>, %arg23: memref<256x512xf32, #tpu.memory_space<vmem>>, %arg24: memref<1x512xf32, #tpu.memory_space<vmem>>, %arg25: memref<512x640xf32, #tpu.memory_space<vmem>>, %arg26: memref<1x640xf32, #tpu.memory_space<vmem>>, %arg27: memref<16x640xf32, #tpu.memory_space<vmem>>, %arg28: memref<16x128xf32, #tpu.memory_space<vmem>>, %arg29: memref<8x128xf32, #tpu.memory_space<vmem>>) attributes {dimension_semantics = [], scalar_prefetch = 0 : i64, scratch_operands = 0 : i64, tpu.core_type = #tpu.core_type<tc>} {
    %c0 = arith.constant 0 : index
    %c0_0 = arith.constant 0 : index
    %0 = vector.load %arg0[%c0, %c0_0] : memref<16x32xf32, #tpu.memory_space<vmem>>, vector<16x32xf32>
    %c0_1 = arith.constant 0 : index
    %c0_2 = arith.constant 0 : index
    %1 = vector.load %arg7[%c0_1, %c0_2] : memref<32x32xf32, #tpu.memory_space<vmem>>, vector<32x32xf32>
    %cst = arith.constant dense<0.000000e+00> : vector<16x32xf32>
    %2 = tpu.matmul %0, %1, %cst {dimension_numbers = #tpu.dot_dimension_numbers<[1], [0], [0], [1], [0, 0, 1, 1], [], []>} : vector<16x32xf32>, vector<32x32xf32>, vector<16x32xf32> -> vector<16x32xf32>
    %c0_3 = arith.constant 0 : index
    %c0_4 = arith.constant 0 : index
    %3 = vector.load %arg8[%c0_3, %c0_4] : memref<1x32xf32, #tpu.memory_space<vmem>>, vector<1x32xf32>
    %4 = vector.broadcast %3 : vector<1x32xf32> to vector<16x32xf32>
    %5 = arith.addf %2, %4 : vector<16x32xf32>
    %cst_5 = arith.constant 2.000000e+01 : f32
    %6 = vector.broadcast %cst_5 : f32 to vector<16x32xf32>
    %7 = arith.cmpf ogt, %5, %6 : vector<16x32xf32>
    %8 = math.exp %5 : vector<16x32xf32>
    %9 = math.log1p %8 : vector<16x32xf32>
    %10 = arith.select %7, %5, %9 : vector<16x32xi1>, vector<16x32xf32>
    %c0_6 = arith.constant 0 : index
    %c0_7 = arith.constant 0 : index
    %11 = vector.load %arg9[%c0_6, %c0_7] : memref<32x32xf32, #tpu.memory_space<vmem>>, vector<32x32xf32>
    %cst_8 = arith.constant dense<0.000000e+00> : vector<16x32xf32>
    %12 = tpu.matmul %10, %11, %cst_8 {dimension_numbers = #tpu.dot_dimension_numbers<[1], [0], [0], [1], [0, 0, 1, 1], [], []>} : vector<16x32xf32>, vector<32x32xf32>, vector<16x32xf32> -> vector<16x32xf32>
    %c0_9 = arith.constant 0 : index
    %c0_10 = arith.constant 0 : index
    %13 = vector.load %arg10[%c0_9, %c0_10] : memref<1x32xf32, #tpu.memory_space<vmem>>, vector<1x32xf32>
    %14 = vector.broadcast %13 : vector<1x32xf32> to vector<16x32xf32>
    %15 = arith.addf %12, %14 : vector<16x32xf32>
    %cst_11 = arith.constant 2.000000e+01 : f32
    %16 = vector.broadcast %cst_11 : f32 to vector<16x32xf32>
    %17 = arith.cmpf ogt, %15, %16 : vector<16x32xf32>
    %18 = math.exp %15 : vector<16x32xf32>
    %19 = math.log1p %18 : vector<16x32xf32>
    %20 = arith.select %17, %15, %19 : vector<16x32xi1>, vector<16x32xf32>
    %21 = tpu.iota {dimensions = array<i32: 1>} : vector<24x16xi32>
    %c0_12 = arith.constant 0 : index
    %c0_13 = arith.constant 0 : index
    %22 = vector.load %arg2[%c0_12, %c0_13] : memref<24x1xi32, #tpu.memory_space<vmem>>, vector<24x1xi32>
    %23 = vector.broadcast %22 : vector<24x1xi32> to vector<24x16xi32>
    %24 = arith.cmpi eq, %23, %21 : vector<24x16xi32>
    %25 = arith.extui %24 : vector<24x16xi1> to vector<24x16xi32>
    %26 = arith.sitofp %25 : vector<24x16xi32> to vector<24x16xf32>
    %27 = arith.truncf %26 : vector<24x16xf32> to vector<24x16xbf16>
    %c0_14 = arith.constant 0 : index
    %c0_15 = arith.constant 0 : index
    %28 = vector.load %arg3[%c0_14, %c0_15] : memref<24x1xi32, #tpu.memory_space<vmem>>, vector<24x1xi32>
    %29 = vector.broadcast %28 : vector<24x1xi32> to vector<24x16xi32>
    %30 = arith.cmpi eq, %29, %21 : vector<24x16xi32>
    %31 = arith.extui %30 : vector<24x16xi1> to vector<24x16xi32>
    %32 = arith.sitofp %31 : vector<24x16xi32> to vector<24x16xf32>
    %33 = arith.truncf %32 : vector<24x16xf32> to vector<24x16xbf16>
    %c0_16 = arith.constant 0 : index
    %c0_17 = arith.constant 0 : index
    %34 = vector.load %arg1[%c0_16, %c0_17] : memref<24x16xf32, #tpu.memory_space<vmem>>, vector<24x16xf32>
    %c0_18 = arith.constant 0 : index
    %c0_19 = arith.constant 0 : index
    %c0_20 = arith.constant 0 : index
    %35 = vector.load %arg11[%c0_18, %c0_19, %c0_20] : memref<3x32x64xf32, #tpu.memory_space<vmem>>, vector<1x32x64xf32>
    %36 = vector.shape_cast %35 : vector<1x32x64xf32> to vector<32x64xf32>
    %cst_21 = arith.constant dense<0.000000e+00> : vector<16x64xf32>
    %37 = tpu.matmul %20, %36, %cst_21 {dimension_numbers = #tpu.dot_dimension_numbers<[1], [0], [0], [1], [0, 0, 1, 1], [], []>} : vector<16x32xf32>, vector<32x64xf32>, vector<16x64xf32> -> vector<16x64xf32>
    %38 = arith.truncf %37 : vector<16x64xf32> to vector<16x64xbf16>
    %c0_22 = arith.constant 0 : index
    %c0_23 = arith.constant 0 : index
    %c0_24 = arith.constant 0 : index
    %39 = vector.load %arg12[%c0_22, %c0_23, %c0_24] : memref<3x32x64xf32, #tpu.memory_space<vmem>>, vector<1x32x64xf32>
    %40 = vector.shape_cast %39 : vector<1x32x64xf32> to vector<32x64xf32>
    %cst_25 = arith.constant dense<0.000000e+00> : vector<16x64xf32>
    %41 = tpu.matmul %20, %40, %cst_25 {dimension_numbers = #tpu.dot_dimension_numbers<[1], [0], [0], [1], [0, 0, 1, 1], [], []>} : vector<16x32xf32>, vector<32x64xf32>, vector<16x64xf32> -> vector<16x64xf32>
    %42 = arith.truncf %41 : vector<16x64xf32> to vector<16x64xbf16>
    %cst_26 = arith.constant dense<0.000000e+00> : vector<24x64xf32>
    %43 = tpu.matmul %27, %38, %cst_26 {dimension_numbers = #tpu.dot_dimension_numbers<[1], [0], [0], [1], [0, 0, 1, 1], [], []>} : vector<24x16xbf16>, vector<16x64xbf16>, vector<24x64xf32> -> vector<24x64xf32>
    %cst_27 = arith.constant dense<0.000000e+00> : vector<24x64xf32>
    %44 = tpu.matmul %33, %42, %cst_27 {dimension_numbers = #tpu.dot_dimension_numbers<[1], [0], [0], [1], [0, 0, 1, 1], [], []>} : vector<24x16xbf16>, vector<16x64xbf16>, vector<24x64xf32> -> vector<24x64xf32>
    %45 = arith.addf %43, %44 : vector<24x64xf32>
    %c0_28 = arith.constant 0 : index
    %c0_29 = arith.constant 0 : index
    %c0_30 = arith.constant 0 : index
    %46 = vector.load %arg13[%c0_28, %c0_29, %c0_30] : memref<3x16x64xf32, #tpu.memory_space<vmem>>, vector<1x16x64xf32>
    %47 = vector.shape_cast %46 : vector<1x16x64xf32> to vector<16x64xf32>
    %cst_31 = arith.constant dense<0.000000e+00> : vector<24x64xf32>
    %48 = tpu.matmul %34, %47, %cst_31 {dimension_numbers = #tpu.dot_dimension_numbers<[1], [0], [0], [1], [0, 0, 1, 1], [], []>} : vector<24x16xf32>, vector<16x64xf32>, vector<24x64xf32> -> vector<24x64xf32>
    %49 = arith.addf %45, %48 : vector<24x64xf32>
    %c0_32 = arith.constant 0 : index
    %c0_33 = arith.constant 0 : index
    %c0_34 = arith.constant 0 : index
    %50 = vector.load %arg14[%c0_32, %c0_33, %c0_34] : memref<3x1x64xf32, #tpu.memory_space<vmem>>, vector<1x1x64xf32>
    %51 = vector.shape_cast %50 : vector<1x1x64xf32> to vector<1x64xf32>
    %52 = vector.broadcast %51 : vector<1x64xf32> to vector<24x64xf32>
    %53 = arith.addf %49, %52 : vector<24x64xf32>
    %cst_35 = arith.constant 2.000000e+01 : f32
    %54 = vector.broadcast %cst_35 : f32 to vector<24x64xf32>
    %55 = arith.cmpf ogt, %53, %54 : vector<24x64xf32>
    %56 = math.exp %53 : vector<24x64xf32>
    %57 = math.log1p %56 : vector<24x64xf32>
    %58 = arith.select %55, %53, %57 : vector<24x64xi1>, vector<24x64xf32>
    %c0_36 = arith.constant 0 : index
    %c0_37 = arith.constant 0 : index
    %c0_38 = arith.constant 0 : index
    %59 = vector.load %arg15[%c0_36, %c0_37, %c0_38] : memref<3x64x64xf32, #tpu.memory_space<vmem>>, vector<1x64x64xf32>
    %60 = vector.shape_cast %59 : vector<1x64x64xf32> to vector<64x64xf32>
    %cst_39 = arith.constant dense<0.000000e+00> : vector<24x64xf32>
    %61 = tpu.matmul %58, %60, %cst_39 {dimension_numbers = #tpu.dot_dimension_numbers<[1], [0], [0], [1], [0, 0, 1, 1], [], []>} : vector<24x64xf32>, vector<64x64xf32>, vector<24x64xf32> -> vector<24x64xf32>
    %c0_40 = arith.constant 0 : index
    %c0_41 = arith.constant 0 : index
    %c0_42 = arith.constant 0 : index
    %62 = vector.load %arg16[%c0_40, %c0_41, %c0_42] : memref<3x1x64xf32, #tpu.memory_space<vmem>>, vector<1x1x64xf32>
    %63 = vector.shape_cast %62 : vector<1x1x64xf32> to vector<1x64xf32>
    %64 = vector.broadcast %63 : vector<1x64xf32> to vector<24x64xf32>
    %65 = arith.addf %61, %64 : vector<24x64xf32>
    %cst_43 = arith.constant 2.000000e+01 : f32
    %66 = vector.broadcast %cst_43 : f32 to vector<24x64xf32>
    %67 = arith.cmpf ogt, %65, %66 : vector<24x64xf32>
    %68 = math.exp %65 : vector<24x64xf32>
    %69 = math.log1p %68 : vector<24x64xf32>
    %70 = arith.select %67, %65, %69 : vector<24x64xi1>, vector<24x64xf32>
    %c0_44 = arith.constant 0 : index
    %c0_45 = arith.constant 0 : index
    %c0_46 = arith.constant 0 : index
    %71 = vector.load %arg17[%c0_44, %c0_45, %c0_46] : memref<3x64x32xf32, #tpu.memory_space<vmem>>, vector<1x64x32xf32>
    %72 = vector.shape_cast %71 : vector<1x64x32xf32> to vector<64x32xf32>
    %cst_47 = arith.constant dense<0.000000e+00> : vector<24x32xf32>
    %73 = tpu.matmul %70, %72, %cst_47 {dimension_numbers = #tpu.dot_dimension_numbers<[1], [0], [0], [1], [0, 0, 1, 1], [], []>} : vector<24x64xf32>, vector<64x32xf32>, vector<24x32xf32> -> vector<24x32xf32>
    %c0_48 = arith.constant 0 : index
    %c0_49 = arith.constant 0 : index
    %c0_50 = arith.constant 0 : index
    %74 = vector.load %arg18[%c0_48, %c0_49, %c0_50] : memref<3x1x32xf32, #tpu.memory_space<vmem>>, vector<1x1x32xf32>
    %75 = vector.shape_cast %74 : vector<1x1x32xf32> to vector<1x32xf32>
    %76 = vector.broadcast %75 : vector<1x32xf32> to vector<24x32xf32>
    %77 = arith.addf %73, %76 : vector<24x32xf32>
    %cst_51 = arith.constant 2.000000e+01 : f32
    %78 = vector.broadcast %cst_51 : f32 to vector<24x32xf32>
    %79 = arith.cmpf ogt, %77, %78 : vector<24x32xf32>
    %80 = math.exp %77 : vector<24x32xf32>
    %81 = math.log1p %80 : vector<24x32xf32>
    %82 = arith.select %79, %77, %81 : vector<24x32xi1>, vector<24x32xf32>
    %83 = arith.truncf %82 : vector<24x32xf32> to vector<24x32xbf16>
    %cst_52 = arith.constant dense<0.000000e+00> : vector<16x32xf32>
    %84 = tpu.matmul %27, %83, %cst_52 {dimension_numbers = #tpu.dot_dimension_numbers<[0], [0], [1], [1], [0, 1, 1, 1], [], []>} : vector<24x16xbf16>, vector<24x32xbf16>, vector<16x32xf32> -> vector<16x32xf32>
    %c0_53 = arith.constant 0 : index
    %c0_54 = arith.constant 0 : index
    %c0_55 = arith.constant 0 : index
    %85 = vector.load %arg19[%c0_53, %c0_54, %c0_55] : memref<3x1x32xf32, #tpu.memory_space<vmem>>, vector<1x1x32xf32>
    %86 = vector.shape_cast %85 : vector<1x1x32xf32> to vector<1x32xf32>
    %87 = vector.broadcast %86 : vector<1x32xf32> to vector<16x32xf32>
    %88 = arith.mulf %84, %87 : vector<16x32xf32>
    %c0_56 = arith.constant 0 : index
    %c0_57 = arith.constant 0 : index
    %c0_58 = arith.constant 0 : index
    %89 = vector.load %arg20[%c0_56, %c0_57, %c0_58] : memref<3x1x32xf32, #tpu.memory_space<vmem>>, vector<1x1x32xf32>
    %90 = vector.shape_cast %89 : vector<1x1x32xf32> to vector<1x32xf32>
    %91 = vector.broadcast %90 : vector<1x32xf32> to vector<16x32xf32>
    %92 = arith.addf %88, %91 : vector<16x32xf32>
    %93 = arith.addf %92, %20 : vector<16x32xf32>
    %cst_59 = arith.constant 2.000000e+01 : f32
    %94 = vector.broadcast %cst_59 : f32 to vector<16x32xf32>
    %95 = arith.cmpf ogt, %93, %94 : vector<16x32xf32>
    %96 = math.exp %93 : vector<16x32xf32>
    %97 = math.log1p %96 : vector<16x32xf32>
    %98 = arith.select %95, %93, %97 : vector<16x32xi1>, vector<16x32xf32>
    %c1 = arith.constant 1 : index
    %c0_60 = arith.constant 0 : index
    %c0_61 = arith.constant 0 : index
    %99 = vector.load %arg11[%c1, %c0_60, %c0_61] : memref<3x32x64xf32, #tpu.memory_space<vmem>>, vector<1x32x64xf32>
    %100 = vector.shape_cast %99 : vector<1x32x64xf32> to vector<32x64xf32>
    %cst_62 = arith.constant dense<0.000000e+00> : vector<16x64xf32>
    %101 = tpu.matmul %98, %100, %cst_62 {dimension_numbers = #tpu.dot_dimension_numbers<[1], [0], [0], [1], [0, 0, 1, 1], [], []>} : vector<16x32xf32>, vector<32x64xf32>, vector<16x64xf32> -> vector<16x64xf32>
    %102 = arith.truncf %101 : vector<16x64xf32> to vector<16x64xbf16>
    %c1_63 = arith.constant 1 : index
    %c0_64 = arith.constant 0 : index
    %c0_65 = arith.constant 0 : index
    %103 = vector.load %arg12[%c1_63, %c0_64, %c0_65] : memref<3x32x64xf32, #tpu.memory_space<vmem>>, vector<1x32x64xf32>
    %104 = vector.shape_cast %103 : vector<1x32x64xf32> to vector<32x64xf32>
    %cst_66 = arith.constant dense<0.000000e+00> : vector<16x64xf32>
    %105 = tpu.matmul %98, %104, %cst_66 {dimension_numbers = #tpu.dot_dimension_numbers<[1], [0], [0], [1], [0, 0, 1, 1], [], []>} : vector<16x32xf32>, vector<32x64xf32>, vector<16x64xf32> -> vector<16x64xf32>
    %106 = arith.truncf %105 : vector<16x64xf32> to vector<16x64xbf16>
    %cst_67 = arith.constant dense<0.000000e+00> : vector<24x64xf32>
    %107 = tpu.matmul %27, %102, %cst_67 {dimension_numbers = #tpu.dot_dimension_numbers<[1], [0], [0], [1], [0, 0, 1, 1], [], []>} : vector<24x16xbf16>, vector<16x64xbf16>, vector<24x64xf32> -> vector<24x64xf32>
    %cst_68 = arith.constant dense<0.000000e+00> : vector<24x64xf32>
    %108 = tpu.matmul %33, %106, %cst_68 {dimension_numbers = #tpu.dot_dimension_numbers<[1], [0], [0], [1], [0, 0, 1, 1], [], []>} : vector<24x16xbf16>, vector<16x64xbf16>, vector<24x64xf32> -> vector<24x64xf32>
    %109 = arith.addf %107, %108 : vector<24x64xf32>
    %c1_69 = arith.constant 1 : index
    %c0_70 = arith.constant 0 : index
    %c0_71 = arith.constant 0 : index
    %110 = vector.load %arg13[%c1_69, %c0_70, %c0_71] : memref<3x16x64xf32, #tpu.memory_space<vmem>>, vector<1x16x64xf32>
    %111 = vector.shape_cast %110 : vector<1x16x64xf32> to vector<16x64xf32>
    %cst_72 = arith.constant dense<0.000000e+00> : vector<24x64xf32>
    %112 = tpu.matmul %34, %111, %cst_72 {dimension_numbers = #tpu.dot_dimension_numbers<[1], [0], [0], [1], [0, 0, 1, 1], [], []>} : vector<24x16xf32>, vector<16x64xf32>, vector<24x64xf32> -> vector<24x64xf32>
    %113 = arith.addf %109, %112 : vector<24x64xf32>
    %c1_73 = arith.constant 1 : index
    %c0_74 = arith.constant 0 : index
    %c0_75 = arith.constant 0 : index
    %114 = vector.load %arg14[%c1_73, %c0_74, %c0_75] : memref<3x1x64xf32, #tpu.memory_space<vmem>>, vector<1x1x64xf32>
    %115 = vector.shape_cast %114 : vector<1x1x64xf32> to vector<1x64xf32>
    %116 = vector.broadcast %115 : vector<1x64xf32> to vector<24x64xf32>
    %117 = arith.addf %113, %116 : vector<24x64xf32>
    %cst_76 = arith.constant 2.000000e+01 : f32
    %118 = vector.broadcast %cst_76 : f32 to vector<24x64xf32>
    %119 = arith.cmpf ogt, %117, %118 : vector<24x64xf32>
    %120 = math.exp %117 : vector<24x64xf32>
    %121 = math.log1p %120 : vector<24x64xf32>
    %122 = arith.select %119, %117, %121 : vector<24x64xi1>, vector<24x64xf32>
    %c1_77 = arith.constant 1 : index
    %c0_78 = arith.constant 0 : index
    %c0_79 = arith.constant 0 : index
    %123 = vector.load %arg15[%c1_77, %c0_78, %c0_79] : memref<3x64x64xf32, #tpu.memory_space<vmem>>, vector<1x64x64xf32>
    %124 = vector.shape_cast %123 : vector<1x64x64xf32> to vector<64x64xf32>
    %cst_80 = arith.constant dense<0.000000e+00> : vector<24x64xf32>
    %125 = tpu.matmul %122, %124, %cst_80 {dimension_numbers = #tpu.dot_dimension_numbers<[1], [0], [0], [1], [0, 0, 1, 1], [], []>} : vector<24x64xf32>, vector<64x64xf32>, vector<24x64xf32> -> vector<24x64xf32>
    %c1_81 = arith.constant 1 : index
    %c0_82 = arith.constant 0 : index
    %c0_83 = arith.constant 0 : index
    %126 = vector.load %arg16[%c1_81, %c0_82, %c0_83] : memref<3x1x64xf32, #tpu.memory_space<vmem>>, vector<1x1x64xf32>
    %127 = vector.shape_cast %126 : vector<1x1x64xf32> to vector<1x64xf32>
    %128 = vector.broadcast %127 : vector<1x64xf32> to vector<24x64xf32>
    %129 = arith.addf %125, %128 : vector<24x64xf32>
    %cst_84 = arith.constant 2.000000e+01 : f32
    %130 = vector.broadcast %cst_84 : f32 to vector<24x64xf32>
    %131 = arith.cmpf ogt, %129, %130 : vector<24x64xf32>
    %132 = math.exp %129 : vector<24x64xf32>
    %133 = math.log1p %132 : vector<24x64xf32>
    %134 = arith.select %131, %129, %133 : vector<24x64xi1>, vector<24x64xf32>
    %c1_85 = arith.constant 1 : index
    %c0_86 = arith.constant 0 : index
    %c0_87 = arith.constant 0 : index
    %135 = vector.load %arg17[%c1_85, %c0_86, %c0_87] : memref<3x64x32xf32, #tpu.memory_space<vmem>>, vector<1x64x32xf32>
    %136 = vector.shape_cast %135 : vector<1x64x32xf32> to vector<64x32xf32>
    %cst_88 = arith.constant dense<0.000000e+00> : vector<24x32xf32>
    %137 = tpu.matmul %134, %136, %cst_88 {dimension_numbers = #tpu.dot_dimension_numbers<[1], [0], [0], [1], [0, 0, 1, 1], [], []>} : vector<24x64xf32>, vector<64x32xf32>, vector<24x32xf32> -> vector<24x32xf32>
    %c1_89 = arith.constant 1 : index
    %c0_90 = arith.constant 0 : index
    %c0_91 = arith.constant 0 : index
    %138 = vector.load %arg18[%c1_89, %c0_90, %c0_91] : memref<3x1x32xf32, #tpu.memory_space<vmem>>, vector<1x1x32xf32>
    %139 = vector.shape_cast %138 : vector<1x1x32xf32> to vector<1x32xf32>
    %140 = vector.broadcast %139 : vector<1x32xf32> to vector<24x32xf32>
    %141 = arith.addf %137, %140 : vector<24x32xf32>
    %cst_92 = arith.constant 2.000000e+01 : f32
    %142 = vector.broadcast %cst_92 : f32 to vector<24x32xf32>
    %143 = arith.cmpf ogt, %141, %142 : vector<24x32xf32>
    %144 = math.exp %141 : vector<24x32xf32>
    %145 = math.log1p %144 : vector<24x32xf32>
    %146 = arith.select %143, %141, %145 : vector<24x32xi1>, vector<24x32xf32>
    %147 = arith.truncf %146 : vector<24x32xf32> to vector<24x32xbf16>
    %cst_93 = arith.constant dense<0.000000e+00> : vector<16x32xf32>
    %148 = tpu.matmul %27, %147, %cst_93 {dimension_numbers = #tpu.dot_dimension_numbers<[0], [0], [1], [1], [0, 1, 1, 1], [], []>} : vector<24x16xbf16>, vector<24x32xbf16>, vector<16x32xf32> -> vector<16x32xf32>
    %c1_94 = arith.constant 1 : index
    %c0_95 = arith.constant 0 : index
    %c0_96 = arith.constant 0 : index
    %149 = vector.load %arg19[%c1_94, %c0_95, %c0_96] : memref<3x1x32xf32, #tpu.memory_space<vmem>>, vector<1x1x32xf32>
    %150 = vector.shape_cast %149 : vector<1x1x32xf32> to vector<1x32xf32>
    %151 = vector.broadcast %150 : vector<1x32xf32> to vector<16x32xf32>
    %152 = arith.mulf %148, %151 : vector<16x32xf32>
    %c1_97 = arith.constant 1 : index
    %c0_98 = arith.constant 0 : index
    %c0_99 = arith.constant 0 : index
    %153 = vector.load %arg20[%c1_97, %c0_98, %c0_99] : memref<3x1x32xf32, #tpu.memory_space<vmem>>, vector<1x1x32xf32>
    %154 = vector.shape_cast %153 : vector<1x1x32xf32> to vector<1x32xf32>
    %155 = vector.broadcast %154 : vector<1x32xf32> to vector<16x32xf32>
    %156 = arith.addf %152, %155 : vector<16x32xf32>
    %157 = arith.addf %156, %98 : vector<16x32xf32>
    %cst_100 = arith.constant 2.000000e+01 : f32
    %158 = vector.broadcast %cst_100 : f32 to vector<16x32xf32>
    %159 = arith.cmpf ogt, %157, %158 : vector<16x32xf32>
    %160 = math.exp %157 : vector<16x32xf32>
    %161 = math.log1p %160 : vector<16x32xf32>
    %162 = arith.select %159, %157, %161 : vector<16x32xi1>, vector<16x32xf32>
    %c2 = arith.constant 2 : index
    %c0_101 = arith.constant 0 : index
    %c0_102 = arith.constant 0 : index
    %163 = vector.load %arg11[%c2, %c0_101, %c0_102] : memref<3x32x64xf32, #tpu.memory_space<vmem>>, vector<1x32x64xf32>
    %164 = vector.shape_cast %163 : vector<1x32x64xf32> to vector<32x64xf32>
    %cst_103 = arith.constant dense<0.000000e+00> : vector<16x64xf32>
    %165 = tpu.matmul %162, %164, %cst_103 {dimension_numbers = #tpu.dot_dimension_numbers<[1], [0], [0], [1], [0, 0, 1, 1], [], []>} : vector<16x32xf32>, vector<32x64xf32>, vector<16x64xf32> -> vector<16x64xf32>
    %166 = arith.truncf %165 : vector<16x64xf32> to vector<16x64xbf16>
    %c2_104 = arith.constant 2 : index
    %c0_105 = arith.constant 0 : index
    %c0_106 = arith.constant 0 : index
    %167 = vector.load %arg12[%c2_104, %c0_105, %c0_106] : memref<3x32x64xf32, #tpu.memory_space<vmem>>, vector<1x32x64xf32>
    %168 = vector.shape_cast %167 : vector<1x32x64xf32> to vector<32x64xf32>
    %cst_107 = arith.constant dense<0.000000e+00> : vector<16x64xf32>
    %169 = tpu.matmul %162, %168, %cst_107 {dimension_numbers = #tpu.dot_dimension_numbers<[1], [0], [0], [1], [0, 0, 1, 1], [], []>} : vector<16x32xf32>, vector<32x64xf32>, vector<16x64xf32> -> vector<16x64xf32>
    %170 = arith.truncf %169 : vector<16x64xf32> to vector<16x64xbf16>
    %cst_108 = arith.constant dense<0.000000e+00> : vector<24x64xf32>
    %171 = tpu.matmul %27, %166, %cst_108 {dimension_numbers = #tpu.dot_dimension_numbers<[1], [0], [0], [1], [0, 0, 1, 1], [], []>} : vector<24x16xbf16>, vector<16x64xbf16>, vector<24x64xf32> -> vector<24x64xf32>
    %cst_109 = arith.constant dense<0.000000e+00> : vector<24x64xf32>
    %172 = tpu.matmul %33, %170, %cst_109 {dimension_numbers = #tpu.dot_dimension_numbers<[1], [0], [0], [1], [0, 0, 1, 1], [], []>} : vector<24x16xbf16>, vector<16x64xbf16>, vector<24x64xf32> -> vector<24x64xf32>
    %173 = arith.addf %171, %172 : vector<24x64xf32>
    %c2_110 = arith.constant 2 : index
    %c0_111 = arith.constant 0 : index
    %c0_112 = arith.constant 0 : index
    %174 = vector.load %arg13[%c2_110, %c0_111, %c0_112] : memref<3x16x64xf32, #tpu.memory_space<vmem>>, vector<1x16x64xf32>
    %175 = vector.shape_cast %174 : vector<1x16x64xf32> to vector<16x64xf32>
    %cst_113 = arith.constant dense<0.000000e+00> : vector<24x64xf32>
    %176 = tpu.matmul %34, %175, %cst_113 {dimension_numbers = #tpu.dot_dimension_numbers<[1], [0], [0], [1], [0, 0, 1, 1], [], []>} : vector<24x16xf32>, vector<16x64xf32>, vector<24x64xf32> -> vector<24x64xf32>
    %177 = arith.addf %173, %176 : vector<24x64xf32>
    %c2_114 = arith.constant 2 : index
    %c0_115 = arith.constant 0 : index
    %c0_116 = arith.constant 0 : index
    %178 = vector.load %arg14[%c2_114, %c0_115, %c0_116] : memref<3x1x64xf32, #tpu.memory_space<vmem>>, vector<1x1x64xf32>
    %179 = vector.shape_cast %178 : vector<1x1x64xf32> to vector<1x64xf32>
    %180 = vector.broadcast %179 : vector<1x64xf32> to vector<24x64xf32>
    %181 = arith.addf %177, %180 : vector<24x64xf32>
    %cst_117 = arith.constant 2.000000e+01 : f32
    %182 = vector.broadcast %cst_117 : f32 to vector<24x64xf32>
    %183 = arith.cmpf ogt, %181, %182 : vector<24x64xf32>
    %184 = math.exp %181 : vector<24x64xf32>
    %185 = math.log1p %184 : vector<24x64xf32>
    %186 = arith.select %183, %181, %185 : vector<24x64xi1>, vector<24x64xf32>
    %c2_118 = arith.constant 2 : index
    %c0_119 = arith.constant 0 : index
    %c0_120 = arith.constant 0 : index
    %187 = vector.load %arg15[%c2_118, %c0_119, %c0_120] : memref<3x64x64xf32, #tpu.memory_space<vmem>>, vector<1x64x64xf32>
    %188 = vector.shape_cast %187 : vector<1x64x64xf32> to vector<64x64xf32>
    %cst_121 = arith.constant dense<0.000000e+00> : vector<24x64xf32>
    %189 = tpu.matmul %186, %188, %cst_121 {dimension_numbers = #tpu.dot_dimension_numbers<[1], [0], [0], [1], [0, 0, 1, 1], [], []>} : vector<24x64xf32>, vector<64x64xf32>, vector<24x64xf32> -> vector<24x64xf32>
    %c2_122 = arith.constant 2 : index
    %c0_123 = arith.constant 0 : index
    %c0_124 = arith.constant 0 : index
    %190 = vector.load %arg16[%c2_122, %c0_123, %c0_124] : memref<3x1x64xf32, #tpu.memory_space<vmem>>, vector<1x1x64xf32>
    %191 = vector.shape_cast %190 : vector<1x1x64xf32> to vector<1x64xf32>
    %192 = vector.broadcast %191 : vector<1x64xf32> to vector<24x64xf32>
    %193 = arith.addf %189, %192 : vector<24x64xf32>
    %cst_125 = arith.constant 2.000000e+01 : f32
    %194 = vector.broadcast %cst_125 : f32 to vector<24x64xf32>
    %195 = arith.cmpf ogt, %193, %194 : vector<24x64xf32>
    %196 = math.exp %193 : vector<24x64xf32>
    %197 = math.log1p %196 : vector<24x64xf32>
    %198 = arith.select %195, %193, %197 : vector<24x64xi1>, vector<24x64xf32>
    %c2_126 = arith.constant 2 : index
    %c0_127 = arith.constant 0 : index
    %c0_128 = arith.constant 0 : index
    %199 = vector.load %arg17[%c2_126, %c0_127, %c0_128] : memref<3x64x32xf32, #tpu.memory_space<vmem>>, vector<1x64x32xf32>
    %200 = vector.shape_cast %199 : vector<1x64x32xf32> to vector<64x32xf32>
    %cst_129 = arith.constant dense<0.000000e+00> : vector<24x32xf32>
    %201 = tpu.matmul %198, %200, %cst_129 {dimension_numbers = #tpu.dot_dimension_numbers<[1], [0], [0], [1], [0, 0, 1, 1], [], []>} : vector<24x64xf32>, vector<64x32xf32>, vector<24x32xf32> -> vector<24x32xf32>
    %c2_130 = arith.constant 2 : index
    %c0_131 = arith.constant 0 : index
    %c0_132 = arith.constant 0 : index
    %202 = vector.load %arg18[%c2_130, %c0_131, %c0_132] : memref<3x1x32xf32, #tpu.memory_space<vmem>>, vector<1x1x32xf32>
    %203 = vector.shape_cast %202 : vector<1x1x32xf32> to vector<1x32xf32>
    %204 = vector.broadcast %203 : vector<1x32xf32> to vector<24x32xf32>
    %205 = arith.addf %201, %204 : vector<24x32xf32>
    %cst_133 = arith.constant 2.000000e+01 : f32
    %206 = vector.broadcast %cst_133 : f32 to vector<24x32xf32>
    %207 = arith.cmpf ogt, %205, %206 : vector<24x32xf32>
    %208 = math.exp %205 : vector<24x32xf32>
    %209 = math.log1p %208 : vector<24x32xf32>
    %210 = arith.select %207, %205, %209 : vector<24x32xi1>, vector<24x32xf32>
    %211 = arith.truncf %210 : vector<24x32xf32> to vector<24x32xbf16>
    %cst_134 = arith.constant dense<0.000000e+00> : vector<16x32xf32>
    %212 = tpu.matmul %27, %211, %cst_134 {dimension_numbers = #tpu.dot_dimension_numbers<[0], [0], [1], [1], [0, 1, 1, 1], [], []>} : vector<24x16xbf16>, vector<24x32xbf16>, vector<16x32xf32> -> vector<16x32xf32>
    %c2_135 = arith.constant 2 : index
    %c0_136 = arith.constant 0 : index
    %c0_137 = arith.constant 0 : index
    %213 = vector.load %arg19[%c2_135, %c0_136, %c0_137] : memref<3x1x32xf32, #tpu.memory_space<vmem>>, vector<1x1x32xf32>
    %214 = vector.shape_cast %213 : vector<1x1x32xf32> to vector<1x32xf32>
    %215 = vector.broadcast %214 : vector<1x32xf32> to vector<16x32xf32>
    %216 = arith.mulf %212, %215 : vector<16x32xf32>
    %c2_138 = arith.constant 2 : index
    %c0_139 = arith.constant 0 : index
    %c0_140 = arith.constant 0 : index
    %217 = vector.load %arg20[%c2_138, %c0_139, %c0_140] : memref<3x1x32xf32, #tpu.memory_space<vmem>>, vector<1x1x32xf32>
    %218 = vector.shape_cast %217 : vector<1x1x32xf32> to vector<1x32xf32>
    %219 = vector.broadcast %218 : vector<1x32xf32> to vector<16x32xf32>
    %220 = arith.addf %216, %219 : vector<16x32xf32>
    %221 = arith.addf %220, %162 : vector<16x32xf32>
    %cst_141 = arith.constant 2.000000e+01 : f32
    %222 = vector.broadcast %cst_141 : f32 to vector<16x32xf32>
    %223 = arith.cmpf ogt, %221, %222 : vector<16x32xf32>
    %224 = math.exp %221 : vector<16x32xf32>
    %225 = math.log1p %224 : vector<16x32xf32>
    %226 = arith.select %223, %221, %225 : vector<16x32xi1>, vector<16x32xf32>
    %c0_142 = arith.constant 0 : index
    %c0_143 = arith.constant 0 : index
    %227 = vector.load %arg21[%c0_142, %c0_143] : memref<32x256xf32, #tpu.memory_space<vmem>>, vector<32x256xf32>
    %cst_144 = arith.constant dense<0.000000e+00> : vector<16x256xf32>
    %228 = tpu.matmul %226, %227, %cst_144 {dimension_numbers = #tpu.dot_dimension_numbers<[1], [0], [0], [1], [0, 0, 1, 1], [], []>} : vector<16x32xf32>, vector<32x256xf32>, vector<16x256xf32> -> vector<16x256xf32>
    %c0_145 = arith.constant 0 : index
    %c0_146 = arith.constant 0 : index
    %229 = vector.load %arg22[%c0_145, %c0_146] : memref<1x256xf32, #tpu.memory_space<vmem>>, vector<1x256xf32>
    %230 = vector.broadcast %229 : vector<1x256xf32> to vector<16x256xf32>
    %231 = arith.addf %228, %230 : vector<16x256xf32>
    %cst_147 = arith.constant 2.000000e+01 : f32
    %232 = vector.broadcast %cst_147 : f32 to vector<16x256xf32>
    %233 = arith.cmpf ogt, %231, %232 : vector<16x256xf32>
    %234 = math.exp %231 : vector<16x256xf32>
    %235 = math.log1p %234 : vector<16x256xf32>
    %236 = arith.select %233, %231, %235 : vector<16x256xi1>, vector<16x256xf32>
    %c0_148 = arith.constant 0 : index
    %c0_149 = arith.constant 0 : index
    %237 = vector.load %arg23[%c0_148, %c0_149] : memref<256x512xf32, #tpu.memory_space<vmem>>, vector<256x512xf32>
    %cst_150 = arith.constant dense<0.000000e+00> : vector<16x512xf32>
    %238 = tpu.matmul %236, %237, %cst_150 {dimension_numbers = #tpu.dot_dimension_numbers<[1], [0], [0], [1], [0, 0, 1, 1], [], []>} : vector<16x256xf32>, vector<256x512xf32>, vector<16x512xf32> -> vector<16x512xf32>
    %c0_151 = arith.constant 0 : index
    %c0_152 = arith.constant 0 : index
    %239 = vector.load %arg24[%c0_151, %c0_152] : memref<1x512xf32, #tpu.memory_space<vmem>>, vector<1x512xf32>
    %240 = vector.broadcast %239 : vector<1x512xf32> to vector<16x512xf32>
    %241 = arith.addf %238, %240 : vector<16x512xf32>
    %cst_153 = arith.constant 2.000000e+01 : f32
    %242 = vector.broadcast %cst_153 : f32 to vector<16x512xf32>
    %243 = arith.cmpf ogt, %241, %242 : vector<16x512xf32>
    %244 = math.exp %241 : vector<16x512xf32>
    %245 = math.log1p %244 : vector<16x512xf32>
    %246 = arith.select %243, %241, %245 : vector<16x512xi1>, vector<16x512xf32>
    %c0_154 = arith.constant 0 : index
    %c0_155 = arith.constant 0 : index
    %247 = vector.load %arg25[%c0_154, %c0_155] : memref<512x640xf32, #tpu.memory_space<vmem>>, vector<512x640xf32>
    %cst_156 = arith.constant dense<0.000000e+00> : vector<16x640xf32>
    %248 = tpu.matmul %246, %247, %cst_156 {dimension_numbers = #tpu.dot_dimension_numbers<[1], [0], [0], [1], [0, 0, 1, 1], [], []>} : vector<16x512xf32>, vector<512x640xf32>, vector<16x640xf32> -> vector<16x640xf32>
    %c0_157 = arith.constant 0 : index
    %c0_158 = arith.constant 0 : index
    %249 = vector.load %arg26[%c0_157, %c0_158] : memref<1x640xf32, #tpu.memory_space<vmem>>, vector<1x640xf32>
    %250 = vector.broadcast %249 : vector<1x640xf32> to vector<16x640xf32>
    %251 = arith.addf %248, %250 : vector<16x640xf32>
    %252 = math.absf %251 : vector<16x640xf32>
    %cst_159 = arith.constant 0.000000e+00 : f32
    %253 = vector.broadcast %cst_159 : f32 to vector<16x640xf32>
    %254 = arith.subf %253, %252 : vector<16x640xf32>
    %255 = math.exp %254 : vector<16x640xf32>
    %cst_160 = arith.constant 1.000000e+00 : f32
    %256 = vector.broadcast %cst_160 : f32 to vector<16x640xf32>
    %257 = arith.addf %256, %255 : vector<16x640xf32>
    %cst_161 = arith.constant 1.000000e+00 : f32
    %258 = vector.broadcast %cst_161 : f32 to vector<16x640xf32>
    %259 = arith.divf %258, %257 : vector<16x640xf32>
    %cst_162 = arith.constant 0.000000e+00 : f32
    %260 = vector.broadcast %cst_162 : f32 to vector<16x640xf32>
    %261 = arith.cmpf oge, %251, %260 : vector<16x640xf32>
    %262 = arith.mulf %255, %259 : vector<16x640xf32>
    %263 = arith.select %261, %259, %262 : vector<16x640xi1>, vector<16x640xf32>
    %c0_163 = arith.constant 0 : index
    %c0_164 = arith.constant 0 : index
    %264 = vector.load %arg27[%c0_163, %c0_164] : memref<16x640xf32, #tpu.memory_space<vmem>>, vector<16x640xf32>
    tpu.vector_store %arg27[%c0_163, %c0_164], %263 {strides = array<i32>} : memref<16x640xf32, #tpu.memory_space<vmem>>, vector<16x640xf32>,
    %265 = arith.truncf %263 : vector<16x640xf32> to vector<16x640xbf16>
    %c0_165 = arith.constant 0 : index
    %c0_166 = arith.constant 0 : index
    %266 = vector.load %arg6[%c0_165, %c0_166] : memref<640x1152xbf16, #tpu.memory_space<vmem>>, vector<640x1152xbf16>
    %cst_167 = arith.constant dense<0.000000e+00> : vector<16x1152xf32>
    %267 = tpu.matmul %265, %266, %cst_167 {dimension_numbers = #tpu.dot_dimension_numbers<[1], [0], [0], [1], [0, 0, 1, 1], [], []>} : vector<16x640xbf16>, vector<640x1152xbf16>, vector<16x1152xf32> -> vector<16x1152xf32>
    %268 = vector.extract_strided_slice %267 {offsets = [0, 0], sizes = [16, 128], strides = [1, 1]} : vector<16x1152xf32> to vector<16x128xf32>
    %269 = vector.extract_strided_slice %267 {offsets = [0, 128], sizes = [16, 128], strides = [1, 1]} : vector<16x1152xf32> to vector<16x128xf32>
    %270 = arith.addf %268, %269 : vector<16x128xf32>
    %271 = vector.extract_strided_slice %267 {offsets = [0, 256], sizes = [16, 128], strides = [1, 1]} : vector<16x1152xf32> to vector<16x128xf32>
    %272 = arith.addf %270, %271 : vector<16x128xf32>
    %273 = vector.extract_strided_slice %267 {offsets = [0, 384], sizes = [16, 128], strides = [1, 1]} : vector<16x1152xf32> to vector<16x128xf32>
    %274 = arith.addf %272, %273 : vector<16x128xf32>
    %275 = vector.extract_strided_slice %267 {offsets = [0, 512], sizes = [16, 128], strides = [1, 1]} : vector<16x1152xf32> to vector<16x128xf32>
    %276 = arith.addf %274, %275 : vector<16x128xf32>
    %277 = vector.extract_strided_slice %267 {offsets = [0, 640], sizes = [16, 128], strides = [1, 1]} : vector<16x1152xf32> to vector<16x128xf32>
    %278 = arith.addf %276, %277 : vector<16x128xf32>
    %279 = vector.extract_strided_slice %267 {offsets = [0, 768], sizes = [16, 128], strides = [1, 1]} : vector<16x1152xf32> to vector<16x128xf32>
    %280 = arith.addf %278, %279 : vector<16x128xf32>
    %281 = vector.extract_strided_slice %267 {offsets = [0, 896], sizes = [16, 128], strides = [1, 1]} : vector<16x1152xf32> to vector<16x128xf32>
    %282 = arith.addf %280, %281 : vector<16x128xf32>
    %283 = vector.extract_strided_slice %267 {offsets = [0, 1024], sizes = [16, 128], strides = [1, 1]} : vector<16x1152xf32> to vector<16x128xf32>
    %284 = arith.addf %282, %283 : vector<16x128xf32>
    %285 = tpu.iota {dimensions = array<i32: 0>} : vector<8x16xi32>
    %c0_168 = arith.constant 0 : index
    %c0_169 = arith.constant 0 : index
    %286 = vector.load %arg4[%c0_168, %c0_169] : memref<1x16xi32, #tpu.memory_space<vmem>>, vector<1x16xi32>
    %287 = vector.broadcast %286 : vector<1x16xi32> to vector<8x16xi32>
    %288 = arith.cmpi eq, %287, %285 : vector<8x16xi32>
    %289 = arith.extui %288 : vector<8x16xi1> to vector<8x16xi32>
    %290 = arith.sitofp %289 : vector<8x16xi32> to vector<8x16xf32>
    %291 = arith.truncf %290 : vector<8x16xf32> to vector<8x16xbf16>
    %292 = arith.truncf %284 : vector<16x128xf32> to vector<16x128xbf16>
    %cst_170 = arith.constant dense<0.000000e+00> : vector<8x128xf32>
    %293 = tpu.matmul %291, %292, %cst_170 {dimension_numbers = #tpu.dot_dimension_numbers<[1], [0], [0], [1], [0, 0, 1, 1], [], []>} : vector<8x16xbf16>, vector<16x128xbf16>, vector<8x128xf32> -> vector<8x128xf32>
    %c0_171 = arith.constant 0 : index
    %c0_172 = arith.constant 0 : index
    %294 = vector.load %arg29[%c0_171, %c0_172] : memref<8x128xf32, #tpu.memory_space<vmem>>, vector<8x128xf32>
    tpu.vector_store %arg29[%c0_171, %c0_172], %293 {strides = array<i32>} : memref<8x128xf32, #tpu.memory_space<vmem>>, vector<8x128xf32>,
    %295 = tpu.iota {dimensions = array<i32: 0>} : vector<16x16xi32>
    %c0_173 = arith.constant 0 : index
    %c0_174 = arith.constant 0 : index
    %296 = vector.load %arg5[%c0_173, %c0_174] : memref<16x16xi32, #tpu.memory_space<vmem>>, vector<16x16xi32>
    %cst_175 = arith.constant 0.000000e+00 : f32
    %297 = vector.broadcast %cst_175 : f32 to vector<16x128xf32>
    %298 = vector.extract_strided_slice %296 {offsets = [0, 0], sizes = [1, 16], strides = [1, 1]} : vector<16x16xi32> to vector<1x16xi32>
    %299 = vector.broadcast %298 : vector<1x16xi32> to vector<16x16xi32>
    %300 = arith.cmpi eq, %299, %295 : vector<16x16xi32>
    %301 = arith.extui %300 : vector<16x16xi1> to vector<16x16xi32>
    %302 = arith.sitofp %301 : vector<16x16xi32> to vector<16x16xf32>
    %303 = arith.truncf %302 : vector<16x16xf32> to vector<16x16xbf16>
    %304 = vector.extract_strided_slice %267 {offsets = [0, 0], sizes = [16, 128], strides = [1, 1]} : vector<16x1152xf32> to vector<16x128xf32>
    %305 = arith.truncf %304 : vector<16x128xf32> to vector<16x128xbf16>
    %cst_176 = arith.constant dense<0.000000e+00> : vector<16x128xf32>
    %306 = tpu.matmul %303, %305, %cst_176 {dimension_numbers = #tpu.dot_dimension_numbers<[1], [0], [0], [1], [0, 0, 1, 1], [], []>} : vector<16x16xbf16>, vector<16x128xbf16>, vector<16x128xf32> -> vector<16x128xf32>
    %307 = arith.addf %297, %306 : vector<16x128xf32>
    %308 = vector.extract_strided_slice %296 {offsets = [1, 0], sizes = [1, 16], strides = [1, 1]} : vector<16x16xi32> to vector<1x16xi32>
    %309 = vector.broadcast %308 : vector<1x16xi32> to vector<16x16xi32>
    %310 = arith.cmpi eq, %309, %295 : vector<16x16xi32>
    %311 = arith.extui %310 : vector<16x16xi1> to vector<16x16xi32>
    %312 = arith.sitofp %311 : vector<16x16xi32> to vector<16x16xf32>
    %313 = arith.truncf %312 : vector<16x16xf32> to vector<16x16xbf16>
    %314 = vector.extract_strided_slice %267 {offsets = [0, 128], sizes = [16, 128], strides = [1, 1]} : vector<16x1152xf32> to vector<16x128xf32>
    %315 = arith.truncf %314 : vector<16x128xf32> to vector<16x128xbf16>
    %cst_177 = arith.constant dense<0.000000e+00> : vector<16x128xf32>
    %316 = tpu.matmul %313, %315, %cst_177 {dimension_numbers = #tpu.dot_dimension_numbers<[1], [0], [0], [1], [0, 0, 1, 1], [], []>} : vector<16x16xbf16>, vector<16x128xbf16>, vector<16x128xf32> -> vector<16x128xf32>
    %317 = arith.addf %307, %316 : vector<16x128xf32>
    %318 = vector.extract_strided_slice %296 {offsets = [2, 0], sizes = [1, 16], strides = [1, 1]} : vector<16x16xi32> to vector<1x16xi32>
    %319 = vector.broadcast %318 : vector<1x16xi32> to vector<16x16xi32>
    %320 = arith.cmpi eq, %319, %295 : vector<16x16xi32>
    %321 = arith.extui %320 : vector<16x16xi1> to vector<16x16xi32>
    %322 = arith.sitofp %321 : vector<16x16xi32> to vector<16x16xf32>
    %323 = arith.truncf %322 : vector<16x16xf32> to vector<16x16xbf16>
    %324 = vector.extract_strided_slice %267 {offsets = [0, 256], sizes = [16, 128], strides = [1, 1]} : vector<16x1152xf32> to vector<16x128xf32>
    %325 = arith.truncf %324 : vector<16x128xf32> to vector<16x128xbf16>
    %cst_178 = arith.constant dense<0.000000e+00> : vector<16x128xf32>
    %326 = tpu.matmul %323, %325, %cst_178 {dimension_numbers = #tpu.dot_dimension_numbers<[1], [0], [0], [1], [0, 0, 1, 1], [], []>} : vector<16x16xbf16>, vector<16x128xbf16>, vector<16x128xf32> -> vector<16x128xf32>
    %327 = arith.addf %317, %326 : vector<16x128xf32>
    %328 = vector.extract_strided_slice %296 {offsets = [3, 0], sizes = [1, 16], strides = [1, 1]} : vector<16x16xi32> to vector<1x16xi32>
    %329 = vector.broadcast %328 : vector<1x16xi32> to vector<16x16xi32>
    %330 = arith.cmpi eq, %329, %295 : vector<16x16xi32>
    %331 = arith.extui %330 : vector<16x16xi1> to vector<16x16xi32>
    %332 = arith.sitofp %331 : vector<16x16xi32> to vector<16x16xf32>
    %333 = arith.truncf %332 : vector<16x16xf32> to vector<16x16xbf16>
    %334 = vector.extract_strided_slice %267 {offsets = [0, 384], sizes = [16, 128], strides = [1, 1]} : vector<16x1152xf32> to vector<16x128xf32>
    %335 = arith.truncf %334 : vector<16x128xf32> to vector<16x128xbf16>
    %cst_179 = arith.constant dense<0.000000e+00> : vector<16x128xf32>
    %336 = tpu.matmul %333, %335, %cst_179 {dimension_numbers = #tpu.dot_dimension_numbers<[1], [0], [0], [1], [0, 0, 1, 1], [], []>} : vector<16x16xbf16>, vector<16x128xbf16>, vector<16x128xf32> -> vector<16x128xf32>
    %337 = arith.addf %327, %336 : vector<16x128xf32>
    %338 = vector.extract_strided_slice %296 {offsets = [4, 0], sizes = [1, 16], strides = [1, 1]} : vector<16x16xi32> to vector<1x16xi32>
    %339 = vector.broadcast %338 : vector<1x16xi32> to vector<16x16xi32>
    %340 = arith.cmpi eq, %339, %295 : vector<16x16xi32>
    %341 = arith.extui %340 : vector<16x16xi1> to vector<16x16xi32>
    %342 = arith.sitofp %341 : vector<16x16xi32> to vector<16x16xf32>
    %343 = arith.truncf %342 : vector<16x16xf32> to vector<16x16xbf16>
    %344 = vector.extract_strided_slice %267 {offsets = [0, 512], sizes = [16, 128], strides = [1, 1]} : vector<16x1152xf32> to vector<16x128xf32>
    %345 = arith.truncf %344 : vector<16x128xf32> to vector<16x128xbf16>
    %cst_180 = arith.constant dense<0.000000e+00> : vector<16x128xf32>
    %346 = tpu.matmul %343, %345, %cst_180 {dimension_numbers = #tpu.dot_dimension_numbers<[1], [0], [0], [1], [0, 0, 1, 1], [], []>} : vector<16x16xbf16>, vector<16x128xbf16>, vector<16x128xf32> -> vector<16x128xf32>
    %347 = arith.addf %337, %346 : vector<16x128xf32>
    %348 = vector.extract_strided_slice %296 {offsets = [5, 0], sizes = [1, 16], strides = [1, 1]} : vector<16x16xi32> to vector<1x16xi32>
    %349 = vector.broadcast %348 : vector<1x16xi32> to vector<16x16xi32>
    %350 = arith.cmpi eq, %349, %295 : vector<16x16xi32>
    %351 = arith.extui %350 : vector<16x16xi1> to vector<16x16xi32>
    %352 = arith.sitofp %351 : vector<16x16xi32> to vector<16x16xf32>
    %353 = arith.truncf %352 : vector<16x16xf32> to vector<16x16xbf16>
    %354 = vector.extract_strided_slice %267 {offsets = [0, 640], sizes = [16, 128], strides = [1, 1]} : vector<16x1152xf32> to vector<16x128xf32>
    %355 = arith.truncf %354 : vector<16x128xf32> to vector<16x128xbf16>
    %cst_181 = arith.constant dense<0.000000e+00> : vector<16x128xf32>
    %356 = tpu.matmul %353, %355, %cst_181 {dimension_numbers = #tpu.dot_dimension_numbers<[1], [0], [0], [1], [0, 0, 1, 1], [], []>} : vector<16x16xbf16>, vector<16x128xbf16>, vector<16x128xf32> -> vector<16x128xf32>
    %357 = arith.addf %347, %356 : vector<16x128xf32>
    %358 = vector.extract_strided_slice %296 {offsets = [6, 0], sizes = [1, 16], strides = [1, 1]} : vector<16x16xi32> to vector<1x16xi32>
    %359 = vector.broadcast %358 : vector<1x16xi32> to vector<16x16xi32>
    %360 = arith.cmpi eq, %359, %295 : vector<16x16xi32>
    %361 = arith.extui %360 : vector<16x16xi1> to vector<16x16xi32>
    %362 = arith.sitofp %361 : vector<16x16xi32> to vector<16x16xf32>
    %363 = arith.truncf %362 : vector<16x16xf32> to vector<16x16xbf16>
    %364 = vector.extract_strided_slice %267 {offsets = [0, 768], sizes = [16, 128], strides = [1, 1]} : vector<16x1152xf32> to vector<16x128xf32>
    %365 = arith.truncf %364 : vector<16x128xf32> to vector<16x128xbf16>
    %cst_182 = arith.constant dense<0.000000e+00> : vector<16x128xf32>
    %366 = tpu.matmul %363, %365, %cst_182 {dimension_numbers = #tpu.dot_dimension_numbers<[1], [0], [0], [1], [0, 0, 1, 1], [], []>} : vector<16x16xbf16>, vector<16x128xbf16>, vector<16x128xf32> -> vector<16x128xf32>
    %367 = arith.addf %357, %366 : vector<16x128xf32>
    %368 = vector.extract_strided_slice %296 {offsets = [7, 0], sizes = [1, 16], strides = [1, 1]} : vector<16x16xi32> to vector<1x16xi32>
    %369 = vector.broadcast %368 : vector<1x16xi32> to vector<16x16xi32>
    %370 = arith.cmpi eq, %369, %295 : vector<16x16xi32>
    %371 = arith.extui %370 : vector<16x16xi1> to vector<16x16xi32>
    %372 = arith.sitofp %371 : vector<16x16xi32> to vector<16x16xf32>
    %373 = arith.truncf %372 : vector<16x16xf32> to vector<16x16xbf16>
    %374 = vector.extract_strided_slice %267 {offsets = [0, 896], sizes = [16, 128], strides = [1, 1]} : vector<16x1152xf32> to vector<16x128xf32>
    %375 = arith.truncf %374 : vector<16x128xf32> to vector<16x128xbf16>
    %cst_183 = arith.constant dense<0.000000e+00> : vector<16x128xf32>
    %376 = tpu.matmul %373, %375, %cst_183 {dimension_numbers = #tpu.dot_dimension_numbers<[1], [0], [0], [1], [0, 0, 1, 1], [], []>} : vector<16x16xbf16>, vector<16x128xbf16>, vector<16x128xf32> -> vector<16x128xf32>
    %377 = arith.addf %367, %376 : vector<16x128xf32>
    %378 = vector.extract_strided_slice %296 {offsets = [8, 0], sizes = [1, 16], strides = [1, 1]} : vector<16x16xi32> to vector<1x16xi32>
    %379 = vector.broadcast %378 : vector<1x16xi32> to vector<16x16xi32>
    %380 = arith.cmpi eq, %379, %295 : vector<16x16xi32>
    %381 = arith.extui %380 : vector<16x16xi1> to vector<16x16xi32>
    %382 = arith.sitofp %381 : vector<16x16xi32> to vector<16x16xf32>
    %383 = arith.truncf %382 : vector<16x16xf32> to vector<16x16xbf16>
    %384 = vector.extract_strided_slice %267 {offsets = [0, 1024], sizes = [16, 128], strides = [1, 1]} : vector<16x1152xf32> to vector<16x128xf32>
    %385 = arith.truncf %384 : vector<16x128xf32> to vector<16x128xbf16>
    %cst_184 = arith.constant dense<0.000000e+00> : vector<16x128xf32>
    %386 = tpu.matmul %383, %385, %cst_184 {dimension_numbers = #tpu.dot_dimension_numbers<[1], [0], [0], [1], [0, 0, 1, 1], [], []>} : vector<16x16xbf16>, vector<16x128xbf16>, vector<16x128xf32> -> vector<16x128xf32>
    %387 = arith.addf %377, %386 : vector<16x128xf32>
    %c0_185 = arith.constant 0 : index
    %c0_186 = arith.constant 0 : index
    %388 = vector.load %arg28[%c0_185, %c0_186] : memref<16x128xf32, #tpu.memory_space<vmem>>, vector<16x128xf32>
    tpu.vector_store %arg28[%c0_185, %c0_186], %387 {strides = array<i32>} : memref<16x128xf32, #tpu.memory_space<vmem>>, vector<16x128xf32>,
    return
  }
}

</mosaic_0001>

<llo_original>
// kernel: prodosnet_forward.1
$region0: #{prodosnet_forward.1}
  #allocation0 [shape = 'u32[]', space=smem, size = 0x4, offset = 0x4, fixed_abs, tag = 'smem constant byte address 0x4 - core index']
  #allocation1 [shape = 'u32[72,128]{1,0:T(1,128)}', space=vmem, size = 0x9000, scoped, tag = 'internal scratch']
  %s0 = inlined_call_operand.smem [shape: u32[30], index: -1, kind: input, shape index: {}]
  %s1 = sld [smem:[%s0]]
  %s2 = scalar_lea.smem %s0, 1
  %s3 = sld [smem:[%s2]]
  %s4 = scalar_lea.smem %s0, 2
  %s5 = sld [smem:[%s4]]
  %s6 = scalar_lea.smem %s0, 3
  %s7 = sld [smem:[%s6]]
  %s8 = scalar_lea.smem %s0, 4
  %s9 = sld [smem:[%s8]]
  %s10 = scalar_lea.smem %s0, 5
  %s11 = sld [smem:[%s10]]
  %s12 = scalar_lea.smem %s0, 6
  %s13 = sld [smem:[%s12]]
  %s14 = scalar_lea.smem %s0, 7
  %s15 = sld [smem:[%s14]]
  %s16 = scalar_lea.smem %s0, 8
  %s17 = sld [smem:[%s16]]
  %s18 = scalar_lea.smem %s0, 9
  %s19 = sld [smem:[%s18]]
  %s20 = scalar_lea.smem %s0, 10
  %s21 = sld [smem:[%s20]]
  %s22 = scalar_lea.smem %s0, 11
  %s23 = sld [smem:[%s22]]
  %s24 = scalar_lea.smem %s0, 12
  %s25 = sld [smem:[%s24]]
  %s26 = scalar_lea.smem %s0, 13
  %s27 = sld [smem:[%s26]]
  %s28 = scalar_lea.smem %s0, 14
  %s29 = sld [smem:[%s28]]
  %s30 = scalar_lea.smem %s0, 15
  %s31 = sld [smem:[%s30]]
  %s32 = scalar_lea.smem %s0, 16
  %s33 = sld [smem:[%s32]]
  %s34 = scalar_lea.smem %s0, 17
  %s35 = sld [smem:[%s34]]
  %s36 = scalar_lea.smem %s0, 18
  %s37 = sld [smem:[%s36]]
  %s38 = scalar_lea.smem %s0, 19
  %s39 = sld [smem:[%s38]]
  %s40 = scalar_lea.smem %s0, 20
  %s41 = sld [smem:[%s40]]
  %s42 = scalar_lea.smem %s0, 21
  %s43 = sld [smem:[%s42]]
  %s44 = scalar_lea.smem %s0, 22
  %s45 = sld [smem:[%s44]]
  %s46 = scalar_lea.smem %s0, 23
  %s47 = sld [smem:[%s46]]
  %s48 = scalar_lea.smem %s0, 24
  %s49 = sld [smem:[%s48]]
  %s50 = scalar_lea.smem %s0, 25
  %s51 = sld [smem:[%s50]]
  %s52 = scalar_lea.smem %s0, 26
  %s53 = sld [smem:[%s52]]
  %s54 = scalar_lea.smem %s0, 27
  %s55 = sld [smem:[%s54]]
  %s56 = scalar_lea.smem %s0, 28
  %s57 = sld [smem:[%s56]]
  %s58 = scalar_lea.smem %s0, 29
  %s59 = sld [smem:[%s58]]
  %60 = xla_tuple %s55, %s57, %s59
  %s61 = sld [smem:[#allocation0]]
  $region134: #{prodosnet_forward.1} parent=0
    _
  %s63 = ssub.s32 1, %s61
  %s64 = scalar_select 0, %s63, %s61
  $region1: #{prodosnet_forward.1} parent=0
    #allocation2 [shape = 'u8[8192]{0}', space=vmem, size = 0x2000, scoped, tag = 'output window, operand 1, single buffered']
    #allocation3 [shape = 's32[1]{0}', space=sflag, size = 0x4, scoped, tag = 'scoped memory for prodosnet_forward.1']
    %65 = vsyncpa [#allocation3], 0
    // Predicated region
    $region2: #{prodosnet_forward.1} parent=1 // pred_check
      _
    $region3: #{prodosnet_forward.1} parent=1 // pred_check_branch
      %67 = sbr.rel (0) target = $region5
    $region4: #{prodosnet_forward.1} parent=1 // pred_region
      _
    $region5: #{prodosnet_forward.1} parent=1 // pred_fallthru
      _
    // Predicated region
    $region6: #{prodosnet_forward.1} parent=1 // pred_check
      _
    $region7: #{prodosnet_forward.1} parent=1 // pred_check_branch
      %69 = sbr.rel (0) target = $region9
    $region8: #{prodosnet_forward.1} parent=1 // pred_region
      _
    $region9: #{prodosnet_forward.1} parent=1 // pred_fallthru
      _
    // Predicated region
    $region10: #{prodosnet_forward.1} parent=1 // pred_check
      _
    $region11: #{prodosnet_forward.1} parent=1 // pred_check_branch
      %71 = sbr.rel (0) target = $region13
    $region12: #{prodosnet_forward.1} parent=1 // pred_region
      _
    $region13: #{prodosnet_forward.1} parent=1 // pred_fallthru
      _
    // Predicated region
    $region14: #{prodosnet_forward.1} parent=1 // pred_check
      _
    $region15: #{prodosnet_forward.1} parent=1 // pred_check_branch
      %73 = sbr.rel (0) target = $region17
    $region16: #{prodosnet_forward.1} parent=1 // pred_region
      _
    $region17: #{prodosnet_forward.1} parent=1 // pred_fallthru
      _
    // Predicated region
    $region18: #{prodosnet_forward.1} parent=1 // pred_check
      _
    $region19: #{prodosnet_forward.1} parent=1 // pred_check_branch
      %75 = sbr.rel (0) target = $region21
    $region20: #{prodosnet_forward.1} parent=1 // pred_region
      _
    $region21: #{prodosnet_forward.1} parent=1 // pred_fallthru
      _
    // Predicated region
    $region22: #{prodosnet_forward.1} parent=1 // pred_check
      _
    $region23: #{prodosnet_forward.1} parent=1 // pred_check_branch
      %77 = sbr.rel (0) target = $region25
    $region24: #{prodosnet_forward.1} parent=1 // pred_region
      _
    $region25: #{prodosnet_forward.1} parent=1 // pred_fallthru
      _
    // Predicated region
    $region26: #{prodosnet_forward.1} parent=1 // pred_check
      _
    $region27: #{prodosnet_forward.1} parent=1 // pred_check_branch
      %79 = sbr.rel (0) target = $region29
    $region28: #{prodosnet_forward.1} parent=1 // pred_region
      _
    $region29: #{prodosnet_forward.1} parent=1 // pred_fallthru
      _
    // Predicated region
    $region30: #{prodosnet_forward.1} parent=1 // pred_check
      _
    $region31: #{prodosnet_forward.1} parent=1 // pred_check_branch
      %81 = sbr.rel (0) target = $region33
    $region32: #{prodosnet_forward.1} parent=1 // pred_region
      _
    $region33: #{prodosnet_forward.1} parent=1 // pred_fallthru
      _
    // Predicated region
    $region34: #{prodosnet_forward.1} parent=1 // pred_check
      _
    $region35: #{prodosnet_forward.1} parent=1 // pred_check_branch
      %83 = sbr.rel (0) target = $region37
    $region36: #{prodosnet_forward.1} parent=1 // pred_region
      _
    $region37: #{prodosnet_forward.1} parent=1 // pred_fallthru
      _
    // Predicated region
    $region38: #{prodosnet_forward.1} parent=1 // pred_check
      _
    $region39: #{prodosnet_forward.1} parent=1 // pred_check_branch
      %85 = sbr.rel (0) target = $region41
    $region40: #{prodosnet_forward.1} parent=1 // pred_region
      _
    $region41: #{prodosnet_forward.1} parent=1 // pred_fallthru
      _
    // Predicated region
    $region42: #{prodosnet_forward.1} parent=1 // pred_check
      _
    $region43: #{prodosnet_forward.1} parent=1 // pred_check_branch
      %87 = sbr.rel (0) target = $region45
    $region44: #{prodosnet_forward.1} parent=1 // pred_region
      _
    $region45: #{prodosnet_forward.1} parent=1 // pred_fallthru
      _
    // Predicated region
    $region46: #{prodosnet_forward.1} parent=1 // pred_check
      _
    $region47: #{prodosnet_forward.1} parent=1 // pred_check_branch
      %89 = sbr.rel (0) target = $region49
    $region48: #{prodosnet_forward.1} parent=1 // pred_region
      _
    $region49: #{prodosnet_forward.1} parent=1 // pred_fallthru
      _
    // Predicated region
    $region50: #{prodosnet_forward.1} parent=1 // pred_check
      _
    $region51: #{prodosnet_forward.1} parent=1 // pred_check_branch
      %91 = sbr.rel (0) target = $region53
    $region52: #{prodosnet_forward.1} parent=1 // pred_region
      _
    $region53: #{prodosnet_forward.1} parent=1 // pred_fallthru
      _
    // Predicated region
    $region54: #{prodosnet_forward.1} parent=1 // pred_check
      _
    $region55: #{prodosnet_forward.1} parent=1 // pred_check_branch
      %93 = sbr.rel (0) target = $region57
    $region56: #{prodosnet_forward.1} parent=1 // pred_region
      _
    $region57: #{prodosnet_forward.1} parent=1 // pred_fallthru
      _
    // Predicated region
    $region58: #{prodosnet_forward.1} parent=1 // pred_check
      _
    $region59: #{prodosnet_forward.1} parent=1 // pred_check_branch
      %95 = sbr.rel (0) target = $region61
    $region60: #{prodosnet_forward.1} parent=1 // pred_region
      _
    $region61: #{prodosnet_forward.1} parent=1 // pred_fallthru
      _
    // Predicated region
    $region62: #{prodosnet_forward.1} parent=1 // pred_check
      _
    $region63: #{prodosnet_forward.1} parent=1 // pred_check_branch
      %97 = sbr.rel (0) target = $region65
    $region64: #{prodosnet_forward.1} parent=1 // pred_region
      _
    $region65: #{prodosnet_forward.1} parent=1 // pred_fallthru
      _
    // Predicated region
    $region66: #{prodosnet_forward.1} parent=1 // pred_check
      _
    $region67: #{prodosnet_forward.1} parent=1 // pred_check_branch
      %99 = sbr.rel (0) target = $region69
    $region68: #{prodosnet_forward.1} parent=1 // pred_region
      _
    $region69: #{prodosnet_forward.1} parent=1 // pred_fallthru
      _
    // Predicated region
    $region70: #{prodosnet_forward.1} parent=1 // pred_check
      _
    $region71: #{prodosnet_forward.1} parent=1 // pred_check_branch
      %101 = sbr.rel (0) target = $region73
    $region72: #{prodosnet_forward.1} parent=1 // pred_region
      _
    $region73: #{prodosnet_forward.1} parent=1 // pred_fallthru
      _
    // Predicated region
    $region74: #{prodosnet_forward.1} parent=1 // pred_check
      _
    $region75: #{prodosnet_forward.1} parent=1 // pred_check_branch
      %103 = sbr.rel (0) target = $region77
    $region76: #{prodosnet_forward.1} parent=1 // pred_region
      _
    $region77: #{prodosnet_forward.1} parent=1 // pred_fallthru
      _
    // Predicated region
    $region78: #{prodosnet_forward.1} parent=1 // pred_check
      _
    $region79: #{prodosnet_forward.1} parent=1 // pred_check_branch
      %105 = sbr.rel (0) target = $region81
    $region80: #{prodosnet_forward.1} parent=1 // pred_region
      _
    $region81: #{prodosnet_forward.1} parent=1 // pred_fallthru
      _
    // Predicated region
    $region82: #{prodosnet_forward.1} parent=1 // pred_check
      _
    $region83: #{prodosnet_forward.1} parent=1 // pred_check_branch
      %107 = sbr.rel (0) target = $region85
    $region84: #{prodosnet_forward.1} parent=1 // pred_region
      _
    $region85: #{prodosnet_forward.1} parent=1 // pred_fallthru
      _
    // Predicated region
    $region86: #{prodosnet_forward.1} parent=1 // pred_check
      _
    $region87: #{prodosnet_forward.1} parent=1 // pred_check_branch
      %109 = sbr.rel (0) target = $region89
    $region88: #{prodosnet_forward.1} parent=1 // pred_region
      _
    $region89: #{prodosnet_forward.1} parent=1 // pred_fallthru
      _
    // Predicated region
    $region90: #{prodosnet_forward.1} parent=1 // pred_check
      _
    $region91: #{prodosnet_forward.1} parent=1 // pred_check_branch
      %111 = sbr.rel (0) target = $region93
    $region92: #{prodosnet_forward.1} parent=1 // pred_region
      _
    $region93: #{prodosnet_forward.1} parent=1 // pred_fallthru
      _
    // Predicated region
    $region94: #{prodosnet_forward.1} parent=1 // pred_check
      _
    $region95: #{prodosnet_forward.1} parent=1 // pred_check_branch
      %113 = sbr.rel (0) target = $region97
    $region96: #{prodosnet_forward.1} parent=1 // pred_region
      _
    $region97: #{prodosnet_forward.1} parent=1 // pred_fallthru
      _
    // Predicated region
    $region98: #{prodosnet_forward.1} parent=1 // pred_check
      _
    $region99: #{prodosnet_forward.1} parent=1 // pred_check_branch
      %115 = sbr.rel (0) target = $region101
    $region100: #{prodosnet_forward.1} parent=1 // pred_region
      _
    $region101: #{prodosnet_forward.1} parent=1 // pred_fallthru
      _
    // Predicated region
    $region102: #{prodosnet_forward.1} parent=1 // pred_check
      _
    $region103: #{prodosnet_forward.1} parent=1 // pred_check_branch
      %117 = sbr.rel (0) target = $region105
    $region104: #{prodosnet_forward.1} parent=1 // pred_region
      _
    $region105: #{prodosnet_forward.1} parent=1 // pred_fallthru
      _
    // Predicated region
    $region106: #{prodosnet_forward.1} parent=1 // pred_check
      _
    $region107: #{prodosnet_forward.1} parent=1 // pred_check_branch
      %119 = sbr.rel (0) target = $region109
    $region108: #{prodosnet_forward.1} parent=1 // pred_region
      _
    $region109: #{prodosnet_forward.1} parent=1 // pred_fallthru
      _
    %v121 = vld [vmem:[%s1] sm:$0xff]
    %v122 = vld [vmem:[%s1 + $0x8] sm:$0xff]
    %v123 = vld [vmem:[%s15] sm:$0xff]
    %v124 = vld [vmem:[%s15 + $0x8] sm:$0xff]
    %v125 = vld [vmem:[%s15 + $0x10] sm:$0xff]
    %v126 = vld [vmem:[%s15 + $0x18] sm:$0xff]
    %v127 = vld [vmem:[%s17] sm:$0x1]
    %v129 = vperm.slane %v127, 0
    %vm131 = vcmask 261120
    %v133 = vsel %vm131, %v121, 0
    %v136 = vsel %vm131, %v122, 0
    %138 = vmatpush.msra.mxu0 0.0
    %139 = vmatpush.msra.mxu0 0.0
    %140 = vmatpush.msra.mxu0 0.0
    %141 = vmatpush.msra.mxu0 0.0
    %142 = vmatpush.msra.mxu0 0.0
    %143 = vmatpush.msra.mxu0 0.0
    %144 = vmatpush.msra.mxu0 0.0
    %145 = vmatpush.msra.mxu0 0.0
    %146 = vmatpush.msra.mxu0 0.0
    %147 = vmatpush.msra.mxu0 0.0
    %148 = vmatpush.msra.mxu0 0.0
    %149 = vmatpush.msra.mxu0 0.0
    %150 = vmatpush.msra.mxu0 %v126
    %151 = vmatpush.msra.mxu0 %v125
    %152 = vmatpush.msra.mxu0 %v124
    %153 = vmatpush.msra.mxu0 %v123
    %154 = vmatmul.f32.gmra.mxu0 %v133
    %v155 = vpop.f32.mrf.mxu0
    %v156 = vadd.f32 %v129, %v155
    %157 = vmatmul.f32.gmra.mxu0 %v136
    %v158 = vpop.f32.mrf.mxu0
    %v159 = vadd.f32 %v129, %v158
    %160 = vdwg.mxu0
    %vm161 = vcmp.gt.f32.partialorder %v156, 20.0
    %vm162 = vcmp.gt.f32.partialorder %v159, 20.0
    %v163 = vmul.f32 %v156, 1.442695
    %v164 = vpow.pop %v163
    %v165 = vmul.f32 %v159, 1.442695
    %v166 = vpow.pop %v165
    %v167 = vadd.f32 %v164, 1.0
    %v168 = vlog2.pop %v167
    %v169 = vmul.f32 %v168, 0.6931472
    %v170 = vmul.f32 -0.5, %v164
    %v171 = vadd.f32 %v170, 1.0
    %v172 = vmul.f32 %v171, %v164
    %v173 = vand.u32 2147483647, %v164
    %vm174 = vcmp.lt.f32.partialorder %v173, 0.0004427343
    %v175 = vsel %vm174, %v172, %v169
    %v176 = vadd.f32 %v166, 1.0
    %v177 = vlog2.pop %v176
    %v178 = vmul.f32 %v177, 0.6931472
    %v179 = vmul.f32 -0.5, %v166
    %v180 = vadd.f32 %v179, 1.0
    %v181 = vmul.f32 %v180, %v166
    %v182 = vand.u32 2147483647, %v166
    %vm183 = vcmp.lt.f32.partialorder %v182, 0.0004427343
    %v184 = vsel %vm183, %v181, %v178
    %v185 = vsel %vm161, %v156, %v175
    %v186 = vsel %vm162, %v159, %v184
    %v187 = vld [vmem:[%s19] sm:$0xff]
    %v188 = vld [vmem:[%s19 + $0x8] sm:$0xff]
    %v189 = vld [vmem:[%s19 + $0x10] sm:$0xff]
    %v190 = vld [vmem:[%s19 + $0x18] sm:$0xff]
    %v191 = vld [vmem:[%s21] sm:$0x1]
    %v193 = vperm.slane %v191, 0
    %v196 = vsel %vm131, %v185, 0
    %v199 = vsel %vm131, %v186, 0
    %201 = vmatpush.msra.mxu0 0.0
    %202 = vmatpush.msra.mxu0 0.0
    %203 = vmatpush.msra.mxu0 0.0
    %204 = vmatpush.msra.mxu0 0.0
    %205 = vmatpush.msra.mxu0 0.0
    %206 = vmatpush.msra.mxu0 0.0
    %207 = vmatpush.msra.mxu0 0.0
    %208 = vmatpush.msra.mxu0 0.0
    %209 = vmatpush.msra.mxu0 0.0
    %210 = vmatpush.msra.mxu0 0.0
    %211 = vmatpush.msra.mxu0 0.0
    %212 = vmatpush.msra.mxu0 0.0
    %213 = vmatpush.msra.mxu0 %v190
    %214 = vmatpush.msra.mxu0 %v189
    %215 = vmatpush.msra.mxu0 %v188
    %216 = vmatpush.msra.mxu0 %v187
    %217 = vmatmul.f32.gmra.mxu0 %v196
    %v218 = vpop.f32.mrf.mxu0
    %v219 = vadd.f32 %v193, %v218
    %220 = vmatmul.f32.gmra.mxu0 %v199
    %v221 = vpop.f32.mrf.mxu0
    %v222 = vadd.f32 %v193, %v221
    %223 = vdwg.mxu0
    %vm224 = vcmp.gt.f32.partialorder %v219, 20.0
    %vm225 = vcmp.gt.f32.partialorder %v222, 20.0
    %v226 = vmul.f32 %v219, 1.442695
    %v227 = vpow.pop %v226
    %v228 = vmul.f32 %v222, 1.442695
    %v229 = vpow.pop %v228
    %v230 = vadd.f32 %v227, 1.0
    %v231 = vlog2.pop %v230
    %v232 = vmul.f32 %v231, 0.6931472
    %v233 = vmul.f32 -0.5, %v227
    %v234 = vadd.f32 %v233, 1.0
    %v235 = vmul.f32 %v234, %v227
    %v236 = vand.u32 2147483647, %v227
    %vm237 = vcmp.lt.f32.partialorder %v236, 0.0004427343
    %v238 = vsel %vm237, %v235, %v232
    %v239 = vadd.f32 %v229, 1.0
    %v240 = vlog2.pop %v239
    %v241 = vmul.f32 %v240, 0.6931472
    %v242 = vmul.f32 -0.5, %v229
    %v243 = vadd.f32 %v242, 1.0
    %v244 = vmul.f32 %v243, %v229
    %v245 = vand.u32 2147483647, %v229
    %vm246 = vcmp.lt.f32.partialorder %v245, 0.0004427343
    %v247 = vsel %vm246, %v244, %v241
    %v248 = vsel %vm224, %v219, %v238
    %v249 = vsel %vm225, %v222, %v247
    %v250 = vlaneseq
    %v251 = vand.u32 %v250, 127
    %v252 = vld [vmem:[%s5] sm:$0xff]
    %v253 = vld [vmem:[%s5 + $0x8] sm:$0xff]
    %v254 = vld [vmem:[%s5 + $0x10] sm:$0xff]
    %255 = vset.pattern.permute.xlu0 0
    %256 = vperm.xlu0 %255, %v252
    %v257 = vpop.permute.xlu0 %256
    %258 = vset.pattern.permute.xlu0 0
    %259 = vperm.xlu0 %258, %v253
    %v260 = vpop.permute.xlu0 %259
    %261 = vset.pattern.permute.xlu0 0
    %262 = vperm.xlu0 %261, %v254
    %v263 = vpop.permute.xlu0 %262
    %vm264 = vcmp.eq.s32.totalorder %v257, %v251
    %vm265 = vcmp.eq.s32.totalorder %v260, %v251
    %vm266 = vcmp.eq.s32.totalorder %v263, %v251
    %v267 = vsel %vm264, 1, 0
    %v268 = vsel %vm265, 1, 0
    %v269 = vsel %vm266, 1, 0
    %v270 = vcvt.s32.f32 %v267
    %v271 = vcvt.s32.f32 %v268
    %v272 = vcvt.s32.f32 %v269
    %v273 = vpack.c.bf16 %v271, %v270
    %v274 = vpack.c.bf16 %v272, %v272
    %v275 = vld [vmem:[%s7] sm:$0xff]
    %v276 = vld [vmem:[%s7 + $0x8] sm:$0xff]
    %v277 = vld [vmem:[%s7 + $0x10] sm:$0xff]
    %278 = vset.pattern.permute.xlu0 0
    %279 = vperm.xlu0 %278, %v275
    %v280 = vpop.permute.xlu0 %279
    %281 = vset.pattern.permute.xlu0 0
    %282 = vperm.xlu0 %281, %v276
    %v283 = vpop.permute.xlu0 %282
    %284 = vset.pattern.permute.xlu0 0
    %285 = vperm.xlu0 %284, %v277
    %v286 = vpop.permute.xlu0 %285
    %vm287 = vcmp.eq.s32.totalorder %v280, %v251
    %vm288 = vcmp.eq.s32.totalorder %v283, %v251
    %vm289 = vcmp.eq.s32.totalorder %v286, %v251
    %v290 = vsel %vm287, 1, 0
    %v291 = vsel %vm288, 1, 0
    %v292 = vsel %vm289, 1, 0
    %v293 = vcvt.s32.f32 %v290
    %v294 = vcvt.s32.f32 %v291
    %v295 = vcvt.s32.f32 %v292
    %v296 = vpack.c.bf16 %v294, %v293
    %v297 = vpack.c.bf16 %v295, %v295
    %v298 = vld [vmem:[%s3] sm:$0xff]
    %v299 = vld [vmem:[%s3 + $0x8] sm:$0xff]
    %v300 = vld [vmem:[%s3 + $0x10] sm:$0xff]
    %v301 = vld [vmem:[%s23] sm:$0xff]
    %v302 = vld [vmem:[%s23 + $0x8] sm:$0xff]
    %v303 = vld [vmem:[%s23 + $0x10] sm:$0xff]
    %v304 = vld [vmem:[%s23 + $0x18] sm:$0xff]
    %v306 = vsel %vm131, %v248, 0
    %v309 = vsel %vm131, %v249, 0
    %311 = vmatpush.msra.mxu0 0.0
    %312 = vmatpush.msra.mxu0 0.0
    %313 = vmatpush.msra.mxu0 0.0
    %314 = vmatpush.msra.mxu0 0.0
    %315 = vmatpush.msra.mxu0 0.0
    %316 = vmatpush.msra.mxu0 0.0
    %317 = vmatpush.msra.mxu0 0.0
    %318 = vmatpush.msra.mxu0 0.0
    %319 = vmatpush.msra.mxu0 0.0
    %320 = vmatpush.msra.mxu0 0.0
    %321 = vmatpush.msra.mxu0 0.0
    %322 = vmatpush.msra.mxu0 0.0
    %323 = vmatpush.msra.mxu0 %v304
    %324 = vmatpush.msra.mxu0 %v303
    %325 = vmatpush.msra.mxu0 %v302
    %326 = vmatpush.msra.mxu0 %v301
    %327 = vmatmul.f32.gmra.mxu0 %v306
    %v328 = vpop.f32.mrf.mxu0
    %v329 = vadd.f32 0.0, %v328
    %330 = vmatmul.f32.gmra.mxu0 %v309
    %v331 = vpop.f32.mrf.mxu0
    %v332 = vadd.f32 0.0, %v331
    %333 = vdwg.mxu0
    %v334 = vpack.c.bf16 %v332, %v329
    %v335 = vld [vmem:[%s25] sm:$0xff]
    %v336 = vld [vmem:[%s25 + $0x8] sm:$0xff]
    %v337 = vld [vmem:[%s25 + $0x10] sm:$0xff]
    %v338 = vld [vmem:[%s25 + $0x18] sm:$0xff]
    %339 = vmatpush.msra.mxu0 0.0
    %340 = vmatpush.msra.mxu0 0.0
    %341 = vmatpush.msra.mxu0 0.0
    %342 = vmatpush.msra.mxu0 0.0
    %343 = vmatpush.msra.mxu0 0.0
    %344 = vmatpush.msra.mxu0 0.0
    %345 = vmatpush.msra.mxu0 0.0
    %346 = vmatpush.msra.mxu0 0.0
    %347 = vmatpush.msra.mxu0 0.0
    %348 = vmatpush.msra.mxu0 0.0
    %349 = vmatpush.msra.mxu0 0.0
    %350 = vmatpush.msra.mxu0 0.0
    %351 = vmatpush.msra.mxu0 %v338
    %352 = vmatpush.msra.mxu0 %v337
    %353 = vmatpush.msra.mxu0 %v336
    %354 = vmatpush.msra.mxu0 %v335
    %355 = vmatmul.f32.gmra.mxu0 %v306
    %v356 = vpop.f32.mrf.mxu0
    %v357 = vadd.f32 0.0, %v356
    %358 = vmatmul.f32.gmra.mxu0 %v309
    %v359 = vpop.f32.mrf.mxu0
    %v360 = vadd.f32 0.0, %v359
    %361 = vdwg.mxu0
    %v362 = vpack.c.bf16 %v360, %v357
    %vm363 = vcmask 130048
    %v365 = vsel %vm363, %v296, 0
    %v368 = vsel %vm363, %v297, 0
    %370 = vmatpush.bf16.msra.mxu0 0
    %371 = vmatpush.bf16.msra.mxu0 0
    %372 = vmatpush.bf16.msra.mxu0 0
    %373 = vmatpush.bf16.msra.mxu0 0
    %374 = vmatpush.bf16.msra.mxu0 0
    %375 = vmatpush.bf16.msra.mxu0 0
    %376 = vmatpush.bf16.msra.mxu0 0
    %377 = vmatpush.bf16.msra.mxu0 %v362
    %378 = vmatmul.bf16.gmra.mxu0 %v365
    %v379 = vpop.f32.mrf.mxu0
    %v380 = vadd.f32 0.0, %v379
    %v381 = vpop.f32.mrf.mxu0
    %v382 = vadd.f32 0.0, %v381
    %383 = vmatmul.bf16.gmra.mxu0 %v368
    %v384 = vpop.f32.mrf.mxu0
    %v385 = vadd.f32 0.0, %v384
    %v386 = vpop.f32.mrf.mxu0
    %387 = vdwg.mxu0
    %v389 = vsel %vm363, %v273, 0
    %v392 = vsel %vm363, %v274, 0
    %394 = vmatpush.bf16.msra.mxu0 0
    %395 = vmatpush.bf16.msra.mxu0 0
    %396 = vmatpush.bf16.msra.mxu0 0
    %397 = vmatpush.bf16.msra.mxu0 0
    %398 = vmatpush.bf16.msra.mxu0 0
    %399 = vmatpush.bf16.msra.mxu0 0
    %400 = vmatpush.bf16.msra.mxu0 0
    %401 = vmatpush.bf16.msra.mxu0 %v334
    %402 = vmatmul.bf16.gmra.mxu0 %v389
    %v403 = vpop.f32.mrf.mxu0
    %v404 = vadd.f32 %v380, %v403
    %v405 = vpop.f32.mrf.mxu0
    %v406 = vadd.f32 %v382, %v405
    %407 = vmatmul.bf16.gmra.mxu0 %v392
    %v408 = vpop.f32.mrf.mxu0
    %v409 = vadd.f32 %v385, %v408
    %v410 = vpop.f32.mrf.mxu0
    %411 = vdwg.mxu0
    %v412 = vld [vmem:[%s27] sm:$0xff]
    %v413 = vld [vmem:[%s27 + $0x8] sm:$0xff]
    %v415 = vsel %vm363, %v298, 0
    %v418 = vsel %vm363, %v299, 0
    %v421 = vsel %vm363, %v300, 0
    %423 = vmatpush.msra.mxu0 0.0
    %424 = vmatpush.msra.mxu0 0.0
    %425 = vmatpush.msra.mxu0 0.0
    %426 = vmatpush.msra.mxu0 0.0
    %427 = vmatpush.msra.mxu0 0.0
    %428 = vmatpush.msra.mxu0 0.0
    %429 = vmatpush.msra.mxu0 0.0
    %430 = vmatpush.msra.mxu0 0.0
    %431 = vmatpush.msra.mxu0 0.0
    %432 = vmatpush.msra.mxu0 0.0
    %433 = vmatpush.msra.mxu0 0.0
    %434 = vmatpush.msra.mxu0 0.0
    %435 = vmatpush.msra.mxu0 0.0
    %436 = vmatpush.msra.mxu0 0.0
    %437 = vmatpush.msra.mxu0 %v413
    %438 = vmatpush.msra.mxu0 %v412
    %439 = vmatmul.f32.gmra.mxu0 %v415
    %v440 = vpop.f32.mrf.mxu0
    %v441 = vadd.f32 0.0, %v440
    %442 = vmatmul.f32.gmra.mxu0 %v418
    %v443 = vpop.f32.mrf.mxu0
    %v444 = vadd.f32 0.0, %v443
    %445 = vmatmul.f32.gmra.mxu0 %v421
    %v446 = vpop.f32.mrf.mxu0
    %v447 = vadd.f32 0.0, %v446
    %448 = vdwg.mxu0
    %v449 = vadd.f32 %v404, %v441
    %v450 = vadd.f32 %v406, %v444
    %v451 = vadd.f32 %v409, %v447
    %v452 = vld [vmem:[%s29] sm:$0x1]
    %v454 = vperm.slane %v452, 0
    %v456 = vadd.f32 %v449, %v454
    %v457 = vadd.f32 %v450, %v454
    %v458 = vadd.f32 %v451, %v454
    %vm459 = vcmp.gt.f32.partialorder %v456, 20.0
    %vm460 = vcmp.gt.f32.partialorder %v457, 20.0
    %vm461 = vcmp.gt.f32.partialorder %v458, 20.0
    %v462 = vmul.f32 %v456, 1.442695
    %v463 = vpow.pop %v462
    %v464 = vmul.f32 %v457, 1.442695
    %v465 = vpow.pop %v464
    %v466 = vmul.f32 %v458, 1.442695
    %v467 = vpow.pop %v466
    %v468 = vadd.f32 %v463, 1.0
    %v469 = vlog2.pop %v468
    %v470 = vmul.f32 %v469, 0.6931472
    %v471 = vmul.f32 -0.5, %v463
    %v472 = vadd.f32 %v471, 1.0
    %v473 = vmul.f32 %v472, %v463
    %v474 = vand.u32 2147483647, %v463
    %vm475 = vcmp.lt.f32.partialorder %v474, 0.0004427343
    %v476 = vsel %vm475, %v473, %v470
    %v477 = vadd.f32 %v465, 1.0
    %v478 = vlog2.pop %v477
    %v479 = vmul.f32 %v478, 0.6931472
    %v480 = vmul.f32 -0.5, %v465
    %v481 = vadd.f32 %v480, 1.0
    %v482 = vmul.f32 %v481, %v465
    %v483 = vand.u32 2147483647, %v465
    %vm484 = vcmp.lt.f32.partialorder %v483, 0.0004427343
    %v485 = vsel %vm484, %v482, %v479
    %v486 = vadd.f32 %v467, 1.0
    %v487 = vlog2.pop %v486
    %v488 = vmul.f32 %v487, 0.6931472
    %v489 = vmul.f32 -0.5, %v467
    %v490 = vadd.f32 %v489, 1.0
    %v491 = vmul.f32 %v490, %v467
    %v492 = vand.u32 2147483647, %v467
    %vm493 = vcmp.lt.f32.partialorder %v492, 0.0004427343
    %v494 = vsel %vm493, %v491, %v488
    %v495 = vsel %vm459, %v456, %v476
    %v496 = vsel %vm460, %v457, %v485
    %v497 = vsel %vm461, %v458, %v494
    %v498 = vld [vmem:[%s31] sm:$0xff]
    %v499 = vld [vmem:[%s31 + $0x8] sm:$0xff]
    %v500 = vld [vmem:[%s31 + $0x10] sm:$0xff]
    %v501 = vld [vmem:[%s31 + $0x18] sm:$0xff]
    %v502 = vld [vmem:[%s31 + $0x20] sm:$0xff]
    %v503 = vld [vmem:[%s31 + $0x28] sm:$0xff]
    %v504 = vld [vmem:[%s31 + $0x30] sm:$0xff]
    %v505 = vld [vmem:[%s31 + $0x38] sm:$0xff]
    %v506 = vld [vmem:[%s33] sm:$0x1]
    %v508 = vperm.slane %v506, 0
    %vm510 = vcmask 523264
    %v512 = vsel %vm510, %v495, 0
    %v515 = vsel %vm510, %v496, 0
    %v518 = vsel %vm510, %v497, 0
    %520 = vmatpush.msra.mxu0 0.0
    %521 = vmatpush.msra.mxu0 0.0
    %522 = vmatpush.msra.mxu0 0.0
    %523 = vmatpush.msra.mxu0 0.0
    %524 = vmatpush.msra.mxu0 0.0
    %525 = vmatpush.msra.mxu0 0.0
    %526 = vmatpush.msra.mxu0 0.0
    %527 = vmatpush.msra.mxu0 0.0
    %528 = vmatpush.msra.mxu0 %v505
    %529 = vmatpush.msra.mxu0 %v504
    %530 = vmatpush.msra.mxu0 %v503
    %531 = vmatpush.msra.mxu0 %v502
    %532 = vmatpush.msra.mxu0 %v501
    %533 = vmatpush.msra.mxu0 %v500
    %534 = vmatpush.msra.mxu0 %v499
    %535 = vmatpush.msra.mxu0 %v498
    %536 = vmatmul.f32.gmra.mxu0 %v512
    %v537 = vpop.f32.mrf.mxu0
    %v538 = vadd.f32 %v508, %v537
    %539 = vmatmul.f32.gmra.mxu0 %v515
    %v540 = vpop.f32.mrf.mxu0
    %v541 = vadd.f32 %v508, %v540
    %542 = vmatmul.f32.gmra.mxu0 %v518
    %v543 = vpop.f32.mrf.mxu0
    %v544 = vadd.f32 %v508, %v543
    %545 = vdwg.mxu0
    %vm546 = vcmp.gt.f32.partialorder %v538, 20.0
    %vm547 = vcmp.gt.f32.partialorder %v541, 20.0
    %vm548 = vcmp.gt.f32.partialorder %v544, 20.0
    %v549 = vmul.f32 %v538, 1.442695
    %v550 = vpow.pop %v549
    %v551 = vmul.f32 %v541, 1.442695
    %v552 = vpow.pop %v551
    %v553 = vmul.f32 %v544, 1.442695
    %v554 = vpow.pop %v553
    %v555 = vadd.f32 %v550, 1.0
    %v556 = vlog2.pop %v555
    %v557 = vmul.f32 %v556, 0.6931472
    %v558 = vmul.f32 -0.5, %v550
    %v559 = vadd.f32 %v558, 1.0
    %v560 = vmul.f32 %v559, %v550
    %v561 = vand.u32 2147483647, %v550
    %vm562 = vcmp.lt.f32.partialorder %v561, 0.0004427343
    %v563 = vsel %vm562, %v560, %v557
    %v564 = vadd.f32 %v552, 1.0
    %v565 = vlog2.pop %v564
    %v566 = vmul.f32 %v565, 0.6931472
    %v567 = vmul.f32 -0.5, %v552
    %v568 = vadd.f32 %v567, 1.0
    %v569 = vmul.f32 %v568, %v552
    %v570 = vand.u32 2147483647, %v552
    %vm571 = vcmp.lt.f32.partialorder %v570, 0.0004427343
    %v572 = vsel %vm571, %v569, %v566
    %v573 = vadd.f32 %v554, 1.0
    %v574 = vlog2.pop %v573
    %v575 = vmul.f32 %v574, 0.6931472
    %v576 = vmul.f32 -0.5, %v554
    %v577 = vadd.f32 %v576, 1.0
    %v578 = vmul.f32 %v577, %v554
    %v579 = vand.u32 2147483647, %v554
    %vm580 = vcmp.lt.f32.partialorder %v579, 0.0004427343
    %v581 = vsel %vm580, %v578, %v575
    %v582 = vsel %vm546, %v538, %v563
    %v583 = vsel %vm547, %v541, %v572
    %v584 = vsel %vm548, %v544, %v581
    %v585 = vld [vmem:[%s35] sm:$0xff]
    %v586 = vld [vmem:[%s35 + $0x8] sm:$0xff]
    %v587 = vld [vmem:[%s35 + $0x10] sm:$0xff]
    %v588 = vld [vmem:[%s35 + $0x18] sm:$0xff]
    %v589 = vld [vmem:[%s35 + $0x20] sm:$0xff]
    %v590 = vld [vmem:[%s35 + $0x28] sm:$0xff]
    %v591 = vld [vmem:[%s35 + $0x30] sm:$0xff]
    %v592 = vld [vmem:[%s35 + $0x38] sm:$0xff]
    %v593 = vld [vmem:[%s37] sm:$0x1]
    %v595 = vperm.slane %v593, 0
    %v598 = vsel %vm510, %v582, 0
    %v601 = vsel %vm510, %v583, 0
    %v604 = vsel %vm510, %v584, 0
    %606 = vmatpush.msra.mxu0 0.0
    %607 = vmatpush.msra.mxu0 0.0
    %608 = vmatpush.msra.mxu0 0.0
    %609 = vmatpush.msra.mxu0 0.0
    %610 = vmatpush.msra.mxu0 0.0
    %611 = vmatpush.msra.mxu0 0.0
    %612 = vmatpush.msra.mxu0 0.0
    %613 = vmatpush.msra.mxu0 0.0
    %614 = vmatpush.msra.mxu0 %v592
    %615 = vmatpush.msra.mxu0 %v591
    %616 = vmatpush.msra.mxu0 %v590
    %617 = vmatpush.msra.mxu0 %v589
    %618 = vmatpush.msra.mxu0 %v588
    %619 = vmatpush.msra.mxu0 %v587
    %620 = vmatpush.msra.mxu0 %v586
    %621 = vmatpush.msra.mxu0 %v585
    %622 = vmatmul.f32.gmra.mxu0 %v598
    %v623 = vpop.f32.mrf.mxu0
    %v624 = vadd.f32 %v595, %v623
    %625 = vmatmul.f32.gmra.mxu0 %v601
    %v626 = vpop.f32.mrf.mxu0
    %v627 = vadd.f32 %v595, %v626
    %628 = vmatmul.f32.gmra.mxu0 %v604
    %v629 = vpop.f32.mrf.mxu0
    %v630 = vadd.f32 %v595, %v629
    %631 = vdwg.mxu0
    %vm632 = vcmp.gt.f32.partialorder %v624, 20.0
    %vm633 = vcmp.gt.f32.partialorder %v627, 20.0
    %vm634 = vcmp.gt.f32.partialorder %v630, 20.0
    %v635 = vmul.f32 %v624, 1.442695
    %v636 = vpow.pop %v635
    %v637 = vmul.f32 %v627, 1.442695
    %v638 = vpow.pop %v637
    %v639 = vmul.f32 %v630, 1.442695
    %v640 = vpow.pop %v639
    %v641 = vadd.f32 %v636, 1.0
    %v642 = vlog2.pop %v641
    %v643 = vmul.f32 %v642, 0.6931472
    %v644 = vmul.f32 -0.5, %v636
    %v645 = vadd.f32 %v644, 1.0
    %v646 = vmul.f32 %v645, %v636
    %v647 = vand.u32 2147483647, %v636
    %vm648 = vcmp.lt.f32.partialorder %v647, 0.0004427343
    %v649 = vsel %vm648, %v646, %v643
    %v650 = vadd.f32 %v638, 1.0
    %v651 = vlog2.pop %v650
    %v652 = vmul.f32 %v651, 0.6931472
    %v653 = vmul.f32 -0.5, %v638
    %v654 = vadd.f32 %v653, 1.0
    %v655 = vmul.f32 %v654, %v638
    %v656 = vand.u32 2147483647, %v638
    %vm657 = vcmp.lt.f32.partialorder %v656, 0.0004427343
    %v658 = vsel %vm657, %v655, %v652
    %v659 = vadd.f32 %v640, 1.0
    %v660 = vlog2.pop %v659
    %v661 = vmul.f32 %v660, 0.6931472
    %v662 = vmul.f32 -0.5, %v640
    %v663 = vadd.f32 %v662, 1.0
    %v664 = vmul.f32 %v663, %v640
    %v665 = vand.u32 2147483647, %v640
    %vm666 = vcmp.lt.f32.partialorder %v665, 0.0004427343
    %v667 = vsel %vm666, %v664, %v661
    %v668 = vsel %vm632, %v624, %v649
    %v669 = vsel %vm633, %v627, %v658
    %v670 = vsel %vm634, %v630, %v667
    %v671 = vpack.c.bf16 %v669, %v668
    %v672 = vpack.c.bf16 %v670, %v670
    %673 = vxpose.xlu0.c.b16.start [1/8] %v273, 128
    %674 = vxpose.xlu0.c.b16.cont [2/8] %v274, 128
    %675 = vxpose.xlu0.c.b16.cont [3/8] 0, 128
    %676 = vxpose.xlu0.c.b16.cont [4/8] 0, 128
    %677 = vxpose.xlu0.c.b16.cont [5/8] 0, 128
    %678 = vxpose.xlu0.c.b16.cont [6/8] 0, 128
    %679 = vxpose.xlu0.c.b16.cont [7/8] 0, 128
    %680 = vxpose.xlu0.c.b16.end [8/8] 0, 128
    %v681 = vpop.trf.xlu0
    %v682 = vpop.trf.xlu0
    %v683 = vpop.trf.xlu0
    %v684 = vpop.trf.xlu0
    %v685 = vpop.trf.xlu0
    %v686 = vpop.trf.xlu0
    %v687 = vpop.trf.xlu0
    %v688 = vpop.trf.xlu0
    %vm689 = vcmask 195584
    %v691 = vsel %vm689, %v681, 0
    %vm693 = vcmask 1043456
    %v695 = vsel %vm693, %v672, 0
    %697 = vmatpush.bf16.msra.mxu0 0
    %698 = vmatpush.bf16.msra.mxu0 0
    %699 = vmatpush.bf16.msra.mxu0 0
    %700 = vmatpush.bf16.msra.mxu0 0
    %701 = vmatpush.bf16.msra.mxu0 0
    %702 = vmatpush.bf16.msra.mxu0 0
    %703 = vmatpush.bf16.msra.mxu0 %v695
    %704 = vmatpush.bf16.msra.mxu0 %v671
    %705 = vmatmul.bf16.gmra.mxu0 %v691
    %v706 = vpop.f32.mrf.mxu0
    %v707 = vadd.f32 0.0, %v706
    %v708 = vpop.f32.mrf.mxu0
    %v709 = vadd.f32 0.0, %v708
    %710 = vdwg.mxu0
    %v711 = vld [vmem:[%s39] sm:$0x1]
    %v713 = vperm.slane %v711, 0
    %v715 = vmul.f32 %v707, %v713
    %v716 = vmul.f32 %v709, %v713
    %v717 = vld [vmem:[%s41] sm:$0x1]
    %v719 = vperm.slane %v717, 0
    %v721 = vadd.f32 %v715, %v719
    %v722 = vadd.f32 %v716, %v719
    %v723 = vadd.f32 %v721, %v248
    %v724 = vadd.f32 %v722, %v249
    %vm725 = vcmp.gt.f32.partialorder %v723, 20.0
    %vm726 = vcmp.gt.f32.partialorder %v724, 20.0
    %v727 = vmul.f32 %v723, 1.442695
    %v728 = vpow.pop %v727
    %v729 = vmul.f32 %v724, 1.442695
    %v730 = vpow.pop %v729
    %v731 = vadd.f32 %v728, 1.0
    %v732 = vlog2.pop %v731
    %v733 = vmul.f32 %v732, 0.6931472
    %v734 = vmul.f32 -0.5, %v728
    %v735 = vadd.f32 %v734, 1.0
    %v736 = vmul.f32 %v735, %v728
    %v737 = vand.u32 2147483647, %v728
    %vm738 = vcmp.lt.f32.partialorder %v737, 0.0004427343
    %v739 = vsel %vm738, %v736, %v733
    %v740 = vadd.f32 %v730, 1.0
    %v741 = vlog2.pop %v740
    %v742 = vmul.f32 %v741, 0.6931472
    %v743 = vmul.f32 -0.5, %v730
    %v744 = vadd.f32 %v743, 1.0
    %v745 = vmul.f32 %v744, %v730
    %v746 = vand.u32 2147483647, %v730
    %vm747 = vcmp.lt.f32.partialorder %v746, 0.0004427343
    %v748 = vsel %vm747, %v745, %v742
    %v749 = vsel %vm725, %v723, %v739
    %v750 = vsel %vm726, %v724, %v748
    %s751 = scalar_lea.vmem %s23, 32
    %v752 = vld [vmem:[%s751] sm:$0xff]
    %v753 = vld [vmem:[%s751 + $0x8] sm:$0xff]
    %v754 = vld [vmem:[%s751 + $0x10] sm:$0xff]
    %v755 = vld [vmem:[%s751 + $0x18] sm:$0xff]
    %v757 = vsel %vm131, %v749, 0
    %v760 = vsel %vm131, %v750, 0
    %762 = vmatpush.msra.mxu0 0.0
    %763 = vmatpush.msra.mxu0 0.0
    %764 = vmatpush.msra.mxu0 0.0
    %765 = vmatpush.msra.mxu0 0.0
    %766 = vmatpush.msra.mxu0 0.0
    %767 = vmatpush.msra.mxu0 0.0
    %768 = vmatpush.msra.mxu0 0.0
    %769 = vmatpush.msra.mxu0 0.0
    %770 = vmatpush.msra.mxu0 0.0
    %771 = vmatpush.msra.mxu0 0.0
    %772 = vmatpush.msra.mxu0 0.0
    %773 = vmatpush.msra.mxu0 0.0
    %774 = vmatpush.msra.mxu0 %v755
    %775 = vmatpush.msra.mxu0 %v754
    %776 = vmatpush.msra.mxu0 %v753
    %777 = vmatpush.msra.mxu0 %v752
    %778 = vmatmul.f32.gmra.mxu0 %v757
    %v779 = vpop.f32.mrf.mxu0
    %v780 = vadd.f32 0.0, %v779
    %781 = vmatmul.f32.gmra.mxu0 %v760
    %v782 = vpop.f32.mrf.mxu0
    %v783 = vadd.f32 0.0, %v782
    %784 = vdwg.mxu0
    %v785 = vpack.c.bf16 %v783, %v780
    %s786 = scalar_lea.vmem %s25, 32
    %v787 = vld [vmem:[%s786] sm:$0xff]
    %v788 = vld [vmem:[%s786 + $0x8] sm:$0xff]
    %v789 = vld [vmem:[%s786 + $0x10] sm:$0xff]
    %v790 = vld [vmem:[%s786 + $0x18] sm:$0xff]
    %791 = vmatpush.msra.mxu0 0.0
    %792 = vmatpush.msra.mxu0 0.0
    %793 = vmatpush.msra.mxu0 0.0
    %794 = vmatpush.msra.mxu0 0.0
    %795 = vmatpush.msra.mxu0 0.0
    %796 = vmatpush.msra.mxu0 0.0
    %797 = vmatpush.msra.mxu0 0.0
    %798 = vmatpush.msra.mxu0 0.0
    %799 = vmatpush.msra.mxu0 0.0
    %800 = vmatpush.msra.mxu0 0.0
    %801 = vmatpush.msra.mxu0 0.0
    %802 = vmatpush.msra.mxu0 0.0
    %803 = vmatpush.msra.mxu0 %v790
    %804 = vmatpush.msra.mxu0 %v789
    %805 = vmatpush.msra.mxu0 %v788
    %806 = vmatpush.msra.mxu0 %v787
    %807 = vmatmul.f32.gmra.mxu0 %v757
    %v808 = vpop.f32.mrf.mxu0
    %v809 = vadd.f32 0.0, %v808
    %810 = vmatmul.f32.gmra.mxu0 %v760
    %v811 = vpop.f32.mrf.mxu0
    %v812 = vadd.f32 0.0, %v811
    %813 = vdwg.mxu0
    %v814 = vpack.c.bf16 %v812, %v809
    %815 = vmatpush.bf16.msra.mxu0 0
    %816 = vmatpush.bf16.msra.mxu0 0
    %817 = vmatpush.bf16.msra.mxu0 0
    %818 = vmatpush.bf16.msra.mxu0 0
    %819 = vmatpush.bf16.msra.mxu0 0
    %820 = vmatpush.bf16.msra.mxu0 0
    %821 = vmatpush.bf16.msra.mxu0 0
    %822 = vmatpush.bf16.msra.mxu0 %v814
    %823 = vmatmul.bf16.gmra.mxu0 %v365
    %v824 = vpop.f32.mrf.mxu0
    %v825 = vadd.f32 0.0, %v824
    %v826 = vpop.f32.mrf.mxu0
    %v827 = vadd.f32 0.0, %v826
    %828 = vmatmul.bf16.gmra.mxu0 %v368
    %v829 = vpop.f32.mrf.mxu0
    %v830 = vadd.f32 0.0, %v829
    %v831 = vpop.f32.mrf.mxu0
    %832 = vdwg.mxu0
    %833 = vmatpush.bf16.msra.mxu0 0
    %834 = vmatpush.bf16.msra.mxu0 0
    %835 = vmatpush.bf16.msra.mxu0 0
    %836 = vmatpush.bf16.msra.mxu0 0
    %837 = vmatpush.bf16.msra.mxu0 0
    %838 = vmatpush.bf16.msra.mxu0 0
    %839 = vmatpush.bf16.msra.mxu0 0
    %840 = vmatpush.bf16.msra.mxu0 %v785
    %841 = vmatmul.bf16.gmra.mxu0 %v389
    %v842 = vpop.f32.mrf.mxu0
    %v843 = vadd.f32 %v825, %v842
    %v844 = vpop.f32.mrf.mxu0
    %v845 = vadd.f32 %v827, %v844
    %846 = vmatmul.bf16.gmra.mxu0 %v392
    %v847 = vpop.f32.mrf.mxu0
    %v848 = vadd.f32 %v830, %v847
    %v849 = vpop.f32.mrf.mxu0
    %850 = vdwg.mxu0
    %s851 = scalar_lea.vmem %s27, 16
    %v852 = vld [vmem:[%s851] sm:$0xff]
    %v853 = vld [vmem:[%s851 + $0x8] sm:$0xff]
    %854 = vmatpush.msra.mxu0 0.0
    %855 = vmatpush.msra.mxu0 0.0
    %856 = vmatpush.msra.mxu0 0.0
    %857 = vmatpush.msra.mxu0 0.0
    %858 = vmatpush.msra.mxu0 0.0
    %859 = vmatpush.msra.mxu0 0.0
    %860 = vmatpush.msra.mxu0 0.0
    %861 = vmatpush.msra.mxu0 0.0
    %862 = vmatpush.msra.mxu0 0.0
    %863 = vmatpush.msra.mxu0 0.0
    %864 = vmatpush.msra.mxu0 0.0
    %865 = vmatpush.msra.mxu0 0.0
    %866 = vmatpush.msra.mxu0 0.0
    %867 = vmatpush.msra.mxu0 0.0
    %868 = vmatpush.msra.mxu0 %v853
    %869 = vmatpush.msra.mxu0 %v852
    %870 = vmatmul.f32.gmra.mxu0 %v415
    %v871 = vpop.f32.mrf.mxu0
    %v872 = vadd.f32 0.0, %v871
    %873 = vmatmul.f32.gmra.mxu0 %v418
    %v874 = vpop.f32.mrf.mxu0
    %v875 = vadd.f32 0.0, %v874
    %876 = vmatmul.f32.gmra.mxu0 %v421
    %v877 = vpop.f32.mrf.mxu0
    %v878 = vadd.f32 0.0, %v877
    %879 = vdwg.mxu0
    %v880 = vadd.f32 %v843, %v872
    %v881 = vadd.f32 %v845, %v875
    %v882 = vadd.f32 %v848, %v878
    %s883 = scalar_lea.vmem %s29, 1
    %v884 = vld [vmem:[%s883] sm:$0x1]
    %v886 = vperm.slane %v884, 0
    %v888 = vadd.f32 %v880, %v886
    %v889 = vadd.f32 %v881, %v886
    %v890 = vadd.f32 %v882, %v886
    %vm891 = vcmp.gt.f32.partialorder %v888, 20.0
    %vm892 = vcmp.gt.f32.partialorder %v889, 20.0
    %vm893 = vcmp.gt.f32.partialorder %v890, 20.0
    %v894 = vmul.f32 %v888, 1.442695
    %v895 = vpow.pop %v894
    %v896 = vmul.f32 %v889, 1.442695
    %v897 = vpow.pop %v896
    %v898 = vmul.f32 %v890, 1.442695
    %v899 = vpow.pop %v898
    %v900 = vadd.f32 %v895, 1.0
    %v901 = vlog2.pop %v900
    %v902 = vmul.f32 %v901, 0.6931472
    %v903 = vmul.f32 -0.5, %v895
    %v904 = vadd.f32 %v903, 1.0
    %v905 = vmul.f32 %v904, %v895
    %v906 = vand.u32 2147483647, %v895
    %vm907 = vcmp.lt.f32.partialorder %v906, 0.0004427343
    %v908 = vsel %vm907, %v905, %v902
    %v909 = vadd.f32 %v897, 1.0
    %v910 = vlog2.pop %v909
    %v911 = vmul.f32 %v910, 0.6931472
    %v912 = vmul.f32 -0.5, %v897
    %v913 = vadd.f32 %v912, 1.0
    %v914 = vmul.f32 %v913, %v897
    %v915 = vand.u32 2147483647, %v897
    %vm916 = vcmp.lt.f32.partialorder %v915, 0.0004427343
    %v917 = vsel %vm916, %v914, %v911
    %v918 = vadd.f32 %v899, 1.0
    %v919 = vlog2.pop %v918
    %v920 = vmul.f32 %v919, 0.6931472
    %v921 = vmul.f32 -0.5, %v899
    %v922 = vadd.f32 %v921, 1.0
    %v923 = vmul.f32 %v922, %v899
    %v924 = vand.u32 2147483647, %v899
    %vm925 = vcmp.lt.f32.partialorder %v924, 0.0004427343
    %v926 = vsel %vm925, %v923, %v920
    %v927 = vsel %vm891, %v888, %v908
    %v928 = vsel %vm892, %v889, %v917
    %v929 = vsel %vm893, %v890, %v926
    %s930 = scalar_lea.vmem %s31, 64
    %v931 = vld [vmem:[%s930] sm:$0xff]
    %v932 = vld [vmem:[%s930 + $0x8] sm:$0xff]
    %v933 = vld [vmem:[%s930 + $0x10] sm:$0xff]
    %v934 = vld [vmem:[%s930 + $0x18] sm:$0xff]
    %v935 = vld [vmem:[%s930 + $0x20] sm:$0xff]
    %v936 = vld [vmem:[%s930 + $0x28] sm:$0xff]
    %v937 = vld [vmem:[%s930 + $0x30] sm:$0xff]
    %v938 = vld [vmem:[%s930 + $0x38] sm:$0xff]
    %s939 = scalar_lea.vmem %s33, 1
    %v940 = vld [vmem:[%s939] sm:$0x1]
    %v942 = vperm.slane %v940, 0
    %v945 = vsel %vm510, %v927, 0
    %v948 = vsel %vm510, %v928, 0
    %v951 = vsel %vm510, %v929, 0
    %953 = vmatpush.msra.mxu0 0.0
    %954 = vmatpush.msra.mxu0 0.0
    %955 = vmatpush.msra.mxu0 0.0
    %956 = vmatpush.msra.mxu0 0.0
    %957 = vmatpush.msra.mxu0 0.0
    %958 = vmatpush.msra.mxu0 0.0
    %959 = vmatpush.msra.mxu0 0.0
    %960 = vmatpush.msra.mxu0 0.0
    %961 = vmatpush.msra.mxu0 %v938
    %962 = vmatpush.msra.mxu0 %v937
    %963 = vmatpush.msra.mxu0 %v936
    %964 = vmatpush.msra.mxu0 %v935
    %965 = vmatpush.msra.mxu0 %v934
    %966 = vmatpush.msra.mxu0 %v933
    %967 = vmatpush.msra.mxu0 %v932
    %968 = vmatpush.msra.mxu0 %v931
    %969 = vmatmul.f32.gmra.mxu0 %v945
    %v970 = vpop.f32.mrf.mxu0
    %v971 = vadd.f32 %v942, %v970
    %972 = vmatmul.f32.gmra.mxu0 %v948
    %v973 = vpop.f32.mrf.mxu0
    %v974 = vadd.f32 %v942, %v973
    %975 = vmatmul.f32.gmra.mxu0 %v951
    %v976 = vpop.f32.mrf.mxu0
    %v977 = vadd.f32 %v942, %v976
    %978 = vdwg.mxu0
    %vm979 = vcmp.gt.f32.partialorder %v971, 20.0
    %vm980 = vcmp.gt.f32.partialorder %v974, 20.0
    %vm981 = vcmp.gt.f32.partialorder %v977, 20.0
    %v982 = vmul.f32 %v971, 1.442695
    %v983 = vpow.pop %v982
    %v984 = vmul.f32 %v974, 1.442695
    %v985 = vpow.pop %v984
    %v986 = vmul.f32 %v977, 1.442695
    %v987 = vpow.pop %v986
    %v988 = vadd.f32 %v983, 1.0
    %v989 = vlog2.pop %v988
    %v990 = vmul.f32 %v989, 0.6931472
    %v991 = vmul.f32 -0.5, %v983
    %v992 = vadd.f32 %v991, 1.0
    %v993 = vmul.f32 %v992, %v983
    %v994 = vand.u32 2147483647, %v983
    %vm995 = vcmp.lt.f32.partialorder %v994, 0.0004427343
    %v996 = vsel %vm995, %v993, %v990
    %v997 = vadd.f32 %v985, 1.0
    %v998 = vlog2.pop %v997
    %v999 = vmul.f32 %v998, 0.6931472
    %v1000 = vmul.f32 -0.5, %v985
    %v1001 = vadd.f32 %v1000, 1.0
    %v1002 = vmul.f32 %v1001, %v985
    %v1003 = vand.u32 2147483647, %v985
    %vm1004 = vcmp.lt.f32.partialorder %v1003, 0.0004427343
    %v1005 = vsel %vm1004, %v1002, %v999
    %v1006 = vadd.f32 %v987, 1.0
    %v1007 = vlog2.pop %v1006
    %v1008 = vmul.f32 %v1007, 0.6931472
    %v1009 = vmul.f32 -0.5, %v987
    %v1010 = vadd.f32 %v1009, 1.0
    %v1011 = vmul.f32 %v1010, %v987
    %v1012 = vand.u32 2147483647, %v987
    %vm1013 = vcmp.lt.f32.partialorder %v1012, 0.0004427343
    %v1014 = vsel %vm1013, %v1011, %v1008
    %v1015 = vsel %vm979, %v971, %v996
    %v1016 = vsel %vm980, %v974, %v1005
    %v1017 = vsel %vm981, %v977, %v1014
    %s1018 = scalar_lea.vmem %s35, 64
    %v1019 = vld [vmem:[%s1018] sm:$0xff]
    %v1020 = vld [vmem:[%s1018 + $0x8] sm:$0xff]
    %v1021 = vld [vmem:[%s1018 + $0x10] sm:$0xff]
    %v1022 = vld [vmem:[%s1018 + $0x18] sm:$0xff]
    %v1023 = vld [vmem:[%s1018 + $0x20] sm:$0xff]
    %v1024 = vld [vmem:[%s1018 + $0x28] sm:$0xff]
    %v1025 = vld [vmem:[%s1018 + $0x30] sm:$0xff]
    %v1026 = vld [vmem:[%s1018 + $0x38] sm:$0xff]
    %s1027 = scalar_lea.vmem %s37, 1
    %v1028 = vld [vmem:[%s1027] sm:$0x1]
    %v1030 = vperm.slane %v1028, 0
    %v1033 = vsel %vm510, %v1015, 0
    %v1036 = vsel %vm510, %v1016, 0
    %v1039 = vsel %vm510, %v1017, 0
    %1041 = vmatpush.msra.mxu0 0.0
    %1042 = vmatpush.msra.mxu0 0.0
    %1043 = vmatpush.msra.mxu0 0.0
    %1044 = vmatpush.msra.mxu0 0.0
    %1045 = vmatpush.msra.mxu0 0.0
    %1046 = vmatpush.msra.mxu0 0.0
    %1047 = vmatpush.msra.mxu0 0.0
    %1048 = vmatpush.msra.mxu0 0.0
    %1049 = vmatpush.msra.mxu0 %v1026
    %1050 = vmatpush.msra.mxu0 %v1025
    %1051 = vmatpush.msra.mxu0 %v1024
    %1052 = vmatpush.msra.mxu0 %v1023
    %1053 = vmatpush.msra.mxu0 %v1022
    %1054 = vmatpush.msra.mxu0 %v1021
    %1055 = vmatpush.msra.mxu0 %v1020
    %1056 = vmatpush.msra.mxu0 %v1019
    %1057 = vmatmul.f32.gmra.mxu0 %v1033
    %v1058 = vpop.f32.mrf.mxu0
    %v1059 = vadd.f32 %v1030, %v1058
    %1060 = vmatmul.f32.gmra.mxu0 %v1036
    %v1061 = vpop.f32.mrf.mxu0
    %v1062 = vadd.f32 %v1030, %v1061
    %1063 = vmatmul.f32.gmra.mxu0 %v1039
    %v1064 = vpop.f32.mrf.mxu0
    %v1065 = vadd.f32 %v1030, %v1064
    %1066 = vdwg.mxu0
    %vm1067 = vcmp.gt.f32.partialorder %v1059, 20.0
    %vm1068 = vcmp.gt.f32.partialorder %v1062, 20.0
    %vm1069 = vcmp.gt.f32.partialorder %v1065, 20.0
    %v1070 = vmul.f32 %v1059, 1.442695
    %v1071 = vpow.pop %v1070
    %v1072 = vmul.f32 %v1062, 1.442695
    %v1073 = vpow.pop %v1072
    %v1074 = vmul.f32 %v1065, 1.442695
    %v1075 = vpow.pop %v1074
    %v1076 = vadd.f32 %v1071, 1.0
    %v1077 = vlog2.pop %v1076
    %v1078 = vmul.f32 %v1077, 0.6931472
    %v1079 = vmul.f32 -0.5, %v1071
    %v1080 = vadd.f32 %v1079, 1.0
    %v1081 = vmul.f32 %v1080, %v1071
    %v1082 = vand.u32 2147483647, %v1071
    %vm1083 = vcmp.lt.f32.partialorder %v1082, 0.0004427343
    %v1084 = vsel %vm1083, %v1081, %v1078
    %v1085 = vadd.f32 %v1073, 1.0
    %v1086 = vlog2.pop %v1085
    %v1087 = vmul.f32 %v1086, 0.6931472
    %v1088 = vmul.f32 -0.5, %v1073
    %v1089 = vadd.f32 %v1088, 1.0
    %v1090 = vmul.f32 %v1089, %v1073
    %v1091 = vand.u32 2147483647, %v1073
    %vm1092 = vcmp.lt.f32.partialorder %v1091, 0.0004427343
    %v1093 = vsel %vm1092, %v1090, %v1087
    %v1094 = vadd.f32 %v1075, 1.0
    %v1095 = vlog2.pop %v1094
    %v1096 = vmul.f32 %v1095, 0.6931472
    %v1097 = vmul.f32 -0.5, %v1075
    %v1098 = vadd.f32 %v1097, 1.0
    %v1099 = vmul.f32 %v1098, %v1075
    %v1100 = vand.u32 2147483647, %v1075
    %vm1101 = vcmp.lt.f32.partialorder %v1100, 0.0004427343
    %v1102 = vsel %vm1101, %v1099, %v1096
    %v1103 = vsel %vm1067, %v1059, %v1084
    %v1104 = vsel %vm1068, %v1062, %v1093
    %v1105 = vsel %vm1069, %v1065, %v1102
    %v1106 = vpack.c.bf16 %v1104, %v1103
    %v1107 = vpack.c.bf16 %v1105, %v1105
    %v1109 = vsel %vm693, %v1107, 0
    %1111 = vmatpush.bf16.msra.mxu0 0
    %1112 = vmatpush.bf16.msra.mxu0 0
    %1113 = vmatpush.bf16.msra.mxu0 0
    %1114 = vmatpush.bf16.msra.mxu0 0
    %1115 = vmatpush.bf16.msra.mxu0 0
    %1116 = vmatpush.bf16.msra.mxu0 0
    %1117 = vmatpush.bf16.msra.mxu0 %v1109
    %1118 = vmatpush.bf16.msra.mxu0 %v1106
    %1119 = vmatmul.bf16.gmra.mxu0 %v691
    %v1120 = vpop.f32.mrf.mxu0
    %v1121 = vadd.f32 0.0, %v1120
    %v1122 = vpop.f32.mrf.mxu0
    %v1123 = vadd.f32 0.0, %v1122
    %1124 = vdwg.mxu0
    %s1125 = scalar_lea.vmem %s39, 1
    %v1126 = vld [vmem:[%s1125] sm:$0x1]
    %v1128 = vperm.slane %v1126, 0
    %v1130 = vmul.f32 %v1121, %v1128
    %v1131 = vmul.f32 %v1123, %v1128
    %s1132 = scalar_lea.vmem %s41, 1
    %v1133 = vld [vmem:[%s1132] sm:$0x1]
    %v1135 = vperm.slane %v1133, 0
    %v1137 = vadd.f32 %v1130, %v1135
    %v1138 = vadd.f32 %v1131, %v1135
    %v1139 = vadd.f32 %v1137, %v749
    %v1140 = vadd.f32 %v1138, %v750
    %vm1141 = vcmp.gt.f32.partialorder %v1139, 20.0
    %vm1142 = vcmp.gt.f32.partialorder %v1140, 20.0
    %v1143 = vmul.f32 %v1139, 1.442695
    %v1144 = vpow.pop %v1143
    %v1145 = vmul.f32 %v1140, 1.442695
    %v1146 = vpow.pop %v1145
    %v1147 = vadd.f32 %v1144, 1.0
    %v1148 = vlog2.pop %v1147
    %v1149 = vmul.f32 %v1148, 0.6931472
    %v1150 = vmul.f32 -0.5, %v1144
    %v1151 = vadd.f32 %v1150, 1.0
    %v1152 = vmul.f32 %v1151, %v1144
    %v1153 = vand.u32 2147483647, %v1144
    %vm1154 = vcmp.lt.f32.partialorder %v1153, 0.0004427343
    %v1155 = vsel %vm1154, %v1152, %v1149
    %v1156 = vadd.f32 %v1146, 1.0
    %v1157 = vlog2.pop %v1156
    %v1158 = vmul.f32 %v1157, 0.6931472
    %v1159 = vmul.f32 -0.5, %v1146
    %v1160 = vadd.f32 %v1159, 1.0
    %v1161 = vmul.f32 %v1160, %v1146
    %v1162 = vand.u32 2147483647, %v1146
    %vm1163 = vcmp.lt.f32.partialorder %v1162, 0.0004427343
    %v1164 = vsel %vm1163, %v1161, %v1158
    %v1165 = vsel %vm1141, %v1139, %v1155
    %v1166 = vsel %vm1142, %v1140, %v1164
    %s1167 = scalar_lea.vmem %s23, 64
    %v1168 = vld [vmem:[%s1167] sm:$0xff]
    %v1169 = vld [vmem:[%s1167 + $0x8] sm:$0xff]
    %v1170 = vld [vmem:[%s1167 + $0x10] sm:$0xff]
    %v1171 = vld [vmem:[%s1167 + $0x18] sm:$0xff]
    %v1173 = vsel %vm131, %v1165, 0
    %v1176 = vsel %vm131, %v1166, 0
    %1178 = vmatpush.msra.mxu0 0.0
    %1179 = vmatpush.msra.mxu0 0.0
    %1180 = vmatpush.msra.mxu0 0.0
    %1181 = vmatpush.msra.mxu0 0.0
    %1182 = vmatpush.msra.mxu0 0.0
    %1183 = vmatpush.msra.mxu0 0.0
    %1184 = vmatpush.msra.mxu0 0.0
    %1185 = vmatpush.msra.mxu0 0.0
    %1186 = vmatpush.msra.mxu0 0.0
    %1187 = vmatpush.msra.mxu0 0.0
    %1188 = vmatpush.msra.mxu0 0.0
    %1189 = vmatpush.msra.mxu0 0.0
    %1190 = vmatpush.msra.mxu0 %v1171
    %1191 = vmatpush.msra.mxu0 %v1170
    %1192 = vmatpush.msra.mxu0 %v1169
    %1193 = vmatpush.msra.mxu0 %v1168
    %1194 = vmatmul.f32.gmra.mxu0 %v1173
    %v1195 = vpop.f32.mrf.mxu0
    %v1196 = vadd.f32 0.0, %v1195
    %1197 = vmatmul.f32.gmra.mxu0 %v1176
    %v1198 = vpop.f32.mrf.mxu0
    %v1199 = vadd.f32 0.0, %v1198
    %1200 = vdwg.mxu0
    %v1201 = vpack.c.bf16 %v1199, %v1196
    %s1202 = scalar_lea.vmem %s25, 64
    %v1203 = vld [vmem:[%s1202] sm:$0xff]
    %v1204 = vld [vmem:[%s1202 + $0x8] sm:$0xff]
    %v1205 = vld [vmem:[%s1202 + $0x10] sm:$0xff]
    %v1206 = vld [vmem:[%s1202 + $0x18] sm:$0xff]
    %1207 = vmatpush.msra.mxu0 0.0
    %1208 = vmatpush.msra.mxu0 0.0
    %1209 = vmatpush.msra.mxu0 0.0
    %1210 = vmatpush.msra.mxu0 0.0
    %1211 = vmatpush.msra.mxu0 0.0
    %1212 = vmatpush.msra.mxu0 0.0
    %1213 = vmatpush.msra.mxu0 0.0
    %1214 = vmatpush.msra.mxu0 0.0
    %1215 = vmatpush.msra.mxu0 0.0
    %1216 = vmatpush.msra.mxu0 0.0
    %1217 = vmatpush.msra.mxu0 0.0
    %1218 = vmatpush.msra.mxu0 0.0
    %1219 = vmatpush.msra.mxu0 %v1206
    %1220 = vmatpush.msra.mxu0 %v1205
    %1221 = vmatpush.msra.mxu0 %v1204
    %1222 = vmatpush.msra.mxu0 %v1203
    %1223 = vmatmul.f32.gmra.mxu0 %v1173
    %v1224 = vpop.f32.mrf.mxu0
    %v1225 = vadd.f32 0.0, %v1224
    %1226 = vmatmul.f32.gmra.mxu0 %v1176
    %v1227 = vpop.f32.mrf.mxu0
    %v1228 = vadd.f32 0.0, %v1227
    %1229 = vdwg.mxu0
    %v1230 = vpack.c.bf16 %v1228, %v1225
    %1231 = vmatpush.bf16.msra.mxu0 0
    %1232 = vmatpush.bf16.msra.mxu0 0
    %1233 = vmatpush.bf16.msra.mxu0 0
    %1234 = vmatpush.bf16.msra.mxu0 0
    %1235 = vmatpush.bf16.msra.mxu0 0
    %1236 = vmatpush.bf16.msra.mxu0 0
    %1237 = vmatpush.bf16.msra.mxu0 0
    %1238 = vmatpush.bf16.msra.mxu0 %v1230
    %1239 = vmatmul.bf16.gmra.mxu0 %v365
    %v1240 = vpop.f32.mrf.mxu0
    %v1241 = vadd.f32 0.0, %v1240
    %v1242 = vpop.f32.mrf.mxu0
    %v1243 = vadd.f32 0.0, %v1242
    %1244 = vmatmul.bf16.gmra.mxu0 %v368
    %v1245 = vpop.f32.mrf.mxu0
    %v1246 = vadd.f32 0.0, %v1245
    %v1247 = vpop.f32.mrf.mxu0
    %1248 = vdwg.mxu0
    %1249 = vmatpush.bf16.msra.mxu0 0
    %1250 = vmatpush.bf16.msra.mxu0 0
    %1251 = vmatpush.bf16.msra.mxu0 0
    %1252 = vmatpush.bf16.msra.mxu0 0
    %1253 = vmatpush.bf16.msra.mxu0 0
    %1254 = vmatpush.bf16.msra.mxu0 0
    %1255 = vmatpush.bf16.msra.mxu0 0
    %1256 = vmatpush.bf16.msra.mxu0 %v1201
    %1257 = vmatmul.bf16.gmra.mxu0 %v389
    %v1258 = vpop.f32.mrf.mxu0
    %v1259 = vadd.f32 %v1241, %v1258
    %v1260 = vpop.f32.mrf.mxu0
    %v1261 = vadd.f32 %v1243, %v1260
    %1262 = vmatmul.bf16.gmra.mxu0 %v392
    %v1263 = vpop.f32.mrf.mxu0
    %v1264 = vadd.f32 %v1246, %v1263
    %v1265 = vpop.f32.mrf.mxu0
    %1266 = vdwg.mxu0
    %s1267 = scalar_lea.vmem %s27, 32
    %v1268 = vld [vmem:[%s1267] sm:$0xff]
    %v1269 = vld [vmem:[%s1267 + $0x8] sm:$0xff]
    %1270 = vmatpush.msra.mxu0 0.0
    %1271 = vmatpush.msra.mxu0 0.0
    %1272 = vmatpush.msra.mxu0 0.0
    %1273 = vmatpush.msra.mxu0 0.0
    %1274 = vmatpush.msra.mxu0 0.0
    %1275 = vmatpush.msra.mxu0 0.0
    %1276 = vmatpush.msra.mxu0 0.0
    %1277 = vmatpush.msra.mxu0 0.0
    %1278 = vmatpush.msra.mxu0 0.0
    %1279 = vmatpush.msra.mxu0 0.0
    %1280 = vmatpush.msra.mxu0 0.0
    %1281 = vmatpush.msra.mxu0 0.0
    %1282 = vmatpush.msra.mxu0 0.0
    %1283 = vmatpush.msra.mxu0 0.0
    %1284 = vmatpush.msra.mxu0 %v1269
    %1285 = vmatpush.msra.mxu0 %v1268
    %1286 = vmatmul.f32.gmra.mxu0 %v415
    %v1287 = vpop.f32.mrf.mxu0
    %v1288 = vadd.f32 0.0, %v1287
    %1289 = vmatmul.f32.gmra.mxu0 %v418
    %v1290 = vpop.f32.mrf.mxu0
    %v1291 = vadd.f32 0.0, %v1290
    %1292 = vmatmul.f32.gmra.mxu0 %v421
    %v1293 = vpop.f32.mrf.mxu0
    %v1294 = vadd.f32 0.0, %v1293
    %1295 = vdwg.mxu0
    %v1296 = vadd.f32 %v1259, %v1288
    %v1297 = vadd.f32 %v1261, %v1291
    %v1298 = vadd.f32 %v1264, %v1294
    %s1299 = scalar_lea.vmem %s29, 2
    %v1300 = vld [vmem:[%s1299] sm:$0x1]
    %v1302 = vperm.slane %v1300, 0
    %v1304 = vadd.f32 %v1296, %v1302
    %v1305 = vadd.f32 %v1297, %v1302
    %v1306 = vadd.f32 %v1298, %v1302
    %vm1307 = vcmp.gt.f32.partialorder %v1304, 20.0
    %vm1308 = vcmp.gt.f32.partialorder %v1305, 20.0
    %vm1309 = vcmp.gt.f32.partialorder %v1306, 20.0
    %v1310 = vmul.f32 %v1304, 1.442695
    %v1311 = vpow.pop %v1310
    %v1312 = vmul.f32 %v1305, 1.442695
    %v1313 = vpow.pop %v1312
    %v1314 = vmul.f32 %v1306, 1.442695
    %v1315 = vpow.pop %v1314
    %v1316 = vadd.f32 %v1311, 1.0
    %v1317 = vlog2.pop %v1316
    %v1318 = vmul.f32 %v1317, 0.6931472
    %v1319 = vmul.f32 -0.5, %v1311
    %v1320 = vadd.f32 %v1319, 1.0
    %v1321 = vmul.f32 %v1320, %v1311
    %v1322 = vand.u32 2147483647, %v1311
    %vm1323 = vcmp.lt.f32.partialorder %v1322, 0.0004427343
    %v1324 = vsel %vm1323, %v1321, %v1318
    %v1325 = vadd.f32 %v1313, 1.0
    %v1326 = vlog2.pop %v1325
    %v1327 = vmul.f32 %v1326, 0.6931472
    %v1328 = vmul.f32 -0.5, %v1313
    %v1329 = vadd.f32 %v1328, 1.0
    %v1330 = vmul.f32 %v1329, %v1313
    %v1331 = vand.u32 2147483647, %v1313
    %vm1332 = vcmp.lt.f32.partialorder %v1331, 0.0004427343
    %v1333 = vsel %vm1332, %v1330, %v1327
    %v1334 = vadd.f32 %v1315, 1.0
    %v1335 = vlog2.pop %v1334
    %v1336 = vmul.f32 %v1335, 0.6931472
    %v1337 = vmul.f32 -0.5, %v1315
    %v1338 = vadd.f32 %v1337, 1.0
    %v1339 = vmul.f32 %v1338, %v1315
    %v1340 = vand.u32 2147483647, %v1315
    %vm1341 = vcmp.lt.f32.partialorder %v1340, 0.0004427343
    %v1342 = vsel %vm1341, %v1339, %v1336
    %v1343 = vsel %vm1307, %v1304, %v1324
    %v1344 = vsel %vm1308, %v1305, %v1333
    %v1345 = vsel %vm1309, %v1306, %v1342
    %s1346 = scalar_lea.vmem %s31, 128
    %v1347 = vld [vmem:[%s1346] sm:$0xff]
    %v1348 = vld [vmem:[%s1346 + $0x8] sm:$0xff]
    %v1349 = vld [vmem:[%s1346 + $0x10] sm:$0xff]
    %v1350 = vld [vmem:[%s1346 + $0x18] sm:$0xff]
    %v1351 = vld [vmem:[%s1346 + $0x20] sm:$0xff]
    %v1352 = vld [vmem:[%s1346 + $0x28] sm:$0xff]
    %v1353 = vld [vmem:[%s1346 + $0x30] sm:$0xff]
    %v1354 = vld [vmem:[%s1346 + $0x38] sm:$0xff]
    %s1355 = scalar_lea.vmem %s33, 2
    %v1356 = vld [vmem:[%s1355] sm:$0x1]
    %v1358 = vperm.slane %v1356, 0
    %v1361 = vsel %vm510, %v1343, 0
    %v1364 = vsel %vm510, %v1344, 0
    %v1367 = vsel %vm510, %v1345, 0
    %1369 = vmatpush.msra.mxu0 0.0
    %1370 = vmatpush.msra.mxu0 0.0
    %1371 = vmatpush.msra.mxu0 0.0
    %1372 = vmatpush.msra.mxu0 0.0
    %1373 = vmatpush.msra.mxu0 0.0
    %1374 = vmatpush.msra.mxu0 0.0
    %1375 = vmatpush.msra.mxu0 0.0
    %1376 = vmatpush.msra.mxu0 0.0
    %1377 = vmatpush.msra.mxu0 %v1354
    %1378 = vmatpush.msra.mxu0 %v1353
    %1379 = vmatpush.msra.mxu0 %v1352
    %1380 = vmatpush.msra.mxu0 %v1351
    %1381 = vmatpush.msra.mxu0 %v1350
    %1382 = vmatpush.msra.mxu0 %v1349
    %1383 = vmatpush.msra.mxu0 %v1348
    %1384 = vmatpush.msra.mxu0 %v1347
    %1385 = vmatmul.f32.gmra.mxu0 %v1361
    %v1386 = vpop.f32.mrf.mxu0
    %v1387 = vadd.f32 %v1358, %v1386
    %1388 = vmatmul.f32.gmra.mxu0 %v1364
    %v1389 = vpop.f32.mrf.mxu0
    %v1390 = vadd.f32 %v1358, %v1389
    %1391 = vmatmul.f32.gmra.mxu0 %v1367
    %v1392 = vpop.f32.mrf.mxu0
    %v1393 = vadd.f32 %v1358, %v1392
    %1394 = vdwg.mxu0
    %vm1395 = vcmp.gt.f32.partialorder %v1387, 20.0
    %vm1396 = vcmp.gt.f32.partialorder %v1390, 20.0
    %vm1397 = vcmp.gt.f32.partialorder %v1393, 20.0
    %v1398 = vmul.f32 %v1387, 1.442695
    %v1399 = vpow.pop %v1398
    %v1400 = vmul.f32 %v1390, 1.442695
    %v1401 = vpow.pop %v1400
    %v1402 = vmul.f32 %v1393, 1.442695
    %v1403 = vpow.pop %v1402
    %v1404 = vadd.f32 %v1399, 1.0
    %v1405 = vlog2.pop %v1404
    %v1406 = vmul.f32 %v1405, 0.6931472
    %v1407 = vmul.f32 -0.5, %v1399
    %v1408 = vadd.f32 %v1407, 1.0
    %v1409 = vmul.f32 %v1408, %v1399
    %v1410 = vand.u32 2147483647, %v1399
    %vm1411 = vcmp.lt.f32.partialorder %v1410, 0.0004427343
    %v1412 = vsel %vm1411, %v1409, %v1406
    %v1413 = vadd.f32 %v1401, 1.0
    %v1414 = vlog2.pop %v1413
    %v1415 = vmul.f32 %v1414, 0.6931472
    %v1416 = vmul.f32 -0.5, %v1401
    %v1417 = vadd.f32 %v1416, 1.0
    %v1418 = vmul.f32 %v1417, %v1401
    %v1419 = vand.u32 2147483647, %v1401
    %vm1420 = vcmp.lt.f32.partialorder %v1419, 0.0004427343
    %v1421 = vsel %vm1420, %v1418, %v1415
    %v1422 = vadd.f32 %v1403, 1.0
    %v1423 = vlog2.pop %v1422
    %v1424 = vmul.f32 %v1423, 0.6931472
    %v1425 = vmul.f32 -0.5, %v1403
    %v1426 = vadd.f32 %v1425, 1.0
    %v1427 = vmul.f32 %v1426, %v1403
    %v1428 = vand.u32 2147483647, %v1403
    %vm1429 = vcmp.lt.f32.partialorder %v1428, 0.0004427343
    %v1430 = vsel %vm1429, %v1427, %v1424
    %v1431 = vsel %vm1395, %v1387, %v1412
    %v1432 = vsel %vm1396, %v1390, %v1421
    %v1433 = vsel %vm1397, %v1393, %v1430
    %s1434 = scalar_lea.vmem %s35, 128
    %v1435 = vld [vmem:[%s1434] sm:$0xff]
    %v1436 = vld [vmem:[%s1434 + $0x8] sm:$0xff]
    %v1437 = vld [vmem:[%s1434 + $0x10] sm:$0xff]
    %v1438 = vld [vmem:[%s1434 + $0x18] sm:$0xff]
    %v1439 = vld [vmem:[%s1434 + $0x20] sm:$0xff]
    %v1440 = vld [vmem:[%s1434 + $0x28] sm:$0xff]
    %v1441 = vld [vmem:[%s1434 + $0x30] sm:$0xff]
    %v1442 = vld [vmem:[%s1434 + $0x38] sm:$0xff]
    %s1443 = scalar_lea.vmem %s37, 2
    %v1444 = vld [vmem:[%s1443] sm:$0x1]
    %v1446 = vperm.slane %v1444, 0
    %v1449 = vsel %vm510, %v1431, 0
    %v1452 = vsel %vm510, %v1432, 0
    %v1455 = vsel %vm510, %v1433, 0
    %1457 = vmatpush.msra.mxu0 0.0
    %1458 = vmatpush.msra.mxu0 0.0
    %1459 = vmatpush.msra.mxu0 0.0
    %1460 = vmatpush.msra.mxu0 0.0
    %1461 = vmatpush.msra.mxu0 0.0
    %1462 = vmatpush.msra.mxu0 0.0
    %1463 = vmatpush.msra.mxu0 0.0
    %1464 = vmatpush.msra.mxu0 0.0
    %1465 = vmatpush.msra.mxu0 %v1442
    %1466 = vmatpush.msra.mxu0 %v1441
    %1467 = vmatpush.msra.mxu0 %v1440
    %1468 = vmatpush.msra.mxu0 %v1439
    %1469 = vmatpush.msra.mxu0 %v1438
    %1470 = vmatpush.msra.mxu0 %v1437
    %1471 = vmatpush.msra.mxu0 %v1436
    %1472 = vmatpush.msra.mxu0 %v1435
    %1473 = vmatmul.f32.gmra.mxu0 %v1449
    %v1474 = vpop.f32.mrf.mxu0
    %v1475 = vadd.f32 %v1446, %v1474
    %1476 = vmatmul.f32.gmra.mxu0 %v1452
    %v1477 = vpop.f32.mrf.mxu0
    %v1478 = vadd.f32 %v1446, %v1477
    %1479 = vmatmul.f32.gmra.mxu0 %v1455
    %v1480 = vpop.f32.mrf.mxu0
    %v1481 = vadd.f32 %v1446, %v1480
    %1482 = vdwg.mxu0
    %vm1483 = vcmp.gt.f32.partialorder %v1475, 20.0
    %vm1484 = vcmp.gt.f32.partialorder %v1478, 20.0
    %vm1485 = vcmp.gt.f32.partialorder %v1481, 20.0
    %v1486 = vmul.f32 %v1475, 1.442695
    %v1487 = vpow.pop %v1486
    %v1488 = vmul.f32 %v1478, 1.442695
    %v1489 = vpow.pop %v1488
    %v1490 = vmul.f32 %v1481, 1.442695
    %v1491 = vpow.pop %v1490
    %v1492 = vadd.f32 %v1487, 1.0
    %v1493 = vlog2.pop %v1492
    %v1494 = vmul.f32 %v1493, 0.6931472
    %v1495 = vmul.f32 -0.5, %v1487
    %v1496 = vadd.f32 %v1495, 1.0
    %v1497 = vmul.f32 %v1496, %v1487
    %v1498 = vand.u32 2147483647, %v1487
    %vm1499 = vcmp.lt.f32.partialorder %v1498, 0.0004427343
    %v1500 = vsel %vm1499, %v1497, %v1494
    %v1501 = vadd.f32 %v1489, 1.0
    %v1502 = vlog2.pop %v1501
    %v1503 = vmul.f32 %v1502, 0.6931472
    %v1504 = vmul.f32 -0.5, %v1489
    %v1505 = vadd.f32 %v1504, 1.0
    %v1506 = vmul.f32 %v1505, %v1489
    %v1507 = vand.u32 2147483647, %v1489
    %vm1508 = vcmp.lt.f32.partialorder %v1507, 0.0004427343
    %v1509 = vsel %vm1508, %v1506, %v1503
    %v1510 = vadd.f32 %v1491, 1.0
    %v1511 = vlog2.pop %v1510
    %v1512 = vmul.f32 %v1511, 0.6931472
    %v1513 = vmul.f32 -0.5, %v1491
    %v1514 = vadd.f32 %v1513, 1.0
    %v1515 = vmul.f32 %v1514, %v1491
    %v1516 = vand.u32 2147483647, %v1491
    %vm1517 = vcmp.lt.f32.partialorder %v1516, 0.0004427343
    %v1518 = vsel %vm1517, %v1515, %v1512
    %v1519 = vsel %vm1483, %v1475, %v1500
    %v1520 = vsel %vm1484, %v1478, %v1509
    %v1521 = vsel %vm1485, %v1481, %v1518
    %v1522 = vpack.c.bf16 %v1520, %v1519
    %v1523 = vpack.c.bf16 %v1521, %v1521
    %v1525 = vsel %vm693, %v1523, 0
    %1527 = vmatpush.bf16.msra.mxu0 0
    %1528 = vmatpush.bf16.msra.mxu0 0
    %1529 = vmatpush.bf16.msra.mxu0 0
    %1530 = vmatpush.bf16.msra.mxu0 0
    %1531 = vmatpush.bf16.msra.mxu0 0
    %1532 = vmatpush.bf16.msra.mxu0 0
    %1533 = vmatpush.bf16.msra.mxu0 %v1525
    %1534 = vmatpush.bf16.msra.mxu0 %v1522
    %1535 = vmatmul.bf16.gmra.mxu0 %v691
    %v1536 = vpop.f32.mrf.mxu0
    %v1537 = vadd.f32 0.0, %v1536
    %v1538 = vpop.f32.mrf.mxu0
    %v1539 = vadd.f32 0.0, %v1538
    %1540 = vdwg.mxu0
    %s1541 = scalar_lea.vmem %s39, 2
    %v1542 = vld [vmem:[%s1541] sm:$0x1]
    %v1544 = vperm.slane %v1542, 0
    %v1546 = vmul.f32 %v1537, %v1544
    %v1547 = vmul.f32 %v1539, %v1544
    %s1548 = scalar_lea.vmem %s41, 2
    %v1549 = vld [vmem:[%s1548] sm:$0x1]
    %v1551 = vperm.slane %v1549, 0
    %v1553 = vadd.f32 %v1546, %v1551
    %v1554 = vadd.f32 %v1547, %v1551
    %v1555 = vadd.f32 %v1553, %v1165
    %v1556 = vadd.f32 %v1554, %v1166
    %vm1557 = vcmp.gt.f32.partialorder %v1555, 20.0
    %vm1558 = vcmp.gt.f32.partialorder %v1556, 20.0
    %v1559 = vmul.f32 %v1555, 1.442695
    %v1560 = vpow.pop %v1559
    %v1561 = vmul.f32 %v1556, 1.442695
    %v1562 = vpow.pop %v1561
    %v1563 = vadd.f32 %v1560, 1.0
    %v1564 = vlog2.pop %v1563
    %v1565 = vmul.f32 %v1564, 0.6931472
    %v1566 = vmul.f32 -0.5, %v1560
    %v1567 = vadd.f32 %v1566, 1.0
    %v1568 = vmul.f32 %v1567, %v1560
    %v1569 = vand.u32 2147483647, %v1560
    %vm1570 = vcmp.lt.f32.partialorder %v1569, 0.0004427343
    %v1571 = vsel %vm1570, %v1568, %v1565
    %v1572 = vadd.f32 %v1562, 1.0
    %v1573 = vlog2.pop %v1572
    %v1574 = vmul.f32 %v1573, 0.6931472
    %v1575 = vmul.f32 -0.5, %v1562
    %v1576 = vadd.f32 %v1575, 1.0
    %v1577 = vmul.f32 %v1576, %v1562
    %v1578 = vand.u32 2147483647, %v1562
    %vm1579 = vcmp.lt.f32.partialorder %v1578, 0.0004427343
    %v1580 = vsel %vm1579, %v1577, %v1574
    %v1581 = vsel %vm1557, %v1555, %v1571
    %v1582 = vsel %vm1558, %v1556, %v1580
    %v1583 = vld [vmem:[%s43] sm:$0xff]
    %v1584 = vld [vmem:[%s43 + $0x8] sm:$0xff]
    %v1585 = vld [vmem:[%s43 + $0x10] sm:$0xff]
    %v1586 = vld [vmem:[%s43 + $0x18] sm:$0xff]
    %v1587 = vld [vmem:[%s43 + $0x20] sm:$0xff]
    %v1588 = vld [vmem:[%s43 + $0x28] sm:$0xff]
    %v1589 = vld [vmem:[%s43 + $0x30] sm:$0xff]
    %v1590 = vld [vmem:[%s43 + $0x38] sm:$0xff]
    %v1591 = vld [vmem:[%s45] sm:$0x3]
    %v1593 = vperm.slane %v1591, 0
    %v1594 = vperm.slane %v1591, 1
    %v1598 = vsel %vm131, %v1581, 0
    %v1601 = vsel %vm131, %v1582, 0
    %1603 = vmatpush.msra.mxu0 0.0
    %1604 = vmatpush.msra.mxu0 0.0
    %1605 = vmatpush.msra.mxu0 0.0
    %1606 = vmatpush.msra.mxu0 0.0
    %1607 = vmatpush.msra.mxu0 0.0
    %1608 = vmatpush.msra.mxu0 0.0
    %1609 = vmatpush.msra.mxu0 0.0
    %1610 = vmatpush.msra.mxu0 0.0
    %1611 = vmatpush.msra.mxu0 0.0
    %1612 = vmatpush.msra.mxu0 0.0
    %1613 = vmatpush.msra.mxu0 0.0
    %1614 = vmatpush.msra.mxu0 0.0
    %1615 = vmatpush.msra.mxu0 %v1589
    %1616 = vmatpush.msra.mxu0 %v1587
    %1617 = vmatpush.msra.mxu0 %v1585
    %1618 = vmatpush.msra.mxu0 %v1583
    %1619 = vmatmul.f32.gmra.mxu0 %v1598
    %v1620 = vpop.f32.mrf.mxu0
    %v1621 = vadd.f32 %v1593, %v1620
    %1622 = vmatmul.f32.gmra.mxu0 %v1601
    %v1623 = vpop.f32.mrf.mxu0
    %v1624 = vadd.f32 %v1593, %v1623
    %1625 = vdwg.mxu0
    %1626 = vmatpush.msra.mxu0 0.0
    %1627 = vmatpush.msra.mxu0 0.0
    %1628 = vmatpush.msra.mxu0 0.0
    %1629 = vmatpush.msra.mxu0 0.0
    %1630 = vmatpush.msra.mxu0 0.0
    %1631 = vmatpush.msra.mxu0 0.0
    %1632 = vmatpush.msra.mxu0 0.0
    %1633 = vmatpush.msra.mxu0 0.0
    %1634 = vmatpush.msra.mxu0 0.0
    %1635 = vmatpush.msra.mxu0 0.0
    %1636 = vmatpush.msra.mxu0 0.0
    %1637 = vmatpush.msra.mxu0 0.0
    %1638 = vmatpush.msra.mxu0 %v1590
    %1639 = vmatpush.msra.mxu0 %v1588
    %1640 = vmatpush.msra.mxu0 %v1586
    %1641 = vmatpush.msra.mxu0 %v1584
    %1642 = vmatmul.f32.gmra.mxu0 %v1598
    %v1643 = vpop.f32.mrf.mxu0
    %v1644 = vadd.f32 %v1594, %v1643
    %1645 = vmatmul.f32.gmra.mxu0 %v1601
    %v1646 = vpop.f32.mrf.mxu0
    %v1647 = vadd.f32 %v1594, %v1646
    %1648 = vdwg.mxu0
    %vm1649 = vcmp.gt.f32.partialorder %v1621, 20.0
    %vm1650 = vcmp.gt.f32.partialorder %v1644, 20.0
    %vm1651 = vcmp.gt.f32.partialorder %v1624, 20.0
    %vm1652 = vcmp.gt.f32.partialorder %v1647, 20.0
    %v1653 = vmul.f32 %v1621, 1.442695
    %v1654 = vpow.pop %v1653
    %v1655 = vmul.f32 %v1644, 1.442695
    %v1656 = vpow.pop %v1655
    %v1657 = vmul.f32 %v1624, 1.442695
    %v1658 = vpow.pop %v1657
    %v1659 = vmul.f32 %v1647, 1.442695
    %v1660 = vpow.pop %v1659
    %v1661 = vadd.f32 %v1654, 1.0
    %v1662 = vlog2.pop %v1661
    %v1663 = vmul.f32 %v1662, 0.6931472
    %v1664 = vmul.f32 -0.5, %v1654
    %v1665 = vadd.f32 %v1664, 1.0
    %v1666 = vmul.f32 %v1665, %v1654
    %v1667 = vand.u32 2147483647, %v1654
    %vm1668 = vcmp.lt.f32.partialorder %v1667, 0.0004427343
    %v1669 = vsel %vm1668, %v1666, %v1663
    %v1670 = vadd.f32 %v1656, 1.0
    %v1671 = vlog2.pop %v1670
    %v1672 = vmul.f32 %v1671, 0.6931472
    %v1673 = vmul.f32 -0.5, %v1656
    %v1674 = vadd.f32 %v1673, 1.0
    %v1675 = vmul.f32 %v1674, %v1656
    %v1676 = vand.u32 2147483647, %v1656
    %vm1677 = vcmp.lt.f32.partialorder %v1676, 0.0004427343
    %v1678 = vsel %vm1677, %v1675, %v1672
    %v1679 = vadd.f32 %v1658, 1.0
    %v1680 = vlog2.pop %v1679
    %v1681 = vmul.f32 %v1680, 0.6931472
    %v1682 = vmul.f32 -0.5, %v1658
    %v1683 = vadd.f32 %v1682, 1.0
    %v1684 = vmul.f32 %v1683, %v1658
    %v1685 = vand.u32 2147483647, %v1658
    %vm1686 = vcmp.lt.f32.partialorder %v1685, 0.0004427343
    %v1687 = vsel %vm1686, %v1684, %v1681
    %v1688 = vadd.f32 %v1660, 1.0
    %v1689 = vlog2.pop %v1688
    %v1690 = vmul.f32 %v1689, 0.6931472
    %v1691 = vmul.f32 -0.5, %v1660
    %v1692 = vadd.f32 %v1691, 1.0
    %v1693 = vmul.f32 %v1692, %v1660
    %v1694 = vand.u32 2147483647, %v1660
    %vm1695 = vcmp.lt.f32.partialorder %v1694, 0.0004427343
    %v1696 = vsel %vm1695, %v1693, %v1690
    %v1697 = vsel %vm1649, %v1621, %v1669
    %v1698 = vsel %vm1650, %v1644, %v1678
    %v1699 = vsel %vm1651, %v1624, %v1687
    %v1700 = vsel %vm1652, %v1647, %v1696
    %v1701 = vld [vmem:[%s47] sm:$0xff]
    %v1702 = vld [vmem:[%s47 + $0x8] sm:$0xff]
    %v1703 = vld [vmem:[%s47 + $0x10] sm:$0xff]
    %v1704 = vld [vmem:[%s47 + $0x18] sm:$0xff]
    %v1705 = vld [vmem:[%s47 + $0x20] sm:$0xff]
    %v1706 = vld [vmem:[%s47 + $0x28] sm:$0xff]
    %v1707 = vld [vmem:[%s47 + $0x30] sm:$0xff]
    %v1708 = vld [vmem:[%s47 + $0x38] sm:$0xff]
    %v1709 = vld [vmem:[%s47 + $0x40] sm:$0xff]
    %v1710 = vld [vmem:[%s47 + $0x48] sm:$0xff]
    %v1711 = vld [vmem:[%s47 + $0x50] sm:$0xff]
    %v1712 = vld [vmem:[%s47 + $0x58] sm:$0xff]
    %v1713 = vld [vmem:[%s47 + $0x60] sm:$0xff]
    %v1714 = vld [vmem:[%s47 + $0x68] sm:$0xff]
    %v1715 = vld [vmem:[%s47 + $0x70] sm:$0xff]
    %v1716 = vld [vmem:[%s47 + $0x78] sm:$0xff]
    %v1717 = vld [vmem:[%s47 + $0x80] sm:$0xff]
    %v1718 = vld [vmem:[%s47 + $0x88] sm:$0xff]
    %v1719 = vld [vmem:[%s47 + $0x90] sm:$0xff]
    %v1720 = vld [vmem:[%s47 + $0x98] sm:$0xff]
    %v1721 = vld [vmem:[%s47 + $0xa0] sm:$0xff]
    %v1722 = vld [vmem:[%s47 + $0xa8] sm:$0xff]
    %v1723 = vld [vmem:[%s47 + $0xb0] sm:$0xff]
    %v1724 = vld [vmem:[%s47 + $0xb8] sm:$0xff]
    %v1725 = vld [vmem:[%s47 + $0xc0] sm:$0xff]
    %v1726 = vld [vmem:[%s47 + $0xc8] sm:$0xff]
    %v1727 = vld [vmem:[%s47 + $0xd0] sm:$0xff]
    %v1728 = vld [vmem:[%s47 + $0xd8] sm:$0xff]
    %v1729 = vld [vmem:[%s47 + $0xe0] sm:$0xff]
    %v1730 = vld [vmem:[%s47 + $0xe8] sm:$0xff]
    %v1731 = vld [vmem:[%s47 + $0xf0] sm:$0xff]
    %v1732 = vld [vmem:[%s47 + $0xf8] sm:$0xff]
    %v1733 = vld [vmem:[%s47 + $0x100] sm:$0xff]
    %v1734 = vld [vmem:[%s47 + $0x108] sm:$0xff]
    %v1735 = vld [vmem:[%s47 + $0x110] sm:$0xff]
    %v1736 = vld [vmem:[%s47 + $0x118] sm:$0xff]
    %v1737 = vld [vmem:[%s47 + $0x120] sm:$0xff]
    %v1738 = vld [vmem:[%s47 + $0x128] sm:$0xff]
    %v1739 = vld [vmem:[%s47 + $0x130] sm:$0xff]
    %v1740 = vld [vmem:[%s47 + $0x138] sm:$0xff]
    %v1741 = vld [vmem:[%s47 + $0x140] sm:$0xff]
    %v1742 = vld [vmem:[%s47 + $0x148] sm:$0xff]
    %v1743 = vld [vmem:[%s47 + $0x150] sm:$0xff]
    %v1744 = vld [vmem:[%s47 + $0x158] sm:$0xff]
    %v1745 = vld [vmem:[%s47 + $0x160] sm:$0xff]
    %v1746 = vld [vmem:[%s47 + $0x168] sm:$0xff]
    %v1747 = vld [vmem:[%s47 + $0x170] sm:$0xff]
    %v1748 = vld [vmem:[%s47 + $0x178] sm:$0xff]
    %v1749 = vld [vmem:[%s47 + $0x180] sm:$0xff]
    %v1750 = vld [vmem:[%s47 + $0x188] sm:$0xff]
    %v1751 = vld [vmem:[%s47 + $0x190] sm:$0xff]
    %v1752 = vld [vmem:[%s47 + $0x198] sm:$0xff]
    %v1753 = vld [vmem:[%s47 + $0x1a0] sm:$0xff]
    %v1754 = vld [vmem:[%s47 + $0x1a8] sm:$0xff]
    %v1755 = vld [vmem:[%s47 + $0x1b0] sm:$0xff]
    %v1756 = vld [vmem:[%s47 + $0x1b8] sm:$0xff]
    %v1757 = vld [vmem:[%s47 + $0x1c0] sm:$0xff]
    %v1758 = vld [vmem:[%s47 + $0x1c8] sm:$0xff]
    %v1759 = vld [vmem:[%s47 + $0x1d0] sm:$0xff]
    %v1760 = vld [vmem:[%s47 + $0x1d8] sm:$0xff]
    %v1761 = vld [vmem:[%s47 + $0x1e0] sm:$0xff]
    %v1762 = vld [vmem:[%s47 + $0x1e8] sm:$0xff]
    %v1763 = vld [vmem:[%s47 + $0x1f0] sm:$0xff]
    %v1764 = vld [vmem:[%s47 + $0x1f8] sm:$0xff]
    %v1765 = vld [vmem:[%s47 + $0x200] sm:$0xff]
    %v1766 = vld [vmem:[%s47 + $0x208] sm:$0xff]
    %v1767 = vld [vmem:[%s47 + $0x210] sm:$0xff]
    %v1768 = vld [vmem:[%s47 + $0x218] sm:$0xff]
    %v1769 = vld [vmem:[%s47 + $0x220] sm:$0xff]
    %v1770 = vld [vmem:[%s47 + $0x228] sm:$0xff]
    %v1771 = vld [vmem:[%s47 + $0x230] sm:$0xff]
    %v1772 = vld [vmem:[%s47 + $0x238] sm:$0xff]
    %v1773 = vld [vmem:[%s47 + $0x240] sm:$0xff]
    %v1774 = vld [vmem:[%s47 + $0x248] sm:$0xff]
    %v1775 = vld [vmem:[%s47 + $0x250] sm:$0xff]
    %v1776 = vld [vmem:[%s47 + $0x258] sm:$0xff]
    %v1777 = vld [vmem:[%s47 + $0x260] sm:$0xff]
    %v1778 = vld [vmem:[%s47 + $0x268] sm:$0xff]
    %v1779 = vld [vmem:[%s47 + $0x270] sm:$0xff]
    %v1780 = vld [vmem:[%s47 + $0x278] sm:$0xff]
    %v1781 = vld [vmem:[%s47 + $0x280] sm:$0xff]
    %v1782 = vld [vmem:[%s47 + $0x288] sm:$0xff]
    %v1783 = vld [vmem:[%s47 + $0x290] sm:$0xff]
    %v1784 = vld [vmem:[%s47 + $0x298] sm:$0xff]
    %v1785 = vld [vmem:[%s47 + $0x2a0] sm:$0xff]
    %v1786 = vld [vmem:[%s47 + $0x2a8] sm:$0xff]
    %v1787 = vld [vmem:[%s47 + $0x2b0] sm:$0xff]
    %v1788 = vld [vmem:[%s47 + $0x2b8] sm:$0xff]
    %v1789 = vld [vmem:[%s47 + $0x2c0] sm:$0xff]
    %v1790 = vld [vmem:[%s47 + $0x2c8] sm:$0xff]
    %v1791 = vld [vmem:[%s47 + $0x2d0] sm:$0xff]
    %v1792 = vld [vmem:[%s47 + $0x2d8] sm:$0xff]
    %v1793 = vld [vmem:[%s47 + $0x2e0] sm:$0xff]
    %v1794 = vld [vmem:[%s47 + $0x2e8] sm:$0xff]
    %v1795 = vld [vmem:[%s47 + $0x2f0] sm:$0xff]
    %v1796 = vld [vmem:[%s47 + $0x2f8] sm:$0xff]
    %v1797 = vld [vmem:[%s47 + $0x300] sm:$0xff]
    %v1798 = vld [vmem:[%s47 + $0x308] sm:$0xff]
    %v1799 = vld [vmem:[%s47 + $0x310] sm:$0xff]
    %v1800 = vld [vmem:[%s47 + $0x318] sm:$0xff]
    %v1801 = vld [vmem:[%s47 + $0x320] sm:$0xff]
    %v1802 = vld [vmem:[%s47 + $0x328] sm:$0xff]
    %v1803 = vld [vmem:[%s47 + $0x330] sm:$0xff]
    %v1804 = vld [vmem:[%s47 + $0x338] sm:$0xff]
    %v1805 = vld [vmem:[%s47 + $0x340] sm:$0xff]
    %v1806 = vld [vmem:[%s47 + $0x348] sm:$0xff]
    %v1807 = vld [vmem:[%s47 + $0x350] sm:$0xff]
    %v1808 = vld [vmem:[%s47 + $0x358] sm:$0xff]
    %v1809 = vld [vmem:[%s47 + $0x360] sm:$0xff]
    %v1810 = vld [vmem:[%s47 + $0x368] sm:$0xff]
    %v1811 = vld [vmem:[%s47 + $0x370] sm:$0xff]
    %v1812 = vld [vmem:[%s47 + $0x378] sm:$0xff]
    %v1813 = vld [vmem:[%s47 + $0x380] sm:$0xff]
    %v1814 = vld [vmem:[%s47 + $0x388] sm:$0xff]
    %v1815 = vld [vmem:[%s47 + $0x390] sm:$0xff]
    %v1816 = vld [vmem:[%s47 + $0x398] sm:$0xff]
    %v1817 = vld [vmem:[%s47 + $0x3a0] sm:$0xff]
    %v1818 = vld [vmem:[%s47 + $0x3a8] sm:$0xff]
    %v1819 = vld [vmem:[%s47 + $0x3b0] sm:$0xff]
    %v1820 = vld [vmem:[%s47 + $0x3b8] sm:$0xff]
    %v1821 = vld [vmem:[%s47 + $0x3c0] sm:$0xff]
    %v1822 = vld [vmem:[%s47 + $0x3c8] sm:$0xff]
    %v1823 = vld [vmem:[%s47 + $0x3d0] sm:$0xff]
    %v1824 = vld [vmem:[%s47 + $0x3d8] sm:$0xff]
    %v1825 = vld [vmem:[%s47 + $0x3e0] sm:$0xff]
    %v1826 = vld [vmem:[%s47 + $0x3e8] sm:$0xff]
    %v1827 = vld [vmem:[%s47 + $0x3f0] sm:$0xff]
    %v1828 = vld [vmem:[%s47 + $0x3f8] sm:$0xff]
    %v1829 = vld [vmem:[%s49] sm:$0xf]
    %v1831 = vperm.slane %v1829, 0
    %v1832 = vperm.slane %v1829, 1
    %v1833 = vperm.slane %v1829, 2
    %v1834 = vperm.slane %v1829, 3
    %1839 = vmatpush.msra.mxu0 %v1761
    %1840 = vmatpush.msra.mxu0 %v1757
    %1841 = vmatpush.msra.mxu0 %v1753
    %1842 = vmatpush.msra.mxu0 %v1749
    %1843 = vmatpush.msra.mxu0 %v1745
    %1844 = vmatpush.msra.mxu0 %v1741
    %1845 = vmatpush.msra.mxu0 %v1737
    %1846 = vmatpush.msra.mxu0 %v1733
    %1847 = vmatpush.msra.mxu0 %v1729
    %1848 = vmatpush.msra.mxu0 %v1725
    %1849 = vmatpush.msra.mxu0 %v1721
    %1850 = vmatpush.msra.mxu0 %v1717
    %1851 = vmatpush.msra.mxu0 %v1713
    %1852 = vmatpush.msra.mxu0 %v1709
    %1853 = vmatpush.msra.mxu0 %v1705
    %1854 = vmatpush.msra.mxu0 %v1701
    %1855 = vmatmul.f32.gmra.mxu0 %v1697
    %v1856 = vpop.f32.mrf.mxu0
    %v1857 = vadd.f32 %v1831, %v1856
    %1858 = vmatmul.f32.gmra.mxu0 %v1699
    %v1859 = vpop.f32.mrf.mxu0
    %v1860 = vadd.f32 %v1831, %v1859
    %1861 = vdwg.mxu0
    %1862 = vmatpush.msra.mxu0 %v1825
    %1863 = vmatpush.msra.mxu0 %v1821
    %1864 = vmatpush.msra.mxu0 %v1817
    %1865 = vmatpush.msra.mxu0 %v1813
    %1866 = vmatpush.msra.mxu0 %v1809
    %1867 = vmatpush.msra.mxu0 %v1805
    %1868 = vmatpush.msra.mxu0 %v1801
    %1869 = vmatpush.msra.mxu0 %v1797
    %1870 = vmatpush.msra.mxu0 %v1793
    %1871 = vmatpush.msra.mxu0 %v1789
    %1872 = vmatpush.msra.mxu0 %v1785
    %1873 = vmatpush.msra.mxu0 %v1781
    %1874 = vmatpush.msra.mxu0 %v1777
    %1875 = vmatpush.msra.mxu0 %v1773
    %1876 = vmatpush.msra.mxu0 %v1769
    %1877 = vmatpush.msra.mxu0 %v1765
    %1878 = vmatmul.f32.gmra.mxu0 %v1698
    %v1879 = vpop.f32.mrf.mxu0
    %v1880 = vadd.f32 %v1857, %v1879
    %1881 = vmatmul.f32.gmra.mxu0 %v1700
    %v1882 = vpop.f32.mrf.mxu0
    %v1883 = vadd.f32 %v1860, %v1882
    %1884 = vdwg.mxu0
    %1885 = vmatpush.msra.mxu0 %v1762
    %1886 = vmatpush.msra.mxu0 %v1758
    %1887 = vmatpush.msra.mxu0 %v1754
    %1888 = vmatpush.msra.mxu0 %v1750
    %1889 = vmatpush.msra.mxu0 %v1746
    %1890 = vmatpush.msra.mxu0 %v1742
    %1891 = vmatpush.msra.mxu0 %v1738
    %1892 = vmatpush.msra.mxu0 %v1734
    %1893 = vmatpush.msra.mxu0 %v1730
    %1894 = vmatpush.msra.mxu0 %v1726
    %1895 = vmatpush.msra.mxu0 %v1722
    %1896 = vmatpush.msra.mxu0 %v1718
    %1897 = vmatpush.msra.mxu0 %v1714
    %1898 = vmatpush.msra.mxu0 %v1710
    %1899 = vmatpush.msra.mxu0 %v1706
    %1900 = vmatpush.msra.mxu0 %v1702
    %1901 = vmatmul.f32.gmra.mxu0 %v1697
    %v1902 = vpop.f32.mrf.mxu0
    %v1903 = vadd.f32 %v1832, %v1902
    %1904 = vmatmul.f32.gmra.mxu0 %v1699
    %v1905 = vpop.f32.mrf.mxu0
    %v1906 = vadd.f32 %v1832, %v1905
    %1907 = vdwg.mxu0
    %1908 = vmatpush.msra.mxu0 %v1826
    %1909 = vmatpush.msra.mxu0 %v1822
    %1910 = vmatpush.msra.mxu0 %v1818
    %1911 = vmatpush.msra.mxu0 %v1814
    %1912 = vmatpush.msra.mxu0 %v1810
    %1913 = vmatpush.msra.mxu0 %v1806
    %1914 = vmatpush.msra.mxu0 %v1802
    %1915 = vmatpush.msra.mxu0 %v1798
    %1916 = vmatpush.msra.mxu0 %v1794
    %1917 = vmatpush.msra.mxu0 %v1790
    %1918 = vmatpush.msra.mxu0 %v1786
    %1919 = vmatpush.msra.mxu0 %v1782
    %1920 = vmatpush.msra.mxu0 %v1778
    %1921 = vmatpush.msra.mxu0 %v1774
    %1922 = vmatpush.msra.mxu0 %v1770
    %1923 = vmatpush.msra.mxu0 %v1766
    %1924 = vmatmul.f32.gmra.mxu0 %v1698
    %v1925 = vpop.f32.mrf.mxu0
    %v1926 = vadd.f32 %v1903, %v1925
    %1927 = vmatmul.f32.gmra.mxu0 %v1700
    %v1928 = vpop.f32.mrf.mxu0
    %v1929 = vadd.f32 %v1906, %v1928
    %1930 = vdwg.mxu0
    %1931 = vmatpush.msra.mxu0 %v1763
    %1932 = vmatpush.msra.mxu0 %v1759
    %1933 = vmatpush.msra.mxu0 %v1755
    %1934 = vmatpush.msra.mxu0 %v1751
    %1935 = vmatpush.msra.mxu0 %v1747
    %1936 = vmatpush.msra.mxu0 %v1743
    %1937 = vmatpush.msra.mxu0 %v1739
    %1938 = vmatpush.msra.mxu0 %v1735
    %1939 = vmatpush.msra.mxu0 %v1731
    %1940 = vmatpush.msra.mxu0 %v1727
    %1941 = vmatpush.msra.mxu0 %v1723
    %1942 = vmatpush.msra.mxu0 %v1719
    %1943 = vmatpush.msra.mxu0 %v1715
    %1944 = vmatpush.msra.mxu0 %v1711
    %1945 = vmatpush.msra.mxu0 %v1707
    %1946 = vmatpush.msra.mxu0 %v1703
    %1947 = vmatmul.f32.gmra.mxu0 %v1697
    %v1948 = vpop.f32.mrf.mxu0
    %v1949 = vadd.f32 %v1833, %v1948
    %1950 = vmatmul.f32.gmra.mxu0 %v1699
    %v1951 = vpop.f32.mrf.mxu0
    %v1952 = vadd.f32 %v1833, %v1951
    %1953 = vdwg.mxu0
    %1954 = vmatpush.msra.mxu0 %v1827
    %1955 = vmatpush.msra.mxu0 %v1823
    %1956 = vmatpush.msra.mxu0 %v1819
    %1957 = vmatpush.msra.mxu0 %v1815
    %1958 = vmatpush.msra.mxu0 %v1811
    %1959 = vmatpush.msra.mxu0 %v1807
    %1960 = vmatpush.msra.mxu0 %v1803
    %1961 = vmatpush.msra.mxu0 %v1799
    %1962 = vmatpush.msra.mxu0 %v1795
    %1963 = vmatpush.msra.mxu0 %v1791
    %1964 = vmatpush.msra.mxu0 %v1787
    %1965 = vmatpush.msra.mxu0 %v1783
    %1966 = vmatpush.msra.mxu0 %v1779
    %1967 = vmatpush.msra.mxu0 %v1775
    %1968 = vmatpush.msra.mxu0 %v1771
    %1969 = vmatpush.msra.mxu0 %v1767
    %1970 = vmatmul.f32.gmra.mxu0 %v1698
    %v1971 = vpop.f32.mrf.mxu0
    %v1972 = vadd.f32 %v1949, %v1971
    %1973 = vmatmul.f32.gmra.mxu0 %v1700
    %v1974 = vpop.f32.mrf.mxu0
    %v1975 = vadd.f32 %v1952, %v1974
    %1976 = vdwg.mxu0
    %1977 = vmatpush.msra.mxu0 %v1764
    %1978 = vmatpush.msra.mxu0 %v1760
    %1979 = vmatpush.msra.mxu0 %v1756
    %1980 = vmatpush.msra.mxu0 %v1752
    %1981 = vmatpush.msra.mxu0 %v1748
    %1982 = vmatpush.msra.mxu0 %v1744
    %1983 = vmatpush.msra.mxu0 %v1740
    %1984 = vmatpush.msra.mxu0 %v1736
    %1985 = vmatpush.msra.mxu0 %v1732
    %1986 = vmatpush.msra.mxu0 %v1728
    %1987 = vmatpush.msra.mxu0 %v1724
    %1988 = vmatpush.msra.mxu0 %v1720
    %1989 = vmatpush.msra.mxu0 %v1716
    %1990 = vmatpush.msra.mxu0 %v1712
    %1991 = vmatpush.msra.mxu0 %v1708
    %1992 = vmatpush.msra.mxu0 %v1704
    %1993 = vmatmul.f32.gmra.mxu0 %v1697
    %v1994 = vpop.f32.mrf.mxu0
    %v1995 = vadd.f32 %v1834, %v1994
    %1996 = vmatmul.f32.gmra.mxu0 %v1699
    %v1997 = vpop.f32.mrf.mxu0
    %v1998 = vadd.f32 %v1834, %v1997
    %1999 = vdwg.mxu0
    %2000 = vmatpush.msra.mxu0 %v1828
    %2001 = vmatpush.msra.mxu0 %v1824
    %2002 = vmatpush.msra.mxu0 %v1820
    %2003 = vmatpush.msra.mxu0 %v1816
    %2004 = vmatpush.msra.mxu0 %v1812
    %2005 = vmatpush.msra.mxu0 %v1808
    %2006 = vmatpush.msra.mxu0 %v1804
    %2007 = vmatpush.msra.mxu0 %v1800
    %2008 = vmatpush.msra.mxu0 %v1796
    %2009 = vmatpush.msra.mxu0 %v1792
    %2010 = vmatpush.msra.mxu0 %v1788
    %2011 = vmatpush.msra.mxu0 %v1784
    %2012 = vmatpush.msra.mxu0 %v1780
    %2013 = vmatpush.msra.mxu0 %v1776
    %2014 = vmatpush.msra.mxu0 %v1772
    %2015 = vmatpush.msra.mxu0 %v1768
    %2016 = vmatmul.f32.gmra.mxu0 %v1698
    %v2017 = vpop.f32.mrf.mxu0
    %v2018 = vadd.f32 %v1995, %v2017
    %2019 = vmatmul.f32.gmra.mxu0 %v1700
    %v2020 = vpop.f32.mrf.mxu0
    %v2021 = vadd.f32 %v1998, %v2020
    %2022 = vdwg.mxu0
    %vm2023 = vcmp.gt.f32.partialorder %v1880, 20.0
    %vm2024 = vcmp.gt.f32.partialorder %v1926, 20.0
    %vm2025 = vcmp.gt.f32.partialorder %v1972, 20.0
    %vm2026 = vcmp.gt.f32.partialorder %v2018, 20.0
    %vm2027 = vcmp.gt.f32.partialorder %v1883, 20.0
    %vm2028 = vcmp.gt.f32.partialorder %v1929, 20.0
    %vm2029 = vcmp.gt.f32.partialorder %v1975, 20.0
    %vm2030 = vcmp.gt.f32.partialorder %v2021, 20.0
    %v2031 = vmul.f32 %v1880, 1.442695
    %v2032 = vpow.pop %v2031
    %v2033 = vmul.f32 %v1926, 1.442695
    %v2034 = vpow.pop %v2033
    %v2035 = vmul.f32 %v1972, 1.442695
    %v2036 = vpow.pop %v2035
    %v2037 = vmul.f32 %v2018, 1.442695
    %v2038 = vpow.pop %v2037
    %v2039 = vmul.f32 %v1883, 1.442695
    %v2040 = vpow.pop %v2039
    %v2041 = vmul.f32 %v1929, 1.442695
    %v2042 = vpow.pop %v2041
    %v2043 = vmul.f32 %v1975, 1.442695
    %v2044 = vpow.pop %v2043
    %v2045 = vmul.f32 %v2021, 1.442695
    %v2046 = vpow.pop %v2045
    %v2047 = vadd.f32 %v2032, 1.0
    %v2048 = vlog2.pop %v2047
    %v2049 = vmul.f32 %v2048, 0.6931472
    %v2050 = vmul.f32 -0.5, %v2032
    %v2051 = vadd.f32 %v2050, 1.0
    %v2052 = vmul.f32 %v2051, %v2032
    %v2053 = vand.u32 2147483647, %v2032
    %vm2054 = vcmp.lt.f32.partialorder %v2053, 0.0004427343
    %v2055 = vsel %vm2054, %v2052, %v2049
    %v2056 = vadd.f32 %v2034, 1.0
    %v2057 = vlog2.pop %v2056
    %v2058 = vmul.f32 %v2057, 0.6931472
    %v2059 = vmul.f32 -0.5, %v2034
    %v2060 = vadd.f32 %v2059, 1.0
    %v2061 = vmul.f32 %v2060, %v2034
    %v2062 = vand.u32 2147483647, %v2034
    %vm2063 = vcmp.lt.f32.partialorder %v2062, 0.0004427343
    %v2064 = vsel %vm2063, %v2061, %v2058
    %v2065 = vadd.f32 %v2036, 1.0
    %v2066 = vlog2.pop %v2065
    %v2067 = vmul.f32 %v2066, 0.6931472
    %v2068 = vmul.f32 -0.5, %v2036
    %v2069 = vadd.f32 %v2068, 1.0
    %v2070 = vmul.f32 %v2069, %v2036
    %v2071 = vand.u32 2147483647, %v2036
    %vm2072 = vcmp.lt.f32.partialorder %v2071, 0.0004427343
    %v2073 = vsel %vm2072, %v2070, %v2067
    %v2074 = vadd.f32 %v2038, 1.0
    %v2075 = vlog2.pop %v2074
    %v2076 = vmul.f32 %v2075, 0.6931472
    %v2077 = vmul.f32 -0.5, %v2038
    %v2078 = vadd.f32 %v2077, 1.0
    %v2079 = vmul.f32 %v2078, %v2038
    %v2080 = vand.u32 2147483647, %v2038
    %vm2081 = vcmp.lt.f32.partialorder %v2080, 0.0004427343
    %v2082 = vsel %vm2081, %v2079, %v2076
    %v2083 = vadd.f32 %v2040, 1.0
    %v2084 = vlog2.pop %v2083
    %v2085 = vmul.f32 %v2084, 0.6931472
    %v2086 = vmul.f32 -0.5, %v2040
    %v2087 = vadd.f32 %v2086, 1.0
    %v2088 = vmul.f32 %v2087, %v2040
    %v2089 = vand.u32 2147483647, %v2040
    %vm2090 = vcmp.lt.f32.partialorder %v2089, 0.0004427343
    %v2091 = vsel %vm2090, %v2088, %v2085
    %v2092 = vadd.f32 %v2042, 1.0
    %v2093 = vlog2.pop %v2092
    %v2094 = vmul.f32 %v2093, 0.6931472
    %v2095 = vmul.f32 -0.5, %v2042
    %v2096 = vadd.f32 %v2095, 1.0
    %v2097 = vmul.f32 %v2096, %v2042
    %v2098 = vand.u32 2147483647, %v2042
    %vm2099 = vcmp.lt.f32.partialorder %v2098, 0.0004427343
    %v2100 = vsel %vm2099, %v2097, %v2094
    %v2101 = vadd.f32 %v2044, 1.0
    %v2102 = vlog2.pop %v2101
    %v2103 = vmul.f32 %v2102, 0.6931472
    %v2104 = vmul.f32 -0.5, %v2044
    %v2105 = vadd.f32 %v2104, 1.0
    %v2106 = vmul.f32 %v2105, %v2044
    %v2107 = vand.u32 2147483647, %v2044
    %vm2108 = vcmp.lt.f32.partialorder %v2107, 0.0004427343
    %v2109 = vsel %vm2108, %v2106, %v2103
    %v2110 = vadd.f32 %v2046, 1.0
    %v2111 = vlog2.pop %v2110
    %v2112 = vmul.f32 %v2111, 0.6931472
    %v2113 = vmul.f32 -0.5, %v2046
    %v2114 = vadd.f32 %v2113, 1.0
    %v2115 = vmul.f32 %v2114, %v2046
    %v2116 = vand.u32 2147483647, %v2046
    %vm2117 = vcmp.lt.f32.partialorder %v2116, 0.0004427343
    %v2118 = vsel %vm2117, %v2115, %v2112
    %v2119 = vsel %vm2023, %v1880, %v2055
    %v2120 = vsel %vm2024, %v1926, %v2064
    %v2121 = vsel %vm2025, %v1972, %v2073
    %v2122 = vsel %vm2026, %v2018, %v2082
    %v2123 = vsel %vm2027, %v1883, %v2091
    %v2124 = vsel %vm2028, %v1929, %v2100
    %v2125 = vsel %vm2029, %v1975, %v2109
    %v2126 = vsel %vm2030, %v2021, %v2118
    %v2127 = vld [vmem:[%s51] sm:$0xff]
    %v2128 = vld [vmem:[%s51 + $0x8] sm:$0xff]
    %v2129 = vld [vmem:[%s51 + $0x10] sm:$0xff]
    %v2130 = vld [vmem:[%s51 + $0x18] sm:$0xff]
    %v2131 = vld [vmem:[%s51 + $0x20] sm:$0xff]
    %v2132 = vld [vmem:[%s51 + $0x28] sm:$0xff]
    %v2133 = vld [vmem:[%s51 + $0x30] sm:$0xff]
    %v2134 = vld [vmem:[%s51 + $0x38] sm:$0xff]
    %v2135 = vld [vmem:[%s51 + $0x40] sm:$0xff]
    %v2136 = vld [vmem:[%s51 + $0x48] sm:$0xff]
    %v2137 = vld [vmem:[%s51 + $0x50] sm:$0xff]
    %v2138 = vld [vmem:[%s51 + $0x58] sm:$0xff]
    %v2139 = vld [vmem:[%s51 + $0x60] sm:$0xff]
    %v2140 = vld [vmem:[%s51 + $0x68] sm:$0xff]
    %v2141 = vld [vmem:[%s51 + $0x70] sm:$0xff]
    %v2142 = vld [vmem:[%s51 + $0x78] sm:$0xff]
    %v2143 = vld [vmem:[%s51 + $0x80] sm:$0xff]
    %v2144 = vld [vmem:[%s51 + $0x88] sm:$0xff]
    %v2145 = vld [vmem:[%s51 + $0x90] sm:$0xff]
    %v2146 = vld [vmem:[%s51 + $0x98] sm:$0xff]
    %v2147 = vld [vmem:[%s51 + $0xa0] sm:$0xff]
    %v2148 = vld [vmem:[%s51 + $0xa8] sm:$0xff]
    %v2149 = vld [vmem:[%s51 + $0xb0] sm:$0xff]
    %v2150 = vld [vmem:[%s51 + $0xb8] sm:$0xff]
    %v2151 = vld [vmem:[%s51 + $0xc0] sm:$0xff]
    %v2152 = vld [vmem:[%s51 + $0xc8] sm:$0xff]
    %v2153 = vld [vmem:[%s51 + $0xd0] sm:$0xff]
    %v2154 = vld [vmem:[%s51 + $0xd8] sm:$0xff]
    %v2155 = vld [vmem:[%s51 + $0xe0] sm:$0xff]
    %v2156 = vld [vmem:[%s51 + $0xe8] sm:$0xff]
    %v2157 = vld [vmem:[%s51 + $0xf0] sm:$0xff]
    %v2158 = vld [vmem:[%s51 + $0xf8] sm:$0xff]
    %v2159 = vld [vmem:[%s51 + $0x100] sm:$0xff]
    %v2160 = vld [vmem:[%s51 + $0x108] sm:$0xff]
    %v2161 = vld [vmem:[%s51 + $0x110] sm:$0xff]
    %v2162 = vld [vmem:[%s51 + $0x118] sm:$0xff]
    %v2163 = vld [vmem:[%s51 + $0x120] sm:$0xff]
    %v2164 = vld [vmem:[%s51 + $0x128] sm:$0xff]
    %v2165 = vld [vmem:[%s51 + $0x130] sm:$0xff]
    %v2166 = vld [vmem:[%s51 + $0x138] sm:$0xff]
    %v2167 = vld [vmem:[%s51 + $0x140] sm:$0xff]
    %v2168 = vld [vmem:[%s51 + $0x148] sm:$0xff]
    %v2169 = vld [vmem:[%s51 + $0x150] sm:$0xff]
    %v2170 = vld [vmem:[%s51 + $0x158] sm:$0xff]
    %v2171 = vld [vmem:[%s51 + $0x160] sm:$0xff]
    %v2172 = vld [vmem:[%s51 + $0x168] sm:$0xff]
    %v2173 = vld [vmem:[%s51 + $0x170] sm:$0xff]
    %v2174 = vld [vmem:[%s51 + $0x178] sm:$0xff]
    %v2175 = vld [vmem:[%s51 + $0x180] sm:$0xff]
    %v2176 = vld [vmem:[%s51 + $0x188] sm:$0xff]
    %v2177 = vld [vmem:[%s51 + $0x190] sm:$0xff]
    %v2178 = vld [vmem:[%s51 + $0x198] sm:$0xff]
    %v2179 = vld [vmem:[%s51 + $0x1a0] sm:$0xff]
    %v2180 = vld [vmem:[%s51 + $0x1a8] sm:$0xff]
    %v2181 = vld [vmem:[%s51 + $0x1b0] sm:$0xff]
    %v2182 = vld [vmem:[%s51 + $0x1b8] sm:$0xff]
    %v2183 = vld [vmem:[%s51 + $0x1c0] sm:$0xff]
    %v2184 = vld [vmem:[%s51 + $0x1c8] sm:$0xff]
    %v2185 = vld [vmem:[%s51 + $0x1d0] sm:$0xff]
    %v2186 = vld [vmem:[%s51 + $0x1d8] sm:$0xff]
    %v2187 = vld [vmem:[%s51 + $0x1e0] sm:$0xff]
    %v2188 = vld [vmem:[%s51 + $0x1e8] sm:$0xff]
    %v2189 = vld [vmem:[%s51 + $0x1f0] sm:$0xff]
    %v2190 = vld [vmem:[%s51 + $0x1f8] sm:$0xff]
    %v2191 = vld [vmem:[%s51 + $0x200] sm:$0xff]
    %v2192 = vld [vmem:[%s51 + $0x208] sm:$0xff]
    %v2193 = vld [vmem:[%s51 + $0x210] sm:$0xff]
    %v2194 = vld [vmem:[%s51 + $0x218] sm:$0xff]
    %v2195 = vld [vmem:[%s51 + $0x220] sm:$0xff]
    %v2196 = vld [vmem:[%s51 + $0x228] sm:$0xff]
    %v2197 = vld [vmem:[%s51 + $0x230] sm:$0xff]
    %v2198 = vld [vmem:[%s51 + $0x238] sm:$0xff]
    %v2199 = vld [vmem:[%s51 + $0x240] sm:$0xff]
    %v2200 = vld [vmem:[%s51 + $0x248] sm:$0xff]
    %v2201 = vld [vmem:[%s51 + $0x250] sm:$0xff]
    %v2202 = vld [vmem:[%s51 + $0x258] sm:$0xff]
    %v2203 = vld [vmem:[%s51 + $0x260] sm:$0xff]
    %v2204 = vld [vmem:[%s51 + $0x268] sm:$0xff]
    %v2205 = vld [vmem:[%s51 + $0x270] sm:$0xff]
    %v2206 = vld [vmem:[%s51 + $0x278] sm:$0xff]
    %v2207 = vld [vmem:[%s51 + $0x280] sm:$0xff]
    %v2208 = vld [vmem:[%s51 + $0x288] sm:$0xff]
    %v2209 = vld [vmem:[%s51 + $0x290] sm:$0xff]
    %v2210 = vld [vmem:[%s51 + $0x298] sm:$0xff]
    %v2211 = vld [vmem:[%s51 + $0x2a0] sm:$0xff]
    %v2212 = vld [vmem:[%s51 + $0x2a8] sm:$0xff]
    %v2213 = vld [vmem:[%s51 + $0x2b0] sm:$0xff]
    %v2214 = vld [vmem:[%s51 + $0x2b8] sm:$0xff]
    %v2215 = vld [vmem:[%s51 + $0x2c0] sm:$0xff]
    %v2216 = vld [vmem:[%s51 + $0x2c8] sm:$0xff]
    %v2217 = vld [vmem:[%s51 + $0x2d0] sm:$0xff]
    %v2218 = vld [vmem:[%s51 + $0x2d8] sm:$0xff]
    %v2219 = vld [vmem:[%s51 + $0x2e0] sm:$0xff]
    %v2220 = vld [vmem:[%s51 + $0x2e8] sm:$0xff]
    %v2221 = vld [vmem:[%s51 + $0x2f0] sm:$0xff]
    %v2222 = vld [vmem:[%s51 + $0x2f8] sm:$0xff]
    %v2223 = vld [vmem:[%s51 + $0x300] sm:$0xff]
    %v2224 = vld [vmem:[%s51 + $0x308] sm:$0xff]
    %v2225 = vld [vmem:[%s51 + $0x310] sm:$0xff]
    %v2226 = vld [vmem:[%s51 + $0x318] sm:$0xff]
    %v2227 = vld [vmem:[%s51 + $0x320] sm:$0xff]
    %v2228 = vld [vmem:[%s51 + $0x328] sm:$0xff]
    %v2229 = vld [vmem:[%s51 + $0x330] sm:$0xff]
    %v2230 = vld [vmem:[%s51 + $0x338] sm:$0xff]
    %v2231 = vld [vmem:[%s51 + $0x340] sm:$0xff]
    %v2232 = vld [vmem:[%s51 + $0x348] sm:$0xff]
    %v2233 = vld [vmem:[%s51 + $0x350] sm:$0xff]
    %v2234 = vld [vmem:[%s51 + $0x358] sm:$0xff]
    %v2235 = vld [vmem:[%s51 + $0x360] sm:$0xff]
    %v2236 = vld [vmem:[%s51 + $0x368] sm:$0xff]
    %v2237 = vld [vmem:[%s51 + $0x370] sm:$0xff]
    %v2238 = vld [vmem:[%s51 + $0x378] sm:$0xff]
    %v2239 = vld [vmem:[%s51 + $0x380] sm:$0xff]
    %v2240 = vld [vmem:[%s51 + $0x388] sm:$0xff]
    %v2241 = vld [vmem:[%s51 + $0x390] sm:$0xff]
    %v2242 = vld [vmem:[%s51 + $0x398] sm:$0xff]
    %v2243 = vld [vmem:[%s51 + $0x3a0] sm:$0xff]
    %v2244 = vld [vmem:[%s51 + $0x3a8] sm:$0xff]
    %v2245 = vld [vmem:[%s51 + $0x3b0] sm:$0xff]
    %v2246 = vld [vmem:[%s51 + $0x3b8] sm:$0xff]
    %v2247 = vld [vmem:[%s51 + $0x3c0] sm:$0xff]
    %v2248 = vld [vmem:[%s51 + $0x3c8] sm:$0xff]
    %v2249 = vld [vmem:[%s51 + $0x3d0] sm:$0xff]
    %v2250 = vld [vmem:[%s51 + $0x3d8] sm:$0xff]
    %v2251 = vld [vmem:[%s51 + $0x3e0] sm:$0xff]
    %v2252 = vld [vmem:[%s51 + $0x3e8] sm:$0xff]
    %v2253 = vld [vmem:[%s51 + $0x3f0] sm:$0xff]
    %v2254 = vld [vmem:[%s51 + $0x3f8] sm:$0xff]
    %v2255 = vld [vmem:[%s51 + $0x400] sm:$0xff]
    %v2256 = vld [vmem:[%s51 + $0x408] sm:$0xff]
    %v2257 = vld [vmem:[%s51 + $0x410] sm:$0xff]
    %v2258 = vld [vmem:[%s51 + $0x418] sm:$0xff]
    %v2259 = vld [vmem:[%s51 + $0x420] sm:$0xff]
    %v2260 = vld [vmem:[%s51 + $0x428] sm:$0xff]
    %v2261 = vld [vmem:[%s51 + $0x430] sm:$0xff]
    %v2262 = vld [vmem:[%s51 + $0x438] sm:$0xff]
    %v2263 = vld [vmem:[%s51 + $0x440] sm:$0xff]
    %v2264 = vld [vmem:[%s51 + $0x448] sm:$0xff]
    %v2265 = vld [vmem:[%s51 + $0x450] sm:$0xff]
    %v2266 = vld [vmem:[%s51 + $0x458] sm:$0xff]
    %v2267 = vld [vmem:[%s51 + $0x460] sm:$0xff]
    %v2268 = vld [vmem:[%s51 + $0x468] sm:$0xff]
    %v2269 = vld [vmem:[%s51 + $0x470] sm:$0xff]
    %v2270 = vld [vmem:[%s51 + $0x478] sm:$0xff]
    %v2271 = vld [vmem:[%s51 + $0x480] sm:$0xff]
    %v2272 = vld [vmem:[%s51 + $0x488] sm:$0xff]
    %v2273 = vld [vmem:[%s51 + $0x490] sm:$0xff]
    %v2274 = vld [vmem:[%s51 + $0x498] sm:$0xff]
    %v2275 = vld [vmem:[%s51 + $0x4a0] sm:$0xff]
    %v2276 = vld [vmem:[%s51 + $0x4a8] sm:$0xff]
    %v2277 = vld [vmem:[%s51 + $0x4b0] sm:$0xff]
    %v2278 = vld [vmem:[%s51 + $0x4b8] sm:$0xff]
    %v2279 = vld [vmem:[%s51 + $0x4c0] sm:$0xff]
    %v2280 = vld [vmem:[%s51 + $0x4c8] sm:$0xff]
    %v2281 = vld [vmem:[%s51 + $0x4d0] sm:$0xff]
    %v2282 = vld [vmem:[%s51 + $0x4d8] sm:$0xff]
    %v2283 = vld [vmem:[%s51 + $0x4e0] sm:$0xff]
    %v2284 = vld [vmem:[%s51 + $0x4e8] sm:$0xff]
    %v2285 = vld [vmem:[%s51 + $0x4f0] sm:$0xff]
    %v2286 = vld [vmem:[%s51 + $0x4f8] sm:$0xff]
    %v2287 = vld [vmem:[%s51 + $0x500] sm:$0xff]
    %v2288 = vld [vmem:[%s51 + $0x508] sm:$0xff]
    %v2289 = vld [vmem:[%s51 + $0x510] sm:$0xff]
    %v2290 = vld [vmem:[%s51 + $0x518] sm:$0xff]
    %v2291 = vld [vmem:[%s51 + $0x520] sm:$0xff]
    %v2292 = vld [vmem:[%s51 + $0x528] sm:$0xff]
    %v2293 = vld [vmem:[%s51 + $0x530] sm:$0xff]
    %v2294 = vld [vmem:[%s51 + $0x538] sm:$0xff]
    %v2295 = vld [vmem:[%s51 + $0x540] sm:$0xff]
    %v2296 = vld [vmem:[%s51 + $0x548] sm:$0xff]
    %v2297 = vld [vmem:[%s51 + $0x550] sm:$0xff]
    %v2298 = vld [vmem:[%s51 + $0x558] sm:$0xff]
    %v2299 = vld [vmem:[%s51 + $0x560] sm:$0xff]
    %v2300 = vld [vmem:[%s51 + $0x568] sm:$0xff]
    %v2301 = vld [vmem:[%s51 + $0x570] sm:$0xff]
    %v2302 = vld [vmem:[%s51 + $0x578] sm:$0xff]
    %v2303 = vld [vmem:[%s51 + $0x580] sm:$0xff]
    %v2304 = vld [vmem:[%s51 + $0x588] sm:$0xff]
    %v2305 = vld [vmem:[%s51 + $0x590] sm:$0xff]
    %v2306 = vld [vmem:[%s51 + $0x598] sm:$0xff]
    %v2307 = vld [vmem:[%s51 + $0x5a0] sm:$0xff]
    %v2308 = vld [vmem:[%s51 + $0x5a8] sm:$0xff]
    %v2309 = vld [vmem:[%s51 + $0x5b0] sm:$0xff]
    %v2310 = vld [vmem:[%s51 + $0x5b8] sm:$0xff]
    %v2311 = vld [vmem:[%s51 + $0x5c0] sm:$0xff]
    %v2312 = vld [vmem:[%s51 + $0x5c8] sm:$0xff]
    %v2313 = vld [vmem:[%s51 + $0x5d0] sm:$0xff]
    %v2314 = vld [vmem:[%s51 + $0x5d8] sm:$0xff]
    %v2315 = vld [vmem:[%s51 + $0x5e0] sm:$0xff]
    %v2316 = vld [vmem:[%s51 + $0x5e8] sm:$0xff]
    %v2317 = vld [vmem:[%s51 + $0x5f0] sm:$0xff]
    %v2318 = vld [vmem:[%s51 + $0x5f8] sm:$0xff]
    %v2319 = vld [vmem:[%s51 + $0x600] sm:$0xff]
    %v2320 = vld [vmem:[%s51 + $0x608] sm:$0xff]
    %v2321 = vld [vmem:[%s51 + $0x610] sm:$0xff]
    %v2322 = vld [vmem:[%s51 + $0x618] sm:$0xff]
    %v2323 = vld [vmem:[%s51 + $0x620] sm:$0xff]
    %v2324 = vld [vmem:[%s51 + $0x628] sm:$0xff]
    %v2325 = vld [vmem:[%s51 + $0x630] sm:$0xff]
    %v2326 = vld [vmem:[%s51 + $0x638] sm:$0xff]
    %v2327 = vld [vmem:[%s51 + $0x640] sm:$0xff]
    %v2328 = vld [vmem:[%s51 + $0x648] sm:$0xff]
    %v2329 = vld [vmem:[%s51 + $0x650] sm:$0xff]
    %v2330 = vld [vmem:[%s51 + $0x658] sm:$0xff]
    %v2331 = vld [vmem:[%s51 + $0x660] sm:$0xff]
    %v2332 = vld [vmem:[%s51 + $0x668] sm:$0xff]
    %v2333 = vld [vmem:[%s51 + $0x670] sm:$0xff]
    %v2334 = vld [vmem:[%s51 + $0x678] sm:$0xff]
    %v2335 = vld [vmem:[%s51 + $0x680] sm:$0xff]
    %v2336 = vld [vmem:[%s51 + $0x688] sm:$0xff]
    %v2337 = vld [vmem:[%s51 + $0x690] sm:$0xff]
    %v2338 = vld [vmem:[%s51 + $0x698] sm:$0xff]
    %v2339 = vld [vmem:[%s51 + $0x6a0] sm:$0xff]
    %v2340 = vld [vmem:[%s51 + $0x6a8] sm:$0xff]
    %v2341 = vld [vmem:[%s51 + $0x6b0] sm:$0xff]
    %v2342 = vld [vmem:[%s51 + $0x6b8] sm:$0xff]
    %v2343 = vld [vmem:[%s51 + $0x6c0] sm:$0xff]
    %v2344 = vld [vmem:[%s51 + $0x6c8] sm:$0xff]
    %v2345 = vld [vmem:[%s51 + $0x6d0] sm:$0xff]
    %v2346 = vld [vmem:[%s51 + $0x6d8] sm:$0xff]
    %v2347 = vld [vmem:[%s51 + $0x6e0] sm:$0xff]
    %v2348 = vld [vmem:[%s51 + $0x6e8] sm:$0xff]
    %v2349 = vld [vmem:[%s51 + $0x6f0] sm:$0xff]
    %v2350 = vld [vmem:[%s51 + $0x6f8] sm:$0xff]
    %v2351 = vld [vmem:[%s51 + $0x700] sm:$0xff]
    %v2352 = vld [vmem:[%s51 + $0x708] sm:$0xff]
    %v2353 = vld [vmem:[%s51 + $0x710] sm:$0xff]
    %v2354 = vld [vmem:[%s51 + $0x718] sm:$0xff]
    %v2355 = vld [vmem:[%s51 + $0x720] sm:$0xff]
    %v2356 = vld [vmem:[%s51 + $0x728] sm:$0xff]
    %v2357 = vld [vmem:[%s51 + $0x730] sm:$0xff]
    %v2358 = vld [vmem:[%s51 + $0x738] sm:$0xff]
    %v2359 = vld [vmem:[%s51 + $0x740] sm:$0xff]
    %v2360 = vld [vmem:[%s51 + $0x748] sm:$0xff]
    %v2361 = vld [vmem:[%s51 + $0x750] sm:$0xff]
    %v2362 = vld [vmem:[%s51 + $0x758] sm:$0xff]
    %v2363 = vld [vmem:[%s51 + $0x760] sm:$0xff]
    %v2364 = vld [vmem:[%s51 + $0x768] sm:$0xff]
    %v2365 = vld [vmem:[%s51 + $0x770] sm:$0xff]
    %v2366 = vld [vmem:[%s51 + $0x778] sm:$0xff]
    %v2367 = vld [vmem:[%s51 + $0x780] sm:$0xff]
    %v2368 = vld [vmem:[%s51 + $0x788] sm:$0xff]
    %v2369 = vld [vmem:[%s51 + $0x790] sm:$0xff]
    %v2370 = vld [vmem:[%s51 + $0x798] sm:$0xff]
    %v2371 = vld [vmem:[%s51 + $0x7a0] sm:$0xff]
    %v2372 = vld [vmem:[%s51 + $0x7a8] sm:$0xff]
    %v2373 = vld [vmem:[%s51 + $0x7b0] sm:$0xff]
    %v2374 = vld [vmem:[%s51 + $0x7b8] sm:$0xff]
    %v2375 = vld [vmem:[%s51 + $0x7c0] sm:$0xff]
    %v2376 = vld [vmem:[%s51 + $0x7c8] sm:$0xff]
    %v2377 = vld [vmem:[%s51 + $0x7d0] sm:$0xff]
    %v2378 = vld [vmem:[%s51 + $0x7d8] sm:$0xff]
    %v2379 = vld [vmem:[%s51 + $0x7e0] sm:$0xff]
    %v2380 = vld [vmem:[%s51 + $0x7e8] sm:$0xff]
    %v2381 = vld [vmem:[%s51 + $0x7f0] sm:$0xff]
    %v2382 = vld [vmem:[%s51 + $0x7f8] sm:$0xff]
    %v2383 = vld [vmem:[%s51 + $0x800] sm:$0xff]
    %v2384 = vld [vmem:[%s51 + $0x808] sm:$0xff]
    %v2385 = vld [vmem:[%s51 + $0x810] sm:$0xff]
    %v2386 = vld [vmem:[%s51 + $0x818] sm:$0xff]
    %v2387 = vld [vmem:[%s51 + $0x820] sm:$0xff]
    %v2388 = vld [vmem:[%s51 + $0x828] sm:$0xff]
    %v2389 = vld [vmem:[%s51 + $0x830] sm:$0xff]
    %v2390 = vld [vmem:[%s51 + $0x838] sm:$0xff]
    %v2391 = vld [vmem:[%s51 + $0x840] sm:$0xff]
    %v2392 = vld [vmem:[%s51 + $0x848] sm:$0xff]
    %v2393 = vld [vmem:[%s51 + $0x850] sm:$0xff]
    %v2394 = vld [vmem:[%s51 + $0x858] sm:$0xff]
    %v2395 = vld [vmem:[%s51 + $0x860] sm:$0xff]
    %v2396 = vld [vmem:[%s51 + $0x868] sm:$0xff]
    %v2397 = vld [vmem:[%s51 + $0x870] sm:$0xff]
    %v2398 = vld [vmem:[%s51 + $0x878] sm:$0xff]
    %v2399 = vld [vmem:[%s51 + $0x880] sm:$0xff]
    %v2400 = vld [vmem:[%s51 + $0x888] sm:$0xff]
    %v2401 = vld [vmem:[%s51 + $0x890] sm:$0xff]
    %v2402 = vld [vmem:[%s51 + $0x898] sm:$0xff]
    %v2403 = vld [vmem:[%s51 + $0x8a0] sm:$0xff]
    %v2404 = vld [vmem:[%s51 + $0x8a8] sm:$0xff]
    %v2405 = vld [vmem:[%s51 + $0x8b0] sm:$0xff]
    %v2406 = vld [vmem:[%s51 + $0x8b8] sm:$0xff]
    %v2407 = vld [vmem:[%s51 + $0x8c0] sm:$0xff]
    %v2408 = vld [vmem:[%s51 + $0x8c8] sm:$0xff]
    %v2409 = vld [vmem:[%s51 + $0x8d0] sm:$0xff]
    %v2410 = vld [vmem:[%s51 + $0x8d8] sm:$0xff]
    %v2411 = vld [vmem:[%s51 + $0x8e0] sm:$0xff]
    %v2412 = vld [vmem:[%s51 + $0x8e8] sm:$0xff]
    %v2413 = vld [vmem:[%s51 + $0x8f0] sm:$0xff]
    %v2414 = vld [vmem:[%s51 + $0x8f8] sm:$0xff]
    %v2415 = vld [vmem:[%s51 + $0x900] sm:$0xff]
    %v2416 = vld [vmem:[%s51 + $0x908] sm:$0xff]
    %v2417 = vld [vmem:[%s51 + $0x910] sm:$0xff]
    %v2418 = vld [vmem:[%s51 + $0x918] sm:$0xff]
    %v2419 = vld [vmem:[%s51 + $0x920] sm:$0xff]
    %v2420 = vld [vmem:[%s51 + $0x928] sm:$0xff]
    %v2421 = vld [vmem:[%s51 + $0x930] sm:$0xff]
    %v2422 = vld [vmem:[%s51 + $0x938] sm:$0xff]
    %v2423 = vld [vmem:[%s51 + $0x940] sm:$0xff]
    %v2424 = vld [vmem:[%s51 + $0x948] sm:$0xff]
    %v2425 = vld [vmem:[%s51 + $0x950] sm:$0xff]
    %v2426 = vld [vmem:[%s51 + $0x958] sm:$0xff]
    %v2427 = vld [vmem:[%s51 + $0x960] sm:$0xff]
    %v2428 = vld [vmem:[%s51 + $0x968] sm:$0xff]
    %v2429 = vld [vmem:[%s51 + $0x970] sm:$0xff]
    %v2430 = vld [vmem:[%s51 + $0x978] sm:$0xff]
    %v2431 = vld [vmem:[%s51 + $0x980] sm:$0xff]
    %v2432 = vld [vmem:[%s51 + $0x988] sm:$0xff]
    %v2433 = vld [vmem:[%s51 + $0x990] sm:$0xff]
    %v2434 = vld [vmem:[%s51 + $0x998] sm:$0xff]
    %v2435 = vld [vmem:[%s51 + $0x9a0] sm:$0xff]
    %v2436 = vld [vmem:[%s51 + $0x9a8] sm:$0xff]
    %v2437 = vld [vmem:[%s51 + $0x9b0] sm:$0xff]
    %v2438 = vld [vmem:[%s51 + $0x9b8] sm:$0xff]
    %v2439 = vld [vmem:[%s51 + $0x9c0] sm:$0xff]
    %v2440 = vld [vmem:[%s51 + $0x9c8] sm:$0xff]
    %v2441 = vld [vmem:[%s51 + $0x9d0] sm:$0xff]
    %v2442 = vld [vmem:[%s51 + $0x9d8] sm:$0xff]
    %v2443 = vld [vmem:[%s51 + $0x9e0] sm:$0xff]
    %v2444 = vld [vmem:[%s51 + $0x9e8] sm:$0xff]
    %v2445 = vld [vmem:[%s51 + $0x9f0] sm:$0xff]
    %v2446 = vld [vmem:[%s51 + $0x9f8] sm:$0xff]
    %v2447 = vld [vmem:[%s53] sm:$0x1f]
    %v2449 = vperm.slane %v2447, 0
    %v2450 = vperm.slane %v2447, 1
    %v2451 = vperm.slane %v2447, 2
    %v2452 = vperm.slane %v2447, 3
    %v2453 = vperm.slane %v2447, 4
    %2459 = vmatpush.msra.mxu0 %v2202
    %2460 = vmatpush.msra.mxu0 %v2197
    %2461 = vmatpush.msra.mxu0 %v2192
    %2462 = vmatpush.msra.mxu0 %v2187
    %2463 = vmatpush.msra.mxu0 %v2182
    %2464 = vmatpush.msra.mxu0 %v2177
    %2465 = vmatpush.msra.mxu0 %v2172
    %2466 = vmatpush.msra.mxu0 %v2167
    %2467 = vmatpush.msra.mxu0 %v2162
    %2468 = vmatpush.msra.mxu0 %v2157
    %2469 = vmatpush.msra.mxu0 %v2152
    %2470 = vmatpush.msra.mxu0 %v2147
    %2471 = vmatpush.msra.mxu0 %v2142
    %2472 = vmatpush.msra.mxu0 %v2137
    %2473 = vmatpush.msra.mxu0 %v2132
    %2474 = vmatpush.msra.mxu0 %v2127
    %2475 = vmatmul.f32.gmra.mxu0 %v2119
    %v2476 = vpop.f32.mrf.mxu0
    %v2477 = vadd.f32 %v2449, %v2476
    %2478 = vmatmul.f32.gmra.mxu0 %v2123
    %v2479 = vpop.f32.mrf.mxu0
    %v2480 = vadd.f32 %v2449, %v2479
    %2481 = vdwg.mxu0
    %2482 = vmatpush.msra.mxu0 %v2282
    %2483 = vmatpush.msra.mxu0 %v2277
    %2484 = vmatpush.msra.mxu0 %v2272
    %2485 = vmatpush.msra.mxu0 %v2267
    %2486 = vmatpush.msra.mxu0 %v2262
    %2487 = vmatpush.msra.mxu0 %v2257
    %2488 = vmatpush.msra.mxu0 %v2252
    %2489 = vmatpush.msra.mxu0 %v2247
    %2490 = vmatpush.msra.mxu0 %v2242
    %2491 = vmatpush.msra.mxu0 %v2237
    %2492 = vmatpush.msra.mxu0 %v2232
    %2493 = vmatpush.msra.mxu0 %v2227
    %2494 = vmatpush.msra.mxu0 %v2222
    %2495 = vmatpush.msra.mxu0 %v2217
    %2496 = vmatpush.msra.mxu0 %v2212
    %2497 = vmatpush.msra.mxu0 %v2207
    %2498 = vmatmul.f32.gmra.mxu0 %v2120
    %v2499 = vpop.f32.mrf.mxu0
    %v2500 = vadd.f32 %v2477, %v2499
    %2501 = vmatmul.f32.gmra.mxu0 %v2124
    %v2502 = vpop.f32.mrf.mxu0
    %v2503 = vadd.f32 %v2480, %v2502
    %2504 = vdwg.mxu0
    %2505 = vmatpush.msra.mxu0 %v2362
    %2506 = vmatpush.msra.mxu0 %v2357
    %2507 = vmatpush.msra.mxu0 %v2352
    %2508 = vmatpush.msra.mxu0 %v2347
    %2509 = vmatpush.msra.mxu0 %v2342
    %2510 = vmatpush.msra.mxu0 %v2337
    %2511 = vmatpush.msra.mxu0 %v2332
    %2512 = vmatpush.msra.mxu0 %v2327
    %2513 = vmatpush.msra.mxu0 %v2322
    %2514 = vmatpush.msra.mxu0 %v2317
    %2515 = vmatpush.msra.mxu0 %v2312
    %2516 = vmatpush.msra.mxu0 %v2307
    %2517 = vmatpush.msra.mxu0 %v2302
    %2518 = vmatpush.msra.mxu0 %v2297
    %2519 = vmatpush.msra.mxu0 %v2292
    %2520 = vmatpush.msra.mxu0 %v2287
    %2521 = vmatmul.f32.gmra.mxu0 %v2121
    %v2522 = vpop.f32.mrf.mxu0
    %v2523 = vadd.f32 %v2500, %v2522
    %2524 = vmatmul.f32.gmra.mxu0 %v2125
    %v2525 = vpop.f32.mrf.mxu0
    %v2526 = vadd.f32 %v2503, %v2525
    %2527 = vdwg.mxu0
    %2528 = vmatpush.msra.mxu0 %v2442
    %2529 = vmatpush.msra.mxu0 %v2437
    %2530 = vmatpush.msra.mxu0 %v2432
    %2531 = vmatpush.msra.mxu0 %v2427
    %2532 = vmatpush.msra.mxu0 %v2422
    %2533 = vmatpush.msra.mxu0 %v2417
    %2534 = vmatpush.msra.mxu0 %v2412
    %2535 = vmatpush.msra.mxu0 %v2407
    %2536 = vmatpush.msra.mxu0 %v2402
    %2537 = vmatpush.msra.mxu0 %v2397
    %2538 = vmatpush.msra.mxu0 %v2392
    %2539 = vmatpush.msra.mxu0 %v2387
    %2540 = vmatpush.msra.mxu0 %v2382
    %2541 = vmatpush.msra.mxu0 %v2377
    %2542 = vmatpush.msra.mxu0 %v2372
    %2543 = vmatpush.msra.mxu0 %v2367
    %2544 = vmatmul.f32.gmra.mxu0 %v2122
    %v2545 = vpop.f32.mrf.mxu0
    %v2546 = vadd.f32 %v2523, %v2545
    %2547 = vmatmul.f32.gmra.mxu0 %v2126
    %v2548 = vpop.f32.mrf.mxu0
    %v2549 = vadd.f32 %v2526, %v2548
    %2550 = vdwg.mxu0
    %2551 = vmatpush.msra.mxu0 %v2203
    %2552 = vmatpush.msra.mxu0 %v2198
    %2553 = vmatpush.msra.mxu0 %v2193
    %2554 = vmatpush.msra.mxu0 %v2188
    %2555 = vmatpush.msra.mxu0 %v2183
    %2556 = vmatpush.msra.mxu0 %v2178
    %2557 = vmatpush.msra.mxu0 %v2173
    %2558 = vmatpush.msra.mxu0 %v2168
    %2559 = vmatpush.msra.mxu0 %v2163
    %2560 = vmatpush.msra.mxu0 %v2158
    %2561 = vmatpush.msra.mxu0 %v2153
    %2562 = vmatpush.msra.mxu0 %v2148
    %2563 = vmatpush.msra.mxu0 %v2143
    %2564 = vmatpush.msra.mxu0 %v2138
    %2565 = vmatpush.msra.mxu0 %v2133
    %2566 = vmatpush.msra.mxu0 %v2128
    %2567 = vmatmul.f32.gmra.mxu0 %v2119
    %v2568 = vpop.f32.mrf.mxu0
    %v2569 = vadd.f32 %v2450, %v2568
    %2570 = vmatmul.f32.gmra.mxu0 %v2123
    %v2571 = vpop.f32.mrf.mxu0
    %v2572 = vadd.f32 %v2450, %v2571
    %2573 = vdwg.mxu0
    %2574 = vmatpush.msra.mxu0 %v2283
    %2575 = vmatpush.msra.mxu0 %v2278
    %2576 = vmatpush.msra.mxu0 %v2273
    %2577 = vmatpush.msra.mxu0 %v2268
    %2578 = vmatpush.msra.mxu0 %v2263
    %2579 = vmatpush.msra.mxu0 %v2258
    %2580 = vmatpush.msra.mxu0 %v2253
    %2581 = vmatpush.msra.mxu0 %v2248
    %2582 = vmatpush.msra.mxu0 %v2243
    %2583 = vmatpush.msra.mxu0 %v2238
    %2584 = vmatpush.msra.mxu0 %v2233
    %2585 = vmatpush.msra.mxu0 %v2228
    %2586 = vmatpush.msra.mxu0 %v2223
    %2587 = vmatpush.msra.mxu0 %v2218
    %2588 = vmatpush.msra.mxu0 %v2213
    %2589 = vmatpush.msra.mxu0 %v2208
    %2590 = vmatmul.f32.gmra.mxu0 %v2120
    %v2591 = vpop.f32.mrf.mxu0
    %v2592 = vadd.f32 %v2569, %v2591
    %2593 = vmatmul.f32.gmra.mxu0 %v2124
    %v2594 = vpop.f32.mrf.mxu0
    %v2595 = vadd.f32 %v2572, %v2594
    %2596 = vdwg.mxu0
    %2597 = vmatpush.msra.mxu0 %v2363
    %2598 = vmatpush.msra.mxu0 %v2358
    %2599 = vmatpush.msra.mxu0 %v2353
    %2600 = vmatpush.msra.mxu0 %v2348
    %2601 = vmatpush.msra.mxu0 %v2343
    %2602 = vmatpush.msra.mxu0 %v2338
    %2603 = vmatpush.msra.mxu0 %v2333
    %2604 = vmatpush.msra.mxu0 %v2328
    %2605 = vmatpush.msra.mxu0 %v2323
    %2606 = vmatpush.msra.mxu0 %v2318
    %2607 = vmatpush.msra.mxu0 %v2313
    %2608 = vmatpush.msra.mxu0 %v2308
    %2609 = vmatpush.msra.mxu0 %v2303
    %2610 = vmatpush.msra.mxu0 %v2298
    %2611 = vmatpush.msra.mxu0 %v2293
    %2612 = vmatpush.msra.mxu0 %v2288
    %2613 = vmatmul.f32.gmra.mxu0 %v2121
    %v2614 = vpop.f32.mrf.mxu0
    %v2615 = vadd.f32 %v2592, %v2614
    %2616 = vmatmul.f32.gmra.mxu0 %v2125
    %v2617 = vpop.f32.mrf.mxu0
    %v2618 = vadd.f32 %v2595, %v2617
    %2619 = vdwg.mxu0
    %2620 = vmatpush.msra.mxu0 %v2443
    %2621 = vmatpush.msra.mxu0 %v2438
    %2622 = vmatpush.msra.mxu0 %v2433
    %2623 = vmatpush.msra.mxu0 %v2428
    %2624 = vmatpush.msra.mxu0 %v2423
    %2625 = vmatpush.msra.mxu0 %v2418
    %2626 = vmatpush.msra.mxu0 %v2413
    %2627 = vmatpush.msra.mxu0 %v2408
    %2628 = vmatpush.msra.mxu0 %v2403
    %2629 = vmatpush.msra.mxu0 %v2398
    %2630 = vmatpush.msra.mxu0 %v2393
    %2631 = vmatpush.msra.mxu0 %v2388
    %2632 = vmatpush.msra.mxu0 %v2383
    %2633 = vmatpush.msra.mxu0 %v2378
    %2634 = vmatpush.msra.mxu0 %v2373
    %2635 = vmatpush.msra.mxu0 %v2368
    %2636 = vmatmul.f32.gmra.mxu0 %v2122
    %v2637 = vpop.f32.mrf.mxu0
    %v2638 = vadd.f32 %v2615, %v2637
    %2639 = vmatmul.f32.gmra.mxu0 %v2126
    %v2640 = vpop.f32.mrf.mxu0
    %v2641 = vadd.f32 %v2618, %v2640
    %2642 = vdwg.mxu0
    %2643 = vmatpush.msra.mxu0 %v2204
    %2644 = vmatpush.msra.mxu0 %v2199
    %2645 = vmatpush.msra.mxu0 %v2194
    %2646 = vmatpush.msra.mxu0 %v2189
    %2647 = vmatpush.msra.mxu0 %v2184
    %2648 = vmatpush.msra.mxu0 %v2179
    %2649 = vmatpush.msra.mxu0 %v2174
    %2650 = vmatpush.msra.mxu0 %v2169
    %2651 = vmatpush.msra.mxu0 %v2164
    %2652 = vmatpush.msra.mxu0 %v2159
    %2653 = vmatpush.msra.mxu0 %v2154
    %2654 = vmatpush.msra.mxu0 %v2149
    %2655 = vmatpush.msra.mxu0 %v2144
    %2656 = vmatpush.msra.mxu0 %v2139
    %2657 = vmatpush.msra.mxu0 %v2134
    %2658 = vmatpush.msra.mxu0 %v2129
    %2659 = vmatmul.f32.gmra.mxu0 %v2119
    %v2660 = vpop.f32.mrf.mxu0
    %v2661 = vadd.f32 %v2451, %v2660
    %2662 = vmatmul.f32.gmra.mxu0 %v2123
    %v2663 = vpop.f32.mrf.mxu0
    %v2664 = vadd.f32 %v2451, %v2663
    %2665 = vdwg.mxu0
    %2666 = vmatpush.msra.mxu0 %v2284
    %2667 = vmatpush.msra.mxu0 %v2279
    %2668 = vmatpush.msra.mxu0 %v2274
    %2669 = vmatpush.msra.mxu0 %v2269
    %2670 = vmatpush.msra.mxu0 %v2264
    %2671 = vmatpush.msra.mxu0 %v2259
    %2672 = vmatpush.msra.mxu0 %v2254
    %2673 = vmatpush.msra.mxu0 %v2249
    %2674 = vmatpush.msra.mxu0 %v2244
    %2675 = vmatpush.msra.mxu0 %v2239
    %2676 = vmatpush.msra.mxu0 %v2234
    %2677 = vmatpush.msra.mxu0 %v2229
    %2678 = vmatpush.msra.mxu0 %v2224
    %2679 = vmatpush.msra.mxu0 %v2219
    %2680 = vmatpush.msra.mxu0 %v2214
    %2681 = vmatpush.msra.mxu0 %v2209
    %2682 = vmatmul.f32.gmra.mxu0 %v2120
    %v2683 = vpop.f32.mrf.mxu0
    %v2684 = vadd.f32 %v2661, %v2683
    %2685 = vmatmul.f32.gmra.mxu0 %v2124
    %v2686 = vpop.f32.mrf.mxu0
    %v2687 = vadd.f32 %v2664, %v2686
    %2688 = vdwg.mxu0
    %2689 = vmatpush.msra.mxu0 %v2364
    %2690 = vmatpush.msra.mxu0 %v2359
    %2691 = vmatpush.msra.mxu0 %v2354
    %2692 = vmatpush.msra.mxu0 %v2349
    %2693 = vmatpush.msra.mxu0 %v2344
    %2694 = vmatpush.msra.mxu0 %v2339
    %2695 = vmatpush.msra.mxu0 %v2334
    %2696 = vmatpush.msra.mxu0 %v2329
    %2697 = vmatpush.msra.mxu0 %v2324
    %2698 = vmatpush.msra.mxu0 %v2319
    %2699 = vmatpush.msra.mxu0 %v2314
    %2700 = vmatpush.msra.mxu0 %v2309
    %2701 = vmatpush.msra.mxu0 %v2304
    %2702 = vmatpush.msra.mxu0 %v2299
    %2703 = vmatpush.msra.mxu0 %v2294
    %2704 = vmatpush.msra.mxu0 %v2289
    %2705 = vmatmul.f32.gmra.mxu0 %v2121
    %v2706 = vpop.f32.mrf.mxu0
    %v2707 = vadd.f32 %v2684, %v2706
    %2708 = vmatmul.f32.gmra.mxu0 %v2125
    %v2709 = vpop.f32.mrf.mxu0
    %v2710 = vadd.f32 %v2687, %v2709
    %2711 = vdwg.mxu0
    %2712 = vmatpush.msra.mxu0 %v2444
    %2713 = vmatpush.msra.mxu0 %v2439
    %2714 = vmatpush.msra.mxu0 %v2434
    %2715 = vmatpush.msra.mxu0 %v2429
    %2716 = vmatpush.msra.mxu0 %v2424
    %2717 = vmatpush.msra.mxu0 %v2419
    %2718 = vmatpush.msra.mxu0 %v2414
    %2719 = vmatpush.msra.mxu0 %v2409
    %2720 = vmatpush.msra.mxu0 %v2404
    %2721 = vmatpush.msra.mxu0 %v2399
    %2722 = vmatpush.msra.mxu0 %v2394
    %2723 = vmatpush.msra.mxu0 %v2389
    %2724 = vmatpush.msra.mxu0 %v2384
    %2725 = vmatpush.msra.mxu0 %v2379
    %2726 = vmatpush.msra.mxu0 %v2374
    %2727 = vmatpush.msra.mxu0 %v2369
    %2728 = vmatmul.f32.gmra.mxu0 %v2122
    %v2729 = vpop.f32.mrf.mxu0
    %v2730 = vadd.f32 %v2707, %v2729
    %2731 = vmatmul.f32.gmra.mxu0 %v2126
    %v2732 = vpop.f32.mrf.mxu0
    %v2733 = vadd.f32 %v2710, %v2732
    %2734 = vdwg.mxu0
    %2735 = vmatpush.msra.mxu0 %v2205
    %2736 = vmatpush.msra.mxu0 %v2200
    %2737 = vmatpush.msra.mxu0 %v2195
    %2738 = vmatpush.msra.mxu0 %v2190
    %2739 = vmatpush.msra.mxu0 %v2185
    %2740 = vmatpush.msra.mxu0 %v2180
    %2741 = vmatpush.msra.mxu0 %v2175
    %2742 = vmatpush.msra.mxu0 %v2170
    %2743 = vmatpush.msra.mxu0 %v2165
    %2744 = vmatpush.msra.mxu0 %v2160
    %2745 = vmatpush.msra.mxu0 %v2155
    %2746 = vmatpush.msra.mxu0 %v2150
    %2747 = vmatpush.msra.mxu0 %v2145
    %2748 = vmatpush.msra.mxu0 %v2140
    %2749 = vmatpush.msra.mxu0 %v2135
    %2750 = vmatpush.msra.mxu0 %v2130
    %2751 = vmatmul.f32.gmra.mxu0 %v2119
    %v2752 = vpop.f32.mrf.mxu0
    %v2753 = vadd.f32 %v2452, %v2752
    %2754 = vmatmul.f32.gmra.mxu0 %v2123
    %v2755 = vpop.f32.mrf.mxu0
    %v2756 = vadd.f32 %v2452, %v2755
    %2757 = vdwg.mxu0
    %2758 = vmatpush.msra.mxu0 %v2285
    %2759 = vmatpush.msra.mxu0 %v2280
    %2760 = vmatpush.msra.mxu0 %v2275
    %2761 = vmatpush.msra.mxu0 %v2270
    %2762 = vmatpush.msra.mxu0 %v2265
    %2763 = vmatpush.msra.mxu0 %v2260
    %2764 = vmatpush.msra.mxu0 %v2255
    %2765 = vmatpush.msra.mxu0 %v2250
    %2766 = vmatpush.msra.mxu0 %v2245
    %2767 = vmatpush.msra.mxu0 %v2240
    %2768 = vmatpush.msra.mxu0 %v2235
    %2769 = vmatpush.msra.mxu0 %v2230
    %2770 = vmatpush.msra.mxu0 %v2225
    %2771 = vmatpush.msra.mxu0 %v2220
    %2772 = vmatpush.msra.mxu0 %v2215
    %2773 = vmatpush.msra.mxu0 %v2210
    %2774 = vmatmul.f32.gmra.mxu0 %v2120
    %v2775 = vpop.f32.mrf.mxu0
    %v2776 = vadd.f32 %v2753, %v2775
    %2777 = vmatmul.f32.gmra.mxu0 %v2124
    %v2778 = vpop.f32.mrf.mxu0
    %v2779 = vadd.f32 %v2756, %v2778
    %2780 = vdwg.mxu0
    %2781 = vmatpush.msra.mxu0 %v2365
    %2782 = vmatpush.msra.mxu0 %v2360
    %2783 = vmatpush.msra.mxu0 %v2355
    %2784 = vmatpush.msra.mxu0 %v2350
    %2785 = vmatpush.msra.mxu0 %v2345
    %2786 = vmatpush.msra.mxu0 %v2340
    %2787 = vmatpush.msra.mxu0 %v2335
    %2788 = vmatpush.msra.mxu0 %v2330
    %2789 = vmatpush.msra.mxu0 %v2325
    %2790 = vmatpush.msra.mxu0 %v2320
    %2791 = vmatpush.msra.mxu0 %v2315
    %2792 = vmatpush.msra.mxu0 %v2310
    %2793 = vmatpush.msra.mxu0 %v2305
    %2794 = vmatpush.msra.mxu0 %v2300
    %2795 = vmatpush.msra.mxu0 %v2295
    %2796 = vmatpush.msra.mxu0 %v2290
    %2797 = vmatmul.f32.gmra.mxu0 %v2121
    %v2798 = vpop.f32.mrf.mxu0
    %v2799 = vadd.f32 %v2776, %v2798
    %2800 = vmatmul.f32.gmra.mxu0 %v2125
    %v2801 = vpop.f32.mrf.mxu0
    %v2802 = vadd.f32 %v2779, %v2801
    %2803 = vdwg.mxu0
    %2804 = vmatpush.msra.mxu0 %v2445
    %2805 = vmatpush.msra.mxu0 %v2440
    %2806 = vmatpush.msra.mxu0 %v2435
    %2807 = vmatpush.msra.mxu0 %v2430
    %2808 = vmatpush.msra.mxu0 %v2425
    %2809 = vmatpush.msra.mxu0 %v2420
    %2810 = vmatpush.msra.mxu0 %v2415
    %2811 = vmatpush.msra.mxu0 %v2410
    %2812 = vmatpush.msra.mxu0 %v2405
    %2813 = vmatpush.msra.mxu0 %v2400
    %2814 = vmatpush.msra.mxu0 %v2395
    %2815 = vmatpush.msra.mxu0 %v2390
    %2816 = vmatpush.msra.mxu0 %v2385
    %2817 = vmatpush.msra.mxu0 %v2380
    %2818 = vmatpush.msra.mxu0 %v2375
    %2819 = vmatpush.msra.mxu0 %v2370
    %2820 = vmatmul.f32.gmra.mxu0 %v2122
    %v2821 = vpop.f32.mrf.mxu0
    %v2822 = vadd.f32 %v2799, %v2821
    %2823 = vmatmul.f32.gmra.mxu0 %v2126
    %v2824 = vpop.f32.mrf.mxu0
    %v2825 = vadd.f32 %v2802, %v2824
    %2826 = vdwg.mxu0
    %2827 = vmatpush.msra.mxu0 %v2206
    %2828 = vmatpush.msra.mxu0 %v2201
    %2829 = vmatpush.msra.mxu0 %v2196
    %2830 = vmatpush.msra.mxu0 %v2191
    %2831 = vmatpush.msra.mxu0 %v2186
    %2832 = vmatpush.msra.mxu0 %v2181
    %2833 = vmatpush.msra.mxu0 %v2176
    %2834 = vmatpush.msra.mxu0 %v2171
    %2835 = vmatpush.msra.mxu0 %v2166
    %2836 = vmatpush.msra.mxu0 %v2161
    %2837 = vmatpush.msra.mxu0 %v2156
    %2838 = vmatpush.msra.mxu0 %v2151
    %2839 = vmatpush.msra.mxu0 %v2146
    %2840 = vmatpush.msra.mxu0 %v2141
    %2841 = vmatpush.msra.mxu0 %v2136
    %2842 = vmatpush.msra.mxu0 %v2131
    %2843 = vmatmul.f32.gmra.mxu0 %v2119
    %v2844 = vpop.f32.mrf.mxu0
    %v2845 = vadd.f32 %v2453, %v2844
    %2846 = vmatmul.f32.gmra.mxu0 %v2123
    %v2847 = vpop.f32.mrf.mxu0
    %v2848 = vadd.f32 %v2453, %v2847
    %2849 = vdwg.mxu0
    %2850 = vmatpush.msra.mxu0 %v2286
    %2851 = vmatpush.msra.mxu0 %v2281
    %2852 = vmatpush.msra.mxu0 %v2276
    %2853 = vmatpush.msra.mxu0 %v2271
    %2854 = vmatpush.msra.mxu0 %v2266
    %2855 = vmatpush.msra.mxu0 %v2261
    %2856 = vmatpush.msra.mxu0 %v2256
    %2857 = vmatpush.msra.mxu0 %v2251
    %2858 = vmatpush.msra.mxu0 %v2246
    %2859 = vmatpush.msra.mxu0 %v2241
    %2860 = vmatpush.msra.mxu0 %v2236
    %2861 = vmatpush.msra.mxu0 %v2231
    %2862 = vmatpush.msra.mxu0 %v2226
    %2863 = vmatpush.msra.mxu0 %v2221
    %2864 = vmatpush.msra.mxu0 %v2216
    %2865 = vmatpush.msra.mxu0 %v2211
    %2866 = vmatmul.f32.gmra.mxu0 %v2120
    %v2867 = vpop.f32.mrf.mxu0
    %v2868 = vadd.f32 %v2845, %v2867
    %2869 = vmatmul.f32.gmra.mxu0 %v2124
    %v2870 = vpop.f32.mrf.mxu0
    %v2871 = vadd.f32 %v2848, %v2870
    %2872 = vdwg.mxu0
    %2873 = vmatpush.msra.mxu0 %v2366
    %2874 = vmatpush.msra.mxu0 %v2361
    %2875 = vmatpush.msra.mxu0 %v2356
    %2876 = vmatpush.msra.mxu0 %v2351
    %2877 = vmatpush.msra.mxu0 %v2346
    %2878 = vmatpush.msra.mxu0 %v2341
    %2879 = vmatpush.msra.mxu0 %v2336
    %2880 = vmatpush.msra.mxu0 %v2331
    %2881 = vmatpush.msra.mxu0 %v2326
    %2882 = vmatpush.msra.mxu0 %v2321
    %2883 = vmatpush.msra.mxu0 %v2316
    %2884 = vmatpush.msra.mxu0 %v2311
    %2885 = vmatpush.msra.mxu0 %v2306
    %2886 = vmatpush.msra.mxu0 %v2301
    %2887 = vmatpush.msra.mxu0 %v2296
    %2888 = vmatpush.msra.mxu0 %v2291
    %2889 = vmatmul.f32.gmra.mxu0 %v2121
    %v2890 = vpop.f32.mrf.mxu0
    %v2891 = vadd.f32 %v2868, %v2890
    %2892 = vmatmul.f32.gmra.mxu0 %v2125
    %v2893 = vpop.f32.mrf.mxu0
    %v2894 = vadd.f32 %v2871, %v2893
    %2895 = vdwg.mxu0
    %2896 = vmatpush.msra.mxu0 %v2446
    %2897 = vmatpush.msra.mxu0 %v2441
    %2898 = vmatpush.msra.mxu0 %v2436
    %2899 = vmatpush.msra.mxu0 %v2431
    %2900 = vmatpush.msra.mxu0 %v2426
    %2901 = vmatpush.msra.mxu0 %v2421
    %2902 = vmatpush.msra.mxu0 %v2416
    %2903 = vmatpush.msra.mxu0 %v2411
    %2904 = vmatpush.msra.mxu0 %v2406
    %2905 = vmatpush.msra.mxu0 %v2401
    %2906 = vmatpush.msra.mxu0 %v2396
    %2907 = vmatpush.msra.mxu0 %v2391
    %2908 = vmatpush.msra.mxu0 %v2386
    %2909 = vmatpush.msra.mxu0 %v2381
    %2910 = vmatpush.msra.mxu0 %v2376
    %2911 = vmatpush.msra.mxu0 %v2371
    %2912 = vmatmul.f32.gmra.mxu0 %v2122
    %v2913 = vpop.f32.mrf.mxu0
    %v2914 = vadd.f32 %v2891, %v2913
    %2915 = vmatmul.f32.gmra.mxu0 %v2126
    %v2916 = vpop.f32.mrf.mxu0
    %v2917 = vadd.f32 %v2894, %v2916
    %2918 = vdwg.mxu0
    %v2919 = vand.u32 2147483647, %v2546
    %v2920 = vand.u32 2147483647, %v2638
    %v2921 = vand.u32 2147483647, %v2730
    %v2922 = vand.u32 2147483647, %v2822
    %v2923 = vand.u32 2147483647, %v2914
    %v2924 = vand.u32 2147483647, %v2549
    %v2925 = vand.u32 2147483647, %v2641
    %v2926 = vand.u32 2147483647, %v2733
    %v2927 = vand.u32 2147483647, %v2825
    %v2928 = vand.u32 2147483647, %v2917
    %v2929 = vsub.f32 0.0, %v2919
    %v2930 = vsub.f32 0.0, %v2920
    %v2931 = vsub.f32 0.0, %v2921
    %v2932 = vsub.f32 0.0, %v2922
    %v2933 = vsub.f32 0.0, %v2923
    %v2934 = vsub.f32 0.0, %v2924
    %v2935 = vsub.f32 0.0, %v2925
    %v2936 = vsub.f32 0.0, %v2926
    %v2937 = vsub.f32 0.0, %v2927
    %v2938 = vsub.f32 0.0, %v2928
    %v2939 = vmul.f32 %v2929, 1.442695
    %v2940 = vpow.pop %v2939
    %v2941 = vmul.f32 %v2930, 1.442695
    %v2942 = vpow.pop %v2941
    %v2943 = vmul.f32 %v2931, 1.442695
    %v2944 = vpow.pop %v2943
    %v2945 = vmul.f32 %v2932, 1.442695
    %v2946 = vpow.pop %v2945
    %v2947 = vmul.f32 %v2933, 1.442695
    %v2948 = vpow.pop %v2947
    %v2949 = vmul.f32 %v2934, 1.442695
    %v2950 = vpow.pop %v2949
    %v2951 = vmul.f32 %v2935, 1.442695
    %v2952 = vpow.pop %v2951
    %v2953 = vmul.f32 %v2936, 1.442695
    %v2954 = vpow.pop %v2953
    %v2955 = vmul.f32 %v2937, 1.442695
    %v2956 = vpow.pop %v2955
    %v2957 = vmul.f32 %v2938, 1.442695
    %v2958 = vpow.pop %v2957
    %v2959 = vadd.f32 %v2940, 1.0
    %v2960 = vadd.f32 %v2942, 1.0
    %v2961 = vadd.f32 %v2944, 1.0
    %v2962 = vadd.f32 %v2946, 1.0
    %v2963 = vadd.f32 %v2948, 1.0
    %v2964 = vadd.f32 %v2950, 1.0
    %v2965 = vadd.f32 %v2952, 1.0
    %v2966 = vadd.f32 %v2954, 1.0
    %v2967 = vadd.f32 %v2956, 1.0
    %v2968 = vadd.f32 %v2958, 1.0
    %v2969 = vrcp.pop %v2959
    %v2970 = vmul.f32 %v2959, %v2969
    %v2971 = vsub.f32 1.0, %v2970
    %v2972 = vmul.f32 %v2969, %v2971
    %v2973 = vadd.f32 %v2969, %v2972
    %vm2974 = vweird.f32 %v2959
    %vm2975 = vweird.f32 %v2969
    %vm2976 = vmor %vm2974, %vm2975
    %v2977 = vsel %vm2976, %v2969, %v2973
    %v2978 = vand.u32 2147483647, %v2959
    %vm2979 = vcmp.eq.f32.partialorder %v2978, 8.507059e+37
    %v2980 = vand.u32 %v2959, 2147483648
    %v2981 = vor.u32 1.1754944e-38, %v2980
    %v2982 = vsel %vm2979, %v2981, %v2977
    %v2983 = vmul.f32 1.0, %v2982
    %v2984 = vrcp.pop %v2960
    %v2985 = vmul.f32 %v2960, %v2984
    %v2986 = vsub.f32 1.0, %v2985
    %v2987 = vmul.f32 %v2984, %v2986
    %v2988 = vadd.f32 %v2984, %v2987
    %vm2989 = vweird.f32 %v2960
    %vm2990 = vweird.f32 %v2984
    %vm2991 = vmor %vm2989, %vm2990
    %v2992 = vsel %vm2991, %v2984, %v2988
    %v2993 = vand.u32 2147483647, %v2960
    %vm2994 = vcmp.eq.f32.partialorder %v2993, 8.507059e+37
    %v2995 = vand.u32 %v2960, 2147483648
    %v2996 = vor.u32 1.1754944e-38, %v2995
    %v2997 = vsel %vm2994, %v2996, %v2992
    %v2998 = vmul.f32 1.0, %v2997
    %v2999 = vrcp.pop %v2961
    %v3000 = vmul.f32 %v2961, %v2999
    %v3001 = vsub.f32 1.0, %v3000
    %v3002 = vmul.f32 %v2999, %v3001
    %v3003 = vadd.f32 %v2999, %v3002
    %vm3004 = vweird.f32 %v2961
    %vm3005 = vweird.f32 %v2999
    %vm3006 = vmor %vm3004, %vm3005
    %v3007 = vsel %vm3006, %v2999, %v3003
    %v3008 = vand.u32 2147483647, %v2961
    %vm3009 = vcmp.eq.f32.partialorder %v3008, 8.507059e+37
    %v3010 = vand.u32 %v2961, 2147483648
    %v3011 = vor.u32 1.1754944e-38, %v3010
    %v3012 = vsel %vm3009, %v3011, %v3007
    %v3013 = vmul.f32 1.0, %v3012
    %v3014 = vrcp.pop %v2962
    %v3015 = vmul.f32 %v2962, %v3014
    %v3016 = vsub.f32 1.0, %v3015
    %v3017 = vmul.f32 %v3014, %v3016
    %v3018 = vadd.f32 %v3014, %v3017
    %vm3019 = vweird.f32 %v2962
    %vm3020 = vweird.f32 %v3014
    %vm3021 = vmor %vm3019, %vm3020
    %v3022 = vsel %vm3021, %v3014, %v3018
    %v3023 = vand.u32 2147483647, %v2962
    %vm3024 = vcmp.eq.f32.partialorder %v3023, 8.507059e+37
    %v3025 = vand.u32 %v2962, 2147483648
    %v3026 = vor.u32 1.1754944e-38, %v3025
    %v3027 = vsel %vm3024, %v3026, %v3022
    %v3028 = vmul.f32 1.0, %v3027
    %v3029 = vrcp.pop %v2963
    %v3030 = vmul.f32 %v2963, %v3029
    %v3031 = vsub.f32 1.0, %v3030
    %v3032 = vmul.f32 %v3029, %v3031
    %v3033 = vadd.f32 %v3029, %v3032
    %vm3034 = vweird.f32 %v2963
    %vm3035 = vweird.f32 %v3029
    %vm3036 = vmor %vm3034, %vm3035
    %v3037 = vsel %vm3036, %v3029, %v3033
    %v3038 = vand.u32 2147483647, %v2963
    %vm3039 = vcmp.eq.f32.partialorder %v3038, 8.507059e+37
    %v3040 = vand.u32 %v2963, 2147483648
    %v3041 = vor.u32 1.1754944e-38, %v3040
    %v3042 = vsel %vm3039, %v3041, %v3037
    %v3043 = vmul.f32 1.0, %v3042
    %v3044 = vrcp.pop %v2964
    %v3045 = vmul.f32 %v2964, %v3044
    %v3046 = vsub.f32 1.0, %v3045
    %v3047 = vmul.f32 %v3044, %v3046
    %v3048 = vadd.f32 %v3044, %v3047
    %vm3049 = vweird.f32 %v2964
    %vm3050 = vweird.f32 %v3044
    %vm3051 = vmor %vm3049, %vm3050
    %v3052 = vsel %vm3051, %v3044, %v3048
    %v3053 = vand.u32 2147483647, %v2964
    %vm3054 = vcmp.eq.f32.partialorder %v3053, 8.507059e+37
    %v3055 = vand.u32 %v2964, 2147483648
    %v3056 = vor.u32 1.1754944e-38, %v3055
    %v3057 = vsel %vm3054, %v3056, %v3052
    %v3058 = vmul.f32 1.0, %v3057
    %v3059 = vrcp.pop %v2965
    %v3060 = vmul.f32 %v2965, %v3059
    %v3061 = vsub.f32 1.0, %v3060
    %v3062 = vmul.f32 %v3059, %v3061
    %v3063 = vadd.f32 %v3059, %v3062
    %vm3064 = vweird.f32 %v2965
    %vm3065 = vweird.f32 %v3059
    %vm3066 = vmor %vm3064, %vm3065
    %v3067 = vsel %vm3066, %v3059, %v3063
    %v3068 = vand.u32 2147483647, %v2965
    %vm3069 = vcmp.eq.f32.partialorder %v3068, 8.507059e+37
    %v3070 = vand.u32 %v2965, 2147483648
    %v3071 = vor.u32 1.1754944e-38, %v3070
    %v3072 = vsel %vm3069, %v3071, %v3067
    %v3073 = vmul.f32 1.0, %v3072
    %v3074 = vrcp.pop %v2966
    %v3075 = vmul.f32 %v2966, %v3074
    %v3076 = vsub.f32 1.0, %v3075
    %v3077 = vmul.f32 %v3074, %v3076
    %v3078 = vadd.f32 %v3074, %v3077
    %vm3079 = vweird.f32 %v2966
    %vm3080 = vweird.f32 %v3074
    %vm3081 = vmor %vm3079, %vm3080
    %v3082 = vsel %vm3081, %v3074, %v3078
    %v3083 = vand.u32 2147483647, %v2966
    %vm3084 = vcmp.eq.f32.partialorder %v3083, 8.507059e+37
    %v3085 = vand.u32 %v2966, 2147483648
    %v3086 = vor.u32 1.1754944e-38, %v3085
    %v3087 = vsel %vm3084, %v3086, %v3082
    %v3088 = vmul.f32 1.0, %v3087
    %v3089 = vrcp.pop %v2967
    %v3090 = vmul.f32 %v2967, %v3089
    %v3091 = vsub.f32 1.0, %v3090
    %v3092 = vmul.f32 %v3089, %v3091
    %v3093 = vadd.f32 %v3089, %v3092
    %vm3094 = vweird.f32 %v2967
    %vm3095 = vweird.f32 %v3089
    %vm3096 = vmor %vm3094, %vm3095
    %v3097 = vsel %vm3096, %v3089, %v3093
    %v3098 = vand.u32 2147483647, %v2967
    %vm3099 = vcmp.eq.f32.partialorder %v3098, 8.507059e+37
    %v3100 = vand.u32 %v2967, 2147483648
    %v3101 = vor.u32 1.1754944e-38, %v3100
    %v3102 = vsel %vm3099, %v3101, %v3097
    %v3103 = vmul.f32 1.0, %v3102
    %v3104 = vrcp.pop %v2968
    %v3105 = vmul.f32 %v2968, %v3104
    %v3106 = vsub.f32 1.0, %v3105
    %v3107 = vmul.f32 %v3104, %v3106
    %v3108 = vadd.f32 %v3104, %v3107
    %vm3109 = vweird.f32 %v2968
    %vm3110 = vweird.f32 %v3104
    %vm3111 = vmor %vm3109, %vm3110
    %v3112 = vsel %vm3111, %v3104, %v3108
    %v3113 = vand.u32 2147483647, %v2968
    %vm3114 = vcmp.eq.f32.partialorder %v3113, 8.507059e+37
    %v3115 = vand.u32 %v2968, 2147483648
    %v3116 = vor.u32 1.1754944e-38, %v3115
    %v3117 = vsel %vm3114, %v3116, %v3112
    %v3118 = vmul.f32 1.0, %v3117
    %vm3119 = vcmp.ge.f32.partialorder %v2546, 0.0
    %vm3120 = vcmp.ge.f32.partialorder %v2638, 0.0
    %vm3121 = vcmp.ge.f32.partialorder %v2730, 0.0
    %vm3122 = vcmp.ge.f32.partialorder %v2822, 0.0
    %vm3123 = vcmp.ge.f32.partialorder %v2914, 0.0
    %vm3124 = vcmp.ge.f32.partialorder %v2549, 0.0
    %vm3125 = vcmp.ge.f32.partialorder %v2641, 0.0
    %vm3126 = vcmp.ge.f32.partialorder %v2733, 0.0
    %vm3127 = vcmp.ge.f32.partialorder %v2825, 0.0
    %vm3128 = vcmp.ge.f32.partialorder %v2917, 0.0
    %v3129 = vmul.f32 %v2940, %v2983
    %v3130 = vmul.f32 %v2942, %v2998
    %v3131 = vmul.f32 %v2944, %v3013
    %v3132 = vmul.f32 %v2946, %v3028
    %v3133 = vmul.f32 %v2948, %v3043
    %v3134 = vmul.f32 %v2950, %v3058
    %v3135 = vmul.f32 %v2952, %v3073
    %v3136 = vmul.f32 %v2954, %v3088
    %v3137 = vmul.f32 %v2956, %v3103
    %v3138 = vmul.f32 %v2958, %v3118
    %v3139 = vsel %vm3119, %v2983, %v3129
    %v3140 = vsel %vm3120, %v2998, %v3130
    %v3141 = vsel %vm3121, %v3013, %v3131
    %v3142 = vsel %vm3122, %v3028, %v3132
    %v3143 = vsel %vm3123, %v3043, %v3133
    %v3144 = vsel %vm3124, %v3058, %v3134
    %v3145 = vsel %vm3125, %v3073, %v3135
    %v3146 = vsel %vm3126, %v3088, %v3136
    %v3147 = vsel %vm3127, %v3103, %v3137
    %v3148 = vsel %vm3128, %v3118, %v3138
    %3149 = vst [vmem:[%s55] sm:$0xff] %v3139
    %3150 = vst [vmem:[%s55 + $0x8] sm:$0xff] %v3140
    %3151 = vst [vmem:[%s55 + $0x10] sm:$0xff] %v3141
    %3152 = vst [vmem:[%s55 + $0x18] sm:$0xff] %v3142
    %3153 = vst [vmem:[%s55 + $0x20] sm:$0xff] %v3143
    %3154 = vst [vmem:[%s55 + $0x28] sm:$0xff] %v3144
    %3155 = vst [vmem:[%s55 + $0x30] sm:$0xff] %v3145
    %3156 = vst [vmem:[%s55 + $0x38] sm:$0xff] %v3146
    %3157 = vst [vmem:[%s55 + $0x40] sm:$0xff] %v3147
    %3158 = vst [vmem:[%s55 + $0x48] sm:$0xff] %v3148
    %v3159 = vpack.c.bf16 %v3144, %v3139
    %v3160 = vpack.c.bf16 %v3145, %v3140
    %v3161 = vpack.c.bf16 %v3146, %v3141
    %v3162 = vpack.c.bf16 %v3147, %v3142
    %v3163 = vpack.c.bf16 %v3148, %v3143
    %v3164 = vld [vmem:[%s13] sm:$0xff]
    %v3165 = vld [vmem:[%s13 + $0x8] sm:$0xff]
    %v3166 = vld [vmem:[%s13 + $0x10] sm:$0xff]
    %v3167 = vld [vmem:[%s13 + $0x18] sm:$0xff]
    %v3168 = vld [vmem:[%s13 + $0x20] sm:$0xf]
    %v3169 = vld [vmem:[%s13 + $0x24] sm:$0xff]
    %v3170 = vld [vmem:[%s13 + $0x2c] sm:$0xff]
    %v3171 = vld [vmem:[%s13 + $0x34] sm:$0xff]
    %v3172 = vld [vmem:[%s13 + $0x3c] sm:$0xff]
    %v3173 = vld [vmem:[%s13 + $0x44] sm:$0xf]
    %v3174 = vld [vmem:[%s13 + $0x48] sm:$0xff]
    %v3175 = vld [vmem:[%s13 + $0x50] sm:$0xff]
    %v3176 = vld [vmem:[%s13 + $0x58] sm:$0xff]
    %v3177 = vld [vmem:[%s13 + $0x60] sm:$0xff]
    %v3178 = vld [vmem:[%s13 + $0x68] sm:$0xf]
    %v3179 = vld [vmem:[%s13 + $0x6c] sm:$0xff]
    %v3180 = vld [vmem:[%s13 + $0x74] sm:$0xff]
    %v3181 = vld [vmem:[%s13 + $0x7c] sm:$0xff]
    %v3182 = vld [vmem:[%s13 + $0x84] sm:$0xff]
    %v3183 = vld [vmem:[%s13 + $0x8c] sm:$0xf]
    %v3184 = vld [vmem:[%s13 + $0x90] sm:$0xff]
    %v3185 = vld [vmem:[%s13 + $0x98] sm:$0xff]
    %v3186 = vld [vmem:[%s13 + $0xa0] sm:$0xff]
    %v3187 = vld [vmem:[%s13 + $0xa8] sm:$0xff]
    %v3188 = vld [vmem:[%s13 + $0xb0] sm:$0xf]
    %v3189 = vld [vmem:[%s13 + $0xb4] sm:$0xff]
    %v3190 = vld [vmem:[%s13 + $0xbc] sm:$0xff]
    %v3191 = vld [vmem:[%s13 + $0xc4] sm:$0xff]
    %v3192 = vld [vmem:[%s13 + $0xcc] sm:$0xff]
    %v3193 = vld [vmem:[%s13 + $0xd4] sm:$0xf]
    %v3194 = vld [vmem:[%s13 + $0xd8] sm:$0xff]
    %v3195 = vld [vmem:[%s13 + $0xe0] sm:$0xff]
    %v3196 = vld [vmem:[%s13 + $0xe8] sm:$0xff]
    %v3197 = vld [vmem:[%s13 + $0xf0] sm:$0xff]
    %v3198 = vld [vmem:[%s13 + $0xf8] sm:$0xf]
    %v3199 = vld [vmem:[%s13 + $0xfc] sm:$0xff]
    %v3200 = vld [vmem:[%s13 + $0x104] sm:$0xff]
    %v3201 = vld [vmem:[%s13 + $0x10c] sm:$0xff]
    %v3202 = vld [vmem:[%s13 + $0x114] sm:$0xff]
    %v3203 = vld [vmem:[%s13 + $0x11c] sm:$0xf]
    %v3204 = vld [vmem:[%s13 + $0x120] sm:$0xff]
    %v3205 = vld [vmem:[%s13 + $0x128] sm:$0xff]
    %v3206 = vld [vmem:[%s13 + $0x130] sm:$0xff]
    %v3207 = vld [vmem:[%s13 + $0x138] sm:$0xff]
    %v3208 = vld [vmem:[%s13 + $0x140] sm:$0xf]
    %v3209 = vld [vmem:[%s13 + $0x144] sm:$0xff]
    %v3210 = vld [vmem:[%s13 + $0x14c] sm:$0xff]
    %v3211 = vld [vmem:[%s13 + $0x154] sm:$0xff]
    %v3212 = vld [vmem:[%s13 + $0x15c] sm:$0xff]
    %v3213 = vld [vmem:[%s13 + $0x164] sm:$0xf]
    %v3214 = vld [vmem:[%s13 + $0x168] sm:$0xff]
    %v3215 = vld [vmem:[%s13 + $0x170] sm:$0xff]
    %v3216 = vld [vmem:[%s13 + $0x178] sm:$0xff]
    %v3217 = vld [vmem:[%s13 + $0x180] sm:$0xff]
    %v3218 = vld [vmem:[%s13 + $0x188] sm:$0xf]
    %v3219 = vld [vmem:[%s13 + $0x18c] sm:$0xff]
    %v3220 = vld [vmem:[%s13 + $0x194] sm:$0xff]
    %v3221 = vld [vmem:[%s13 + $0x19c] sm:$0xff]
    %v3222 = vld [vmem:[%s13 + $0x1a4] sm:$0xff]
    %v3223 = vld [vmem:[%s13 + $0x1ac] sm:$0xf]
    %v3224 = vld [vmem:[%s13 + $0x1b0] sm:$0xff]
    %v3225 = vld [vmem:[%s13 + $0x1b8] sm:$0xff]
    %v3226 = vld [vmem:[%s13 + $0x1c0] sm:$0xff]
    %v3227 = vld [vmem:[%s13 + $0x1c8] sm:$0xff]
    %v3228 = vld [vmem:[%s13 + $0x1d0] sm:$0xf]
    %v3229 = vld [vmem:[%s13 + $0x1d4] sm:$0xff]
    %v3230 = vld [vmem:[%s13 + $0x1dc] sm:$0xff]
    %v3231 = vld [vmem:[%s13 + $0x1e4] sm:$0xff]
    %v3232 = vld [vmem:[%s13 + $0x1ec] sm:$0xff]
    %v3233 = vld [vmem:[%s13 + $0x1f4] sm:$0xf]
    %v3234 = vld [vmem:[%s13 + $0x1f8] sm:$0xff]
    %v3235 = vld [vmem:[%s13 + $0x200] sm:$0xff]
    %v3236 = vld [vmem:[%s13 + $0x208] sm:$0xff]
    %v3237 = vld [vmem:[%s13 + $0x210] sm:$0xff]
    %v3238 = vld [vmem:[%s13 + $0x218] sm:$0xf]
    %v3239 = vld [vmem:[%s13 + $0x21c] sm:$0xff]
    %v3240 = vld [vmem:[%s13 + $0x224] sm:$0xff]
    %v3241 = vld [vmem:[%s13 + $0x22c] sm:$0xff]
    %v3242 = vld [vmem:[%s13 + $0x234] sm:$0xff]
    %v3243 = vld [vmem:[%s13 + $0x23c] sm:$0xf]
    %v3244 = vld [vmem:[%s13 + $0x240] sm:$0xff]
    %v3245 = vld [vmem:[%s13 + $0x248] sm:$0xff]
    %v3246 = vld [vmem:[%s13 + $0x250] sm:$0xff]
    %v3247 = vld [vmem:[%s13 + $0x258] sm:$0xff]
    %v3248 = vld [vmem:[%s13 + $0x260] sm:$0xf]
    %v3249 = vld [vmem:[%s13 + $0x264] sm:$0xff]
    %v3250 = vld [vmem:[%s13 + $0x26c] sm:$0xff]
    %v3251 = vld [vmem:[%s13 + $0x274] sm:$0xff]
    %v3252 = vld [vmem:[%s13 + $0x27c] sm:$0xff]
    %v3253 = vld [vmem:[%s13 + $0x284] sm:$0xf]
    %v3254 = vld [vmem:[%s13 + $0x288] sm:$0xff]
    %v3255 = vld [vmem:[%s13 + $0x290] sm:$0xff]
    %v3256 = vld [vmem:[%s13 + $0x298] sm:$0xff]
    %v3257 = vld [vmem:[%s13 + $0x2a0] sm:$0xff]
    %v3258 = vld [vmem:[%s13 + $0x2a8] sm:$0xf]
    %v3259 = vld [vmem:[%s13 + $0x2ac] sm:$0xff]
    %v3260 = vld [vmem:[%s13 + $0x2b4] sm:$0xff]
    %v3261 = vld [vmem:[%s13 + $0x2bc] sm:$0xff]
    %v3262 = vld [vmem:[%s13 + $0x2c4] sm:$0xff]
    %v3263 = vld [vmem:[%s13 + $0x2cc] sm:$0xf]
    %v3264 = vld [vmem:[%s13 + $0x2d0] sm:$0xff]
    %v3265 = vld [vmem:[%s13 + $0x2d8] sm:$0xff]
    %v3266 = vld [vmem:[%s13 + $0x2e0] sm:$0xff]
    %v3267 = vld [vmem:[%s13 + $0x2e8] sm:$0xff]
    %v3268 = vld [vmem:[%s13 + $0x2f0] sm:$0xf]
    %v3269 = vld [vmem:[%s13 + $0x2f4] sm:$0xff]
    %v3270 = vld [vmem:[%s13 + $0x2fc] sm:$0xff]
    %v3271 = vld [vmem:[%s13 + $0x304] sm:$0xff]
    %v3272 = vld [vmem:[%s13 + $0x30c] sm:$0xff]
    %v3273 = vld [vmem:[%s13 + $0x314] sm:$0xf]
    %v3274 = vld [vmem:[%s13 + $0x318] sm:$0xff]
    %v3275 = vld [vmem:[%s13 + $0x320] sm:$0xff]
    %v3276 = vld [vmem:[%s13 + $0x328] sm:$0xff]
    %v3277 = vld [vmem:[%s13 + $0x330] sm:$0xff]
    %v3278 = vld [vmem:[%s13 + $0x338] sm:$0xf]
    %v3279 = vld [vmem:[%s13 + $0x33c] sm:$0xff]
    %v3280 = vld [vmem:[%s13 + $0x344] sm:$0xff]
    %v3281 = vld [vmem:[%s13 + $0x34c] sm:$0xff]
    %v3282 = vld [vmem:[%s13 + $0x354] sm:$0xff]
    %v3283 = vld [vmem:[%s13 + $0x35c] sm:$0xf]
    %v3284 = vld [vmem:[%s13 + $0x360] sm:$0xff]
    %v3285 = vld [vmem:[%s13 + $0x368] sm:$0xff]
    %v3286 = vld [vmem:[%s13 + $0x370] sm:$0xff]
    %v3287 = vld [vmem:[%s13 + $0x378] sm:$0xff]
    %v3288 = vld [vmem:[%s13 + $0x380] sm:$0xf]
    %v3289 = vld [vmem:[%s13 + $0x384] sm:$0xff]
    %v3290 = vld [vmem:[%s13 + $0x38c] sm:$0xff]
    %v3291 = vld [vmem:[%s13 + $0x394] sm:$0xff]
    %v3292 = vld [vmem:[%s13 + $0x39c] sm:$0xff]
    %v3293 = vld [vmem:[%s13 + $0x3a4] sm:$0xf]
    %v3294 = vld [vmem:[%s13 + $0x3a8] sm:$0xff]
    %v3295 = vld [vmem:[%s13 + $0x3b0] sm:$0xff]
    %v3296 = vld [vmem:[%s13 + $0x3b8] sm:$0xff]
    %v3297 = vld [vmem:[%s13 + $0x3c0] sm:$0xff]
    %v3298 = vld [vmem:[%s13 + $0x3c8] sm:$0xf]
    %v3299 = vld [vmem:[%s13 + $0x3cc] sm:$0xff]
    %v3300 = vld [vmem:[%s13 + $0x3d4] sm:$0xff]
    %v3301 = vld [vmem:[%s13 + $0x3dc] sm:$0xff]
    %v3302 = vld [vmem:[%s13 + $0x3e4] sm:$0xff]
    %v3303 = vld [vmem:[%s13 + $0x3ec] sm:$0xf]
    %v3304 = vld [vmem:[%s13 + $0x3f0] sm:$0xff]
    %v3305 = vld [vmem:[%s13 + $0x3f8] sm:$0xff]
    %v3306 = vld [vmem:[%s13 + $0x400] sm:$0xff]
    %v3307 = vld [vmem:[%s13 + $0x408] sm:$0xff]
    %v3308 = vld [vmem:[%s13 + $0x410] sm:$0xf]
    %v3309 = vld [vmem:[%s13 + $0x414] sm:$0xff]
    %v3310 = vld [vmem:[%s13 + $0x41c] sm:$0xff]
    %v3311 = vld [vmem:[%s13 + $0x424] sm:$0xff]
    %v3312 = vld [vmem:[%s13 + $0x42c] sm:$0xff]
    %v3313 = vld [vmem:[%s13 + $0x434] sm:$0xf]
    %v3314 = vld [vmem:[%s13 + $0x438] sm:$0xff]
    %v3315 = vld [vmem:[%s13 + $0x440] sm:$0xff]
    %v3316 = vld [vmem:[%s13 + $0x448] sm:$0xff]
    %v3317 = vld [vmem:[%s13 + $0x450] sm:$0xff]
    %v3318 = vld [vmem:[%s13 + $0x458] sm:$0xf]
    %v3319 = vld [vmem:[%s13 + $0x45c] sm:$0xff]
    %v3320 = vld [vmem:[%s13 + $0x464] sm:$0xff]
    %v3321 = vld [vmem:[%s13 + $0x46c] sm:$0xff]
    %v3322 = vld [vmem:[%s13 + $0x474] sm:$0xff]
    %v3323 = vld [vmem:[%s13 + $0x47c] sm:$0xf]
    %v3324 = vld [vmem:[%s13 + $0x480] sm:$0xff]
    %v3325 = vld [vmem:[%s13 + $0x488] sm:$0xff]
    %v3326 = vld [vmem:[%s13 + $0x490] sm:$0xff]
    %v3327 = vld [vmem:[%s13 + $0x498] sm:$0xff]
    %v3328 = vld [vmem:[%s13 + $0x4a0] sm:$0xf]
    %v3329 = vld [vmem:[%s13 + $0x4a4] sm:$0xff]
    %v3330 = vld [vmem:[%s13 + $0x4ac] sm:$0xff]
    %v3331 = vld [vmem:[%s13 + $0x4b4] sm:$0xff]
    %v3332 = vld [vmem:[%s13 + $0x4bc] sm:$0xff]
    %v3333 = vld [vmem:[%s13 + $0x4c4] sm:$0xf]
    %v3334 = vld [vmem:[%s13 + $0x4c8] sm:$0xff]
    %v3335 = vld [vmem:[%s13 + $0x4d0] sm:$0xff]
    %v3336 = vld [vmem:[%s13 + $0x4d8] sm:$0xff]
    %v3337 = vld [vmem:[%s13 + $0x4e0] sm:$0xff]
    %v3338 = vld [vmem:[%s13 + $0x4e8] sm:$0xf]
    %v3339 = vld [vmem:[%s13 + $0x4ec] sm:$0xff]
    %v3340 = vld [vmem:[%s13 + $0x4f4] sm:$0xff]
    %v3341 = vld [vmem:[%s13 + $0x4fc] sm:$0xff]
    %v3342 = vld [vmem:[%s13 + $0x504] sm:$0xff]
    %v3343 = vld [vmem:[%s13 + $0x50c] sm:$0xf]
    %v3344 = vld [vmem:[%s13 + $0x510] sm:$0xff]
    %v3345 = vld [vmem:[%s13 + $0x518] sm:$0xff]
    %v3346 = vld [vmem:[%s13 + $0x520] sm:$0xff]
    %v3347 = vld [vmem:[%s13 + $0x528] sm:$0xff]
    %v3348 = vld [vmem:[%s13 + $0x530] sm:$0xf]
    %v3349 = vld [vmem:[%s13 + $0x534] sm:$0xff]
    %v3350 = vld [vmem:[%s13 + $0x53c] sm:$0xff]
    %v3351 = vld [vmem:[%s13 + $0x544] sm:$0xff]
    %v3352 = vld [vmem:[%s13 + $0x54c] sm:$0xff]
    %v3353 = vld [vmem:[%s13 + $0x554] sm:$0xf]
    %v3354 = vld [vmem:[%s13 + $0x558] sm:$0xff]
    %v3355 = vld [vmem:[%s13 + $0x560] sm:$0xff]
    %v3356 = vld [vmem:[%s13 + $0x568] sm:$0xff]
    %v3357 = vld [vmem:[%s13 + $0x570] sm:$0xff]
    %v3358 = vld [vmem:[%s13 + $0x578] sm:$0xf]
    %v3359 = vld [vmem:[%s13 + $0x57c] sm:$0xff]
    %v3360 = vld [vmem:[%s13 + $0x584] sm:$0xff]
    %v3361 = vld [vmem:[%s13 + $0x58c] sm:$0xff]
    %v3362 = vld [vmem:[%s13 + $0x594] sm:$0xff]
    %v3363 = vld [vmem:[%s13 + $0x59c] sm:$0xf]
    %v3364 = vld [vmem:[%s13 + $0x5a0] sm:$0xff]
    %v3365 = vld [vmem:[%s13 + $0x5a8] sm:$0xff]
    %v3366 = vld [vmem:[%s13 + $0x5b0] sm:$0xff]
    %v3367 = vld [vmem:[%s13 + $0x5b8] sm:$0xff]
    %v3368 = vld [vmem:[%s13 + $0x5c0] sm:$0xf]
    %v3369 = vld [vmem:[%s13 + $0x5c4] sm:$0xff]
    %v3370 = vld [vmem:[%s13 + $0x5cc] sm:$0xff]
    %v3371 = vld [vmem:[%s13 + $0x5d4] sm:$0xff]
    %v3372 = vld [vmem:[%s13 + $0x5dc] sm:$0xff]
    %v3373 = vld [vmem:[%s13 + $0x5e4] sm:$0xf]
    %v3374 = vld [vmem:[%s13 + $0x5e8] sm:$0xff]
    %v3375 = vld [vmem:[%s13 + $0x5f0] sm:$0xff]
    %v3376 = vld [vmem:[%s13 + $0x5f8] sm:$0xff]
    %v3377 = vld [vmem:[%s13 + $0x600] sm:$0xff]
    %v3378 = vld [vmem:[%s13 + $0x608] sm:$0xf]
    %v3379 = vld [vmem:[%s13 + $0x60c] sm:$0xff]
    %v3380 = vld [vmem:[%s13 + $0x614] sm:$0xff]
    %v3381 = vld [vmem:[%s13 + $0x61c] sm:$0xff]
    %v3382 = vld [vmem:[%s13 + $0x624] sm:$0xff]
    %v3383 = vld [vmem:[%s13 + $0x62c] sm:$0xf]
    %v3384 = vld [vmem:[%s13 + $0x630] sm:$0xff]
    %v3385 = vld [vmem:[%s13 + $0x638] sm:$0xff]
    %v3386 = vld [vmem:[%s13 + $0x640] sm:$0xff]
    %v3387 = vld [vmem:[%s13 + $0x648] sm:$0xff]
    %v3388 = vld [vmem:[%s13 + $0x650] sm:$0xf]
    %v3389 = vld [vmem:[%s13 + $0x654] sm:$0xff]
    %v3390 = vld [vmem:[%s13 + $0x65c] sm:$0xff]
    %v3391 = vld [vmem:[%s13 + $0x664] sm:$0xff]
    %v3392 = vld [vmem:[%s13 + $0x66c] sm:$0xff]
    %v3393 = vld [vmem:[%s13 + $0x674] sm:$0xf]
    %v3394 = vld [vmem:[%s13 + $0x678] sm:$0xff]
    %v3395 = vld [vmem:[%s13 + $0x680] sm:$0xff]
    %v3396 = vld [vmem:[%s13 + $0x688] sm:$0xff]
    %v3397 = vld [vmem:[%s13 + $0x690] sm:$0xff]
    %v3398 = vld [vmem:[%s13 + $0x698] sm:$0xf]
    %v3399 = vld [vmem:[%s13 + $0x69c] sm:$0xff]
    %v3400 = vld [vmem:[%s13 + $0x6a4] sm:$0xff]
    %v3401 = vld [vmem:[%s13 + $0x6ac] sm:$0xff]
    %v3402 = vld [vmem:[%s13 + $0x6b4] sm:$0xff]
    %v3403 = vld [vmem:[%s13 + $0x6bc] sm:$0xf]
    %v3404 = vld [vmem:[%s13 + $0x6c0] sm:$0xff]
    %v3405 = vld [vmem:[%s13 + $0x6c8] sm:$0xff]
    %v3406 = vld [vmem:[%s13 + $0x6d0] sm:$0xff]
    %v3407 = vld [vmem:[%s13 + $0x6d8] sm:$0xff]
    %v3408 = vld [vmem:[%s13 + $0x6e0] sm:$0xf]
    %v3409 = vld [vmem:[%s13 + $0x6e4] sm:$0xff]
    %v3410 = vld [vmem:[%s13 + $0x6ec] sm:$0xff]
    %v3411 = vld [vmem:[%s13 + $0x6f4] sm:$0xff]
    %v3412 = vld [vmem:[%s13 + $0x6fc] sm:$0xff]
    %v3413 = vld [vmem:[%s13 + $0x704] sm:$0xf]
    %v3414 = vld [vmem:[%s13 + $0x708] sm:$0xff]
    %v3415 = vld [vmem:[%s13 + $0x710] sm:$0xff]
    %v3416 = vld [vmem:[%s13 + $0x718] sm:$0xff]
    %v3417 = vld [vmem:[%s13 + $0x720] sm:$0xff]
    %v3418 = vld [vmem:[%s13 + $0x728] sm:$0xf]
    %v3419 = vld [vmem:[%s13 + $0x72c] sm:$0xff]
    %v3420 = vld [vmem:[%s13 + $0x734] sm:$0xff]
    %v3421 = vld [vmem:[%s13 + $0x73c] sm:$0xff]
    %v3422 = vld [vmem:[%s13 + $0x744] sm:$0xff]
    %v3423 = vld [vmem:[%s13 + $0x74c] sm:$0xf]
    %v3424 = vld [vmem:[%s13 + $0x750] sm:$0xff]
    %v3425 = vld [vmem:[%s13 + $0x758] sm:$0xff]
    %v3426 = vld [vmem:[%s13 + $0x760] sm:$0xff]
    %v3427 = vld [vmem:[%s13 + $0x768] sm:$0xff]
    %v3428 = vld [vmem:[%s13 + $0x770] sm:$0xf]
    %v3429 = vld [vmem:[%s13 + $0x774] sm:$0xff]
    %v3430 = vld [vmem:[%s13 + $0x77c] sm:$0xff]
    %v3431 = vld [vmem:[%s13 + $0x784] sm:$0xff]
    %v3432 = vld [vmem:[%s13 + $0x78c] sm:$0xff]
    %v3433 = vld [vmem:[%s13 + $0x794] sm:$0xf]
    %v3434 = vld [vmem:[%s13 + $0x798] sm:$0xff]
    %v3435 = vld [vmem:[%s13 + $0x7a0] sm:$0xff]
    %v3436 = vld [vmem:[%s13 + $0x7a8] sm:$0xff]
    %v3437 = vld [vmem:[%s13 + $0x7b0] sm:$0xff]
    %v3438 = vld [vmem:[%s13 + $0x7b8] sm:$0xf]
    %v3439 = vld [vmem:[%s13 + $0x7bc] sm:$0xff]
    %v3440 = vld [vmem:[%s13 + $0x7c4] sm:$0xff]
    %v3441 = vld [vmem:[%s13 + $0x7cc] sm:$0xff]
    %v3442 = vld [vmem:[%s13 + $0x7d4] sm:$0xff]
    %v3443 = vld [vmem:[%s13 + $0x7dc] sm:$0xf]
    %v3444 = vld [vmem:[%s13 + $0x7e0] sm:$0xff]
    %v3445 = vld [vmem:[%s13 + $0x7e8] sm:$0xff]
    %v3446 = vld [vmem:[%s13 + $0x7f0] sm:$0xff]
    %v3447 = vld [vmem:[%s13 + $0x7f8] sm:$0xff]
    %v3448 = vld [vmem:[%s13 + $0x800] sm:$0xf]
    %v3449 = vld [vmem:[%s13 + $0x804] sm:$0xff]
    %v3450 = vld [vmem:[%s13 + $0x80c] sm:$0xff]
    %v3451 = vld [vmem:[%s13 + $0x814] sm:$0xff]
    %v3452 = vld [vmem:[%s13 + $0x81c] sm:$0xff]
    %v3453 = vld [vmem:[%s13 + $0x824] sm:$0xf]
    %v3454 = vld [vmem:[%s13 + $0x828] sm:$0xff]
    %v3455 = vld [vmem:[%s13 + $0x830] sm:$0xff]
    %v3456 = vld [vmem:[%s13 + $0x838] sm:$0xff]
    %v3457 = vld [vmem:[%s13 + $0x840] sm:$0xff]
    %v3458 = vld [vmem:[%s13 + $0x848] sm:$0xf]
    %v3459 = vld [vmem:[%s13 + $0x84c] sm:$0xff]
    %v3460 = vld [vmem:[%s13 + $0x854] sm:$0xff]
    %v3461 = vld [vmem:[%s13 + $0x85c] sm:$0xff]
    %v3462 = vld [vmem:[%s13 + $0x864] sm:$0xff]
    %v3463 = vld [vmem:[%s13 + $0x86c] sm:$0xf]
    %v3464 = vld [vmem:[%s13 + $0x870] sm:$0xff]
    %v3465 = vld [vmem:[%s13 + $0x878] sm:$0xff]
    %v3466 = vld [vmem:[%s13 + $0x880] sm:$0xff]
    %v3467 = vld [vmem:[%s13 + $0x888] sm:$0xff]
    %v3468 = vld [vmem:[%s13 + $0x890] sm:$0xf]
    %v3469 = vld [vmem:[%s13 + $0x894] sm:$0xff]
    %v3470 = vld [vmem:[%s13 + $0x89c] sm:$0xff]
    %v3471 = vld [vmem:[%s13 + $0x8a4] sm:$0xff]
    %v3472 = vld [vmem:[%s13 + $0x8ac] sm:$0xff]
    %v3473 = vld [vmem:[%s13 + $0x8b4] sm:$0xf]
    %v3474 = vld [vmem:[%s13 + $0x8b8] sm:$0xff]
    %v3475 = vld [vmem:[%s13 + $0x8c0] sm:$0xff]
    %v3476 = vld [vmem:[%s13 + $0x8c8] sm:$0xff]
    %v3477 = vld [vmem:[%s13 + $0x8d0] sm:$0xff]
    %v3478 = vld [vmem:[%s13 + $0x8d8] sm:$0xf]
    %v3479 = vld [vmem:[%s13 + $0x8dc] sm:$0xff]
    %v3480 = vld [vmem:[%s13 + $0x8e4] sm:$0xff]
    %v3481 = vld [vmem:[%s13 + $0x8ec] sm:$0xff]
    %v3482 = vld [vmem:[%s13 + $0x8f4] sm:$0xff]
    %v3483 = vld [vmem:[%s13 + $0x8fc] sm:$0xf]
    %v3484 = vld [vmem:[%s13 + $0x900] sm:$0xff]
    %v3485 = vld [vmem:[%s13 + $0x908] sm:$0xff]
    %v3486 = vld [vmem:[%s13 + $0x910] sm:$0xff]
    %v3487 = vld [vmem:[%s13 + $0x918] sm:$0xff]
    %v3488 = vld [vmem:[%s13 + $0x920] sm:$0xf]
    %v3489 = vld [vmem:[%s13 + $0x924] sm:$0xff]
    %v3490 = vld [vmem:[%s13 + $0x92c] sm:$0xff]
    %v3491 = vld [vmem:[%s13 + $0x934] sm:$0xff]
    %v3492 = vld [vmem:[%s13 + $0x93c] sm:$0xff]
    %v3493 = vld [vmem:[%s13 + $0x944] sm:$0xf]
    %v3494 = vld [vmem:[%s13 + $0x948] sm:$0xff]
    %v3495 = vld [vmem:[%s13 + $0x950] sm:$0xff]
    %v3496 = vld [vmem:[%s13 + $0x958] sm:$0xff]
    %v3497 = vld [vmem:[%s13 + $0x960] sm:$0xff]
    %v3498 = vld [vmem:[%s13 + $0x968] sm:$0xf]
    %v3499 = vld [vmem:[%s13 + $0x96c] sm:$0xff]
    %v3500 = vld [vmem:[%s13 + $0x974] sm:$0xff]
    %v3501 = vld [vmem:[%s13 + $0x97c] sm:$0xff]
    %v3502 = vld [vmem:[%s13 + $0x984] sm:$0xff]
    %v3503 = vld [vmem:[%s13 + $0x98c] sm:$0xf]
    %v3504 = vld [vmem:[%s13 + $0x990] sm:$0xff]
    %v3505 = vld [vmem:[%s13 + $0x998] sm:$0xff]
    %v3506 = vld [vmem:[%s13 + $0x9a0] sm:$0xff]
    %v3507 = vld [vmem:[%s13 + $0x9a8] sm:$0xff]
    %v3508 = vld [vmem:[%s13 + $0x9b0] sm:$0xf]
    %v3509 = vld [vmem:[%s13 + $0x9b4] sm:$0xff]
    %v3510 = vld [vmem:[%s13 + $0x9bc] sm:$0xff]
    %v3511 = vld [vmem:[%s13 + $0x9c4] sm:$0xff]
    %v3512 = vld [vmem:[%s13 + $0x9cc] sm:$0xff]
    %v3513 = vld [vmem:[%s13 + $0x9d4] sm:$0xf]
    %v3514 = vld [vmem:[%s13 + $0x9d8] sm:$0xff]
    %v3515 = vld [vmem:[%s13 + $0x9e0] sm:$0xff]
    %v3516 = vld [vmem:[%s13 + $0x9e8] sm:$0xff]
    %v3517 = vld [vmem:[%s13 + $0x9f0] sm:$0xff]
    %v3518 = vld [vmem:[%s13 + $0x9f8] sm:$0xf]
    %v3519 = vld [vmem:[%s13 + $0x9fc] sm:$0xff]
    %v3520 = vld [vmem:[%s13 + $0xa04] sm:$0xff]
    %v3521 = vld [vmem:[%s13 + $0xa0c] sm:$0xff]
    %v3522 = vld [vmem:[%s13 + $0xa14] sm:$0xff]
    %v3523 = vld [vmem:[%s13 + $0xa1c] sm:$0xf]
    %v3524 = vld [vmem:[%s13 + $0xa20] sm:$0xff]
    %v3525 = vld [vmem:[%s13 + $0xa28] sm:$0xff]
    %v3526 = vld [vmem:[%s13 + $0xa30] sm:$0xff]
    %v3527 = vld [vmem:[%s13 + $0xa38] sm:$0xff]
    %v3528 = vld [vmem:[%s13 + $0xa40] sm:$0xf]
    %v3529 = vld [vmem:[%s13 + $0xa44] sm:$0xff]
    %v3530 = vld [vmem:[%s13 + $0xa4c] sm:$0xff]
    %v3531 = vld [vmem:[%s13 + $0xa54] sm:$0xff]
    %v3532 = vld [vmem:[%s13 + $0xa5c] sm:$0xff]
    %v3533 = vld [vmem:[%s13 + $0xa64] sm:$0xf]
    %v3534 = vld [vmem:[%s13 + $0xa68] sm:$0xff]
    %v3535 = vld [vmem:[%s13 + $0xa70] sm:$0xff]
    %v3536 = vld [vmem:[%s13 + $0xa78] sm:$0xff]
    %v3537 = vld [vmem:[%s13 + $0xa80] sm:$0xff]
    %v3538 = vld [vmem:[%s13 + $0xa88] sm:$0xf]
    %v3539 = vld [vmem:[%s13 + $0xa8c] sm:$0xff]
    %v3540 = vld [vmem:[%s13 + $0xa94] sm:$0xff]
    %v3541 = vld [vmem:[%s13 + $0xa9c] sm:$0xff]
    %v3542 = vld [vmem:[%s13 + $0xaa4] sm:$0xff]
    %v3543 = vld [vmem:[%s13 + $0xaac] sm:$0xf]
    %v3544 = vld [vmem:[%s13 + $0xab0] sm:$0xff]
    %v3545 = vld [vmem:[%s13 + $0xab8] sm:$0xff]
    %v3546 = vld [vmem:[%s13 + $0xac0] sm:$0xff]
    %v3547 = vld [vmem:[%s13 + $0xac8] sm:$0xff]
    %v3548 = vld [vmem:[%s13 + $0xad0] sm:$0xf]
    %v3549 = vld [vmem:[%s13 + $0xad4] sm:$0xff]
    %v3550 = vld [vmem:[%s13 + $0xadc] sm:$0xff]
    %v3551 = vld [vmem:[%s13 + $0xae4] sm:$0xff]
    %v3552 = vld [vmem:[%s13 + $0xaec] sm:$0xff]
    %v3553 = vld [vmem:[%s13 + $0xaf4] sm:$0xf]
    %v3554 = vld [vmem:[%s13 + $0xaf8] sm:$0xff]
    %v3555 = vld [vmem:[%s13 + $0xb00] sm:$0xff]
    %v3556 = vld [vmem:[%s13 + $0xb08] sm:$0xff]
    %v3557 = vld [vmem:[%s13 + $0xb10] sm:$0xff]
    %v3558 = vld [vmem:[%s13 + $0xb18] sm:$0xf]
    %v3559 = vld [vmem:[%s13 + $0xb1c] sm:$0xff]
    %v3560 = vld [vmem:[%s13 + $0xb24] sm:$0xff]
    %v3561 = vld [vmem:[%s13 + $0xb2c] sm:$0xff]
    %v3562 = vld [vmem:[%s13 + $0xb34] sm:$0xff]
    %v3563 = vld [vmem:[%s13 + $0xb3c] sm:$0xf]
    %v3964 = vunpack.c.l.b16 %v3164
    %v3965 = vunpack.c.h.b16 %v3164
    %v3966 = vunpack.c.l.b16 %v3165
    %v3967 = vunpack.c.h.b16 %v3165
    %v3968 = vunpack.c.l.b16 %v3166
    %v3969 = vunpack.c.h.b16 %v3166
    %v3970 = vunpack.c.l.b16 %v3167
    %v3971 = vunpack.c.h.b16 %v3167
    %v3972 = vunpack.c.l.b16 %v3168
    %v3973 = vunpack.c.l.b16 %v3169
    %v3974 = vunpack.c.h.b16 %v3169
    %v3975 = vunpack.c.l.b16 %v3170
    %v3976 = vunpack.c.h.b16 %v3170
    %v3977 = vunpack.c.l.b16 %v3171
    %v3978 = vunpack.c.h.b16 %v3171
    %v3979 = vunpack.c.l.b16 %v3172
    %v3980 = vunpack.c.h.b16 %v3172
    %v3981 = vunpack.c.l.b16 %v3173
    %v3982 = vunpack.c.l.b16 %v3174
    %v3983 = vunpack.c.h.b16 %v3174
    %v3984 = vunpack.c.l.b16 %v3175
    %v3985 = vunpack.c.h.b16 %v3175
    %v3986 = vunpack.c.l.b16 %v3176
    %v3987 = vunpack.c.h.b16 %v3176
    %v3988 = vunpack.c.l.b16 %v3177
    %v3989 = vunpack.c.h.b16 %v3177
    %v3990 = vunpack.c.l.b16 %v3178
    %v3991 = vunpack.c.l.b16 %v3179
    %v3992 = vunpack.c.h.b16 %v3179
    %v3993 = vunpack.c.l.b16 %v3180
    %v3994 = vunpack.c.h.b16 %v3180
    %v3995 = vunpack.c.l.b16 %v3181
    %v3996 = vunpack.c.h.b16 %v3181
    %v3997 = vunpack.c.l.b16 %v3182
    %v3998 = vunpack.c.h.b16 %v3182
    %v3999 = vunpack.c.l.b16 %v3183
    %v4000 = vunpack.c.l.b16 %v3184
    %v4001 = vunpack.c.h.b16 %v3184
    %v4002 = vunpack.c.l.b16 %v3185
    %v4003 = vunpack.c.h.b16 %v3185
    %v4004 = vunpack.c.l.b16 %v3186
    %v4005 = vunpack.c.h.b16 %v3186
    %v4006 = vunpack.c.l.b16 %v3187
    %v4007 = vunpack.c.h.b16 %v3187
    %v4008 = vunpack.c.l.b16 %v3188
    %v4009 = vunpack.c.l.b16 %v3189
    %v4010 = vunpack.c.h.b16 %v3189
    %v4011 = vunpack.c.l.b16 %v3190
    %v4012 = vunpack.c.h.b16 %v3190
    %v4013 = vunpack.c.l.b16 %v3191
    %v4014 = vunpack.c.h.b16 %v3191
    %v4015 = vunpack.c.l.b16 %v3192
    %v4016 = vunpack.c.h.b16 %v3192
    %v4017 = vunpack.c.l.b16 %v3193
    %v4018 = vunpack.c.l.b16 %v3194
    %v4019 = vunpack.c.h.b16 %v3194
    %v4020 = vunpack.c.l.b16 %v3195
    %v4021 = vunpack.c.h.b16 %v3195
    %v4022 = vunpack.c.l.b16 %v3196
    %v4023 = vunpack.c.h.b16 %v3196
    %v4024 = vunpack.c.l.b16 %v3197
    %v4025 = vunpack.c.h.b16 %v3197
    %v4026 = vunpack.c.l.b16 %v3198
    %v4027 = vunpack.c.l.b16 %v3199
    %v4028 = vunpack.c.h.b16 %v3199
    %v4029 = vunpack.c.l.b16 %v3200
    %v4030 = vunpack.c.h.b16 %v3200
    %v4031 = vunpack.c.l.b16 %v3201
    %v4032 = vunpack.c.h.b16 %v3201
    %v4033 = vunpack.c.l.b16 %v3202
    %v4034 = vunpack.c.h.b16 %v3202
    %v4035 = vunpack.c.l.b16 %v3203
    %v4036 = vunpack.c.l.b16 %v3204
    %v4037 = vunpack.c.h.b16 %v3204
    %v4038 = vunpack.c.l.b16 %v3205
    %v4039 = vunpack.c.h.b16 %v3205
    %v4040 = vunpack.c.l.b16 %v3206
    %v4041 = vunpack.c.h.b16 %v3206
    %v4042 = vunpack.c.l.b16 %v3207
    %v4043 = vunpack.c.h.b16 %v3207
    %v4044 = vunpack.c.l.b16 %v3208
    %v4045 = vunpack.c.l.b16 %v3209
    %v4046 = vunpack.c.h.b16 %v3209
    %v4047 = vunpack.c.l.b16 %v3210
    %v4048 = vunpack.c.h.b16 %v3210
    %v4049 = vunpack.c.l.b16 %v3211
    %v4050 = vunpack.c.h.b16 %v3211
    %v4051 = vunpack.c.l.b16 %v3212
    %v4052 = vunpack.c.h.b16 %v3212
    %v4053 = vunpack.c.l.b16 %v3213
    %v4054 = vunpack.c.l.b16 %v3214
    %v4055 = vunpack.c.h.b16 %v3214
    %v4056 = vunpack.c.l.b16 %v3215
    %v4057 = vunpack.c.h.b16 %v3215
    %v4058 = vunpack.c.l.b16 %v3216
    %v4059 = vunpack.c.h.b16 %v3216
    %v4060 = vunpack.c.l.b16 %v3217
    %v4061 = vunpack.c.h.b16 %v3217
    %v4062 = vunpack.c.l.b16 %v3218
    %v4063 = vunpack.c.l.b16 %v3219
    %v4064 = vunpack.c.h.b16 %v3219
    %v4065 = vunpack.c.l.b16 %v3220
    %v4066 = vunpack.c.h.b16 %v3220
    %v4067 = vunpack.c.l.b16 %v3221
    %v4068 = vunpack.c.h.b16 %v3221
    %v4069 = vunpack.c.l.b16 %v3222
    %v4070 = vunpack.c.h.b16 %v3222
    %v4071 = vunpack.c.l.b16 %v3223
    %v4072 = vunpack.c.l.b16 %v3224
    %v4073 = vunpack.c.h.b16 %v3224
    %v4074 = vunpack.c.l.b16 %v3225
    %v4075 = vunpack.c.h.b16 %v3225
    %v4076 = vunpack.c.l.b16 %v3226
    %v4077 = vunpack.c.h.b16 %v3226
    %v4078 = vunpack.c.l.b16 %v3227
    %v4079 = vunpack.c.h.b16 %v3227
    %v4080 = vunpack.c.l.b16 %v3228
    %v4081 = vunpack.c.l.b16 %v3229
    %v4082 = vunpack.c.h.b16 %v3229
    %v4083 = vunpack.c.l.b16 %v3230
    %v4084 = vunpack.c.h.b16 %v3230
    %v4085 = vunpack.c.l.b16 %v3231
    %v4086 = vunpack.c.h.b16 %v3231
    %v4087 = vunpack.c.l.b16 %v3232
    %v4088 = vunpack.c.h.b16 %v3232
    %v4089 = vunpack.c.l.b16 %v3233
    %v4090 = vunpack.c.l.b16 %v3234
    %v4091 = vunpack.c.h.b16 %v3234
    %v4092 = vunpack.c.l.b16 %v3235
    %v4093 = vunpack.c.h.b16 %v3235
    %v4094 = vunpack.c.l.b16 %v3236
    %v4095 = vunpack.c.h.b16 %v3236
    %v4096 = vunpack.c.l.b16 %v3237
    %v4097 = vunpack.c.h.b16 %v3237
    %v4098 = vunpack.c.l.b16 %v3238
    %v4099 = vunpack.c.l.b16 %v3239
    %v4100 = vunpack.c.h.b16 %v3239
    %v4101 = vunpack.c.l.b16 %v3240
    %v4102 = vunpack.c.h.b16 %v3240
    %v4103 = vunpack.c.l.b16 %v3241
    %v4104 = vunpack.c.h.b16 %v3241
    %v4105 = vunpack.c.l.b16 %v3242
    %v4106 = vunpack.c.h.b16 %v3242
    %v4107 = vunpack.c.l.b16 %v3243
    %v4108 = vunpack.c.l.b16 %v3244
    %v4109 = vunpack.c.h.b16 %v3244
    %v4110 = vunpack.c.l.b16 %v3245
    %v4111 = vunpack.c.h.b16 %v3245
    %v4112 = vunpack.c.l.b16 %v3246
    %v4113 = vunpack.c.h.b16 %v3246
    %v4114 = vunpack.c.l.b16 %v3247
    %v4115 = vunpack.c.h.b16 %v3247
    %v4116 = vunpack.c.l.b16 %v3248
    %v4117 = vunpack.c.l.b16 %v3249
    %v4118 = vunpack.c.h.b16 %v3249
    %v4119 = vunpack.c.l.b16 %v3250
    %v4120 = vunpack.c.h.b16 %v3250
    %v4121 = vunpack.c.l.b16 %v3251
    %v4122 = vunpack.c.h.b16 %v3251
    %v4123 = vunpack.c.l.b16 %v3252
    %v4124 = vunpack.c.h.b16 %v3252
    %v4125 = vunpack.c.l.b16 %v3253
    %v4126 = vunpack.c.l.b16 %v3254
    %v4127 = vunpack.c.h.b16 %v3254
    %v4128 = vunpack.c.l.b16 %v3255
    %v4129 = vunpack.c.h.b16 %v3255
    %v4130 = vunpack.c.l.b16 %v3256
    %v4131 = vunpack.c.h.b16 %v3256
    %v4132 = vunpack.c.l.b16 %v3257
    %v4133 = vunpack.c.h.b16 %v3257
    %v4134 = vunpack.c.l.b16 %v3258
    %v4135 = vunpack.c.l.b16 %v3259
    %v4136 = vunpack.c.h.b16 %v3259
    %v4137 = vunpack.c.l.b16 %v3260
    %v4138 = vunpack.c.h.b16 %v3260
    %v4139 = vunpack.c.l.b16 %v3261
    %v4140 = vunpack.c.h.b16 %v3261
    %v4141 = vunpack.c.l.b16 %v3262
    %v4142 = vunpack.c.h.b16 %v3262
    %v4143 = vunpack.c.l.b16 %v3263
    %v4144 = vunpack.c.l.b16 %v3264
    %v4145 = vunpack.c.h.b16 %v3264
    %v4146 = vunpack.c.l.b16 %v3265
    %v4147 = vunpack.c.h.b16 %v3265
    %v4148 = vunpack.c.l.b16 %v3266
    %v4149 = vunpack.c.h.b16 %v3266
    %v4150 = vunpack.c.l.b16 %v3267
    %v4151 = vunpack.c.h.b16 %v3267
    %v4152 = vunpack.c.l.b16 %v3268
    %v4153 = vunpack.c.l.b16 %v3269
    %v4154 = vunpack.c.h.b16 %v3269
    %v4155 = vunpack.c.l.b16 %v3270
    %v4156 = vunpack.c.h.b16 %v3270
    %v4157 = vunpack.c.l.b16 %v3271
    %v4158 = vunpack.c.h.b16 %v3271
    %v4159 = vunpack.c.l.b16 %v3272
    %v4160 = vunpack.c.h.b16 %v3272
    %v4161 = vunpack.c.l.b16 %v3273
    %v4162 = vunpack.c.l.b16 %v3274
    %v4163 = vunpack.c.h.b16 %v3274
    %v4164 = vunpack.c.l.b16 %v3275
    %v4165 = vunpack.c.h.b16 %v3275
    %v4166 = vunpack.c.l.b16 %v3276
    %v4167 = vunpack.c.h.b16 %v3276
    %v4168 = vunpack.c.l.b16 %v3277
    %v4169 = vunpack.c.h.b16 %v3277
    %v4170 = vunpack.c.l.b16 %v3278
    %v4171 = vunpack.c.l.b16 %v3279
    %v4172 = vunpack.c.h.b16 %v3279
    %v4173 = vunpack.c.l.b16 %v3280
    %v4174 = vunpack.c.h.b16 %v3280
    %v4175 = vunpack.c.l.b16 %v3281
    %v4176 = vunpack.c.h.b16 %v3281
    %v4177 = vunpack.c.l.b16 %v3282
    %v4178 = vunpack.c.h.b16 %v3282
    %v4179 = vunpack.c.l.b16 %v3283
    %v4180 = vunpack.c.l.b16 %v3284
    %v4181 = vunpack.c.h.b16 %v3284
    %v4182 = vunpack.c.l.b16 %v3285
    %v4183 = vunpack.c.h.b16 %v3285
    %v4184 = vunpack.c.l.b16 %v3286
    %v4185 = vunpack.c.h.b16 %v3286
    %v4186 = vunpack.c.l.b16 %v3287
    %v4187 = vunpack.c.h.b16 %v3287
    %v4188 = vunpack.c.l.b16 %v3288
    %v4189 = vunpack.c.l.b16 %v3289
    %v4190 = vunpack.c.h.b16 %v3289
    %v4191 = vunpack.c.l.b16 %v3290
    %v4192 = vunpack.c.h.b16 %v3290
    %v4193 = vunpack.c.l.b16 %v3291
    %v4194 = vunpack.c.h.b16 %v3291
    %v4195 = vunpack.c.l.b16 %v3292
    %v4196 = vunpack.c.h.b16 %v3292
    %v4197 = vunpack.c.l.b16 %v3293
    %v4198 = vunpack.c.l.b16 %v3294
    %v4199 = vunpack.c.h.b16 %v3294
    %v4200 = vunpack.c.l.b16 %v3295
    %v4201 = vunpack.c.h.b16 %v3295
    %v4202 = vunpack.c.l.b16 %v3296
    %v4203 = vunpack.c.h.b16 %v3296
    %v4204 = vunpack.c.l.b16 %v3297
    %v4205 = vunpack.c.h.b16 %v3297
    %v4206 = vunpack.c.l.b16 %v3298
    %v4207 = vunpack.c.l.b16 %v3299
    %v4208 = vunpack.c.h.b16 %v3299
    %v4209 = vunpack.c.l.b16 %v3300
    %v4210 = vunpack.c.h.b16 %v3300
    %v4211 = vunpack.c.l.b16 %v3301
    %v4212 = vunpack.c.h.b16 %v3301
    %v4213 = vunpack.c.l.b16 %v3302
    %v4214 = vunpack.c.h.b16 %v3302
    %v4215 = vunpack.c.l.b16 %v3303
    %v4216 = vunpack.c.l.b16 %v3304
    %v4217 = vunpack.c.h.b16 %v3304
    %v4218 = vunpack.c.l.b16 %v3305
    %v4219 = vunpack.c.h.b16 %v3305
    %v4220 = vunpack.c.l.b16 %v3306
    %v4221 = vunpack.c.h.b16 %v3306
    %v4222 = vunpack.c.l.b16 %v3307
    %v4223 = vunpack.c.h.b16 %v3307
    %v4224 = vunpack.c.l.b16 %v3308
    %v4225 = vunpack.c.l.b16 %v3309
    %v4226 = vunpack.c.h.b16 %v3309
    %v4227 = vunpack.c.l.b16 %v3310
    %v4228 = vunpack.c.h.b16 %v3310
    %v4229 = vunpack.c.l.b16 %v3311
    %v4230 = vunpack.c.h.b16 %v3311
    %v4231 = vunpack.c.l.b16 %v3312
    %v4232 = vunpack.c.h.b16 %v3312
    %v4233 = vunpack.c.l.b16 %v3313
    %v4234 = vunpack.c.l.b16 %v3314
    %v4235 = vunpack.c.h.b16 %v3314
    %v4236 = vunpack.c.l.b16 %v3315
    %v4237 = vunpack.c.h.b16 %v3315
    %v4238 = vunpack.c.l.b16 %v3316
    %v4239 = vunpack.c.h.b16 %v3316
    %v4240 = vunpack.c.l.b16 %v3317
    %v4241 = vunpack.c.h.b16 %v3317
    %v4242 = vunpack.c.l.b16 %v3318
    %v4243 = vunpack.c.l.b16 %v3319
    %v4244 = vunpack.c.h.b16 %v3319
    %v4245 = vunpack.c.l.b16 %v3320
    %v4246 = vunpack.c.h.b16 %v3320
    %v4247 = vunpack.c.l.b16 %v3321
    %v4248 = vunpack.c.h.b16 %v3321
    %v4249 = vunpack.c.l.b16 %v3322
    %v4250 = vunpack.c.h.b16 %v3322
    %v4251 = vunpack.c.l.b16 %v3323
    %v4252 = vunpack.c.l.b16 %v3324
    %v4253 = vunpack.c.h.b16 %v3324
    %v4254 = vunpack.c.l.b16 %v3325
    %v4255 = vunpack.c.h.b16 %v3325
    %v4256 = vunpack.c.l.b16 %v3326
    %v4257 = vunpack.c.h.b16 %v3326
    %v4258 = vunpack.c.l.b16 %v3327
    %v4259 = vunpack.c.h.b16 %v3327
    %v4260 = vunpack.c.l.b16 %v3328
    %v4261 = vunpack.c.l.b16 %v3329
    %v4262 = vunpack.c.h.b16 %v3329
    %v4263 = vunpack.c.l.b16 %v3330
    %v4264 = vunpack.c.h.b16 %v3330
    %v4265 = vunpack.c.l.b16 %v3331
    %v4266 = vunpack.c.h.b16 %v3331
    %v4267 = vunpack.c.l.b16 %v3332
    %v4268 = vunpack.c.h.b16 %v3332
    %v4269 = vunpack.c.l.b16 %v3333
    %v4270 = vunpack.c.l.b16 %v3334
    %v4271 = vunpack.c.h.b16 %v3334
    %v4272 = vunpack.c.l.b16 %v3335
    %v4273 = vunpack.c.h.b16 %v3335
    %v4274 = vunpack.c.l.b16 %v3336
    %v4275 = vunpack.c.h.b16 %v3336
    %v4276 = vunpack.c.l.b16 %v3337
    %v4277 = vunpack.c.h.b16 %v3337
    %v4278 = vunpack.c.l.b16 %v3338
    %v4279 = vunpack.c.l.b16 %v3339
    %v4280 = vunpack.c.h.b16 %v3339
    %v4281 = vunpack.c.l.b16 %v3340
    %v4282 = vunpack.c.h.b16 %v3340
    %v4283 = vunpack.c.l.b16 %v3341
    %v4284 = vunpack.c.h.b16 %v3341
    %v4285 = vunpack.c.l.b16 %v3342
    %v4286 = vunpack.c.h.b16 %v3342
    %v4287 = vunpack.c.l.b16 %v3343
    %v4288 = vunpack.c.l.b16 %v3344
    %v4289 = vunpack.c.h.b16 %v3344
    %v4290 = vunpack.c.l.b16 %v3345
    %v4291 = vunpack.c.h.b16 %v3345
    %v4292 = vunpack.c.l.b16 %v3346
    %v4293 = vunpack.c.h.b16 %v3346
    %v4294 = vunpack.c.l.b16 %v3347
    %v4295 = vunpack.c.h.b16 %v3347
    %v4296 = vunpack.c.l.b16 %v3348
    %v4297 = vunpack.c.l.b16 %v3349
    %v4298 = vunpack.c.h.b16 %v3349
    %v4299 = vunpack.c.l.b16 %v3350
    %v4300 = vunpack.c.h.b16 %v3350
    %v4301 = vunpack.c.l.b16 %v3351
    %v4302 = vunpack.c.h.b16 %v3351
    %v4303 = vunpack.c.l.b16 %v3352
    %v4304 = vunpack.c.h.b16 %v3352
    %v4305 = vunpack.c.l.b16 %v3353
    %v4306 = vunpack.c.l.b16 %v3354
    %v4307 = vunpack.c.h.b16 %v3354
    %v4308 = vunpack.c.l.b16 %v3355
    %v4309 = vunpack.c.h.b16 %v3355
    %v4310 = vunpack.c.l.b16 %v3356
    %v4311 = vunpack.c.h.b16 %v3356
    %v4312 = vunpack.c.l.b16 %v3357
    %v4313 = vunpack.c.h.b16 %v3357
    %v4314 = vunpack.c.l.b16 %v3358
    %v4315 = vunpack.c.l.b16 %v3359
    %v4316 = vunpack.c.h.b16 %v3359
    %v4317 = vunpack.c.l.b16 %v3360
    %v4318 = vunpack.c.h.b16 %v3360
    %v4319 = vunpack.c.l.b16 %v3361
    %v4320 = vunpack.c.h.b16 %v3361
    %v4321 = vunpack.c.l.b16 %v3362
    %v4322 = vunpack.c.h.b16 %v3362
    %v4323 = vunpack.c.l.b16 %v3363
    %v4324 = vunpack.c.l.b16 %v3364
    %v4325 = vunpack.c.h.b16 %v3364
    %v4326 = vunpack.c.l.b16 %v3365
    %v4327 = vunpack.c.h.b16 %v3365
    %v4328 = vunpack.c.l.b16 %v3366
    %v4329 = vunpack.c.h.b16 %v3366
    %v4330 = vunpack.c.l.b16 %v3367
    %v4331 = vunpack.c.h.b16 %v3367
    %v4332 = vunpack.c.l.b16 %v3368
    %v4333 = vunpack.c.l.b16 %v3369
    %v4334 = vunpack.c.h.b16 %v3369
    %v4335 = vunpack.c.l.b16 %v3370
    %v4336 = vunpack.c.h.b16 %v3370
    %v4337 = vunpack.c.l.b16 %v3371
    %v4338 = vunpack.c.h.b16 %v3371
    %v4339 = vunpack.c.l.b16 %v3372
    %v4340 = vunpack.c.h.b16 %v3372
    %v4341 = vunpack.c.l.b16 %v3373
    %v4342 = vunpack.c.l.b16 %v3374
    %v4343 = vunpack.c.h.b16 %v3374
    %v4344 = vunpack.c.l.b16 %v3375
    %v4345 = vunpack.c.h.b16 %v3375
    %v4346 = vunpack.c.l.b16 %v3376
    %v4347 = vunpack.c.h.b16 %v3376
    %v4348 = vunpack.c.l.b16 %v3377
    %v4349 = vunpack.c.h.b16 %v3377
    %v4350 = vunpack.c.l.b16 %v3378
    %v4351 = vunpack.c.l.b16 %v3379
    %v4352 = vunpack.c.h.b16 %v3379
    %v4353 = vunpack.c.l.b16 %v3380
    %v4354 = vunpack.c.h.b16 %v3380
    %v4355 = vunpack.c.l.b16 %v3381
    %v4356 = vunpack.c.h.b16 %v3381
    %v4357 = vunpack.c.l.b16 %v3382
    %v4358 = vunpack.c.h.b16 %v3382
    %v4359 = vunpack.c.l.b16 %v3383
    %v4360 = vunpack.c.l.b16 %v3384
    %v4361 = vunpack.c.h.b16 %v3384
    %v4362 = vunpack.c.l.b16 %v3385
    %v4363 = vunpack.c.h.b16 %v3385
    %v4364 = vunpack.c.l.b16 %v3386
    %v4365 = vunpack.c.h.b16 %v3386
    %v4366 = vunpack.c.l.b16 %v3387
    %v4367 = vunpack.c.h.b16 %v3387
    %v4368 = vunpack.c.l.b16 %v3388
    %v4369 = vunpack.c.l.b16 %v3389
    %v4370 = vunpack.c.h.b16 %v3389
    %v4371 = vunpack.c.l.b16 %v3390
    %v4372 = vunpack.c.h.b16 %v3390
    %v4373 = vunpack.c.l.b16 %v3391
    %v4374 = vunpack.c.h.b16 %v3391
    %v4375 = vunpack.c.l.b16 %v3392
    %v4376 = vunpack.c.h.b16 %v3392
    %v4377 = vunpack.c.l.b16 %v3393
    %v4378 = vunpack.c.l.b16 %v3394
    %v4379 = vunpack.c.h.b16 %v3394
    %v4380 = vunpack.c.l.b16 %v3395
    %v4381 = vunpack.c.h.b16 %v3395
    %v4382 = vunpack.c.l.b16 %v3396
    %v4383 = vunpack.c.h.b16 %v3396
    %v4384 = vunpack.c.l.b16 %v3397
    %v4385 = vunpack.c.h.b16 %v3397
    %v4386 = vunpack.c.l.b16 %v3398
    %v4387 = vunpack.c.l.b16 %v3399
    %v4388 = vunpack.c.h.b16 %v3399
    %v4389 = vunpack.c.l.b16 %v3400
    %v4390 = vunpack.c.h.b16 %v3400
    %v4391 = vunpack.c.l.b16 %v3401
    %v4392 = vunpack.c.h.b16 %v3401
    %v4393 = vunpack.c.l.b16 %v3402
    %v4394 = vunpack.c.h.b16 %v3402
    %v4395 = vunpack.c.l.b16 %v3403
    %v4396 = vunpack.c.l.b16 %v3404
    %v4397 = vunpack.c.h.b16 %v3404
    %v4398 = vunpack.c.l.b16 %v3405
    %v4399 = vunpack.c.h.b16 %v3405
    %v4400 = vunpack.c.l.b16 %v3406
    %v4401 = vunpack.c.h.b16 %v3406
    %v4402 = vunpack.c.l.b16 %v3407
    %v4403 = vunpack.c.h.b16 %v3407
    %v4404 = vunpack.c.l.b16 %v3408
    %v4405 = vunpack.c.l.b16 %v3409
    %v4406 = vunpack.c.h.b16 %v3409
    %v4407 = vunpack.c.l.b16 %v3410
    %v4408 = vunpack.c.h.b16 %v3410
    %v4409 = vunpack.c.l.b16 %v3411
    %v4410 = vunpack.c.h.b16 %v3411
    %v4411 = vunpack.c.l.b16 %v3412
    %v4412 = vunpack.c.h.b16 %v3412
    %v4413 = vunpack.c.l.b16 %v3413
    %v4414 = vunpack.c.l.b16 %v3414
    %v4415 = vunpack.c.h.b16 %v3414
    %v4416 = vunpack.c.l.b16 %v3415
    %v4417 = vunpack.c.h.b16 %v3415
    %v4418 = vunpack.c.l.b16 %v3416
    %v4419 = vunpack.c.h.b16 %v3416
    %v4420 = vunpack.c.l.b16 %v3417
    %v4421 = vunpack.c.h.b16 %v3417
    %v4422 = vunpack.c.l.b16 %v3418
    %v4423 = vunpack.c.l.b16 %v3419
    %v4424 = vunpack.c.h.b16 %v3419
    %v4425 = vunpack.c.l.b16 %v3420
    %v4426 = vunpack.c.h.b16 %v3420
    %v4427 = vunpack.c.l.b16 %v3421
    %v4428 = vunpack.c.h.b16 %v3421
    %v4429 = vunpack.c.l.b16 %v3422
    %v4430 = vunpack.c.h.b16 %v3422
    %v4431 = vunpack.c.l.b16 %v3423
    %v4432 = vunpack.c.l.b16 %v3424
    %v4433 = vunpack.c.h.b16 %v3424
    %v4434 = vunpack.c.l.b16 %v3425
    %v4435 = vunpack.c.h.b16 %v3425
    %v4436 = vunpack.c.l.b16 %v3426
    %v4437 = vunpack.c.h.b16 %v3426
    %v4438 = vunpack.c.l.b16 %v3427
    %v4439 = vunpack.c.h.b16 %v3427
    %v4440 = vunpack.c.l.b16 %v3428
    %v4441 = vunpack.c.l.b16 %v3429
    %v4442 = vunpack.c.h.b16 %v3429
    %v4443 = vunpack.c.l.b16 %v3430
    %v4444 = vunpack.c.h.b16 %v3430
    %v4445 = vunpack.c.l.b16 %v3431
    %v4446 = vunpack.c.h.b16 %v3431
    %v4447 = vunpack.c.l.b16 %v3432
    %v4448 = vunpack.c.h.b16 %v3432
    %v4449 = vunpack.c.l.b16 %v3433
    %v4450 = vunpack.c.l.b16 %v3434
    %v4451 = vunpack.c.h.b16 %v3434
    %v4452 = vunpack.c.l.b16 %v3435
    %v4453 = vunpack.c.h.b16 %v3435
    %v4454 = vunpack.c.l.b16 %v3436
    %v4455 = vunpack.c.h.b16 %v3436
    %v4456 = vunpack.c.l.b16 %v3437
    %v4457 = vunpack.c.h.b16 %v3437
    %v4458 = vunpack.c.l.b16 %v3438
    %v4459 = vunpack.c.l.b16 %v3439
    %v4460 = vunpack.c.h.b16 %v3439
    %v4461 = vunpack.c.l.b16 %v3440
    %v4462 = vunpack.c.h.b16 %v3440
    %v4463 = vunpack.c.l.b16 %v3441
    %v4464 = vunpack.c.h.b16 %v3441
    %v4465 = vunpack.c.l.b16 %v3442
    %v4466 = vunpack.c.h.b16 %v3442
    %v4467 = vunpack.c.l.b16 %v3443
    %v4468 = vunpack.c.l.b16 %v3444
    %v4469 = vunpack.c.h.b16 %v3444
    %v4470 = vunpack.c.l.b16 %v3445
    %v4471 = vunpack.c.h.b16 %v3445
    %v4472 = vunpack.c.l.b16 %v3446
    %v4473 = vunpack.c.h.b16 %v3446
    %v4474 = vunpack.c.l.b16 %v3447
    %v4475 = vunpack.c.h.b16 %v3447
    %v4476 = vunpack.c.l.b16 %v3448
    %v4477 = vunpack.c.l.b16 %v3449
    %v4478 = vunpack.c.h.b16 %v3449
    %v4479 = vunpack.c.l.b16 %v3450
    %v4480 = vunpack.c.h.b16 %v3450
    %v4481 = vunpack.c.l.b16 %v3451
    %v4482 = vunpack.c.h.b16 %v3451
    %v4483 = vunpack.c.l.b16 %v3452
    %v4484 = vunpack.c.h.b16 %v3452
    %v4485 = vunpack.c.l.b16 %v3453
    %v4486 = vunpack.c.l.b16 %v3454
    %v4487 = vunpack.c.h.b16 %v3454
    %v4488 = vunpack.c.l.b16 %v3455
    %v4489 = vunpack.c.h.b16 %v3455
    %v4490 = vunpack.c.l.b16 %v3456
    %v4491 = vunpack.c.h.b16 %v3456
    %v4492 = vunpack.c.l.b16 %v3457
    %v4493 = vunpack.c.h.b16 %v3457
    %v4494 = vunpack.c.l.b16 %v3458
    %v4495 = vunpack.c.l.b16 %v3459
    %v4496 = vunpack.c.h.b16 %v3459
    %v4497 = vunpack.c.l.b16 %v3460
    %v4498 = vunpack.c.h.b16 %v3460
    %v4499 = vunpack.c.l.b16 %v3461
    %v4500 = vunpack.c.h.b16 %v3461
    %v4501 = vunpack.c.l.b16 %v3462
    %v4502 = vunpack.c.h.b16 %v3462
    %v4503 = vunpack.c.l.b16 %v3463
    %v4504 = vunpack.c.l.b16 %v3464
    %v4505 = vunpack.c.h.b16 %v3464
    %v4506 = vunpack.c.l.b16 %v3465
    %v4507 = vunpack.c.h.b16 %v3465
    %v4508 = vunpack.c.l.b16 %v3466
    %v4509 = vunpack.c.h.b16 %v3466
    %v4510 = vunpack.c.l.b16 %v3467
    %v4511 = vunpack.c.h.b16 %v3467
    %v4512 = vunpack.c.l.b16 %v3468
    %v4513 = vunpack.c.l.b16 %v3469
    %v4514 = vunpack.c.h.b16 %v3469
    %v4515 = vunpack.c.l.b16 %v3470
    %v4516 = vunpack.c.h.b16 %v3470
    %v4517 = vunpack.c.l.b16 %v3471
    %v4518 = vunpack.c.h.b16 %v3471
    %v4519 = vunpack.c.l.b16 %v3472
    %v4520 = vunpack.c.h.b16 %v3472
    %v4521 = vunpack.c.l.b16 %v3473
    %v4522 = vunpack.c.l.b16 %v3474
    %v4523 = vunpack.c.h.b16 %v3474
    %v4524 = vunpack.c.l.b16 %v3475
    %v4525 = vunpack.c.h.b16 %v3475
    %v4526 = vunpack.c.l.b16 %v3476
    %v4527 = vunpack.c.h.b16 %v3476
    %v4528 = vunpack.c.l.b16 %v3477
    %v4529 = vunpack.c.h.b16 %v3477
    %v4530 = vunpack.c.l.b16 %v3478
    %v4531 = vunpack.c.l.b16 %v3479
    %v4532 = vunpack.c.h.b16 %v3479
    %v4533 = vunpack.c.l.b16 %v3480
    %v4534 = vunpack.c.h.b16 %v3480
    %v4535 = vunpack.c.l.b16 %v3481
    %v4536 = vunpack.c.h.b16 %v3481
    %v4537 = vunpack.c.l.b16 %v3482
    %v4538 = vunpack.c.h.b16 %v3482
    %v4539 = vunpack.c.l.b16 %v3483
    %v4540 = vunpack.c.l.b16 %v3484
    %v4541 = vunpack.c.h.b16 %v3484
    %v4542 = vunpack.c.l.b16 %v3485
    %v4543 = vunpack.c.h.b16 %v3485
    %v4544 = vunpack.c.l.b16 %v3486
    %v4545 = vunpack.c.h.b16 %v3486
    %v4546 = vunpack.c.l.b16 %v3487
    %v4547 = vunpack.c.h.b16 %v3487
    %v4548 = vunpack.c.l.b16 %v3488
    %v4549 = vunpack.c.l.b16 %v3489
    %v4550 = vunpack.c.h.b16 %v3489
    %v4551 = vunpack.c.l.b16 %v3490
    %v4552 = vunpack.c.h.b16 %v3490
    %v4553 = vunpack.c.l.b16 %v3491
    %v4554 = vunpack.c.h.b16 %v3491
    %v4555 = vunpack.c.l.b16 %v3492
    %v4556 = vunpack.c.h.b16 %v3492
    %v4557 = vunpack.c.l.b16 %v3493
    %v4558 = vunpack.c.l.b16 %v3494
    %v4559 = vunpack.c.h.b16 %v3494
    %v4560 = vunpack.c.l.b16 %v3495
    %v4561 = vunpack.c.h.b16 %v3495
    %v4562 = vunpack.c.l.b16 %v3496
    %v4563 = vunpack.c.h.b16 %v3496
    %v4564 = vunpack.c.l.b16 %v3497
    %v4565 = vunpack.c.h.b16 %v3497
    %v4566 = vunpack.c.l.b16 %v3498
    %v4567 = vunpack.c.l.b16 %v3499
    %v4568 = vunpack.c.h.b16 %v3499
    %v4569 = vunpack.c.l.b16 %v3500
    %v4570 = vunpack.c.h.b16 %v3500
    %v4571 = vunpack.c.l.b16 %v3501
    %v4572 = vunpack.c.h.b16 %v3501
    %v4573 = vunpack.c.l.b16 %v3502
    %v4574 = vunpack.c.h.b16 %v3502
    %v4575 = vunpack.c.l.b16 %v3503
    %v4576 = vunpack.c.l.b16 %v3504
    %v4577 = vunpack.c.h.b16 %v3504
    %v4578 = vunpack.c.l.b16 %v3505
    %v4579 = vunpack.c.h.b16 %v3505
    %v4580 = vunpack.c.l.b16 %v3506
    %v4581 = vunpack.c.h.b16 %v3506
    %v4582 = vunpack.c.l.b16 %v3507
    %v4583 = vunpack.c.h.b16 %v3507
    %v4584 = vunpack.c.l.b16 %v3508
    %v4585 = vunpack.c.l.b16 %v3509
    %v4586 = vunpack.c.h.b16 %v3509
    %v4587 = vunpack.c.l.b16 %v3510
    %v4588 = vunpack.c.h.b16 %v3510
    %v4589 = vunpack.c.l.b16 %v3511
    %v4590 = vunpack.c.h.b16 %v3511
    %v4591 = vunpack.c.l.b16 %v3512
    %v4592 = vunpack.c.h.b16 %v3512
    %v4593 = vunpack.c.l.b16 %v3513
    %v4594 = vunpack.c.l.b16 %v3514
    %v4595 = vunpack.c.h.b16 %v3514
    %v4596 = vunpack.c.l.b16 %v3515
    %v4597 = vunpack.c.h.b16 %v3515
    %v4598 = vunpack.c.l.b16 %v3516
    %v4599 = vunpack.c.h.b16 %v3516
    %v4600 = vunpack.c.l.b16 %v3517
    %v4601 = vunpack.c.h.b16 %v3517
    %v4602 = vunpack.c.l.b16 %v3518
    %v4603 = vunpack.c.l.b16 %v3519
    %v4604 = vunpack.c.h.b16 %v3519
    %v4605 = vunpack.c.l.b16 %v3520
    %v4606 = vunpack.c.h.b16 %v3520
    %v4607 = vunpack.c.l.b16 %v3521
    %v4608 = vunpack.c.h.b16 %v3521
    %v4609 = vunpack.c.l.b16 %v3522
    %v4610 = vunpack.c.h.b16 %v3522
    %v4611 = vunpack.c.l.b16 %v3523
    %v4612 = vunpack.c.l.b16 %v3524
    %v4613 = vunpack.c.h.b16 %v3524
    %v4614 = vunpack.c.l.b16 %v3525
    %v4615 = vunpack.c.h.b16 %v3525
    %v4616 = vunpack.c.l.b16 %v3526
    %v4617 = vunpack.c.h.b16 %v3526
    %v4618 = vunpack.c.l.b16 %v3527
    %v4619 = vunpack.c.h.b16 %v3527
    %v4620 = vunpack.c.l.b16 %v3528
    %v4621 = vunpack.c.l.b16 %v3529
    %v4622 = vunpack.c.h.b16 %v3529
    %v4623 = vunpack.c.l.b16 %v3530
    %v4624 = vunpack.c.h.b16 %v3530
    %v4625 = vunpack.c.l.b16 %v3531
    %v4626 = vunpack.c.h.b16 %v3531
    %v4627 = vunpack.c.l.b16 %v3532
    %v4628 = vunpack.c.h.b16 %v3532
    %v4629 = vunpack.c.l.b16 %v3533
    %v4630 = vunpack.c.l.b16 %v3534
    %v4631 = vunpack.c.h.b16 %v3534
    %v4632 = vunpack.c.l.b16 %v3535
    %v4633 = vunpack.c.h.b16 %v3535
    %v4634 = vunpack.c.l.b16 %v3536
    %v4635 = vunpack.c.h.b16 %v3536
    %v4636 = vunpack.c.l.b16 %v3537
    %v4637 = vunpack.c.h.b16 %v3537
    %v4638 = vunpack.c.l.b16 %v3538
    %v4639 = vunpack.c.l.b16 %v3539
    %v4640 = vunpack.c.h.b16 %v3539
    %v4641 = vunpack.c.l.b16 %v3540
    %v4642 = vunpack.c.h.b16 %v3540
    %v4643 = vunpack.c.l.b16 %v3541
    %v4644 = vunpack.c.h.b16 %v3541
    %v4645 = vunpack.c.l.b16 %v3542
    %v4646 = vunpack.c.h.b16 %v3542
    %v4647 = vunpack.c.l.b16 %v3543
    %v4648 = vunpack.c.l.b16 %v3544
    %v4649 = vunpack.c.h.b16 %v3544
    %v4650 = vunpack.c.l.b16 %v3545
    %v4651 = vunpack.c.h.b16 %v3545
    %v4652 = vunpack.c.l.b16 %v3546
    %v4653 = vunpack.c.h.b16 %v3546
    %v4654 = vunpack.c.l.b16 %v3547
    %v4655 = vunpack.c.h.b16 %v3547
    %v4656 = vunpack.c.l.b16 %v3548
    %v4657 = vunpack.c.l.b16 %v3549
    %v4658 = vunpack.c.h.b16 %v3549
    %v4659 = vunpack.c.l.b16 %v3550
    %v4660 = vunpack.c.h.b16 %v3550
    %v4661 = vunpack.c.l.b16 %v3551
    %v4662 = vunpack.c.h.b16 %v3551
    %v4663 = vunpack.c.l.b16 %v3552
    %v4664 = vunpack.c.h.b16 %v3552
    %v4665 = vunpack.c.l.b16 %v3553
    %v4666 = vunpack.c.l.b16 %v3554
    %v4667 = vunpack.c.h.b16 %v3554
    %v4668 = vunpack.c.l.b16 %v3555
    %v4669 = vunpack.c.h.b16 %v3555
    %v4670 = vunpack.c.l.b16 %v3556
    %v4671 = vunpack.c.h.b16 %v3556
    %v4672 = vunpack.c.l.b16 %v3557
    %v4673 = vunpack.c.h.b16 %v3557
    %v4674 = vunpack.c.l.b16 %v3558
    %v4675 = vunpack.c.l.b16 %v3559
    %v4676 = vunpack.c.h.b16 %v3559
    %v4677 = vunpack.c.l.b16 %v3560
    %v4678 = vunpack.c.h.b16 %v3560
    %v4679 = vunpack.c.l.b16 %v3561
    %v4680 = vunpack.c.h.b16 %v3561
    %v4681 = vunpack.c.l.b16 %v3562
    %v4682 = vunpack.c.h.b16 %v3562
    %v4683 = vunpack.c.l.b16 %v3563
    %v4684 = vpack.c.b16 %v3973, %v3964
    %v4685 = vpack.c.b16 %v3974, %v3965
    %v4686 = vpack.c.b16 %v3975, %v3966
    %v4687 = vpack.c.b16 %v3976, %v3967
    %v4688 = vpack.c.b16 %v3977, %v3968
    %v4689 = vpack.c.b16 %v3978, %v3969
    %v4690 = vpack.c.b16 %v3979, %v3970
    %v4691 = vpack.c.b16 %v3980, %v3971
    %v4692 = vpack.c.b16 %v3981, %v3972
    %v4693 = vpack.c.b16 %v3991, %v3982
    %v4694 = vpack.c.b16 %v3992, %v3983
    %v4695 = vpack.c.b16 %v3993, %v3984
    %v4696 = vpack.c.b16 %v3994, %v3985
    %v4697 = vpack.c.b16 %v3995, %v3986
    %v4698 = vpack.c.b16 %v3996, %v3987
    %v4699 = vpack.c.b16 %v3997, %v3988
    %v4700 = vpack.c.b16 %v3998, %v3989
    %v4701 = vpack.c.b16 %v3999, %v3990
    %v4702 = vpack.c.b16 %v4009, %v4000
    %v4703 = vpack.c.b16 %v4010, %v4001
    %v4704 = vpack.c.b16 %v4011, %v4002
    %v4705 = vpack.c.b16 %v4012, %v4003
    %v4706 = vpack.c.b16 %v4013, %v4004
    %v4707 = vpack.c.b16 %v4014, %v4005
    %v4708 = vpack.c.b16 %v4015, %v4006
    %v4709 = vpack.c.b16 %v4016, %v4007
    %v4710 = vpack.c.b16 %v4017, %v4008
    %v4711 = vpack.c.b16 %v4027, %v4018
    %v4712 = vpack.c.b16 %v4028, %v4019
    %v4713 = vpack.c.b16 %v4029, %v4020
    %v4714 = vpack.c.b16 %v4030, %v4021
    %v4715 = vpack.c.b16 %v4031, %v4022
    %v4716 = vpack.c.b16 %v4032, %v4023
    %v4717 = vpack.c.b16 %v4033, %v4024
    %v4718 = vpack.c.b16 %v4034, %v4025
    %v4719 = vpack.c.b16 %v4035, %v4026
    %v4720 = vpack.c.b16 %v4045, %v4036
    %v4721 = vpack.c.b16 %v4046, %v4037
    %v4722 = vpack.c.b16 %v4047, %v4038
    %v4723 = vpack.c.b16 %v4048, %v4039
    %v4724 = vpack.c.b16 %v4049, %v4040
    %v4725 = vpack.c.b16 %v4050, %v4041
    %v4726 = vpack.c.b16 %v4051, %v4042
    %v4727 = vpack.c.b16 %v4052, %v4043
    %v4728 = vpack.c.b16 %v4053, %v4044
    %v4729 = vpack.c.b16 %v4063, %v4054
    %v4730 = vpack.c.b16 %v4064, %v4055
    %v4731 = vpack.c.b16 %v4065, %v4056
    %v4732 = vpack.c.b16 %v4066, %v4057
    %v4733 = vpack.c.b16 %v4067, %v4058
    %v4734 = vpack.c.b16 %v4068, %v4059
    %v4735 = vpack.c.b16 %v4069, %v4060
    %v4736 = vpack.c.b16 %v4070, %v4061
    %v4737 = vpack.c.b16 %v4071, %v4062
    %v4738 = vpack.c.b16 %v4081, %v4072
    %v4739 = vpack.c.b16 %v4082, %v4073
    %v4740 = vpack.c.b16 %v4083, %v4074
    %v4741 = vpack.c.b16 %v4084, %v4075
    %v4742 = vpack.c.b16 %v4085, %v4076
    %v4743 = vpack.c.b16 %v4086, %v4077
    %v4744 = vpack.c.b16 %v4087, %v4078
    %v4745 = vpack.c.b16 %v4088, %v4079
    %v4746 = vpack.c.b16 %v4089, %v4080
    %v4747 = vpack.c.b16 %v4099, %v4090
    %v4748 = vpack.c.b16 %v4100, %v4091
    %v4749 = vpack.c.b16 %v4101, %v4092
    %v4750 = vpack.c.b16 %v4102, %v4093
    %v4751 = vpack.c.b16 %v4103, %v4094
    %v4752 = vpack.c.b16 %v4104, %v4095
    %v4753 = vpack.c.b16 %v4105, %v4096
    %v4754 = vpack.c.b16 %v4106, %v4097
    %v4755 = vpack.c.b16 %v4107, %v4098
    %v4756 = vpack.c.b16 %v4117, %v4108
    %v4757 = vpack.c.b16 %v4118, %v4109
    %v4758 = vpack.c.b16 %v4119, %v4110
    %v4759 = vpack.c.b16 %v4120, %v4111
    %v4760 = vpack.c.b16 %v4121, %v4112
    %v4761 = vpack.c.b16 %v4122, %v4113
    %v4762 = vpack.c.b16 %v4123, %v4114
    %v4763 = vpack.c.b16 %v4124, %v4115
    %v4764 = vpack.c.b16 %v4125, %v4116
    %v4765 = vpack.c.b16 %v4135, %v4126
    %v4766 = vpack.c.b16 %v4136, %v4127
    %v4767 = vpack.c.b16 %v4137, %v4128
    %v4768 = vpack.c.b16 %v4138, %v4129
    %v4769 = vpack.c.b16 %v4139, %v4130
    %v4770 = vpack.c.b16 %v4140, %v4131
    %v4771 = vpack.c.b16 %v4141, %v4132
    %v4772 = vpack.c.b16 %v4142, %v4133
    %v4773 = vpack.c.b16 %v4143, %v4134
    %v4774 = vpack.c.b16 %v4153, %v4144
    %v4775 = vpack.c.b16 %v4154, %v4145
    %v4776 = vpack.c.b16 %v4155, %v4146
    %v4777 = vpack.c.b16 %v4156, %v4147
    %v4778 = vpack.c.b16 %v4157, %v4148
    %v4779 = vpack.c.b16 %v4158, %v4149
    %v4780 = vpack.c.b16 %v4159, %v4150
    %v4781 = vpack.c.b16 %v4160, %v4151
    %v4782 = vpack.c.b16 %v4161, %v4152
    %v4783 = vpack.c.b16 %v4171, %v4162
    %v4784 = vpack.c.b16 %v4172, %v4163
    %v4785 = vpack.c.b16 %v4173, %v4164
    %v4786 = vpack.c.b16 %v4174, %v4165
    %v4787 = vpack.c.b16 %v4175, %v4166
    %v4788 = vpack.c.b16 %v4176, %v4167
    %v4789 = vpack.c.b16 %v4177, %v4168
    %v4790 = vpack.c.b16 %v4178, %v4169
    %v4791 = vpack.c.b16 %v4179, %v4170
    %v4792 = vpack.c.b16 %v4189, %v4180
    %v4793 = vpack.c.b16 %v4190, %v4181
    %v4794 = vpack.c.b16 %v4191, %v4182
    %v4795 = vpack.c.b16 %v4192, %v4183
    %v4796 = vpack.c.b16 %v4193, %v4184
    %v4797 = vpack.c.b16 %v4194, %v4185
    %v4798 = vpack.c.b16 %v4195, %v4186
    %v4799 = vpack.c.b16 %v4196, %v4187
    %v4800 = vpack.c.b16 %v4197, %v4188
    %v4801 = vpack.c.b16 %v4207, %v4198
    %v4802 = vpack.c.b16 %v4208, %v4199
    %v4803 = vpack.c.b16 %v4209, %v4200
    %v4804 = vpack.c.b16 %v4210, %v4201
    %v4805 = vpack.c.b16 %v4211, %v4202
    %v4806 = vpack.c.b16 %v4212, %v4203
    %v4807 = vpack.c.b16 %v4213, %v4204
    %v4808 = vpack.c.b16 %v4214, %v4205
    %v4809 = vpack.c.b16 %v4215, %v4206
    %v4810 = vpack.c.b16 %v4225, %v4216
    %v4811 = vpack.c.b16 %v4226, %v4217
    %v4812 = vpack.c.b16 %v4227, %v4218
    %v4813 = vpack.c.b16 %v4228, %v4219
    %v4814 = vpack.c.b16 %v4229, %v4220
    %v4815 = vpack.c.b16 %v4230, %v4221
    %v4816 = vpack.c.b16 %v4231, %v4222
    %v4817 = vpack.c.b16 %v4232, %v4223
    %v4818 = vpack.c.b16 %v4233, %v4224
    %v4819 = vpack.c.b16 %v4243, %v4234
    %v4820 = vpack.c.b16 %v4244, %v4235
    %v4821 = vpack.c.b16 %v4245, %v4236
    %v4822 = vpack.c.b16 %v4246, %v4237
    %v4823 = vpack.c.b16 %v4247, %v4238
    %v4824 = vpack.c.b16 %v4248, %v4239
    %v4825 = vpack.c.b16 %v4249, %v4240
    %v4826 = vpack.c.b16 %v4250, %v4241
    %v4827 = vpack.c.b16 %v4251, %v4242
    %v4828 = vpack.c.b16 %v4261, %v4252
    %v4829 = vpack.c.b16 %v4262, %v4253
    %v4830 = vpack.c.b16 %v4263, %v4254
    %v4831 = vpack.c.b16 %v4264, %v4255
    %v4832 = vpack.c.b16 %v4265, %v4256
    %v4833 = vpack.c.b16 %v4266, %v4257
    %v4834 = vpack.c.b16 %v4267, %v4258
    %v4835 = vpack.c.b16 %v4268, %v4259
    %v4836 = vpack.c.b16 %v4269, %v4260
    %v4837 = vpack.c.b16 %v4279, %v4270
    %v4838 = vpack.c.b16 %v4280, %v4271
    %v4839 = vpack.c.b16 %v4281, %v4272
    %v4840 = vpack.c.b16 %v4282, %v4273
    %v4841 = vpack.c.b16 %v4283, %v4274
    %v4842 = vpack.c.b16 %v4284, %v4275
    %v4843 = vpack.c.b16 %v4285, %v4276
    %v4844 = vpack.c.b16 %v4286, %v4277
    %v4845 = vpack.c.b16 %v4287, %v4278
    %v4846 = vpack.c.b16 %v4297, %v4288
    %v4847 = vpack.c.b16 %v4298, %v4289
    %v4848 = vpack.c.b16 %v4299, %v4290
    %v4849 = vpack.c.b16 %v4300, %v4291
    %v4850 = vpack.c.b16 %v4301, %v4292
    %v4851 = vpack.c.b16 %v4302, %v4293
    %v4852 = vpack.c.b16 %v4303, %v4294
    %v4853 = vpack.c.b16 %v4304, %v4295
    %v4854 = vpack.c.b16 %v4305, %v4296
    %v4855 = vpack.c.b16 %v4315, %v4306
    %v4856 = vpack.c.b16 %v4316, %v4307
    %v4857 = vpack.c.b16 %v4317, %v4308
    %v4858 = vpack.c.b16 %v4318, %v4309
    %v4859 = vpack.c.b16 %v4319, %v4310
    %v4860 = vpack.c.b16 %v4320, %v4311
    %v4861 = vpack.c.b16 %v4321, %v4312
    %v4862 = vpack.c.b16 %v4322, %v4313
    %v4863 = vpack.c.b16 %v4323, %v4314
    %v4864 = vpack.c.b16 %v4333, %v4324
    %v4865 = vpack.c.b16 %v4334, %v4325
    %v4866 = vpack.c.b16 %v4335, %v4326
    %v4867 = vpack.c.b16 %v4336, %v4327
    %v4868 = vpack.c.b16 %v4337, %v4328
    %v4869 = vpack.c.b16 %v4338, %v4329
    %v4870 = vpack.c.b16 %v4339, %v4330
    %v4871 = vpack.c.b16 %v4340, %v4331
    %v4872 = vpack.c.b16 %v4341, %v4332
    %v4873 = vpack.c.b16 %v4351, %v4342
    %v4874 = vpack.c.b16 %v4352, %v4343
    %v4875 = vpack.c.b16 %v4353, %v4344
    %v4876 = vpack.c.b16 %v4354, %v4345
    %v4877 = vpack.c.b16 %v4355, %v4346
    %v4878 = vpack.c.b16 %v4356, %v4347
    %v4879 = vpack.c.b16 %v4357, %v4348
    %v4880 = vpack.c.b16 %v4358, %v4349
    %v4881 = vpack.c.b16 %v4359, %v4350
    %v4882 = vpack.c.b16 %v4369, %v4360
    %v4883 = vpack.c.b16 %v4370, %v4361
    %v4884 = vpack.c.b16 %v4371, %v4362
    %v4885 = vpack.c.b16 %v4372, %v4363
    %v4886 = vpack.c.b16 %v4373, %v4364
    %v4887 = vpack.c.b16 %v4374, %v4365
    %v4888 = vpack.c.b16 %v4375, %v4366
    %v4889 = vpack.c.b16 %v4376, %v4367
    %v4890 = vpack.c.b16 %v4377, %v4368
    %v4891 = vpack.c.b16 %v4387, %v4378
    %v4892 = vpack.c.b16 %v4388, %v4379
    %v4893 = vpack.c.b16 %v4389, %v4380
    %v4894 = vpack.c.b16 %v4390, %v4381
    %v4895 = vpack.c.b16 %v4391, %v4382
    %v4896 = vpack.c.b16 %v4392, %v4383
    %v4897 = vpack.c.b16 %v4393, %v4384
    %v4898 = vpack.c.b16 %v4394, %v4385
    %v4899 = vpack.c.b16 %v4395, %v4386
    %v4900 = vpack.c.b16 %v4405, %v4396
    %v4901 = vpack.c.b16 %v4406, %v4397
    %v4902 = vpack.c.b16 %v4407, %v4398
    %v4903 = vpack.c.b16 %v4408, %v4399
    %v4904 = vpack.c.b16 %v4409, %v4400
    %v4905 = vpack.c.b16 %v4410, %v4401
    %v4906 = vpack.c.b16 %v4411, %v4402
    %v4907 = vpack.c.b16 %v4412, %v4403
    %v4908 = vpack.c.b16 %v4413, %v4404
    %v4909 = vpack.c.b16 %v4423, %v4414
    %v4910 = vpack.c.b16 %v4424, %v4415
    %v4911 = vpack.c.b16 %v4425, %v4416
    %v4912 = vpack.c.b16 %v4426, %v4417
    %v4913 = vpack.c.b16 %v4427, %v4418
    %v4914 = vpack.c.b16 %v4428, %v4419
    %v4915 = vpack.c.b16 %v4429, %v4420
    %v4916 = vpack.c.b16 %v4430, %v4421
    %v4917 = vpack.c.b16 %v4431, %v4422
    %v4918 = vpack.c.b16 %v4441, %v4432
    %v4919 = vpack.c.b16 %v4442, %v4433
    %v4920 = vpack.c.b16 %v4443, %v4434
    %v4921 = vpack.c.b16 %v4444, %v4435
    %v4922 = vpack.c.b16 %v4445, %v4436
    %v4923 = vpack.c.b16 %v4446, %v4437
    %v4924 = vpack.c.b16 %v4447, %v4438
    %v4925 = vpack.c.b16 %v4448, %v4439
    %v4926 = vpack.c.b16 %v4449, %v4440
    %v4927 = vpack.c.b16 %v4459, %v4450
    %v4928 = vpack.c.b16 %v4460, %v4451
    %v4929 = vpack.c.b16 %v4461, %v4452
    %v4930 = vpack.c.b16 %v4462, %v4453
    %v4931 = vpack.c.b16 %v4463, %v4454
    %v4932 = vpack.c.b16 %v4464, %v4455
    %v4933 = vpack.c.b16 %v4465, %v4456
    %v4934 = vpack.c.b16 %v4466, %v4457
    %v4935 = vpack.c.b16 %v4467, %v4458
    %v4936 = vpack.c.b16 %v4477, %v4468
    %v4937 = vpack.c.b16 %v4478, %v4469
    %v4938 = vpack.c.b16 %v4479, %v4470
    %v4939 = vpack.c.b16 %v4480, %v4471
    %v4940 = vpack.c.b16 %v4481, %v4472
    %v4941 = vpack.c.b16 %v4482, %v4473
    %v4942 = vpack.c.b16 %v4483, %v4474
    %v4943 = vpack.c.b16 %v4484, %v4475
    %v4944 = vpack.c.b16 %v4485, %v4476
    %v4945 = vpack.c.b16 %v4495, %v4486
    %v4946 = vpack.c.b16 %v4496, %v4487
    %v4947 = vpack.c.b16 %v4497, %v4488
    %v4948 = vpack.c.b16 %v4498, %v4489
    %v4949 = vpack.c.b16 %v4499, %v4490
    %v4950 = vpack.c.b16 %v4500, %v4491
    %v4951 = vpack.c.b16 %v4501, %v4492
    %v4952 = vpack.c.b16 %v4502, %v4493
    %v4953 = vpack.c.b16 %v4503, %v4494
    %v4954 = vpack.c.b16 %v4513, %v4504
    %v4955 = vpack.c.b16 %v4514, %v4505
    %v4956 = vpack.c.b16 %v4515, %v4506
    %v4957 = vpack.c.b16 %v4516, %v4507
    %v4958 = vpack.c.b16 %v4517, %v4508
    %v4959 = vpack.c.b16 %v4518, %v4509
    %v4960 = vpack.c.b16 %v4519, %v4510
    %v4961 = vpack.c.b16 %v4520, %v4511
    %v4962 = vpack.c.b16 %v4521, %v4512
    %v4963 = vpack.c.b16 %v4531, %v4522
    %v4964 = vpack.c.b16 %v4532, %v4523
    %v4965 = vpack.c.b16 %v4533, %v4524
    %v4966 = vpack.c.b16 %v4534, %v4525
    %v4967 = vpack.c.b16 %v4535, %v4526
    %v4968 = vpack.c.b16 %v4536, %v4527
    %v4969 = vpack.c.b16 %v4537, %v4528
    %v4970 = vpack.c.b16 %v4538, %v4529
    %v4971 = vpack.c.b16 %v4539, %v4530
    %v4972 = vpack.c.b16 %v4549, %v4540
    %v4973 = vpack.c.b16 %v4550, %v4541
    %v4974 = vpack.c.b16 %v4551, %v4542
    %v4975 = vpack.c.b16 %v4552, %v4543
    %v4976 = vpack.c.b16 %v4553, %v4544
    %v4977 = vpack.c.b16 %v4554, %v4545
    %v4978 = vpack.c.b16 %v4555, %v4546
    %v4979 = vpack.c.b16 %v4556, %v4547
    %v4980 = vpack.c.b16 %v4557, %v4548
    %v4981 = vpack.c.b16 %v4567, %v4558
    %v4982 = vpack.c.b16 %v4568, %v4559
    %v4983 = vpack.c.b16 %v4569, %v4560
    %v4984 = vpack.c.b16 %v4570, %v4561
    %v4985 = vpack.c.b16 %v4571, %v4562
    %v4986 = vpack.c.b16 %v4572, %v4563
    %v4987 = vpack.c.b16 %v4573, %v4564
    %v4988 = vpack.c.b16 %v4574, %v4565
    %v4989 = vpack.c.b16 %v4575, %v4566
    %v4990 = vpack.c.b16 %v4585, %v4576
    %v4991 = vpack.c.b16 %v4586, %v4577
    %v4992 = vpack.c.b16 %v4587, %v4578
    %v4993 = vpack.c.b16 %v4588, %v4579
    %v4994 = vpack.c.b16 %v4589, %v4580
    %v4995 = vpack.c.b16 %v4590, %v4581
    %v4996 = vpack.c.b16 %v4591, %v4582
    %v4997 = vpack.c.b16 %v4592, %v4583
    %v4998 = vpack.c.b16 %v4593, %v4584
    %v4999 = vpack.c.b16 %v4603, %v4594
    %v5000 = vpack.c.b16 %v4604, %v4595
    %v5001 = vpack.c.b16 %v4605, %v4596
    %v5002 = vpack.c.b16 %v4606, %v4597
    %v5003 = vpack.c.b16 %v4607, %v4598
    %v5004 = vpack.c.b16 %v4608, %v4599
    %v5005 = vpack.c.b16 %v4609, %v4600
    %v5006 = vpack.c.b16 %v4610, %v4601
    %v5007 = vpack.c.b16 %v4611, %v4602
    %v5008 = vpack.c.b16 %v4621, %v4612
    %v5009 = vpack.c.b16 %v4622, %v4613
    %v5010 = vpack.c.b16 %v4623, %v4614
    %v5011 = vpack.c.b16 %v4624, %v4615
    %v5012 = vpack.c.b16 %v4625, %v4616
    %v5013 = vpack.c.b16 %v4626, %v4617
    %v5014 = vpack.c.b16 %v4627, %v4618
    %v5015 = vpack.c.b16 %v4628, %v4619
    %v5016 = vpack.c.b16 %v4629, %v4620
    %v5017 = vpack.c.b16 %v4639, %v4630
    %v5018 = vpack.c.b16 %v4640, %v4631
    %v5019 = vpack.c.b16 %v4641, %v4632
    %v5020 = vpack.c.b16 %v4642, %v4633
    %v5021 = vpack.c.b16 %v4643, %v4634
    %v5022 = vpack.c.b16 %v4644, %v4635
    %v5023 = vpack.c.b16 %v4645, %v4636
    %v5024 = vpack.c.b16 %v4646, %v4637
    %v5025 = vpack.c.b16 %v4647, %v4638
    %v5026 = vpack.c.b16 %v4657, %v4648
    %v5027 = vpack.c.b16 %v4658, %v4649
    %v5028 = vpack.c.b16 %v4659, %v4650
    %v5029 = vpack.c.b16 %v4660, %v4651
    %v5030 = vpack.c.b16 %v4661, %v4652
    %v5031 = vpack.c.b16 %v4662, %v4653
    %v5032 = vpack.c.b16 %v4663, %v4654
    %v5033 = vpack.c.b16 %v4664, %v4655
    %v5034 = vpack.c.b16 %v4665, %v4656
    %v5035 = vpack.c.b16 %v4675, %v4666
    %v5036 = vpack.c.b16 %v4676, %v4667
    %v5037 = vpack.c.b16 %v4677, %v4668
    %v5038 = vpack.c.b16 %v4678, %v4669
    %v5039 = vpack.c.b16 %v4679, %v4670
    %v5040 = vpack.c.b16 %v4680, %v4671
    %v5041 = vpack.c.b16 %v4681, %v4672
    %v5042 = vpack.c.b16 %v4682, %v4673
    %v5043 = vpack.c.b16 %v4683, %v4674
    %5404 = vmatpush.bf16.msra.mxu0 %v4747
    %5405 = vmatpush.bf16.msra.mxu0 %v4738
    %5406 = vmatpush.bf16.msra.mxu0 %v4729
    %5407 = vmatpush.bf16.msra.mxu0 %v4720
    %5408 = vmatpush.bf16.msra.mxu0 %v4711
    %5409 = vmatpush.bf16.msra.mxu0 %v4702
    %5410 = vmatpush.bf16.msra.mxu0 %v4693
    %5411 = vmatpush.bf16.msra.mxu0 %v4684
    %5412 = vmatmul.bf16.gmra.mxu0 %v3159
    %v5413 = vpop.f32.mrf.mxu0
    %v5414 = vadd.f32 0.0, %v5413
    %v5415 = vpop.f32.mrf.mxu0
    %v5416 = vadd.f32 0.0, %v5415
    %5417 = vdwg.mxu0
    %5418 = vmatpush.bf16.msra.mxu0 %v4819
    %5419 = vmatpush.bf16.msra.mxu0 %v4810
    %5420 = vmatpush.bf16.msra.mxu0 %v4801
    %5421 = vmatpush.bf16.msra.mxu0 %v4792
    %5422 = vmatpush.bf16.msra.mxu0 %v4783
    %5423 = vmatpush.bf16.msra.mxu0 %v4774
    %5424 = vmatpush.bf16.msra.mxu0 %v4765
    %5425 = vmatpush.bf16.msra.mxu0 %v4756
    %5426 = vmatmul.bf16.gmra.mxu0 %v3160
    %v5427 = vpop.f32.mrf.mxu0
    %v5428 = vadd.f32 %v5414, %v5427
    %v5429 = vpop.f32.mrf.mxu0
    %v5430 = vadd.f32 %v5416, %v5429
    %5431 = vdwg.mxu0
    %5432 = vmatpush.bf16.msra.mxu0 %v4891
    %5433 = vmatpush.bf16.msra.mxu0 %v4882
    %5434 = vmatpush.bf16.msra.mxu0 %v4873
    %5435 = vmatpush.bf16.msra.mxu0 %v4864
    %5436 = vmatpush.bf16.msra.mxu0 %v4855
    %5437 = vmatpush.bf16.msra.mxu0 %v4846
    %5438 = vmatpush.bf16.msra.mxu0 %v4837
    %5439 = vmatpush.bf16.msra.mxu0 %v4828
    %5440 = vmatmul.bf16.gmra.mxu0 %v3161
    %v5441 = vpop.f32.mrf.mxu0
    %v5442 = vadd.f32 %v5428, %v5441
    %v5443 = vpop.f32.mrf.mxu0
    %v5444 = vadd.f32 %v5430, %v5443
    %5445 = vdwg.mxu0
    %5446 = vmatpush.bf16.msra.mxu0 %v4963
    %5447 = vmatpush.bf16.msra.mxu0 %v4954
    %5448 = vmatpush.bf16.msra.mxu0 %v4945
    %5449 = vmatpush.bf16.msra.mxu0 %v4936
    %5450 = vmatpush.bf16.msra.mxu0 %v4927
    %5451 = vmatpush.bf16.msra.mxu0 %v4918
    %5452 = vmatpush.bf16.msra.mxu0 %v4909
    %5453 = vmatpush.bf16.msra.mxu0 %v4900
    %5454 = vmatmul.bf16.gmra.mxu0 %v3162
    %v5455 = vpop.f32.mrf.mxu0
    %v5456 = vadd.f32 %v5442, %v5455
    %v5457 = vpop.f32.mrf.mxu0
    %v5458 = vadd.f32 %v5444, %v5457
    %5459 = vdwg.mxu0
    %5460 = vmatpush.bf16.msra.mxu0 %v5035
    %5461 = vmatpush.bf16.msra.mxu0 %v5026
    %5462 = vmatpush.bf16.msra.mxu0 %v5017
    %5463 = vmatpush.bf16.msra.mxu0 %v5008
    %5464 = vmatpush.bf16.msra.mxu0 %v4999
    %5465 = vmatpush.bf16.msra.mxu0 %v4990
    %5466 = vmatpush.bf16.msra.mxu0 %v4981
    %5467 = vmatpush.bf16.msra.mxu0 %v4972
    %5468 = vmatmul.bf16.gmra.mxu0 %v3163
    %v5469 = vpop.f32.mrf.mxu0
    %v5470 = vadd.f32 %v5456, %v5469
    %v5471 = vpop.f32.mrf.mxu0
    %v5472 = vadd.f32 %v5458, %v5471
    %5473 = vdwg.mxu0
    %5474 = vmatpush.bf16.msra.mxu0 %v4748
    %5475 = vmatpush.bf16.msra.mxu0 %v4739
    %5476 = vmatpush.bf16.msra.mxu0 %v4730
    %5477 = vmatpush.bf16.msra.mxu0 %v4721
    %5478 = vmatpush.bf16.msra.mxu0 %v4712
    %5479 = vmatpush.bf16.msra.mxu0 %v4703
    %5480 = vmatpush.bf16.msra.mxu0 %v4694
    %5481 = vmatpush.bf16.msra.mxu0 %v4685
    %5482 = vmatmul.bf16.gmra.mxu0 %v3159
    %v5483 = vpop.f32.mrf.mxu0
    %v5484 = vadd.f32 0.0, %v5483
    %v5485 = vpop.f32.mrf.mxu0
    %v5486 = vadd.f32 0.0, %v5485
    %5487 = vdwg.mxu0
    %5488 = vmatpush.bf16.msra.mxu0 %v4820
    %5489 = vmatpush.bf16.msra.mxu0 %v4811
    %5490 = vmatpush.bf16.msra.mxu0 %v4802
    %5491 = vmatpush.bf16.msra.mxu0 %v4793
    %5492 = vmatpush.bf16.msra.mxu0 %v4784
    %5493 = vmatpush.bf16.msra.mxu0 %v4775
    %5494 = vmatpush.bf16.msra.mxu0 %v4766
    %5495 = vmatpush.bf16.msra.mxu0 %v4757
    %5496 = vmatmul.bf16.gmra.mxu0 %v3160
    %v5497 = vpop.f32.mrf.mxu0
    %v5498 = vadd.f32 %v5484, %v5497
    %v5499 = vpop.f32.mrf.mxu0
    %v5500 = vadd.f32 %v5486, %v5499
    %5501 = vdwg.mxu0
    %5502 = vmatpush.bf16.msra.mxu0 %v4892
    %5503 = vmatpush.bf16.msra.mxu0 %v4883
    %5504 = vmatpush.bf16.msra.mxu0 %v4874
    %5505 = vmatpush.bf16.msra.mxu0 %v4865
    %5506 = vmatpush.bf16.msra.mxu0 %v4856
    %5507 = vmatpush.bf16.msra.mxu0 %v4847
    %5508 = vmatpush.bf16.msra.mxu0 %v4838
    %5509 = vmatpush.bf16.msra.mxu0 %v4829
    %5510 = vmatmul.bf16.gmra.mxu0 %v3161
    %v5511 = vpop.f32.mrf.mxu0
    %v5512 = vadd.f32 %v5498, %v5511
    %v5513 = vpop.f32.mrf.mxu0
    %v5514 = vadd.f32 %v5500, %v5513
    %5515 = vdwg.mxu0
    %5516 = vmatpush.bf16.msra.mxu0 %v4964
    %5517 = vmatpush.bf16.msra.mxu0 %v4955
    %5518 = vmatpush.bf16.msra.mxu0 %v4946
    %5519 = vmatpush.bf16.msra.mxu0 %v4937
    %5520 = vmatpush.bf16.msra.mxu0 %v4928
    %5521 = vmatpush.bf16.msra.mxu0 %v4919
    %5522 = vmatpush.bf16.msra.mxu0 %v4910
    %5523 = vmatpush.bf16.msra.mxu0 %v4901
    %5524 = vmatmul.bf16.gmra.mxu0 %v3162
    %v5525 = vpop.f32.mrf.mxu0
    %v5526 = vadd.f32 %v5512, %v5525
    %v5527 = vpop.f32.mrf.mxu0
    %v5528 = vadd.f32 %v5514, %v5527
    %5529 = vdwg.mxu0
    %5530 = vmatpush.bf16.msra.mxu0 %v5036
    %5531 = vmatpush.bf16.msra.mxu0 %v5027
    %5532 = vmatpush.bf16.msra.mxu0 %v5018
    %5533 = vmatpush.bf16.msra.mxu0 %v5009
    %5534 = vmatpush.bf16.msra.mxu0 %v5000
    %5535 = vmatpush.bf16.msra.mxu0 %v4991
    %5536 = vmatpush.bf16.msra.mxu0 %v4982
    %5537 = vmatpush.bf16.msra.mxu0 %v4973
    %5538 = vmatmul.bf16.gmra.mxu0 %v3163
    %v5539 = vpop.f32.mrf.mxu0
    %v5540 = vadd.f32 %v5526, %v5539
    %v5541 = vpop.f32.mrf.mxu0
    %v5542 = vadd.f32 %v5528, %v5541
    %5543 = vdwg.mxu0
    %5544 = vmatpush.bf16.msra.mxu0 %v4749
    %5545 = vmatpush.bf16.msra.mxu0 %v4740
    %5546 = vmatpush.bf16.msra.mxu0 %v4731
    %5547 = vmatpush.bf16.msra.mxu0 %v4722
    %5548 = vmatpush.bf16.msra.mxu0 %v4713
    %5549 = vmatpush.bf16.msra.mxu0 %v4704
    %5550 = vmatpush.bf16.msra.mxu0 %v4695
    %5551 = vmatpush.bf16.msra.mxu0 %v4686
    %5552 = vmatmul.bf16.gmra.mxu0 %v3159
    %v5553 = vpop.f32.mrf.mxu0
    %v5554 = vadd.f32 0.0, %v5553
    %v5555 = vpop.f32.mrf.mxu0
    %v5556 = vadd.f32 0.0, %v5555
    %5557 = vdwg.mxu0
    %5558 = vmatpush.bf16.msra.mxu0 %v4821
    %5559 = vmatpush.bf16.msra.mxu0 %v4812
    %5560 = vmatpush.bf16.msra.mxu0 %v4803
    %5561 = vmatpush.bf16.msra.mxu0 %v4794
    %5562 = vmatpush.bf16.msra.mxu0 %v4785
    %5563 = vmatpush.bf16.msra.mxu0 %v4776
    %5564 = vmatpush.bf16.msra.mxu0 %v4767
    %5565 = vmatpush.bf16.msra.mxu0 %v4758
    %5566 = vmatmul.bf16.gmra.mxu0 %v3160
    %v5567 = vpop.f32.mrf.mxu0
    %v5568 = vadd.f32 %v5554, %v5567
    %v5569 = vpop.f32.mrf.mxu0
    %v5570 = vadd.f32 %v5556, %v5569
    %5571 = vdwg.mxu0
    %5572 = vmatpush.bf16.msra.mxu0 %v4893
    %5573 = vmatpush.bf16.msra.mxu0 %v4884
    %5574 = vmatpush.bf16.msra.mxu0 %v4875
    %5575 = vmatpush.bf16.msra.mxu0 %v4866
    %5576 = vmatpush.bf16.msra.mxu0 %v4857
    %5577 = vmatpush.bf16.msra.mxu0 %v4848
    %5578 = vmatpush.bf16.msra.mxu0 %v4839
    %5579 = vmatpush.bf16.msra.mxu0 %v4830
    %5580 = vmatmul.bf16.gmra.mxu0 %v3161
    %v5581 = vpop.f32.mrf.mxu0
    %v5582 = vadd.f32 %v5568, %v5581
    %v5583 = vpop.f32.mrf.mxu0
    %v5584 = vadd.f32 %v5570, %v5583
    %5585 = vdwg.mxu0
    %5586 = vmatpush.bf16.msra.mxu0 %v4965
    %5587 = vmatpush.bf16.msra.mxu0 %v4956
    %5588 = vmatpush.bf16.msra.mxu0 %v4947
    %5589 = vmatpush.bf16.msra.mxu0 %v4938
    %5590 = vmatpush.bf16.msra.mxu0 %v4929
    %5591 = vmatpush.bf16.msra.mxu0 %v4920
    %5592 = vmatpush.bf16.msra.mxu0 %v4911
    %5593 = vmatpush.bf16.msra.mxu0 %v4902
    %5594 = vmatmul.bf16.gmra.mxu0 %v3162
    %v5595 = vpop.f32.mrf.mxu0
    %v5596 = vadd.f32 %v5582, %v5595
    %v5597 = vpop.f32.mrf.mxu0
    %v5598 = vadd.f32 %v5584, %v5597
    %5599 = vdwg.mxu0
    %5600 = vmatpush.bf16.msra.mxu0 %v5037
    %5601 = vmatpush.bf16.msra.mxu0 %v5028
    %5602 = vmatpush.bf16.msra.mxu0 %v5019
    %5603 = vmatpush.bf16.msra.mxu0 %v5010
    %5604 = vmatpush.bf16.msra.mxu0 %v5001
    %5605 = vmatpush.bf16.msra.mxu0 %v4992
    %5606 = vmatpush.bf16.msra.mxu0 %v4983
    %5607 = vmatpush.bf16.msra.mxu0 %v4974
    %5608 = vmatmul.bf16.gmra.mxu0 %v3163
    %v5609 = vpop.f32.mrf.mxu0
    %v5610 = vadd.f32 %v5596, %v5609
    %v5611 = vpop.f32.mrf.mxu0
    %v5612 = vadd.f32 %v5598, %v5611
    %5613 = vdwg.mxu0
    %5614 = vmatpush.bf16.msra.mxu0 %v4750
    %5615 = vmatpush.bf16.msra.mxu0 %v4741
    %5616 = vmatpush.bf16.msra.mxu0 %v4732
    %5617 = vmatpush.bf16.msra.mxu0 %v4723
    %5618 = vmatpush.bf16.msra.mxu0 %v4714
    %5619 = vmatpush.bf16.msra.mxu0 %v4705
    %5620 = vmatpush.bf16.msra.mxu0 %v4696
    %5621 = vmatpush.bf16.msra.mxu0 %v4687
    %5622 = vmatmul.bf16.gmra.mxu0 %v3159
    %v5623 = vpop.f32.mrf.mxu0
    %v5624 = vadd.f32 0.0, %v5623
    %v5625 = vpop.f32.mrf.mxu0
    %v5626 = vadd.f32 0.0, %v5625
    %5627 = vdwg.mxu0
    %5628 = vmatpush.bf16.msra.mxu0 %v4822
    %5629 = vmatpush.bf16.msra.mxu0 %v4813
    %5630 = vmatpush.bf16.msra.mxu0 %v4804
    %5631 = vmatpush.bf16.msra.mxu0 %v4795
    %5632 = vmatpush.bf16.msra.mxu0 %v4786
    %5633 = vmatpush.bf16.msra.mxu0 %v4777
    %5634 = vmatpush.bf16.msra.mxu0 %v4768
    %5635 = vmatpush.bf16.msra.mxu0 %v4759
    %5636 = vmatmul.bf16.gmra.mxu0 %v3160
    %v5637 = vpop.f32.mrf.mxu0
    %v5638 = vadd.f32 %v5624, %v5637
    %v5639 = vpop.f32.mrf.mxu0
    %v5640 = vadd.f32 %v5626, %v5639
    %5641 = vdwg.mxu0
    %5642 = vmatpush.bf16.msra.mxu0 %v4894
    %5643 = vmatpush.bf16.msra.mxu0 %v4885
    %5644 = vmatpush.bf16.msra.mxu0 %v4876
    %5645 = vmatpush.bf16.msra.mxu0 %v4867
    %5646 = vmatpush.bf16.msra.mxu0 %v4858
    %5647 = vmatpush.bf16.msra.mxu0 %v4849
    %5648 = vmatpush.bf16.msra.mxu0 %v4840
    %5649 = vmatpush.bf16.msra.mxu0 %v4831
    %5650 = vmatmul.bf16.gmra.mxu0 %v3161
    %v5651 = vpop.f32.mrf.mxu0
    %v5652 = vadd.f32 %v5638, %v5651
    %v5653 = vpop.f32.mrf.mxu0
    %v5654 = vadd.f32 %v5640, %v5653
    %5655 = vdwg.mxu0
    %5656 = vmatpush.bf16.msra.mxu0 %v4966
    %5657 = vmatpush.bf16.msra.mxu0 %v4957
    %5658 = vmatpush.bf16.msra.mxu0 %v4948
    %5659 = vmatpush.bf16.msra.mxu0 %v4939
    %5660 = vmatpush.bf16.msra.mxu0 %v4930
    %5661 = vmatpush.bf16.msra.mxu0 %v4921
    %5662 = vmatpush.bf16.msra.mxu0 %v4912
    %5663 = vmatpush.bf16.msra.mxu0 %v4903
    %5664 = vmatmul.bf16.gmra.mxu0 %v3162
    %v5665 = vpop.f32.mrf.mxu0
    %v5666 = vadd.f32 %v5652, %v5665
    %v5667 = vpop.f32.mrf.mxu0
    %v5668 = vadd.f32 %v5654, %v5667
    %5669 = vdwg.mxu0
    %5670 = vmatpush.bf16.msra.mxu0 %v5038
    %5671 = vmatpush.bf16.msra.mxu0 %v5029
    %5672 = vmatpush.bf16.msra.mxu0 %v5020
    %5673 = vmatpush.bf16.msra.mxu0 %v5011
    %5674 = vmatpush.bf16.msra.mxu0 %v5002
    %5675 = vmatpush.bf16.msra.mxu0 %v4993
    %5676 = vmatpush.bf16.msra.mxu0 %v4984
    %5677 = vmatpush.bf16.msra.mxu0 %v4975
    %5678 = vmatmul.bf16.gmra.mxu0 %v3163
    %v5679 = vpop.f32.mrf.mxu0
    %v5680 = vadd.f32 %v5666, %v5679
    %v5681 = vpop.f32.mrf.mxu0
    %v5682 = vadd.f32 %v5668, %v5681
    %5683 = vdwg.mxu0
    %5684 = vmatpush.bf16.msra.mxu0 %v4751
    %5685 = vmatpush.bf16.msra.mxu0 %v4742
    %5686 = vmatpush.bf16.msra.mxu0 %v4733
    %5687 = vmatpush.bf16.msra.mxu0 %v4724
    %5688 = vmatpush.bf16.msra.mxu0 %v4715
    %5689 = vmatpush.bf16.msra.mxu0 %v4706
    %5690 = vmatpush.bf16.msra.mxu0 %v4697
    %5691 = vmatpush.bf16.msra.mxu0 %v4688
    %5692 = vmatmul.bf16.gmra.mxu0 %v3159
    %v5693 = vpop.f32.mrf.mxu0
    %v5694 = vadd.f32 0.0, %v5693
    %v5695 = vpop.f32.mrf.mxu0
    %v5696 = vadd.f32 0.0, %v5695
    %5697 = vdwg.mxu0
    %5698 = vmatpush.bf16.msra.mxu0 %v4823
    %5699 = vmatpush.bf16.msra.mxu0 %v4814
    %5700 = vmatpush.bf16.msra.mxu0 %v4805
    %5701 = vmatpush.bf16.msra.mxu0 %v4796
    %5702 = vmatpush.bf16.msra.mxu0 %v4787
    %5703 = vmatpush.bf16.msra.mxu0 %v4778
    %5704 = vmatpush.bf16.msra.mxu0 %v4769
    %5705 = vmatpush.bf16.msra.mxu0 %v4760
    %5706 = vmatmul.bf16.gmra.mxu0 %v3160
    %v5707 = vpop.f32.mrf.mxu0
    %v5708 = vadd.f32 %v5694, %v5707
    %v5709 = vpop.f32.mrf.mxu0
    %v5710 = vadd.f32 %v5696, %v5709
    %5711 = vdwg.mxu0
    %5712 = vmatpush.bf16.msra.mxu0 %v4895
    %5713 = vmatpush.bf16.msra.mxu0 %v4886
    %5714 = vmatpush.bf16.msra.mxu0 %v4877
    %5715 = vmatpush.bf16.msra.mxu0 %v4868
    %5716 = vmatpush.bf16.msra.mxu0 %v4859
    %5717 = vmatpush.bf16.msra.mxu0 %v4850
    %5718 = vmatpush.bf16.msra.mxu0 %v4841
    %5719 = vmatpush.bf16.msra.mxu0 %v4832
    %5720 = vmatmul.bf16.gmra.mxu0 %v3161
    %v5721 = vpop.f32.mrf.mxu0
    %v5722 = vadd.f32 %v5708, %v5721
    %v5723 = vpop.f32.mrf.mxu0
    %v5724 = vadd.f32 %v5710, %v5723
    %5725 = vdwg.mxu0
    %5726 = vmatpush.bf16.msra.mxu0 %v4967
    %5727 = vmatpush.bf16.msra.mxu0 %v4958
    %5728 = vmatpush.bf16.msra.mxu0 %v4949
    %5729 = vmatpush.bf16.msra.mxu0 %v4940
    %5730 = vmatpush.bf16.msra.mxu0 %v4931
    %5731 = vmatpush.bf16.msra.mxu0 %v4922
    %5732 = vmatpush.bf16.msra.mxu0 %v4913
    %5733 = vmatpush.bf16.msra.mxu0 %v4904
    %5734 = vmatmul.bf16.gmra.mxu0 %v3162
    %v5735 = vpop.f32.mrf.mxu0
    %v5736 = vadd.f32 %v5722, %v5735
    %v5737 = vpop.f32.mrf.mxu0
    %v5738 = vadd.f32 %v5724, %v5737
    %5739 = vdwg.mxu0
    %5740 = vmatpush.bf16.msra.mxu0 %v5039
    %5741 = vmatpush.bf16.msra.mxu0 %v5030
    %5742 = vmatpush.bf16.msra.mxu0 %v5021
    %5743 = vmatpush.bf16.msra.mxu0 %v5012
    %5744 = vmatpush.bf16.msra.mxu0 %v5003
    %5745 = vmatpush.bf16.msra.mxu0 %v4994
    %5746 = vmatpush.bf16.msra.mxu0 %v4985
    %5747 = vmatpush.bf16.msra.mxu0 %v4976
    %5748 = vmatmul.bf16.gmra.mxu0 %v3163
    %v5749 = vpop.f32.mrf.mxu0
    %v5750 = vadd.f32 %v5736, %v5749
    %v5751 = vpop.f32.mrf.mxu0
    %v5752 = vadd.f32 %v5738, %v5751
    %5753 = vdwg.mxu0
    %5754 = vmatpush.bf16.msra.mxu0 %v4752
    %5755 = vmatpush.bf16.msra.mxu0 %v4743
    %5756 = vmatpush.bf16.msra.mxu0 %v4734
    %5757 = vmatpush.bf16.msra.mxu0 %v4725
    %5758 = vmatpush.bf16.msra.mxu0 %v4716
    %5759 = vmatpush.bf16.msra.mxu0 %v4707
    %5760 = vmatpush.bf16.msra.mxu0 %v4698
    %5761 = vmatpush.bf16.msra.mxu0 %v4689
    %5762 = vmatmul.bf16.gmra.mxu0 %v3159
    %v5763 = vpop.f32.mrf.mxu0
    %v5764 = vadd.f32 0.0, %v5763
    %v5765 = vpop.f32.mrf.mxu0
    %v5766 = vadd.f32 0.0, %v5765
    %5767 = vdwg.mxu0
    %5768 = vmatpush.bf16.msra.mxu0 %v4824
    %5769 = vmatpush.bf16.msra.mxu0 %v4815
    %5770 = vmatpush.bf16.msra.mxu0 %v4806
    %5771 = vmatpush.bf16.msra.mxu0 %v4797
    %5772 = vmatpush.bf16.msra.mxu0 %v4788
    %5773 = vmatpush.bf16.msra.mxu0 %v4779
    %5774 = vmatpush.bf16.msra.mxu0 %v4770
    %5775 = vmatpush.bf16.msra.mxu0 %v4761
    %5776 = vmatmul.bf16.gmra.mxu0 %v3160
    %v5777 = vpop.f32.mrf.mxu0
    %v5778 = vadd.f32 %v5764, %v5777
    %v5779 = vpop.f32.mrf.mxu0
    %v5780 = vadd.f32 %v5766, %v5779
    %5781 = vdwg.mxu0
    %5782 = vmatpush.bf16.msra.mxu0 %v4896
    %5783 = vmatpush.bf16.msra.mxu0 %v4887
    %5784 = vmatpush.bf16.msra.mxu0 %v4878
    %5785 = vmatpush.bf16.msra.mxu0 %v4869
    %5786 = vmatpush.bf16.msra.mxu0 %v4860
    %5787 = vmatpush.bf16.msra.mxu0 %v4851
    %5788 = vmatpush.bf16.msra.mxu0 %v4842
    %5789 = vmatpush.bf16.msra.mxu0 %v4833
    %5790 = vmatmul.bf16.gmra.mxu0 %v3161
    %v5791 = vpop.f32.mrf.mxu0
    %v5792 = vadd.f32 %v5778, %v5791
    %v5793 = vpop.f32.mrf.mxu0
    %v5794 = vadd.f32 %v5780, %v5793
    %5795 = vdwg.mxu0
    %5796 = vmatpush.bf16.msra.mxu0 %v4968
    %5797 = vmatpush.bf16.msra.mxu0 %v4959
    %5798 = vmatpush.bf16.msra.mxu0 %v4950
    %5799 = vmatpush.bf16.msra.mxu0 %v4941
    %5800 = vmatpush.bf16.msra.mxu0 %v4932
    %5801 = vmatpush.bf16.msra.mxu0 %v4923
    %5802 = vmatpush.bf16.msra.mxu0 %v4914
    %5803 = vmatpush.bf16.msra.mxu0 %v4905
    %5804 = vmatmul.bf16.gmra.mxu0 %v3162
    %v5805 = vpop.f32.mrf.mxu0
    %v5806 = vadd.f32 %v5792, %v5805
    %v5807 = vpop.f32.mrf.mxu0
    %v5808 = vadd.f32 %v5794, %v5807
    %5809 = vdwg.mxu0
    %5810 = vmatpush.bf16.msra.mxu0 %v5040
    %5811 = vmatpush.bf16.msra.mxu0 %v5031
    %5812 = vmatpush.bf16.msra.mxu0 %v5022
    %5813 = vmatpush.bf16.msra.mxu0 %v5013
    %5814 = vmatpush.bf16.msra.mxu0 %v5004
    %5815 = vmatpush.bf16.msra.mxu0 %v4995
    %5816 = vmatpush.bf16.msra.mxu0 %v4986
    %5817 = vmatpush.bf16.msra.mxu0 %v4977
    %5818 = vmatmul.bf16.gmra.mxu0 %v3163
    %v5819 = vpop.f32.mrf.mxu0
    %v5820 = vadd.f32 %v5806, %v5819
    %v5821 = vpop.f32.mrf.mxu0
    %v5822 = vadd.f32 %v5808, %v5821
    %5823 = vdwg.mxu0
    %5824 = vmatpush.bf16.msra.mxu0 %v4753
    %5825 = vmatpush.bf16.msra.mxu0 %v4744
    %5826 = vmatpush.bf16.msra.mxu0 %v4735
    %5827 = vmatpush.bf16.msra.mxu0 %v4726
    %5828 = vmatpush.bf16.msra.mxu0 %v4717
    %5829 = vmatpush.bf16.msra.mxu0 %v4708
    %5830 = vmatpush.bf16.msra.mxu0 %v4699
    %5831 = vmatpush.bf16.msra.mxu0 %v4690
    %5832 = vmatmul.bf16.gmra.mxu0 %v3159
    %v5833 = vpop.f32.mrf.mxu0
    %v5834 = vadd.f32 0.0, %v5833
    %v5835 = vpop.f32.mrf.mxu0
    %v5836 = vadd.f32 0.0, %v5835
    %5837 = vdwg.mxu0
    %5838 = vmatpush.bf16.msra.mxu0 %v4825
    %5839 = vmatpush.bf16.msra.mxu0 %v4816
    %5840 = vmatpush.bf16.msra.mxu0 %v4807
    %5841 = vmatpush.bf16.msra.mxu0 %v4798
    %5842 = vmatpush.bf16.msra.mxu0 %v4789
    %5843 = vmatpush.bf16.msra.mxu0 %v4780
    %5844 = vmatpush.bf16.msra.mxu0 %v4771
    %5845 = vmatpush.bf16.msra.mxu0 %v4762
    %5846 = vmatmul.bf16.gmra.mxu0 %v3160
    %v5847 = vpop.f32.mrf.mxu0
    %v5848 = vadd.f32 %v5834, %v5847
    %v5849 = vpop.f32.mrf.mxu0
    %v5850 = vadd.f32 %v5836, %v5849
    %5851 = vdwg.mxu0
    %5852 = vmatpush.bf16.msra.mxu0 %v4897
    %5853 = vmatpush.bf16.msra.mxu0 %v4888
    %5854 = vmatpush.bf16.msra.mxu0 %v4879
    %5855 = vmatpush.bf16.msra.mxu0 %v4870
    %5856 = vmatpush.bf16.msra.mxu0 %v4861
    %5857 = vmatpush.bf16.msra.mxu0 %v4852
    %5858 = vmatpush.bf16.msra.mxu0 %v4843
    %5859 = vmatpush.bf16.msra.mxu0 %v4834
    %5860 = vmatmul.bf16.gmra.mxu0 %v3161
    %v5861 = vpop.f32.mrf.mxu0
    %v5862 = vadd.f32 %v5848, %v5861
    %v5863 = vpop.f32.mrf.mxu0
    %v5864 = vadd.f32 %v5850, %v5863
    %5865 = vdwg.mxu0
    %5866 = vmatpush.bf16.msra.mxu0 %v4969
    %5867 = vmatpush.bf16.msra.mxu0 %v4960
    %5868 = vmatpush.bf16.msra.mxu0 %v4951
    %5869 = vmatpush.bf16.msra.mxu0 %v4942
    %5870 = vmatpush.bf16.msra.mxu0 %v4933
    %5871 = vmatpush.bf16.msra.mxu0 %v4924
    %5872 = vmatpush.bf16.msra.mxu0 %v4915
    %5873 = vmatpush.bf16.msra.mxu0 %v4906
    %5874 = vmatmul.bf16.gmra.mxu0 %v3162
    %v5875 = vpop.f32.mrf.mxu0
    %v5876 = vadd.f32 %v5862, %v5875
    %v5877 = vpop.f32.mrf.mxu0
    %v5878 = vadd.f32 %v5864, %v5877
    %5879 = vdwg.mxu0
    %5880 = vmatpush.bf16.msra.mxu0 %v5041
    %5881 = vmatpush.bf16.msra.mxu0 %v5032
    %5882 = vmatpush.bf16.msra.mxu0 %v5023
    %5883 = vmatpush.bf16.msra.mxu0 %v5014
    %5884 = vmatpush.bf16.msra.mxu0 %v5005
    %5885 = vmatpush.bf16.msra.mxu0 %v4996
    %5886 = vmatpush.bf16.msra.mxu0 %v4987
    %5887 = vmatpush.bf16.msra.mxu0 %v4978
    %5888 = vmatmul.bf16.gmra.mxu0 %v3163
    %v5889 = vpop.f32.mrf.mxu0
    %v5890 = vadd.f32 %v5876, %v5889
    %v5891 = vpop.f32.mrf.mxu0
    %v5892 = vadd.f32 %v5878, %v5891
    %5893 = vdwg.mxu0
    %5894 = vmatpush.bf16.msra.mxu0 %v4754
    %5895 = vmatpush.bf16.msra.mxu0 %v4745
    %5896 = vmatpush.bf16.msra.mxu0 %v4736
    %5897 = vmatpush.bf16.msra.mxu0 %v4727
    %5898 = vmatpush.bf16.msra.mxu0 %v4718
    %5899 = vmatpush.bf16.msra.mxu0 %v4709
    %5900 = vmatpush.bf16.msra.mxu0 %v4700
    %5901 = vmatpush.bf16.msra.mxu0 %v4691
    %5902 = vmatmul.bf16.gmra.mxu0 %v3159
    %v5903 = vpop.f32.mrf.mxu0
    %v5904 = vadd.f32 0.0, %v5903
    %v5905 = vpop.f32.mrf.mxu0
    %v5906 = vadd.f32 0.0, %v5905
    %5907 = vdwg.mxu0
    %5908 = vmatpush.bf16.msra.mxu0 %v4826
    %5909 = vmatpush.bf16.msra.mxu0 %v4817
    %5910 = vmatpush.bf16.msra.mxu0 %v4808
    %5911 = vmatpush.bf16.msra.mxu0 %v4799
    %5912 = vmatpush.bf16.msra.mxu0 %v4790
    %5913 = vmatpush.bf16.msra.mxu0 %v4781
    %5914 = vmatpush.bf16.msra.mxu0 %v4772
    %5915 = vmatpush.bf16.msra.mxu0 %v4763
    %5916 = vmatmul.bf16.gmra.mxu0 %v3160
    %v5917 = vpop.f32.mrf.mxu0
    %v5918 = vadd.f32 %v5904, %v5917
    %v5919 = vpop.f32.mrf.mxu0
    %v5920 = vadd.f32 %v5906, %v5919
    %5921 = vdwg.mxu0
    %5922 = vmatpush.bf16.msra.mxu0 %v4898
    %5923 = vmatpush.bf16.msra.mxu0 %v4889
    %5924 = vmatpush.bf16.msra.mxu0 %v4880
    %5925 = vmatpush.bf16.msra.mxu0 %v4871
    %5926 = vmatpush.bf16.msra.mxu0 %v4862
    %5927 = vmatpush.bf16.msra.mxu0 %v4853
    %5928 = vmatpush.bf16.msra.mxu0 %v4844
    %5929 = vmatpush.bf16.msra.mxu0 %v4835
    %5930 = vmatmul.bf16.gmra.mxu0 %v3161
    %v5931 = vpop.f32.mrf.mxu0
    %v5932 = vadd.f32 %v5918, %v5931
    %v5933 = vpop.f32.mrf.mxu0
    %v5934 = vadd.f32 %v5920, %v5933
    %5935 = vdwg.mxu0
    %5936 = vmatpush.bf16.msra.mxu0 %v4970
    %5937 = vmatpush.bf16.msra.mxu0 %v4961
    %5938 = vmatpush.bf16.msra.mxu0 %v4952
    %5939 = vmatpush.bf16.msra.mxu0 %v4943
    %5940 = vmatpush.bf16.msra.mxu0 %v4934
    %5941 = vmatpush.bf16.msra.mxu0 %v4925
    %5942 = vmatpush.bf16.msra.mxu0 %v4916
    %5943 = vmatpush.bf16.msra.mxu0 %v4907
    %5944 = vmatmul.bf16.gmra.mxu0 %v3162
    %v5945 = vpop.f32.mrf.mxu0
    %v5946 = vadd.f32 %v5932, %v5945
    %v5947 = vpop.f32.mrf.mxu0
    %v5948 = vadd.f32 %v5934, %v5947
    %5949 = vdwg.mxu0
    %5950 = vmatpush.bf16.msra.mxu0 %v5042
    %5951 = vmatpush.bf16.msra.mxu0 %v5033
    %5952 = vmatpush.bf16.msra.mxu0 %v5024
    %5953 = vmatpush.bf16.msra.mxu0 %v5015
    %5954 = vmatpush.bf16.msra.mxu0 %v5006
    %5955 = vmatpush.bf16.msra.mxu0 %v4997
    %5956 = vmatpush.bf16.msra.mxu0 %v4988
    %5957 = vmatpush.bf16.msra.mxu0 %v4979
    %5958 = vmatmul.bf16.gmra.mxu0 %v3163
    %v5959 = vpop.f32.mrf.mxu0
    %v5960 = vadd.f32 %v5946, %v5959
    %v5961 = vpop.f32.mrf.mxu0
    %v5962 = vadd.f32 %v5948, %v5961
    %5963 = vdwg.mxu0
    %5964 = vmatpush.bf16.msra.mxu0 %v4755
    %5965 = vmatpush.bf16.msra.mxu0 %v4746
    %5966 = vmatpush.bf16.msra.mxu0 %v4737
    %5967 = vmatpush.bf16.msra.mxu0 %v4728
    %5968 = vmatpush.bf16.msra.mxu0 %v4719
    %5969 = vmatpush.bf16.msra.mxu0 %v4710
    %5970 = vmatpush.bf16.msra.mxu0 %v4701
    %5971 = vmatpush.bf16.msra.mxu0 %v4692
    %5972 = vmatmul.bf16.gmra.mxu0 %v3159
    %v5973 = vpop.f32.mrf.mxu0
    %v5974 = vadd.f32 0.0, %v5973
    %v5975 = vpop.f32.mrf.mxu0
    %v5976 = vadd.f32 0.0, %v5975
    %5977 = vdwg.mxu0
    %5978 = vmatpush.bf16.msra.mxu0 %v4827
    %5979 = vmatpush.bf16.msra.mxu0 %v4818
    %5980 = vmatpush.bf16.msra.mxu0 %v4809
    %5981 = vmatpush.bf16.msra.mxu0 %v4800
    %5982 = vmatpush.bf16.msra.mxu0 %v4791
    %5983 = vmatpush.bf16.msra.mxu0 %v4782
    %5984 = vmatpush.bf16.msra.mxu0 %v4773
    %5985 = vmatpush.bf16.msra.mxu0 %v4764
    %5986 = vmatmul.bf16.gmra.mxu0 %v3160
    %v5987 = vpop.f32.mrf.mxu0
    %v5988 = vadd.f32 %v5974, %v5987
    %v5989 = vpop.f32.mrf.mxu0
    %v5990 = vadd.f32 %v5976, %v5989
    %5991 = vdwg.mxu0
    %5992 = vmatpush.bf16.msra.mxu0 %v4899
    %5993 = vmatpush.bf16.msra.mxu0 %v4890
    %5994 = vmatpush.bf16.msra.mxu0 %v4881
    %5995 = vmatpush.bf16.msra.mxu0 %v4872
    %5996 = vmatpush.bf16.msra.mxu0 %v4863
    %5997 = vmatpush.bf16.msra.mxu0 %v4854
    %5998 = vmatpush.bf16.msra.mxu0 %v4845
    %5999 = vmatpush.bf16.msra.mxu0 %v4836
    %6000 = vmatmul.bf16.gmra.mxu0 %v3161
    %v6001 = vpop.f32.mrf.mxu0
    %v6002 = vadd.f32 %v5988, %v6001
    %v6003 = vpop.f32.mrf.mxu0
    %v6004 = vadd.f32 %v5990, %v6003
    %6005 = vdwg.mxu0
    %6006 = vmatpush.bf16.msra.mxu0 %v4971
    %6007 = vmatpush.bf16.msra.mxu0 %v4962
    %6008 = vmatpush.bf16.msra.mxu0 %v4953
    %6009 = vmatpush.bf16.msra.mxu0 %v4944
    %6010 = vmatpush.bf16.msra.mxu0 %v4935
    %6011 = vmatpush.bf16.msra.mxu0 %v4926
    %6012 = vmatpush.bf16.msra.mxu0 %v4917
    %6013 = vmatpush.bf16.msra.mxu0 %v4908
    %6014 = vmatmul.bf16.gmra.mxu0 %v3162
    %v6015 = vpop.f32.mrf.mxu0
    %v6016 = vadd.f32 %v6002, %v6015
    %v6017 = vpop.f32.mrf.mxu0
    %v6018 = vadd.f32 %v6004, %v6017
    %6019 = vdwg.mxu0
    %6020 = vmatpush.bf16.msra.mxu0 %v5043
    %6021 = vmatpush.bf16.msra.mxu0 %v5034
    %6022 = vmatpush.bf16.msra.mxu0 %v5025
    %6023 = vmatpush.bf16.msra.mxu0 %v5016
    %6024 = vmatpush.bf16.msra.mxu0 %v5007
    %6025 = vmatpush.bf16.msra.mxu0 %v4998
    %6026 = vmatpush.bf16.msra.mxu0 %v4989
    %6027 = vmatpush.bf16.msra.mxu0 %v4980
    %6028 = vmatmul.bf16.gmra.mxu0 %v3163
    %v6029 = vpop.f32.mrf.mxu0
    %v6030 = vadd.f32 %v6016, %v6029
    %v6031 = vpop.f32.mrf.mxu0
    %v6032 = vadd.f32 %v6018, %v6031
    %6033 = vdwg.mxu0
    %v6034 = vadd.f32 %v5470, %v5540
    %v6035 = vadd.f32 %v5472, %v5542
    %v6036 = vadd.f32 %v6034, %v5610
    %v6037 = vadd.f32 %v6035, %v5612
    %v6038 = vadd.f32 %v6036, %v5680
    %v6039 = vadd.f32 %v6037, %v5682
    %v6040 = vadd.f32 %v6038, %v5750
    %v6041 = vadd.f32 %v6039, %v5752
    %v6042 = vadd.f32 %v6040, %v5820
    %v6043 = vadd.f32 %v6041, %v5822
    %v6044 = vadd.f32 %v6042, %v5890
    %v6045 = vadd.f32 %v6043, %v5892
    %v6046 = vadd.f32 %v6044, %v5960
    %v6047 = vadd.f32 %v6045, %v5962
    %v6048 = vadd.f32 %v6046, %v6030
    %v6049 = vadd.f32 %v6047, %v6032
    %v6050 = vlaneseq
    %v6051 = vshrl.u32 %v6050, 7
    %v6052 = vld [vmem:[%s9] sm:$0x1]
    %v6053 = vperm.slane %v6052, 0
    %vm6054 = vcmp.eq.s32.totalorder %v6053, %v6051
    %v6055 = vsel %vm6054, 1, 0
    %v6056 = vcvt.s32.f32 %v6055
    %v6057 = vpack.c.bf16 %v6056, %v6056
    %v6058 = vpack.c.bf16 %v6049, %v6048
    %v6060 = vsel %vm363, %v6057, 0
    %6062 = vmatpush.bf16.msra.mxu0 0
    %6063 = vmatpush.bf16.msra.mxu0 0
    %6064 = vmatpush.bf16.msra.mxu0 0
    %6065 = vmatpush.bf16.msra.mxu0 0
    %6066 = vmatpush.bf16.msra.mxu0 0
    %6067 = vmatpush.bf16.msra.mxu0 0
    %6068 = vmatpush.bf16.msra.mxu0 0
    %6069 = vmatpush.bf16.msra.mxu0 %v6058
    %6070 = vmatmul.bf16.gmra.mxu0 %v6060
    %v6071 = vpop.f32.mrf.mxu0
    %v6072 = vadd.f32 0.0, %v6071
    %v6073 = vpop.f32.mrf.mxu0
    %6074 = vdwg.mxu0
    %6075 = vst [vmem:[%s59] sm:$0xff] %v6072
    %v6076 = vadd.s32 %v6051, 8
    %v6077 = vld [vmem:[%s11] sm:$0xff]
    %v6078 = vld [vmem:[%s11 + $0x8] sm:$0xff]
    %v6079 = vperm.slane %v6077, 0
    %vm6080 = vcmp.eq.s32.totalorder %v6079, %v6051
    %vm6081 = vcmp.eq.s32.totalorder %v6079, %v6076
    %v6082 = vsel %vm6080, 1, 0
    %v6083 = vsel %vm6081, 1, 0
    %v6084 = vcvt.s32.f32 %v6082
    %v6085 = vcvt.s32.f32 %v6083
    %v6086 = vpack.c.bf16 %v6085, %v6084
    %v6087 = vpack.c.bf16 %v5472, %v5470
    %v6088 = vperm.slane %v6077, 1
    %vm6089 = vcmp.eq.s32.totalorder %v6088, %v6051
    %vm6090 = vcmp.eq.s32.totalorder %v6088, %v6076
    %v6091 = vsel %vm6089, 1, 0
    %v6092 = vsel %vm6090, 1, 0
    %v6093 = vcvt.s32.f32 %v6091
    %v6094 = vcvt.s32.f32 %v6092
    %v6095 = vpack.c.bf16 %v6094, %v6093
    %v6096 = vpack.c.bf16 %v5542, %v5540
    %v6098 = vsel %vm363, %v6095, 0
    %6100 = vmatpush.bf16.msra.mxu0 0
    %6101 = vmatpush.bf16.msra.mxu0 0
    %6102 = vmatpush.bf16.msra.mxu0 0
    %6103 = vmatpush.bf16.msra.mxu0 0
    %6104 = vmatpush.bf16.msra.mxu0 0
    %6105 = vmatpush.bf16.msra.mxu0 0
    %6106 = vmatpush.bf16.msra.mxu0 0
    %6107 = vmatpush.bf16.msra.mxu0 %v6096
    %6108 = vmatmul.bf16.gmra.mxu0 %v6098
    %v6109 = vpop.f32.mrf.mxu0
    %v6110 = vadd.f32 0.0, %v6109
    %v6111 = vpop.f32.mrf.mxu0
    %v6112 = vadd.f32 0.0, %v6111
    %6113 = vdwg.mxu0
    %v6115 = vsel %vm363, %v6086, 0
    %6117 = vmatpush.bf16.msra.mxu0 0
    %6118 = vmatpush.bf16.msra.mxu0 0
    %6119 = vmatpush.bf16.msra.mxu0 0
    %6120 = vmatpush.bf16.msra.mxu0 0
    %6121 = vmatpush.bf16.msra.mxu0 0
    %6122 = vmatpush.bf16.msra.mxu0 0
    %6123 = vmatpush.bf16.msra.mxu0 0
    %6124 = vmatpush.bf16.msra.mxu0 %v6087
    %6125 = vmatmul.bf16.gmra.mxu0 %v6115
    %v6126 = vpop.f32.mrf.mxu0
    %v6127 = vadd.f32 %v6110, %v6126
    %v6128 = vpop.f32.mrf.mxu0
    %v6129 = vadd.f32 %v6112, %v6128
    %6130 = vdwg.mxu0
    %v6131 = vperm.slane %v6077, 2
    %vm6132 = vcmp.eq.s32.totalorder %v6131, %v6051
    %vm6133 = vcmp.eq.s32.totalorder %v6131, %v6076
    %v6134 = vsel %vm6132, 1, 0
    %v6135 = vsel %vm6133, 1, 0
    %v6136 = vcvt.s32.f32 %v6134
    %v6137 = vcvt.s32.f32 %v6135
    %v6138 = vpack.c.bf16 %v6137, %v6136
    %v6139 = vpack.c.bf16 %v5612, %v5610
    %v6141 = vsel %vm363, %v6138, 0
    %6143 = vmatpush.bf16.msra.mxu0 0
    %6144 = vmatpush.bf16.msra.mxu0 0
    %6145 = vmatpush.bf16.msra.mxu0 0
    %6146 = vmatpush.bf16.msra.mxu0 0
    %6147 = vmatpush.bf16.msra.mxu0 0
    %6148 = vmatpush.bf16.msra.mxu0 0
    %6149 = vmatpush.bf16.msra.mxu0 0
    %6150 = vmatpush.bf16.msra.mxu0 %v6139
    %6151 = vmatmul.bf16.gmra.mxu0 %v6141
    %v6152 = vpop.f32.mrf.mxu0
    %v6153 = vadd.f32 0.0, %v6152
    %v6154 = vpop.f32.mrf.mxu0
    %v6155 = vadd.f32 0.0, %v6154
    %6156 = vdwg.mxu0
    %v6157 = vadd.f32 %v6127, %v6153
    %v6158 = vadd.f32 %v6129, %v6155
    %v6159 = vperm.slane %v6077, 3
    %vm6160 = vcmp.eq.s32.totalorder %v6159, %v6051
    %vm6161 = vcmp.eq.s32.totalorder %v6159, %v6076
    %v6162 = vsel %vm6160, 1, 0
    %v6163 = vsel %vm6161, 1, 0
    %v6164 = vcvt.s32.f32 %v6162
    %v6165 = vcvt.s32.f32 %v6163
    %v6166 = vpack.c.bf16 %v6165, %v6164
    %v6167 = vpack.c.bf16 %v5682, %v5680
    %v6169 = vsel %vm363, %v6166, 0
    %6171 = vmatpush.bf16.msra.mxu0 0
    %6172 = vmatpush.bf16.msra.mxu0 0
    %6173 = vmatpush.bf16.msra.mxu0 0
    %6174 = vmatpush.bf16.msra.mxu0 0
    %6175 = vmatpush.bf16.msra.mxu0 0
    %6176 = vmatpush.bf16.msra.mxu0 0
    %6177 = vmatpush.bf16.msra.mxu0 0
    %6178 = vmatpush.bf16.msra.mxu0 %v6167
    %6179 = vmatmul.bf16.gmra.mxu0 %v6169
    %v6180 = vpop.f32.mrf.mxu0
    %v6181 = vadd.f32 0.0, %v6180
    %v6182 = vpop.f32.mrf.mxu0
    %v6183 = vadd.f32 0.0, %v6182
    %6184 = vdwg.mxu0
    %v6185 = vadd.f32 %v6157, %v6181
    %v6186 = vadd.f32 %v6158, %v6183
    %v6187 = vperm.slane %v6077, 4
    %vm6188 = vcmp.eq.s32.totalorder %v6187, %v6051
    %vm6189 = vcmp.eq.s32.totalorder %v6187, %v6076
    %v6190 = vsel %vm6188, 1, 0
    %v6191 = vsel %vm6189, 1, 0
    %v6192 = vcvt.s32.f32 %v6190
    %v6193 = vcvt.s32.f32 %v6191
    %v6194 = vpack.c.bf16 %v6193, %v6192
    %v6195 = vpack.c.bf16 %v5752, %v5750
    %v6197 = vsel %vm363, %v6194, 0
    %6199 = vmatpush.bf16.msra.mxu0 0
    %6200 = vmatpush.bf16.msra.mxu0 0
    %6201 = vmatpush.bf16.msra.mxu0 0
    %6202 = vmatpush.bf16.msra.mxu0 0
    %6203 = vmatpush.bf16.msra.mxu0 0
    %6204 = vmatpush.bf16.msra.mxu0 0
    %6205 = vmatpush.bf16.msra.mxu0 0
    %6206 = vmatpush.bf16.msra.mxu0 %v6195
    %6207 = vmatmul.bf16.gmra.mxu0 %v6197
    %v6208 = vpop.f32.mrf.mxu0
    %v6209 = vadd.f32 0.0, %v6208
    %v6210 = vpop.f32.mrf.mxu0
    %v6211 = vadd.f32 0.0, %v6210
    %6212 = vdwg.mxu0
    %v6213 = vadd.f32 %v6185, %v6209
    %v6214 = vadd.f32 %v6186, %v6211
    %v6215 = vperm.slane %v6077, 5
    %vm6216 = vcmp.eq.s32.totalorder %v6215, %v6051
    %vm6217 = vcmp.eq.s32.totalorder %v6215, %v6076
    %v6218 = vsel %vm6216, 1, 0
    %v6219 = vsel %vm6217, 1, 0
    %v6220 = vcvt.s32.f32 %v6218
    %v6221 = vcvt.s32.f32 %v6219
    %v6222 = vpack.c.bf16 %v6221, %v6220
    %v6223 = vpack.c.bf16 %v5822, %v5820
    %v6225 = vsel %vm363, %v6222, 0
    %6227 = vmatpush.bf16.msra.mxu0 0
    %6228 = vmatpush.bf16.msra.mxu0 0
    %6229 = vmatpush.bf16.msra.mxu0 0
    %6230 = vmatpush.bf16.msra.mxu0 0
    %6231 = vmatpush.bf16.msra.mxu0 0
    %6232 = vmatpush.bf16.msra.mxu0 0
    %6233 = vmatpush.bf16.msra.mxu0 0
    %6234 = vmatpush.bf16.msra.mxu0 %v6223
    %6235 = vmatmul.bf16.gmra.mxu0 %v6225
    %v6236 = vpop.f32.mrf.mxu0
    %v6237 = vadd.f32 0.0, %v6236
    %v6238 = vpop.f32.mrf.mxu0
    %v6239 = vadd.f32 0.0, %v6238
    %6240 = vdwg.mxu0
    %v6241 = vadd.f32 %v6213, %v6237
    %v6242 = vadd.f32 %v6214, %v6239
    %v6243 = vperm.slane %v6077, 6
    %vm6244 = vcmp.eq.s32.totalorder %v6243, %v6051
    %vm6245 = vcmp.eq.s32.totalorder %v6243, %v6076
    %v6246 = vsel %vm6244, 1, 0
    %v6247 = vsel %vm6245, 1, 0
    %v6248 = vcvt.s32.f32 %v6246
    %v6249 = vcvt.s32.f32 %v6247
    %v6250 = vpack.c.bf16 %v6249, %v6248
    %v6251 = vpack.c.bf16 %v5892, %v5890
    %v6253 = vsel %vm363, %v6250, 0
    %6255 = vmatpush.bf16.msra.mxu0 0
    %6256 = vmatpush.bf16.msra.mxu0 0
    %6257 = vmatpush.bf16.msra.mxu0 0
    %6258 = vmatpush.bf16.msra.mxu0 0
    %6259 = vmatpush.bf16.msra.mxu0 0
    %6260 = vmatpush.bf16.msra.mxu0 0
    %6261 = vmatpush.bf16.msra.mxu0 0
    %6262 = vmatpush.bf16.msra.mxu0 %v6251
    %6263 = vmatmul.bf16.gmra.mxu0 %v6253
    %v6264 = vpop.f32.mrf.mxu0
    %v6265 = vadd.f32 0.0, %v6264
    %v6266 = vpop.f32.mrf.mxu0
    %v6267 = vadd.f32 0.0, %v6266
    %6268 = vdwg.mxu0
    %v6269 = vadd.f32 %v6241, %v6265
    %v6270 = vadd.f32 %v6242, %v6267
    %v6271 = vperm.slane %v6077, 7
    %vm6272 = vcmp.eq.s32.totalorder %v6271, %v6051
    %vm6273 = vcmp.eq.s32.totalorder %v6271, %v6076
    %v6274 = vsel %vm6272, 1, 0
    %v6275 = vsel %vm6273, 1, 0
    %v6276 = vcvt.s32.f32 %v6274
    %v6277 = vcvt.s32.f32 %v6275
    %v6278 = vpack.c.bf16 %v6277, %v6276
    %v6279 = vpack.c.bf16 %v5962, %v5960
    %v6281 = vsel %vm363, %v6278, 0
    %6283 = vmatpush.bf16.msra.mxu0 0
    %6284 = vmatpush.bf16.msra.mxu0 0
    %6285 = vmatpush.bf16.msra.mxu0 0
    %6286 = vmatpush.bf16.msra.mxu0 0
    %6287 = vmatpush.bf16.msra.mxu0 0
    %6288 = vmatpush.bf16.msra.mxu0 0
    %6289 = vmatpush.bf16.msra.mxu0 0
    %6290 = vmatpush.bf16.msra.mxu0 %v6279
    %6291 = vmatmul.bf16.gmra.mxu0 %v6281
    %v6292 = vpop.f32.mrf.mxu0
    %v6293 = vadd.f32 0.0, %v6292
    %v6294 = vpop.f32.mrf.mxu0
    %v6295 = vadd.f32 0.0, %v6294
    %6296 = vdwg.mxu0
    %v6297 = vadd.f32 %v6269, %v6293
    %v6298 = vadd.f32 %v6270, %v6295
    %v6299 = vperm.slane %v6078, 0
    %vm6300 = vcmp.eq.s32.totalorder %v6299, %v6051
    %vm6301 = vcmp.eq.s32.totalorder %v6299, %v6076
    %v6302 = vsel %vm6300, 1, 0
    %v6303 = vsel %vm6301, 1, 0
    %v6304 = vcvt.s32.f32 %v6302
    %v6305 = vcvt.s32.f32 %v6303
    %v6306 = vpack.c.bf16 %v6305, %v6304
    %v6307 = vpack.c.bf16 %v6032, %v6030
    %v6309 = vsel %vm363, %v6306, 0
    %6311 = vmatpush.bf16.msra.mxu0 0
    %6312 = vmatpush.bf16.msra.mxu0 0
    %6313 = vmatpush.bf16.msra.mxu0 0
    %6314 = vmatpush.bf16.msra.mxu0 0
    %6315 = vmatpush.bf16.msra.mxu0 0
    %6316 = vmatpush.bf16.msra.mxu0 0
    %6317 = vmatpush.bf16.msra.mxu0 0
    %6318 = vmatpush.bf16.msra.mxu0 %v6307
    %6319 = vmatmul.bf16.gmra.mxu0 %v6309
    %v6320 = vpop.f32.mrf.mxu0
    %v6321 = vadd.f32 0.0, %v6320
    %v6322 = vpop.f32.mrf.mxu0
    %v6323 = vadd.f32 0.0, %v6322
    %6324 = vdwg.mxu0
    %v6325 = vadd.f32 %v6297, %v6321
    %v6326 = vadd.f32 %v6298, %v6323
    %6327 = vst [vmem:[#allocation2] sm:$0xff] %v6325
    %6328 = vst [vmem:[#allocation2 + $0x8] sm:$0xff] %v6326
    // Predicated region
    $region110: #{prodosnet_forward.1} parent=1 // pred_check
      _
    $region111: #{prodosnet_forward.1} parent=1 // pred_check_branch
      %6330 = sbr.rel (0) target = $region113
    $region112: #{prodosnet_forward.1} parent=1 // pred_region
      _
    $region113: #{prodosnet_forward.1} parent=1 // pred_fallthru
      _
    // Predicated region
    $region114: #{prodosnet_forward.1} parent=1 // pred_check
      _
    $region115: #{prodosnet_forward.1} parent=1 // pred_check_branch
      %6332 = sbr.rel (0) target = $region117
    $region116: #{prodosnet_forward.1} parent=1 // pred_region
      %6334 = vsyncadd [#allocation3], 0
      %s6335 = sshll.u32 [#allocation2], 4
      %s6336 = int_to_ptr.vmem [resolvable:$true] %s6335
      %s6337 = sshll.u32 %s57, 4
      %s6338 = int_to_ptr.hbm [resolvable:$true] %s6337
      %6343 = dma.vmem_to_hbm [thread:$0]  %s6336, 256, %s6338, [#allocation3], 128, 128, 8
    $region117: #{prodosnet_forward.1} parent=1 // pred_fallthru
      _
    // Predicated region
    $region118: #{prodosnet_forward.1} parent=1 // pred_check
      _
    $region119: #{prodosnet_forward.1} parent=1 // pred_check_branch
      %6345 = sbr.rel (0) target = $region121
    $region120: #{prodosnet_forward.1} parent=1 // pred_region
      _
    $region121: #{prodosnet_forward.1} parent=1 // pred_fallthru
      _
    // Predicated region
    $region122: #{prodosnet_forward.1} parent=1 // pred_check
      _
    $region123: #{prodosnet_forward.1} parent=1 // pred_check_branch
      %6347 = sbr.rel (0) target = $region125
    $region124: #{prodosnet_forward.1} parent=1 // pred_region
      _
    $region125: #{prodosnet_forward.1} parent=1 // pred_fallthru
      _
    // Predicated region
    $region126: #{prodosnet_forward.1} parent=1 // pred_check
      _
    $region127: #{prodosnet_forward.1} parent=1 // pred_check_branch
      %6349 = sbr.rel (0) target = $region129
    $region128: #{prodosnet_forward.1} parent=1 // pred_region
      %6351 = dma.done [#allocation3], 256
    $region129: #{prodosnet_forward.1} parent=1 // pred_fallthru
      _
    // Predicated region
    $region130: #{prodosnet_forward.1} parent=1 // pred_check
      _
    $region131: #{prodosnet_forward.1} parent=1 // pred_check_branch
      %6353 = sbr.rel (0) target = $region133
    $region132: #{prodosnet_forward.1} parent=1 // pred_region
      _
    $region133: #{prodosnet_forward.1} parent=1 // pred_fallthru
      _
    %6354 = vsyncpa [#allocation3], 1

</llo_original>
